<compile_context>
chip_gen: v7x
topology: tpu7x:2x2x1
jax: 0.10.0
libtpu: 0.0.40
codegen_flags: <defaults>
</compile_context>

<pallas_src>
import jax
import jax.numpy as jnp
from jax import lax
from jax.experimental import pallas as pl
from jax.experimental.pallas import tpu as pltpu


def _round_up(x, m):
    return (x + m - 1) // m * m


# -----------------------------------------------------------------------------
# Pallas kernel: one output tile  o = (x @ w + b), full-K, resident weight.
# -----------------------------------------------------------------------------
def _mm_bias_kernel(x_ref, w_ref, b_ref, o_ref):
    o_ref[...] = (
        jnp.dot(x_ref[...], w_ref[...], preferred_element_type=jnp.float32)
        + b_ref[...]
    ).astype(o_ref.dtype)


def matmul_bias(x, w, bias=None, *, tm=2048, out_dtype=jnp.float32,
                use_pallas=True):
    """x: (M, K), w: (K, N), bias: (N,) or None -> (M, N) in out_dtype.

    K is a single (full) reduction block so the weight is DMA'd once and stays
    resident in VMEM across all M tiles; M is tiled by `tm` on a 1-D parallel
    grid.
    """
    M, K = x.shape
    K2, N = w.shape
    assert K == K2
    b = jnp.zeros((N,), jnp.float32) if bias is None else bias.astype(jnp.float32)

    if not use_pallas:  # pure-JAX reference path (same dtypes / same math)
        out = jnp.dot(x, w, preferred_element_type=jnp.float32) + b
        return out.astype(out_dtype)

    tm = max(8, min(tm, _round_up(M, 8)))
    Mp = _round_up(M, tm)
    Kp = _round_up(K, 16)
    Np = _round_up(N, 8)

    xp = jnp.pad(x, ((0, Mp - M), (0, Kp - K)))
    wp = jnp.pad(w, ((0, Kp - K), (0, Np - N)))
    bp = jnp.pad(b, (0, Np - N)).reshape(1, Np)

    out = pl.pallas_call(
        _mm_bias_kernel,
        out_shape=jax.ShapeDtypeStruct((Mp, Np), out_dtype),
        grid_spec=pltpu.PrefetchScalarGridSpec(
            num_scalar_prefetch=0,
            grid=(Mp // tm,),
            in_specs=[
                pl.BlockSpec((tm, Kp), lambda i: (i, 0)),
                pl.BlockSpec((Kp, Np), lambda i: (0, 0)),  # resident weight
                pl.BlockSpec((1, Np), lambda i: (0, 0)),   # resident bias
            ],
            out_specs=pl.BlockSpec((tm, Np), lambda i: (i, 0)),
        ),
        compiler_params=pltpu.CompilerParams(
            dimension_semantics=("parallel",)),
    )(xp, wp, bp)
    return out[:M, :N]


# -----------------------------------------------------------------------------
# ConvTranspose2d (PyTorch semantics) on NHWC activations.
#   1) zero-insert (stride) + pad once (lax.pad, interior+edge in one op)
#   2) unroll only the KH taps in HBM (KH slices, channels-last, bf16)
#   3) single Pallas matmul: K = KH*Cin, N = KW*Cout, f32 accumulate
#   4) overlap-add over the KW taps + bias + activation (small XLA epilogue)
# -----------------------------------------------------------------------------
def conv_transpose2d_nhwc(x, wt, bias, *, stride, padding, dilation,
                          activation, use_pallas=True):
    B, H, W, Cin = x.shape
    Cin2, Cout, KH, KW = wt.shape
    assert Cin == Cin2
    sh, sw = stride
    ph, pw = padding
    dh, dw = dilation

    Hout = (H - 1) * sh - 2 * ph + dh * (KH - 1) + 1
    Wout = (W - 1) * sw - 2 * pw + dw * (KW - 1) + 1
    ph_eq = dh * (KH - 1) - ph
    pw_eq = dw * (KW - 1) - pw
    assert ph_eq >= 0 and pw_eq >= 0, "negative equivalent padding unsupported"

    xb = x.astype(jnp.bfloat16)
    xdp = lax.pad(
        xb, jnp.array(0, dtype=xb.dtype),
        ((0, 0, 0), (ph_eq, ph_eq, sh - 1), (pw_eq, pw_eq, sw - 1), (0, 0, 0)))
    Hp = Hout + dh * (KH - 1)
    Wp = Wout + dw * (KW - 1)
    assert xdp.shape == (B, Hp, Wp, Cin)

    # XH[b, oh, w, i, ci] = xdp[b, oh + i*dh, w, ci]   (KH-only unroll)
    rows = [xdp[:, i * dh: i * dh + Hout, :, :] for i in range(KH)]
    xh = jnp.stack(rows, axis=3).reshape(B * Hout * Wp, KH * Cin)

    # W2[(i,ci), (j,co)] = wt[ci, co, KH-1-i, KW-1-j]  (flipped, swapped in/out)
    w2 = jnp.flip(wt, axis=(2, 3)).transpose(2, 0, 3, 1)     # (KH, Cin, KW, Cout)
    w2 = w2.reshape(KH * Cin, KW * Cout).astype(jnp.bfloat16)

    z = matmul_bias(xh, w2, bias=None, out_dtype=jnp.float32,
                    use_pallas=use_pallas)                    # (B*Hout*Wp, KW*Cout)
    z = z.reshape(B, Hout, Wp, KW, Cout)

    # TODO(synk): the KW-tap overlap-add + bias/activation epilogue is left as
    # small XLA glue; it could be fused into a second Pallas pass if needed.
    out = z[:, :, 0:Wout, 0, :]
    for j in range(1, KW):
        out = out + z[:, :, j * dw: j * dw + Wout, j, :]
    out = out + bias.astype(jnp.float32)
    if activation == "relu":
        out = jnp.maximum(out, 0.0)
    elif activation == "sigmoid":
        out = jax.nn.sigmoid(out)
    return out                                                # (B, Hout, Wout, Cout)


# -----------------------------------------------------------------------------
# VerySmallDecoder forward (matches the PyTorch module)
# -----------------------------------------------------------------------------
def very_small_decoder_forward(params, z, *, use_pallas=True):
    B = z.shape[0]
    C = params["conv5_w"].shape[0]          # num_channels

    # fc: (B, latent) -> (B, C*50*5)
    h = matmul_bias(z.astype(jnp.float32), params["fc_w"].T.astype(jnp.float32),
                    bias=params["fc_b"], out_dtype=jnp.float32,
                    use_pallas=use_pallas)
    # PyTorch: x.view(B, C, 50, -1)  (NCHW)  -> convert once to NHWC
    x = h.reshape(B, C, 50, 5).transpose(0, 2, 3, 1)          # (B, 50, 5, C)

    x = conv_transpose2d_nhwc(x, params["conv5_w"], params["conv5_b"],
                              stride=(1, 4), padding=(0, 1), dilation=(1, 4),
                              activation="relu", use_pallas=use_pallas)
    x = conv_transpose2d_nhwc(x, params["conv4_w"], params["conv4_b"],
                              stride=(1, 2), padding=(2, 2), dilation=(1, 1),
                              activation="relu", use_pallas=use_pallas)
    x = conv_transpose2d_nhwc(x, params["conv3_w"], params["conv3_b"],
                              stride=(2, 1), padding=(2, 2), dilation=(1, 1),
                              activation="relu", use_pallas=use_pallas)
    x = conv_transpose2d_nhwc(x, params["conv2_w"], params["conv2_b"],
                              stride=(1, 1), padding=(2, 3), dilation=(1, 1),
                              activation="sigmoid", use_pallas=use_pallas)
    return x.transpose(0, 3, 1, 2)                            # NCHW (B,1,190,100)


def init_params(key, num_channels, latent_dims):
    C = num_channels

    def tconv_init(k, cin, cout, kh, kw):
        k1, k2 = jax.random.split(k)
        bound = (1.0 / (cout * kh * kw)) ** 0.5
        w = jax.random.uniform(k1, (cin, cout, kh, kw), jnp.float32, -bound, bound)
        b = jax.random.uniform(k2, (cout,), jnp.float32, -bound, bound)
        return w, b

    def fc_init(k, out_f, in_f):
        k1, k2 = jax.random.split(k)
        bound = (1.0 / in_f) ** 0.5
        w = jax.random.uniform(k1, (out_f, in_f), jnp.float32, -bound, bound)
        b = jax.random.uniform(k2, (out_f,), jnp.float32, -bound, bound)
        return w, b

    ks = jax.random.split(key, 5)
    p = {}
    p["fc_w"], p["fc_b"] = fc_init(ks[0], C * 50 * 5, latent_dims)
    p["conv5_w"], p["conv5_b"] = tconv_init(ks[1], C, C * 8, 46, 10)
    p["conv4_w"], p["conv4_b"] = tconv_init(ks[2], C * 8, C * 8, 5, 5)
    p["conv3_w"], p["conv3_b"] = tconv_init(ks[3], C * 8, C * 8, 5, 5)
    p["conv2_w"], p["conv2_b"] = tconv_init(ks[4], C * 8, 1, 6, 6)
    return p


if __name__ == "__main__":
    NUM_CHANNELS = 2   # small stand-in for configs.ParamsConfig.NUM_CHANNELS
    LATENT_DIMS = 8    # small stand-in for configs.ParamsConfig.LATENT_DIMS
    B = 2

    key = jax.random.PRNGKey(0)
    kz, kp = jax.random.split(key)
    z = jax.random.normal(kz, (B, LATENT_DIMS), jnp.float32)
    params = init_params(kp, NUM_CHANNELS, LATENT_DIMS)

    fwd = jax.jit(very_small_decoder_forward, static_argnames=("use_pallas",))
    out = fwd(params, z, use_pallas=True)
    jax.block_until_ready(out)

    assert out.shape == (B, 1, 190, 100), out.shape
    assert bool(jnp.all(jnp.isfinite(out)))
    assert bool(jnp.all(out >= 0.0)) and bool(jnp.all(out <= 1.0))

    # cross-check the Pallas matmul path against the identical pure-JAX math
    ref = fwd(params, z, use_pallas=False)
    jax.block_until_ready(ref)
    assert bool(jnp.all(jnp.abs(out - ref) < 1e-2))

    print("KERNEL_OK")
</pallas_src>

<mosaic_0001>
module attributes {stable_mosaic.version = 11 : i64} {
  func.func @_mm_bias_kernel(%arg0: i32, %arg1: memref<8x16xf32, #tpu.memory_space<vmem>>, %arg2: memref<16x504xf32, #tpu.memory_space<vmem>>, %arg3: memref<1x504xf32, #tpu.memory_space<vmem>>, %arg4: memref<8x504xf32, #tpu.memory_space<vmem>>) attributes {dimension_semantics = [#tpu.dimension_semantics<parallel>], iteration_bounds = array<i64: 1>, scalar_prefetch = 0 : i64, scratch_operands = 0 : i64, tpu.core_type = #tpu.core_type<tc>, window_params = [{transform_indices = @transform_0, window_bounds = array<i64: 8, 16>}, {pipeline_mode = #tpu.pipeline_mode<synchronous>, transform_indices = @transform_1, window_bounds = array<i64: 16, 504>}, {pipeline_mode = #tpu.pipeline_mode<synchronous>, transform_indices = @transform_2, window_bounds = array<i64: 1, 504>}, {transform_indices = @transform_3, window_bounds = array<i64: 8, 504>}]} {
    %c0 = arith.constant 0 : index
    %c0_0 = arith.constant 0 : index
    %0 = vector.load %arg1[%c0, %c0_0] : memref<8x16xf32, #tpu.memory_space<vmem>>, vector<8x16xf32>
    %c0_1 = arith.constant 0 : index
    %c0_2 = arith.constant 0 : index
    %1 = vector.load %arg2[%c0_1, %c0_2] : memref<16x504xf32, #tpu.memory_space<vmem>>, vector<16x504xf32>
    %cst = arith.constant dense<0.000000e+00> : vector<8x504xf32>
    %2 = tpu.matmul %0, %1, %cst {dimension_numbers = #tpu.dot_dimension_numbers<[1], [0], [0], [1], [0, 0, 1, 1], [], []>} : vector<8x16xf32>, vector<16x504xf32>, vector<8x504xf32> -> vector<8x504xf32>
    %c0_3 = arith.constant 0 : index
    %c0_4 = arith.constant 0 : index
    %3 = vector.load %arg3[%c0_3, %c0_4] : memref<1x504xf32, #tpu.memory_space<vmem>>, vector<1x504xf32>
    %4 = vector.broadcast %3 : vector<1x504xf32> to vector<8x504xf32>
    %5 = arith.addf %2, %4 : vector<8x504xf32>
    %c0_5 = arith.constant 0 : index
    %c0_6 = arith.constant 0 : index
    %6 = vector.load %arg4[%c0_5, %c0_6] : memref<8x504xf32, #tpu.memory_space<vmem>>, vector<8x504xf32>
    tpu.vector_store %arg4[%c0_5, %c0_6], %5 {strides = array<i32>} : memref<8x504xf32, #tpu.memory_space<vmem>>, vector<8x504xf32>,
    return
  }
  func.func @transform_0(%arg0: i32) -> (i32, i32) {
    %c0_i32 = arith.constant 0 : i32
    %c0_i32_0 = arith.constant 0 : i32
    return %arg0, %c0_i32 : i32, i32
  }
  func.func @transform_1(%arg0: i32) -> (i32, i32) {
    %c0_i32 = arith.constant 0 : i32
    %c0_i32_0 = arith.constant 0 : i32
    %c0_i32_1 = arith.constant 0 : i32
    return %c0_i32, %c0_i32_0 : i32, i32
  }
  func.func @transform_2(%arg0: i32) -> (i32, i32) {
    %c0_i32 = arith.constant 0 : i32
    %c0_i32_0 = arith.constant 0 : i32
    %c0_i32_1 = arith.constant 0 : i32
    return %c0_i32, %c0_i32_0 : i32, i32
  }
  func.func @transform_3(%arg0: i32) -> (i32, i32) {
    %c0_i32 = arith.constant 0 : i32
    %c0_i32_0 = arith.constant 0 : i32
    return %arg0, %c0_i32 : i32, i32
  }
}

module attributes {stable_mosaic.version = 11 : i64} {
  func.func @_mm_bias_kernel(%arg0: i32, %arg1: memref<2048x96xbf16, #tpu.memory_space<vmem>>, %arg2: memref<96x160xbf16, #tpu.memory_space<vmem>>, %arg3: memref<1x160xf32, #tpu.memory_space<vmem>>, %arg4: memref<2048x160xf32, #tpu.memory_space<vmem>>) attributes {dimension_semantics = [#tpu.dimension_semantics<parallel>], iteration_bounds = array<i64: 9>, scalar_prefetch = 0 : i64, scratch_operands = 0 : i64, tpu.core_type = #tpu.core_type<tc>, window_params = [{transform_indices = @transform_0, window_bounds = array<i64: 2048, 96>}, {pipeline_mode = #tpu.pipeline_mode<synchronous>, transform_indices = @transform_1, window_bounds = array<i64: 96, 160>}, {pipeline_mode = #tpu.pipeline_mode<synchronous>, transform_indices = @transform_2, window_bounds = array<i64: 1, 160>}, {transform_indices = @transform_3, window_bounds = array<i64: 2048, 160>}]} {
    %c0 = arith.constant 0 : index
    %c0_0 = arith.constant 0 : index
    %0 = vector.load %arg1[%c0, %c0_0] : memref<2048x96xbf16, #tpu.memory_space<vmem>>, vector<2048x96xbf16>
    %c0_1 = arith.constant 0 : index
    %c0_2 = arith.constant 0 : index
    %1 = vector.load %arg2[%c0_1, %c0_2] : memref<96x160xbf16, #tpu.memory_space<vmem>>, vector<96x160xbf16>
    %cst = arith.constant dense<0.000000e+00> : vector<2048x160xf32>
    %2 = tpu.matmul %0, %1, %cst {dimension_numbers = #tpu.dot_dimension_numbers<[1], [0], [0], [1], [0, 0, 1, 1], [], []>} : vector<2048x96xbf16>, vector<96x160xbf16>, vector<2048x160xf32> -> vector<2048x160xf32>
    %c0_3 = arith.constant 0 : index
    %c0_4 = arith.constant 0 : index
    %3 = vector.load %arg3[%c0_3, %c0_4] : memref<1x160xf32, #tpu.memory_space<vmem>>, vector<1x160xf32>
    %4 = vector.broadcast %3 : vector<1x160xf32> to vector<2048x160xf32>
    %5 = arith.addf %2, %4 : vector<2048x160xf32>
    %c0_5 = arith.constant 0 : index
    %c0_6 = arith.constant 0 : index
    %6 = vector.load %arg4[%c0_5, %c0_6] : memref<2048x160xf32, #tpu.memory_space<vmem>>, vector<2048x160xf32>
    tpu.vector_store %arg4[%c0_5, %c0_6], %5 {strides = array<i32>} : memref<2048x160xf32, #tpu.memory_space<vmem>>, vector<2048x160xf32>,
    return
  }
  func.func @transform_0(%arg0: i32) -> (i32, i32) {
    %c0_i32 = arith.constant 0 : i32
    %c0_i32_0 = arith.constant 0 : i32
    return %arg0, %c0_i32 : i32, i32
  }
  func.func @transform_1(%arg0: i32) -> (i32, i32) {
    %c0_i32 = arith.constant 0 : i32
    %c0_i32_0 = arith.constant 0 : i32
    %c0_i32_1 = arith.constant 0 : i32
    return %c0_i32, %c0_i32_0 : i32, i32
  }
  func.func @transform_2(%arg0: i32) -> (i32, i32) {
    %c0_i32 = arith.constant 0 : i32
    %c0_i32_0 = arith.constant 0 : i32
    %c0_i32_1 = arith.constant 0 : i32
    return %c0_i32, %c0_i32_0 : i32, i32
  }
  func.func @transform_3(%arg0: i32) -> (i32, i32) {
    %c0_i32 = arith.constant 0 : i32
    %c0_i32_0 = arith.constant 0 : i32
    return %arg0, %c0_i32 : i32, i32
  }
}

module attributes {stable_mosaic.version = 11 : i64} {
  func.func @_mm_bias_kernel(%arg0: i32, %arg1: memref<2048x80xbf16, #tpu.memory_space<vmem>>, %arg2: memref<80x80xbf16, #tpu.memory_space<vmem>>, %arg3: memref<1x80xf32, #tpu.memory_space<vmem>>, %arg4: memref<2048x80xf32, #tpu.memory_space<vmem>>) attributes {dimension_semantics = [#tpu.dimension_semantics<parallel>], iteration_bounds = array<i64: 10>, scalar_prefetch = 0 : i64, scratch_operands = 0 : i64, tpu.core_type = #tpu.core_type<tc>, window_params = [{transform_indices = @transform_0, window_bounds = array<i64: 2048, 80>}, {pipeline_mode = #tpu.pipeline_mode<synchronous>, transform_indices = @transform_1, window_bounds = array<i64: 80, 80>}, {pipeline_mode = #tpu.pipeline_mode<synchronous>, transform_indices = @transform_2, window_bounds = array<i64: 1, 80>}, {transform_indices = @transform_3, window_bounds = array<i64: 2048, 80>}]} {
    %c0 = arith.constant 0 : index
    %c0_0 = arith.constant 0 : index
    %0 = vector.load %arg1[%c0, %c0_0] : memref<2048x80xbf16, #tpu.memory_space<vmem>>, vector<2048x80xbf16>
    %c0_1 = arith.constant 0 : index
    %c0_2 = arith.constant 0 : index
    %1 = vector.load %arg2[%c0_1, %c0_2] : memref<80x80xbf16, #tpu.memory_space<vmem>>, vector<80x80xbf16>
    %cst = arith.constant dense<0.000000e+00> : vector<2048x80xf32>
    %2 = tpu.matmul %0, %1, %cst {dimension_numbers = #tpu.dot_dimension_numbers<[1], [0], [0], [1], [0, 0, 1, 1], [], []>} : vector<2048x80xbf16>, vector<80x80xbf16>, vector<2048x80xf32> -> vector<2048x80xf32>
    %c0_3 = arith.constant 0 : index
    %c0_4 = arith.constant 0 : index
    %3 = vector.load %arg3[%c0_3, %c0_4] : memref<1x80xf32, #tpu.memory_space<vmem>>, vector<1x80xf32>
    %4 = vector.broadcast %3 : vector<1x80xf32> to vector<2048x80xf32>
    %5 = arith.addf %2, %4 : vector<2048x80xf32>
    %c0_5 = arith.constant 0 : index
    %c0_6 = arith.constant 0 : index
    %6 = vector.load %arg4[%c0_5, %c0_6] : memref<2048x80xf32, #tpu.memory_space<vmem>>, vector<2048x80xf32>
    tpu.vector_store %arg4[%c0_5, %c0_6], %5 {strides = array<i32>} : memref<2048x80xf32, #tpu.memory_space<vmem>>, vector<2048x80xf32>,
    return
  }
  func.func @transform_0(%arg0: i32) -> (i32, i32) {
    %c0_i32 = arith.constant 0 : i32
    %c0_i32_0 = arith.constant 0 : i32
    return %arg0, %c0_i32 : i32, i32
  }
  func.func @transform_1(%arg0: i32) -> (i32, i32) {
    %c0_i32 = arith.constant 0 : i32
    %c0_i32_0 = arith.constant 0 : i32
    %c0_i32_1 = arith.constant 0 : i32
    return %c0_i32, %c0_i32_0 : i32, i32
  }
  func.func @transform_2(%arg0: i32) -> (i32, i32) {
    %c0_i32 = arith.constant 0 : i32
    %c0_i32_0 = arith.constant 0 : i32
    %c0_i32_1 = arith.constant 0 : i32
    return %c0_i32, %c0_i32_0 : i32, i32
  }
  func.func @transform_3(%arg0: i32) -> (i32, i32) {
    %c0_i32 = arith.constant 0 : i32
    %c0_i32_0 = arith.constant 0 : i32
    return %arg0, %c0_i32 : i32, i32
  }
}

module attributes {stable_mosaic.version = 11 : i64} {
  func.func @_mm_bias_kernel(%arg0: i32, %arg1: memref<2048x80xbf16, #tpu.memory_space<vmem>>, %arg2: memref<80x80xbf16, #tpu.memory_space<vmem>>, %arg3: memref<1x80xf32, #tpu.memory_space<vmem>>, %arg4: memref<2048x80xf32, #tpu.memory_space<vmem>>) attributes {dimension_semantics = [#tpu.dimension_semantics<parallel>], iteration_bounds = array<i64: 20>, scalar_prefetch = 0 : i64, scratch_operands = 0 : i64, tpu.core_type = #tpu.core_type<tc>, window_params = [{transform_indices = @transform_0, window_bounds = array<i64: 2048, 80>}, {pipeline_mode = #tpu.pipeline_mode<synchronous>, transform_indices = @transform_1, window_bounds = array<i64: 80, 80>}, {pipeline_mode = #tpu.pipeline_mode<synchronous>, transform_indices = @transform_2, window_bounds = array<i64: 1, 80>}, {transform_indices = @transform_3, window_bounds = array<i64: 2048, 80>}]} {
    %c0 = arith.constant 0 : index
    %c0_0 = arith.constant 0 : index
    %0 = vector.load %arg1[%c0, %c0_0] : memref<2048x80xbf16, #tpu.memory_space<vmem>>, vector<2048x80xbf16>
    %c0_1 = arith.constant 0 : index
    %c0_2 = arith.constant 0 : index
    %1 = vector.load %arg2[%c0_1, %c0_2] : memref<80x80xbf16, #tpu.memory_space<vmem>>, vector<80x80xbf16>
    %cst = arith.constant dense<0.000000e+00> : vector<2048x80xf32>
    %2 = tpu.matmul %0, %1, %cst {dimension_numbers = #tpu.dot_dimension_numbers<[1], [0], [0], [1], [0, 0, 1, 1], [], []>} : vector<2048x80xbf16>, vector<80x80xbf16>, vector<2048x80xf32> -> vector<2048x80xf32>
    %c0_3 = arith.constant 0 : index
    %c0_4 = arith.constant 0 : index
    %3 = vector.load %arg3[%c0_3, %c0_4] : memref<1x80xf32, #tpu.memory_space<vmem>>, vector<1x80xf32>
    %4 = vector.broadcast %3 : vector<1x80xf32> to vector<2048x80xf32>
    %5 = arith.addf %2, %4 : vector<2048x80xf32>
    %c0_5 = arith.constant 0 : index
    %c0_6 = arith.constant 0 : index
    %6 = vector.load %arg4[%c0_5, %c0_6] : memref<2048x80xf32, #tpu.memory_space<vmem>>, vector<2048x80xf32>
    tpu.vector_store %arg4[%c0_5, %c0_6], %5 {strides = array<i32>} : memref<2048x80xf32, #tpu.memory_space<vmem>>, vector<2048x80xf32>,
    return
  }
  func.func @transform_0(%arg0: i32) -> (i32, i32) {
    %c0_i32 = arith.constant 0 : i32
    %c0_i32_0 = arith.constant 0 : i32
    return %arg0, %c0_i32 : i32, i32
  }
  func.func @transform_1(%arg0: i32) -> (i32, i32) {
    %c0_i32 = arith.constant 0 : i32
    %c0_i32_0 = arith.constant 0 : i32
    %c0_i32_1 = arith.constant 0 : i32
    return %c0_i32, %c0_i32_0 : i32, i32
  }
  func.func @transform_2(%arg0: i32) -> (i32, i32) {
    %c0_i32 = arith.constant 0 : i32
    %c0_i32_0 = arith.constant 0 : i32
    %c0_i32_1 = arith.constant 0 : i32
    return %c0_i32, %c0_i32_0 : i32, i32
  }
  func.func @transform_3(%arg0: i32) -> (i32, i32) {
    %c0_i32 = arith.constant 0 : i32
    %c0_i32_0 = arith.constant 0 : i32
    return %arg0, %c0_i32 : i32, i32
  }
}

module attributes {stable_mosaic.version = 11 : i64} {
  func.func @_mm_bias_kernel(%arg0: i32, %arg1: memref<2048x96xbf16, #tpu.memory_space<vmem>>, %arg2: memref<96x8xbf16, #tpu.memory_space<vmem>>, %arg3: memref<1x8xf32, #tpu.memory_space<vmem>>, %arg4: memref<2048x8xf32, #tpu.memory_space<vmem>>) attributes {dimension_semantics = [#tpu.dimension_semantics<parallel>], iteration_bounds = array<i64: 20>, scalar_prefetch = 0 : i64, scratch_operands = 0 : i64, tpu.core_type = #tpu.core_type<tc>, window_params = [{transform_indices = @transform_0, window_bounds = array<i64: 2048, 96>}, {pipeline_mode = #tpu.pipeline_mode<synchronous>, transform_indices = @transform_1, window_bounds = array<i64: 96, 8>}, {pipeline_mode = #tpu.pipeline_mode<synchronous>, transform_indices = @transform_2, window_bounds = array<i64: 1, 8>}, {transform_indices = @transform_3, window_bounds = array<i64: 2048, 8>}]} {
    %c0 = arith.constant 0 : index
    %c0_0 = arith.constant 0 : index
    %0 = vector.load %arg1[%c0, %c0_0] : memref<2048x96xbf16, #tpu.memory_space<vmem>>, vector<2048x96xbf16>
    %c0_1 = arith.constant 0 : index
    %c0_2 = arith.constant 0 : index
    %1 = vector.load %arg2[%c0_1, %c0_2] : memref<96x8xbf16, #tpu.memory_space<vmem>>, vector<96x8xbf16>
    %cst = arith.constant dense<0.000000e+00> : vector<2048x8xf32>
    %2 = tpu.matmul %0, %1, %cst {dimension_numbers = #tpu.dot_dimension_numbers<[1], [0], [0], [1], [0, 0, 1, 1], [], []>} : vector<2048x96xbf16>, vector<96x8xbf16>, vector<2048x8xf32> -> vector<2048x8xf32>
    %c0_3 = arith.constant 0 : index
    %c0_4 = arith.constant 0 : index
    %3 = vector.load %arg3[%c0_3, %c0_4] : memref<1x8xf32, #tpu.memory_space<vmem>>, vector<1x8xf32>
    %4 = vector.broadcast %3 : vector<1x8xf32> to vector<2048x8xf32>
    %5 = arith.addf %2, %4 : vector<2048x8xf32>
    %c0_5 = arith.constant 0 : index
    %c0_6 = arith.constant 0 : index
    %6 = vector.load %arg4[%c0_5, %c0_6] : memref<2048x8xf32, #tpu.memory_space<vmem>>, vector<2048x8xf32>
    tpu.vector_store %arg4[%c0_5, %c0_6], %5 {strides = array<i32>} : memref<2048x8xf32, #tpu.memory_space<vmem>>, vector<2048x8xf32>,
    return
  }
  func.func @transform_0(%arg0: i32) -> (i32, i32) {
    %c0_i32 = arith.constant 0 : i32
    %c0_i32_0 = arith.constant 0 : i32
    return %arg0, %c0_i32 : i32, i32
  }
  func.func @transform_1(%arg0: i32) -> (i32, i32) {
    %c0_i32 = arith.constant 0 : i32
    %c0_i32_0 = arith.constant 0 : i32
    %c0_i32_1 = arith.constant 0 : i32
    return %c0_i32, %c0_i32_0 : i32, i32
  }
  func.func @transform_2(%arg0: i32) -> (i32, i32) {
    %c0_i32 = arith.constant 0 : i32
    %c0_i32_0 = arith.constant 0 : i32
    %c0_i32_1 = arith.constant 0 : i32
    return %c0_i32, %c0_i32_0 : i32, i32
  }
  func.func @transform_3(%arg0: i32) -> (i32, i32) {
    %c0_i32 = arith.constant 0 : i32
    %c0_i32_0 = arith.constant 0 : i32
    return %arg0, %c0_i32 : i32, i32
  }
}

</mosaic_0001>

<llo_original>
// kernel: very_small_decoder_forward.5
$region0: #{very_small_decoder_forward.5}
  #allocation0 [shape = 'u32[]', space=smem, size = 0x4, offset = 0x4, fixed_abs, tag = 'smem constant byte address 0x4 - core index']
  #allocation1 [shape = 'u32[144,128]{1,0:T(1,128)}', space=vmem, size = 0x12000, scoped, tag = 'internal scratch']
  %s0 = inlined_call_operand.vmem [shape: f32[8,16], index: 0, kind: input, shape index: {}]
  %s1 = inlined_call_operand.vmem [shape: f32[16,504], index: 1, kind: input, shape index: {}]
  %s2 = inlined_call_operand.vmem [shape: f32[1,504], index: 2, kind: input, shape index: {}]
  %s3 = inlined_call_operand.vmem [shape: f32[8,504], index: 3, kind: output, shape index: {}]
  %s4 = sld [smem:[#allocation0]]
  $region22: #{very_small_decoder_forward.5} parent=0
    _
  %s6 = ssub.s32 1, %s4
  %s7 = scalar_select 0, %s6, %s4
  // Predicated region
  $region2: #{very_small_decoder_forward.5} parent=0 // pred_check
    _
  $region3: #{very_small_decoder_forward.5} parent=0 // pred_check_branch
    %9 = sbr.rel (0) target = $region5
  $region4: #{very_small_decoder_forward.5} parent=0 // pred_region
    _
  $region5: #{very_small_decoder_forward.5} parent=0 // pred_fallthru
    _
  // Predicated region
  $region6: #{very_small_decoder_forward.5} parent=0 // pred_check
    _
  $region7: #{very_small_decoder_forward.5} parent=0 // pred_check_branch
    %11 = sbr.rel (0) target = $region9
  $region8: #{very_small_decoder_forward.5} parent=0 // pred_region
    _
  $region9: #{very_small_decoder_forward.5} parent=0 // pred_fallthru
    _
  // Predicated region
  $region10: #{very_small_decoder_forward.5} parent=0 // pred_check
    _
  $region11: #{very_small_decoder_forward.5} parent=0 // pred_check_branch
    %13 = sbr.rel (0) target = $region13
  $region12: #{very_small_decoder_forward.5} parent=0 // pred_region
    _
  $region13: #{very_small_decoder_forward.5} parent=0 // pred_fallthru
    _
  %v14 = vld [vmem:[%s0] sm:$0xff]
  %v15 = vld [vmem:[%s1] sm:$0xff]
  %v16 = vld [vmem:[%s1 + $0x8] sm:$0xff]
  %v17 = vld [vmem:[%s1 + $0x10] sm:$0xff]
  %v18 = vld [vmem:[%s1 + $0x18] sm:$0xff]
  %v19 = vld [vmem:[%s1 + $0x20] sm:$0xff]
  %v20 = vld [vmem:[%s1 + $0x28] sm:$0xff]
  %v21 = vld [vmem:[%s1 + $0x30] sm:$0xff]
  %v22 = vld [vmem:[%s1 + $0x38] sm:$0xff]
  %v23 = vld [vmem:[%s2] sm:$0xf]
  %v25 = vlaneseq
  %v26 = vshrl.u32 %v25, 7
  %v27 = vsub.s32 0, %v26
  %v28 = vrot.slane %v23, %v27
  %v29 = vlaneseq
  %v30 = vshrl.u32 %v29, 7
  %v31 = vsub.s32 1, %v30
  %v32 = vrot.slane %v23, %v31
  %v33 = vlaneseq
  %v34 = vshrl.u32 %v33, 7
  %v35 = vsub.s32 2, %v34
  %v36 = vrot.slane %v23, %v35
  %v37 = vlaneseq
  %v38 = vshrl.u32 %v37, 7
  %v39 = vsub.s32 3, %v38
  %v40 = vrot.slane %v23, %v39
  %vm45 = vcmask 130048
  %v47 = vsel %vm45, %v14, 0
  %49 = vmatprep.subr.mxu0 %v16
  %50 = vmatpush1.msra.mxu0 %v15
  %51 = vmatprep.subr.mxu0 %v20
  %52 = vmatpush1.msra.mxu0 %v19
  %53 = vmatprep.subr.mxu0 0.0
  %54 = vmatpush1.msra.mxu0 0.0
  %55 = vmatprep.subr.mxu0 0.0
  %56 = vmatpush1.msra.mxu0 0.0
  %57 = vmatprep.subr.mxu0 0.0
  %58 = vmatpush1.msra.mxu0 0.0
  %59 = vmatprep.subr.mxu0 0.0
  %60 = vmatpush1.msra.mxu0 0.0
  %61 = vmatprep.subr.mxu0 0.0
  %62 = vmatpush1.msra.mxu0 0.0
  %63 = vmatprep.subr.mxu0 0.0
  %64 = vmatpush1.msra.mxu0 0.0
  %65 = vmatprep.subr.mxu0 0.0
  %66 = vmatpush1.msra.mxu0 0.0
  %67 = vmatprep.subr.mxu0 0.0
  %68 = vmatpush1.msra.mxu0 0.0
  %69 = vmatprep.subr.mxu0 0.0
  %70 = vmatpush1.msra.mxu0 0.0
  %71 = vmatprep.subr.mxu0 0.0
  %72 = vmatpush1.msra.mxu0 0.0
  %73 = vmatprep.subr.mxu0 0.0
  %74 = vmatpush1.msra.mxu0 0.0
  %75 = vmatprep.subr.mxu0 0.0
  %76 = vmatpush1.msra.mxu0 0.0
  %77 = vmatprep.subr.mxu0 0.0
  %78 = vmatpush1.msra.mxu0 0.0
  %79 = vmatprep.subr.mxu0 0.0
  %80 = vmatpush1.msra.mxu0 0.0
  %81 = vmatprep.subr.mxu0 0.0
  %82 = vmatpush1.msra.mxu0 0.0
  %83 = vmatprep.subr.mxu0 0.0
  %84 = vmatpush1.msra.mxu0 0.0
  %85 = vmatprep.subr.mxu0 0.0
  %86 = vmatpush1.msra.mxu0 0.0
  %87 = vmatprep.subr.mxu0 0.0
  %88 = vmatpush1.msra.mxu0 0.0
  %89 = vmatprep.subr.mxu0 0.0
  %90 = vmatpush1.msra.mxu0 0.0
  %91 = vmatprep.subr.mxu0 0.0
  %92 = vmatpush1.msra.mxu0 0.0
  %93 = vmatprep.subr.mxu0 0.0
  %94 = vmatpush1.msra.mxu0 0.0
  %95 = vmatprep.subr.mxu0 0.0
  %96 = vmatpush1.msra.mxu0 0.0
  %97 = vmatprep.subr.mxu0 0.0
  %98 = vmatpush1.msra.mxu0 0.0
  %99 = vmatprep.subr.mxu0 0.0
  %100 = vmatpush1.msra.mxu0 0.0
  %101 = vmatprep.subr.mxu0 0.0
  %102 = vmatpush1.msra.mxu0 0.0
  %103 = vmatprep.subr.mxu0 0.0
  %104 = vmatpush1.msra.mxu0 0.0
  %105 = vmatprep.subr.mxu0 0.0
  %106 = vmatpush1.msra.mxu0 0.0
  %107 = vmatprep.subr.mxu0 0.0
  %108 = vmatpush1.msra.mxu0 0.0
  %109 = vmatprep.subr.mxu0 0.0
  %110 = vmatpush1.msra.mxu0 0.0
  %111 = vmatprep.subr.mxu0 0.0
  %112 = vmatpush1.msra.mxu0 0.0
  %113 = vmatprep.mubr.f32.mxu0 0.0
  %114 = vmatmul.mubr.f32.gmra.mrb[0].mxu0 %v47
  %v115 = vpop.f32.mrb[0].mxu0
  %v116 = vadd.f32 %v28, %v115
  %v117 = vpop.f32.mrb[0].mxu0
  %v118 = vadd.f32 %v32, %v117
  %119 = vdwg.mxu0
  %120 = vmatprep.subr.mxu0 %v18
  %121 = vmatpush1.msra.mxu0 %v17
  %122 = vmatprep.subr.mxu0 %v22
  %123 = vmatpush1.msra.mxu0 %v21
  %124 = vmatprep.subr.mxu0 0.0
  %125 = vmatpush1.msra.mxu0 0.0
  %126 = vmatprep.subr.mxu0 0.0
  %127 = vmatpush1.msra.mxu0 0.0
  %128 = vmatprep.subr.mxu0 0.0
  %129 = vmatpush1.msra.mxu0 0.0
  %130 = vmatprep.subr.mxu0 0.0
  %131 = vmatpush1.msra.mxu0 0.0
  %132 = vmatprep.subr.mxu0 0.0
  %133 = vmatpush1.msra.mxu0 0.0
  %134 = vmatprep.subr.mxu0 0.0
  %135 = vmatpush1.msra.mxu0 0.0
  %136 = vmatprep.subr.mxu0 0.0
  %137 = vmatpush1.msra.mxu0 0.0
  %138 = vmatprep.subr.mxu0 0.0
  %139 = vmatpush1.msra.mxu0 0.0
  %140 = vmatprep.subr.mxu0 0.0
  %141 = vmatpush1.msra.mxu0 0.0
  %142 = vmatprep.subr.mxu0 0.0
  %143 = vmatpush1.msra.mxu0 0.0
  %144 = vmatprep.subr.mxu0 0.0
  %145 = vmatpush1.msra.mxu0 0.0
  %146 = vmatprep.subr.mxu0 0.0
  %147 = vmatpush1.msra.mxu0 0.0
  %148 = vmatprep.subr.mxu0 0.0
  %149 = vmatpush1.msra.mxu0 0.0
  %150 = vmatprep.subr.mxu0 0.0
  %151 = vmatpush1.msra.mxu0 0.0
  %152 = vmatprep.subr.mxu0 0.0
  %153 = vmatpush1.msra.mxu0 0.0
  %154 = vmatprep.subr.mxu0 0.0
  %155 = vmatpush1.msra.mxu0 0.0
  %156 = vmatprep.subr.mxu0 0.0
  %157 = vmatpush1.msra.mxu0 0.0
  %158 = vmatprep.subr.mxu0 0.0
  %159 = vmatpush1.msra.mxu0 0.0
  %160 = vmatprep.subr.mxu0 0.0
  %161 = vmatpush1.msra.mxu0 0.0
  %162 = vmatprep.subr.mxu0 0.0
  %163 = vmatpush1.msra.mxu0 0.0
  %164 = vmatprep.subr.mxu0 0.0
  %165 = vmatpush1.msra.mxu0 0.0
  %166 = vmatprep.subr.mxu0 0.0
  %167 = vmatpush1.msra.mxu0 0.0
  %168 = vmatprep.subr.mxu0 0.0
  %169 = vmatpush1.msra.mxu0 0.0
  %170 = vmatprep.subr.mxu0 0.0
  %171 = vmatpush1.msra.mxu0 0.0
  %172 = vmatprep.subr.mxu0 0.0
  %173 = vmatpush1.msra.mxu0 0.0
  %174 = vmatprep.subr.mxu0 0.0
  %175 = vmatpush1.msra.mxu0 0.0
  %176 = vmatprep.subr.mxu0 0.0
  %177 = vmatpush1.msra.mxu0 0.0
  %178 = vmatprep.subr.mxu0 0.0
  %179 = vmatpush1.msra.mxu0 0.0
  %180 = vmatprep.subr.mxu0 0.0
  %181 = vmatpush1.msra.mxu0 0.0
  %182 = vmatprep.subr.mxu0 0.0
  %183 = vmatpush1.msra.mxu0 0.0
  %184 = vmatprep.mubr.f32.mxu0 0.0
  %185 = vmatmul.mubr.f32.gmra.mrb[0].mxu0 %v47
  %v186 = vpop.f32.mrb[0].mxu0
  %v187 = vadd.f32 %v36, %v186
  %v188 = vpop.f32.mrb[0].mxu0
  %v189 = vadd.f32 %v40, %v188
  %190 = vdwg.mxu0
  %191 = vst [vmem:[%s3] sm:$0xff] %v116
  %192 = vst [vmem:[%s3 + $0x8] sm:$0xff] %v118
  %193 = vst [vmem:[%s3 + $0x10] sm:$0xff] %v187
  %vm194 = vcmask 982016
  %195 = vst.msk [vmem:[%s3 + $0x18] sm:$0xff] %vm194, %v189
  // Predicated region
  $region14: #{very_small_decoder_forward.5} parent=0 // pred_check
    _
  $region15: #{very_small_decoder_forward.5} parent=0 // pred_check_branch
    %197 = sbr.rel (0) target = $region17
  $region16: #{very_small_decoder_forward.5} parent=0 // pred_region
    _
  $region17: #{very_small_decoder_forward.5} parent=0 // pred_fallthru
    _
  // Predicated region
  $region18: #{very_small_decoder_forward.5} parent=0 // pred_check
    _
  $region19: #{very_small_decoder_forward.5} parent=0 // pred_check_branch
    %199 = sbr.rel (0) target = $region21
  $region20: #{very_small_decoder_forward.5} parent=0 // pred_region
    _
  $region21: #{very_small_decoder_forward.5} parent=0 // pred_fallthru
    _

// kernel: very_small_decoder_forward.6
$region0: #{very_small_decoder_forward.6}
  #allocation0 [shape = 'u32[]', space=smem, size = 0x4, offset = 0x4, fixed_abs, tag = 'smem constant byte address 0x4 - core index']
  #allocation1 [shape = 'u32[144,128]{1,0:T(1,128)}', space=vmem, size = 0x12000, scoped, tag = 'internal scratch']
  %s0 = inlined_call_operand.vmem [shape: bf16[18432,96], index: 0, kind: input, shape index: {}]
  %s1 = inlined_call_operand.vmem [shape: bf16[96,160], index: 1, kind: input, shape index: {}]
  %s2 = inlined_call_operand.vmem [shape: f32[1,160], index: 2, kind: input, shape index: {}]
  %s3 = inlined_call_operand.vmem [shape: f32[18432,160], index: 3, kind: output, shape index: {}]
  %s4 = sld [smem:[#allocation0]]
  $region45: #{very_small_decoder_forward.6} parent=0
    _
  %s6 = ssub.s32 1, %s4
  %s7 = scalar_select 0, %s6, %s4
  loop: start=0, step=1, limit=11
  $region2: #{very_small_decoder_forward.6} parent=0 // loop_pre_header
    _
  $region3: #{very_small_decoder_forward.6} parent=0 // loop_header
    %s9 = sphi 0, %s13
    %p10 = scmp.ge.s32.totalorder %s9, 11
    %s19 = sphi 0, %s21
    %s22 = sphi 0, %s19
    %s23 = sphi 0, %s22
    %s39 = sphi 0, %s23
    %s43 = sphi 0, %s43
    %s45 = sphi 0, %s43
    %s46 = sphi 0, %s45
    %s60 = sphi 0, %s46
    %s64 = sphi 0, %s64
    %s66 = sphi 0, %s64
    %s67 = sphi 0, %s66
    %s81 = sphi 0, %s67
    %s87 = sphi 0, %s89
    %s90 = sphi 0, %s87
    %s91 = sphi 0, %s90
    %s107 = sphi 0, %s91
  $region4: #{very_small_decoder_forward.6} parent=0 // loop_header_branch
    %12 = sbr.rel (%p10) target = $region8
  $region5: #{very_small_decoder_forward.6} parent=0 // loop_body
    %s14 = ssub.s32 %s9, 1
    %s15 = ssub.s32 %s9, 2
    %s16 = sadd.s32 %s9, 1
    %s17 = ssub.s32 %s9, %s16
    %p18 = scmp.eq.s32.totalorder %s17, 0
    %s20 = sadd.s32 %s19, 1
    %s21 = scalar_select %p18, %s19, %s20
    %p24 = pneg %p18
    %p25 = scmp.eq.s32.totalorder %s9, 8
    %p26 = por %p24, %p25
    %p27 = scmp.ne.s32.totalorder %s19, %s22
    %p28 = scmp.eq.s32.totalorder %s9, 0
    %p29 = por %p27, %p28
    %p30 = scmp.ne.s32.totalorder %s19, %s22
    %p31 = scmp.eq.s32.totalorder %s14, 8
    %p32 = por %p30, %p31
    %p33 = scmp.ne.s32.totalorder %s22, %s23
    %p34 = scmp.eq.s32.totalorder %s14, 0
    %p35 = por %p33, %p34
    %p36 = scmp.ne.s32.totalorder %s22, %s23
    %p37 = scmp.eq.s32.totalorder %s15, 8
    %p38 = por %p36, %p37
    %p40 = scmp.ne.s32.totalorder %s23, %s39
    %p41 = scmp.eq.s32.totalorder %s15, 0
    %p42 = por %p40, %p41
    %s44 = sadd.s32 %s43, 1
    %p47 = scmp.eq.s32.totalorder %s9, 8
    %p48 = scmp.ne.s32.totalorder %s43, %s45
    %p49 = scmp.eq.s32.totalorder %s9, 0
    %p50 = por %p48, %p49
    %p51 = scmp.ne.s32.totalorder %s43, %s45
    %p52 = scmp.eq.s32.totalorder %s14, 8
    %p53 = por %p51, %p52
    %p54 = scmp.ne.s32.totalorder %s45, %s46
    %p55 = scmp.eq.s32.totalorder %s14, 0
    %p56 = por %p54, %p55
    %p57 = scmp.ne.s32.totalorder %s45, %s46
    %p58 = scmp.eq.s32.totalorder %s15, 8
    %p59 = por %p57, %p58
    %p61 = scmp.ne.s32.totalorder %s46, %s60
    %p62 = scmp.eq.s32.totalorder %s15, 0
    %p63 = por %p61, %p62
    %s65 = sadd.s32 %s64, 1
    %p68 = scmp.eq.s32.totalorder %s9, 8
    %p69 = scmp.ne.s32.totalorder %s64, %s66
    %p70 = scmp.eq.s32.totalorder %s9, 0
    %p71 = por %p69, %p70
    %p72 = scmp.ne.s32.totalorder %s64, %s66
    %p73 = scmp.eq.s32.totalorder %s14, 8
    %p74 = por %p72, %p73
    %p75 = scmp.ne.s32.totalorder %s66, %s67
    %p76 = scmp.eq.s32.totalorder %s14, 0
    %p77 = por %p75, %p76
    %p78 = scmp.ne.s32.totalorder %s66, %s67
    %p79 = scmp.eq.s32.totalorder %s15, 8
    %p80 = por %p78, %p79
    %p82 = scmp.ne.s32.totalorder %s67, %s81
    %p83 = scmp.eq.s32.totalorder %s15, 0
    %p84 = por %p82, %p83
    %s85 = ssub.s32 %s9, %s16
    %p86 = scmp.eq.s32.totalorder %s85, 0
    %s88 = sadd.s32 %s87, 1
    %s89 = scalar_select %p86, %s87, %s88
    %p92 = pneg %p86
    %p93 = scmp.eq.s32.totalorder %s9, 8
    %p94 = por %p92, %p93
    %p95 = scmp.ne.s32.totalorder %s87, %s90
    %p96 = scmp.eq.s32.totalorder %s9, 0
    %p97 = por %p95, %p96
    %p98 = scmp.ne.s32.totalorder %s87, %s90
    %p99 = scmp.eq.s32.totalorder %s14, 8
    %p100 = por %p98, %p99
    %p101 = scmp.ne.s32.totalorder %s90, %s91
    %p102 = scmp.eq.s32.totalorder %s14, 0
    %p103 = por %p101, %p102
    %p104 = scmp.ne.s32.totalorder %s90, %s91
    %p105 = scmp.eq.s32.totalorder %s15, 8
    %p106 = por %p104, %p105
    %p108 = scmp.ne.s32.totalorder %s91, %s107
    %p109 = scmp.eq.s32.totalorder %s15, 0
    %p110 = por %p108, %p109
    %p111 = scmp.le.s32.totalorder 1, %s9
    %p112 = scmp.lt.s32.totalorder %s9, 10
    %p113 = pnand %p111, %p112
    %p114 = pneg %p113
    // Predicated region
    $region9: #{very_small_decoder_forward.6} parent=5 // pred_check
      _
    $region10: #{very_small_decoder_forward.6} parent=5 // pred_check_branch
      %116 = sbr.rel (%p113) target = $region12
    $region11: #{very_small_decoder_forward.6} parent=5 // pred_region
      %s117 = ssub.s32 %s9, 1
      // Predicated region
      $region13: #{very_small_decoder_forward.6} parent=11 // pred_check
        %p118 = pneg %p56
      $region14: #{very_small_decoder_forward.6} parent=11 // pred_check_branch
        %120 = sbr.rel (%p118) target = $region16
      $region15: #{very_small_decoder_forward.6} parent=11 // pred_region
        _
      $region16: #{very_small_decoder_forward.6} parent=11 // pred_fallthru
        _
      // Predicated region
      $region17: #{very_small_decoder_forward.6} parent=11 // pred_check
        %p121 = pneg %p77
      $region18: #{very_small_decoder_forward.6} parent=11 // pred_check_branch
        %123 = sbr.rel (%p121) target = $region20
      $region19: #{very_small_decoder_forward.6} parent=11 // pred_region
        _
      $region20: #{very_small_decoder_forward.6} parent=11 // pred_fallthru
        _
    $region12: #{very_small_decoder_forward.6} parent=5 // pred_fallthru
      _
    %p124 = scmp.lt.s32.totalorder %s9, 9
    // Predicated region
    $region21: #{very_small_decoder_forward.6} parent=5 // pred_check
      %p125 = pneg %p124
    $region22: #{very_small_decoder_forward.6} parent=5 // pred_check_branch
      %127 = sbr.rel (%p125) target = $region24
    $region23: #{very_small_decoder_forward.6} parent=5 // pred_region
      // Predicated region
      $region25: #{very_small_decoder_forward.6} parent=23 // pred_check
        %p128 = pneg %p29
      $region26: #{very_small_decoder_forward.6} parent=23 // pred_check_branch
        %130 = sbr.rel (%p128) target = $region28
      $region27: #{very_small_decoder_forward.6} parent=23 // pred_region
        %s131 = smul.u32 256, %s9
        %p132 = scmp.lt.s32.totalorder %s131, 2303
        %s133 = scalar_select %p132, %s131, 2303
        %s134 = smul.addr %s133, 4
        %s135 = scalar_lea.vmem %s0, %s134
        %s136 = smul.u32 256, %s9
      $region28: #{very_small_decoder_forward.6} parent=23 // pred_fallthru
        _
    $region24: #{very_small_decoder_forward.6} parent=5 // pred_fallthru
      _
    %p137 = scmp.le.s32.totalorder 1, %s9
    %p138 = scmp.lt.s32.totalorder %s9, 10
    %p139 = pnand %p137, %p138
    %p140 = pneg %p139
    // Predicated region
    $region29: #{very_small_decoder_forward.6} parent=5 // pred_check
      _
    $region30: #{very_small_decoder_forward.6} parent=5 // pred_check_branch
      %142 = sbr.rel (%p139) target = $region32
    $region31: #{very_small_decoder_forward.6} parent=5 // pred_region
      %s143 = ssub.s32 %s9, 1
      %s144 = smul.u32 256, %s14
      %p145 = scmp.lt.s32.totalorder %s144, 2303
      %s146 = scalar_select %p145, %s144, 2303
      %s147 = smul.addr %s146, 4
      %s148 = scalar_lea.vmem %s0, %s147
      %p149 = pneg %p35
      %p150 = pneg %p32
      %p151 = pneg %p56
      %p152 = pneg %p53
      %p153 = pneg %p77
      %p154 = pneg %p74
      %p155 = pneg %p103
      %p156 = pneg %p100
      %s157 = smul.u32 256, %s14
      %p158 = scmp.lt.s32.totalorder %s157, 2303
      %s159 = scalar_select %p158, %s157, 2303
      %s160 = smul.addr %s159, 2
      %s161 = smul.addr %s160, 8
      %s162 = scalar_lea.vmem %s3, %s161
      %s163 = smul.u32 256, %s14
      %p164 = scmp.lt.s32.totalorder %s163, 2303
      %s165 = scalar_select %p164, %s163, 2303
      %s166 = smul.addr %s165, 4
      %s167 = scalar_lea.vmem %s0, %s166
      %s168 = smul.u32 256, %s14
      %s169 = smul.u32 256, %s14
      %p170 = scmp.lt.s32.totalorder %s169, 2303
      %s171 = scalar_select %p170, %s169, 2303
      %s172 = smul.addr %s171, 2
      %s173 = smul.addr %s172, 8
      %s174 = scalar_lea.vmem %s3, %s173
      %s175 = smul.u32 256, %s14
      %v177 = vld [vmem:[%s167] sm:$0xf]
      %v178 = vld [vmem:[%s167 + $0x4] sm:$0xf]
      %v179 = vld [vmem:[%s167 + $0x8] sm:$0xf]
      %v180 = vld [vmem:[%s167 + $0xc] sm:$0xf]
      %v181 = vld [vmem:[%s167 + $0x10] sm:$0xf]
      %v182 = vld [vmem:[%s167 + $0x14] sm:$0xf]
      %v183 = vld [vmem:[%s167 + $0x18] sm:$0xf]
      %v184 = vld [vmem:[%s167 + $0x1c] sm:$0xf]
      %v185 = vld [vmem:[%s167 + $0x20] sm:$0xf]
      %v186 = vld [vmem:[%s167 + $0x24] sm:$0xf]
      %v187 = vld [vmem:[%s167 + $0x28] sm:$0xf]
      %v188 = vld [vmem:[%s167 + $0x2c] sm:$0xf]
      %v189 = vld [vmem:[%s167 + $0x30] sm:$0xf]
      %v190 = vld [vmem:[%s167 + $0x34] sm:$0xf]
      %v191 = vld [vmem:[%s167 + $0x38] sm:$0xf]
      %v192 = vld [vmem:[%s167 + $0x3c] sm:$0xf]
      %v193 = vld [vmem:[%s167 + $0x40] sm:$0xf]
      %v194 = vld [vmem:[%s167 + $0x44] sm:$0xf]
      %v195 = vld [vmem:[%s167 + $0x48] sm:$0xf]
      %v196 = vld [vmem:[%s167 + $0x4c] sm:$0xf]
      %v197 = vld [vmem:[%s167 + $0x50] sm:$0xf]
      %v198 = vld [vmem:[%s167 + $0x54] sm:$0xf]
      %v199 = vld [vmem:[%s167 + $0x58] sm:$0xf]
      %v200 = vld [vmem:[%s167 + $0x5c] sm:$0xf]
      %v201 = vld [vmem:[%s167 + $0x60] sm:$0xf]
      %v202 = vld [vmem:[%s167 + $0x64] sm:$0xf]
      %v203 = vld [vmem:[%s167 + $0x68] sm:$0xf]
      %v204 = vld [vmem:[%s167 + $0x6c] sm:$0xf]
      %v205 = vld [vmem:[%s167 + $0x70] sm:$0xf]
      %v206 = vld [vmem:[%s167 + $0x74] sm:$0xf]
      %v207 = vld [vmem:[%s167 + $0x78] sm:$0xf]
      %v208 = vld [vmem:[%s167 + $0x7c] sm:$0xf]
      %v209 = vld [vmem:[%s167 + $0x80] sm:$0xf]
      %v210 = vld [vmem:[%s167 + $0x84] sm:$0xf]
      %v211 = vld [vmem:[%s167 + $0x88] sm:$0xf]
      %v212 = vld [vmem:[%s167 + $0x8c] sm:$0xf]
      %v213 = vld [vmem:[%s167 + $0x90] sm:$0xf]
      %v214 = vld [vmem:[%s167 + $0x94] sm:$0xf]
      %v215 = vld [vmem:[%s167 + $0x98] sm:$0xf]
      %v216 = vld [vmem:[%s167 + $0x9c] sm:$0xf]
      %v217 = vld [vmem:[%s167 + $0xa0] sm:$0xf]
      %v218 = vld [vmem:[%s167 + $0xa4] sm:$0xf]
      %v219 = vld [vmem:[%s167 + $0xa8] sm:$0xf]
      %v220 = vld [vmem:[%s167 + $0xac] sm:$0xf]
      %v221 = vld [vmem:[%s167 + $0xb0] sm:$0xf]
      %v222 = vld [vmem:[%s167 + $0xb4] sm:$0xf]
      %v223 = vld [vmem:[%s167 + $0xb8] sm:$0xf]
      %v224 = vld [vmem:[%s167 + $0xbc] sm:$0xf]
      %v225 = vld [vmem:[%s167 + $0xc0] sm:$0xf]
      %v226 = vld [vmem:[%s167 + $0xc4] sm:$0xf]
      %v227 = vld [vmem:[%s167 + $0xc8] sm:$0xf]
      %v228 = vld [vmem:[%s167 + $0xcc] sm:$0xf]
      %v229 = vld [vmem:[%s167 + $0xd0] sm:$0xf]
      %v230 = vld [vmem:[%s167 + $0xd4] sm:$0xf]
      %v231 = vld [vmem:[%s167 + $0xd8] sm:$0xf]
      %v232 = vld [vmem:[%s167 + $0xdc] sm:$0xf]
      %v233 = vld [vmem:[%s167 + $0xe0] sm:$0xf]
      %v234 = vld [vmem:[%s167 + $0xe4] sm:$0xf]
      %v235 = vld [vmem:[%s167 + $0xe8] sm:$0xf]
      %v236 = vld [vmem:[%s167 + $0xec] sm:$0xf]
      %v237 = vld [vmem:[%s167 + $0xf0] sm:$0xf]
      %v238 = vld [vmem:[%s167 + $0xf4] sm:$0xf]
      %v239 = vld [vmem:[%s167 + $0xf8] sm:$0xf]
      %v240 = vld [vmem:[%s167 + $0xfc] sm:$0xf]
      %v241 = vld [vmem:[%s167 + $0x100] sm:$0xf]
      %v242 = vld [vmem:[%s167 + $0x104] sm:$0xf]
      %v243 = vld [vmem:[%s167 + $0x108] sm:$0xf]
      %v244 = vld [vmem:[%s167 + $0x10c] sm:$0xf]
      %v245 = vld [vmem:[%s167 + $0x110] sm:$0xf]
      %v246 = vld [vmem:[%s167 + $0x114] sm:$0xf]
      %v247 = vld [vmem:[%s167 + $0x118] sm:$0xf]
      %v248 = vld [vmem:[%s167 + $0x11c] sm:$0xf]
      %v249 = vld [vmem:[%s167 + $0x120] sm:$0xf]
      %v250 = vld [vmem:[%s167 + $0x124] sm:$0xf]
      %v251 = vld [vmem:[%s167 + $0x128] sm:$0xf]
      %v252 = vld [vmem:[%s167 + $0x12c] sm:$0xf]
      %v253 = vld [vmem:[%s167 + $0x130] sm:$0xf]
      %v254 = vld [vmem:[%s167 + $0x134] sm:$0xf]
      %v255 = vld [vmem:[%s167 + $0x138] sm:$0xf]
      %v256 = vld [vmem:[%s167 + $0x13c] sm:$0xf]
      %v257 = vld [vmem:[%s167 + $0x140] sm:$0xf]
      %v258 = vld [vmem:[%s167 + $0x144] sm:$0xf]
      %v259 = vld [vmem:[%s167 + $0x148] sm:$0xf]
      %v260 = vld [vmem:[%s167 + $0x14c] sm:$0xf]
      %v261 = vld [vmem:[%s167 + $0x150] sm:$0xf]
      %v262 = vld [vmem:[%s167 + $0x154] sm:$0xf]
      %v263 = vld [vmem:[%s167 + $0x158] sm:$0xf]
      %v264 = vld [vmem:[%s167 + $0x15c] sm:$0xf]
      %v265 = vld [vmem:[%s167 + $0x160] sm:$0xf]
      %v266 = vld [vmem:[%s167 + $0x164] sm:$0xf]
      %v267 = vld [vmem:[%s167 + $0x168] sm:$0xf]
      %v268 = vld [vmem:[%s167 + $0x16c] sm:$0xf]
      %v269 = vld [vmem:[%s167 + $0x170] sm:$0xf]
      %v270 = vld [vmem:[%s167 + $0x174] sm:$0xf]
      %v271 = vld [vmem:[%s167 + $0x178] sm:$0xf]
      %v272 = vld [vmem:[%s167 + $0x17c] sm:$0xf]
      %v273 = vld [vmem:[%s167 + $0x180] sm:$0xf]
      %v274 = vld [vmem:[%s167 + $0x184] sm:$0xf]
      %v275 = vld [vmem:[%s167 + $0x188] sm:$0xf]
      %v276 = vld [vmem:[%s167 + $0x18c] sm:$0xf]
      %v277 = vld [vmem:[%s167 + $0x190] sm:$0xf]
      %v278 = vld [vmem:[%s167 + $0x194] sm:$0xf]
      %v279 = vld [vmem:[%s167 + $0x198] sm:$0xf]
      %v280 = vld [vmem:[%s167 + $0x19c] sm:$0xf]
      %v281 = vld [vmem:[%s167 + $0x1a0] sm:$0xf]
      %v282 = vld [vmem:[%s167 + $0x1a4] sm:$0xf]
      %v283 = vld [vmem:[%s167 + $0x1a8] sm:$0xf]
      %v284 = vld [vmem:[%s167 + $0x1ac] sm:$0xf]
      %v285 = vld [vmem:[%s167 + $0x1b0] sm:$0xf]
      %v286 = vld [vmem:[%s167 + $0x1b4] sm:$0xf]
      %v287 = vld [vmem:[%s167 + $0x1b8] sm:$0xf]
      %v288 = vld [vmem:[%s167 + $0x1bc] sm:$0xf]
      %v289 = vld [vmem:[%s167 + $0x1c0] sm:$0xf]
      %v290 = vld [vmem:[%s167 + $0x1c4] sm:$0xf]
      %v291 = vld [vmem:[%s167 + $0x1c8] sm:$0xf]
      %v292 = vld [vmem:[%s167 + $0x1cc] sm:$0xf]
      %v293 = vld [vmem:[%s167 + $0x1d0] sm:$0xf]
      %v294 = vld [vmem:[%s167 + $0x1d4] sm:$0xf]
      %v295 = vld [vmem:[%s167 + $0x1d8] sm:$0xf]
      %v296 = vld [vmem:[%s167 + $0x1dc] sm:$0xf]
      %v297 = vld [vmem:[%s167 + $0x1e0] sm:$0xf]
      %v298 = vld [vmem:[%s167 + $0x1e4] sm:$0xf]
      %v299 = vld [vmem:[%s167 + $0x1e8] sm:$0xf]
      %v300 = vld [vmem:[%s167 + $0x1ec] sm:$0xf]
      %v301 = vld [vmem:[%s167 + $0x1f0] sm:$0xf]
      %v302 = vld [vmem:[%s167 + $0x1f4] sm:$0xf]
      %v303 = vld [vmem:[%s167 + $0x1f8] sm:$0xf]
      %v304 = vld [vmem:[%s167 + $0x1fc] sm:$0xf]
      %v305 = vld [vmem:[%s167 + $0x200] sm:$0xf]
      %v306 = vld [vmem:[%s167 + $0x204] sm:$0xf]
      %v307 = vld [vmem:[%s167 + $0x208] sm:$0xf]
      %v308 = vld [vmem:[%s167 + $0x20c] sm:$0xf]
      %v309 = vld [vmem:[%s167 + $0x210] sm:$0xf]
      %v310 = vld [vmem:[%s167 + $0x214] sm:$0xf]
      %v311 = vld [vmem:[%s167 + $0x218] sm:$0xf]
      %v312 = vld [vmem:[%s167 + $0x21c] sm:$0xf]
      %v313 = vld [vmem:[%s167 + $0x220] sm:$0xf]
      %v314 = vld [vmem:[%s167 + $0x224] sm:$0xf]
      %v315 = vld [vmem:[%s167 + $0x228] sm:$0xf]
      %v316 = vld [vmem:[%s167 + $0x22c] sm:$0xf]
      %v317 = vld [vmem:[%s167 + $0x230] sm:$0xf]
      %v318 = vld [vmem:[%s167 + $0x234] sm:$0xf]
      %v319 = vld [vmem:[%s167 + $0x238] sm:$0xf]
      %v320 = vld [vmem:[%s167 + $0x23c] sm:$0xf]
      %v321 = vld [vmem:[%s167 + $0x240] sm:$0xf]
      %v322 = vld [vmem:[%s167 + $0x244] sm:$0xf]
      %v323 = vld [vmem:[%s167 + $0x248] sm:$0xf]
      %v324 = vld [vmem:[%s167 + $0x24c] sm:$0xf]
      %v325 = vld [vmem:[%s167 + $0x250] sm:$0xf]
      %v326 = vld [vmem:[%s167 + $0x254] sm:$0xf]
      %v327 = vld [vmem:[%s167 + $0x258] sm:$0xf]
      %v328 = vld [vmem:[%s167 + $0x25c] sm:$0xf]
      %v329 = vld [vmem:[%s167 + $0x260] sm:$0xf]
      %v330 = vld [vmem:[%s167 + $0x264] sm:$0xf]
      %v331 = vld [vmem:[%s167 + $0x268] sm:$0xf]
      %v332 = vld [vmem:[%s167 + $0x26c] sm:$0xf]
      %v333 = vld [vmem:[%s167 + $0x270] sm:$0xf]
      %v334 = vld [vmem:[%s167 + $0x274] sm:$0xf]
      %v335 = vld [vmem:[%s167 + $0x278] sm:$0xf]
      %v336 = vld [vmem:[%s167 + $0x27c] sm:$0xf]
      %v337 = vld [vmem:[%s167 + $0x280] sm:$0xf]
      %v338 = vld [vmem:[%s167 + $0x284] sm:$0xf]
      %v339 = vld [vmem:[%s167 + $0x288] sm:$0xf]
      %v340 = vld [vmem:[%s167 + $0x28c] sm:$0xf]
      %v341 = vld [vmem:[%s167 + $0x290] sm:$0xf]
      %v342 = vld [vmem:[%s167 + $0x294] sm:$0xf]
      %v343 = vld [vmem:[%s167 + $0x298] sm:$0xf]
      %v344 = vld [vmem:[%s167 + $0x29c] sm:$0xf]
      %v345 = vld [vmem:[%s167 + $0x2a0] sm:$0xf]
      %v346 = vld [vmem:[%s167 + $0x2a4] sm:$0xf]
      %v347 = vld [vmem:[%s167 + $0x2a8] sm:$0xf]
      %v348 = vld [vmem:[%s167 + $0x2ac] sm:$0xf]
      %v349 = vld [vmem:[%s167 + $0x2b0] sm:$0xf]
      %v350 = vld [vmem:[%s167 + $0x2b4] sm:$0xf]
      %v351 = vld [vmem:[%s167 + $0x2b8] sm:$0xf]
      %v352 = vld [vmem:[%s167 + $0x2bc] sm:$0xf]
      %v353 = vld [vmem:[%s167 + $0x2c0] sm:$0xf]
      %v354 = vld [vmem:[%s167 + $0x2c4] sm:$0xf]
      %v355 = vld [vmem:[%s167 + $0x2c8] sm:$0xf]
      %v356 = vld [vmem:[%s167 + $0x2cc] sm:$0xf]
      %v357 = vld [vmem:[%s167 + $0x2d0] sm:$0xf]
      %v358 = vld [vmem:[%s167 + $0x2d4] sm:$0xf]
      %v359 = vld [vmem:[%s167 + $0x2d8] sm:$0xf]
      %v360 = vld [vmem:[%s167 + $0x2dc] sm:$0xf]
      %v361 = vld [vmem:[%s167 + $0x2e0] sm:$0xf]
      %v362 = vld [vmem:[%s167 + $0x2e4] sm:$0xf]
      %v363 = vld [vmem:[%s167 + $0x2e8] sm:$0xf]
      %v364 = vld [vmem:[%s167 + $0x2ec] sm:$0xf]
      %v365 = vld [vmem:[%s167 + $0x2f0] sm:$0xf]
      %v366 = vld [vmem:[%s167 + $0x2f4] sm:$0xf]
      %v367 = vld [vmem:[%s167 + $0x2f8] sm:$0xf]
      %v368 = vld [vmem:[%s167 + $0x2fc] sm:$0xf]
      %v369 = vld [vmem:[%s167 + $0x300] sm:$0xf]
      %v370 = vld [vmem:[%s167 + $0x304] sm:$0xf]
      %v371 = vld [vmem:[%s167 + $0x308] sm:$0xf]
      %v372 = vld [vmem:[%s167 + $0x30c] sm:$0xf]
      %v373 = vld [vmem:[%s167 + $0x310] sm:$0xf]
      %v374 = vld [vmem:[%s167 + $0x314] sm:$0xf]
      %v375 = vld [vmem:[%s167 + $0x318] sm:$0xf]
      %v376 = vld [vmem:[%s167 + $0x31c] sm:$0xf]
      %v377 = vld [vmem:[%s167 + $0x320] sm:$0xf]
      %v378 = vld [vmem:[%s167 + $0x324] sm:$0xf]
      %v379 = vld [vmem:[%s167 + $0x328] sm:$0xf]
      %v380 = vld [vmem:[%s167 + $0x32c] sm:$0xf]
      %v381 = vld [vmem:[%s167 + $0x330] sm:$0xf]
      %v382 = vld [vmem:[%s167 + $0x334] sm:$0xf]
      %v383 = vld [vmem:[%s167 + $0x338] sm:$0xf]
      %v384 = vld [vmem:[%s167 + $0x33c] sm:$0xf]
      %v385 = vld [vmem:[%s167 + $0x340] sm:$0xf]
      %v386 = vld [vmem:[%s167 + $0x344] sm:$0xf]
      %v387 = vld [vmem:[%s167 + $0x348] sm:$0xf]
      %v388 = vld [vmem:[%s167 + $0x34c] sm:$0xf]
      %v389 = vld [vmem:[%s167 + $0x350] sm:$0xf]
      %v390 = vld [vmem:[%s167 + $0x354] sm:$0xf]
      %v391 = vld [vmem:[%s167 + $0x358] sm:$0xf]
      %v392 = vld [vmem:[%s167 + $0x35c] sm:$0xf]
      %v393 = vld [vmem:[%s167 + $0x360] sm:$0xf]
      %v394 = vld [vmem:[%s167 + $0x364] sm:$0xf]
      %v395 = vld [vmem:[%s167 + $0x368] sm:$0xf]
      %v396 = vld [vmem:[%s167 + $0x36c] sm:$0xf]
      %v397 = vld [vmem:[%s167 + $0x370] sm:$0xf]
      %v398 = vld [vmem:[%s167 + $0x374] sm:$0xf]
      %v399 = vld [vmem:[%s167 + $0x378] sm:$0xf]
      %v400 = vld [vmem:[%s167 + $0x37c] sm:$0xf]
      %v401 = vld [vmem:[%s167 + $0x380] sm:$0xf]
      %v402 = vld [vmem:[%s167 + $0x384] sm:$0xf]
      %v403 = vld [vmem:[%s167 + $0x388] sm:$0xf]
      %v404 = vld [vmem:[%s167 + $0x38c] sm:$0xf]
      %v405 = vld [vmem:[%s167 + $0x390] sm:$0xf]
      %v406 = vld [vmem:[%s167 + $0x394] sm:$0xf]
      %v407 = vld [vmem:[%s167 + $0x398] sm:$0xf]
      %v408 = vld [vmem:[%s167 + $0x39c] sm:$0xf]
      %v409 = vld [vmem:[%s167 + $0x3a0] sm:$0xf]
      %v410 = vld [vmem:[%s167 + $0x3a4] sm:$0xf]
      %v411 = vld [vmem:[%s167 + $0x3a8] sm:$0xf]
      %v412 = vld [vmem:[%s167 + $0x3ac] sm:$0xf]
      %v413 = vld [vmem:[%s167 + $0x3b0] sm:$0xf]
      %v414 = vld [vmem:[%s167 + $0x3b4] sm:$0xf]
      %v415 = vld [vmem:[%s167 + $0x3b8] sm:$0xf]
      %v416 = vld [vmem:[%s167 + $0x3bc] sm:$0xf]
      %v417 = vld [vmem:[%s167 + $0x3c0] sm:$0xf]
      %v418 = vld [vmem:[%s167 + $0x3c4] sm:$0xf]
      %v419 = vld [vmem:[%s167 + $0x3c8] sm:$0xf]
      %v420 = vld [vmem:[%s167 + $0x3cc] sm:$0xf]
      %v421 = vld [vmem:[%s167 + $0x3d0] sm:$0xf]
      %v422 = vld [vmem:[%s167 + $0x3d4] sm:$0xf]
      %v423 = vld [vmem:[%s167 + $0x3d8] sm:$0xf]
      %v424 = vld [vmem:[%s167 + $0x3dc] sm:$0xf]
      %v425 = vld [vmem:[%s167 + $0x3e0] sm:$0xf]
      %v426 = vld [vmem:[%s167 + $0x3e4] sm:$0xf]
      %v427 = vld [vmem:[%s167 + $0x3e8] sm:$0xf]
      %v428 = vld [vmem:[%s167 + $0x3ec] sm:$0xf]
      %v429 = vld [vmem:[%s167 + $0x3f0] sm:$0xf]
      %v430 = vld [vmem:[%s167 + $0x3f4] sm:$0xf]
      %v431 = vld [vmem:[%s167 + $0x3f8] sm:$0xf]
      %v432 = vld [vmem:[%s167 + $0x3fc] sm:$0xf]
      %v433 = vld [vmem:[%s1] sm:$0xff]
      %v434 = vld [vmem:[%s1 + $0x8] sm:$0xff]
      %v435 = vld [vmem:[%s1 + $0x10] sm:$0xff]
      %v436 = vld [vmem:[%s1 + $0x18] sm:$0xff]
      %v437 = vld [vmem:[%s1 + $0x20] sm:$0xff]
      %v438 = vld [vmem:[%s1 + $0x28] sm:$0xff]
      %v439 = vld [vmem:[%s1 + $0x30] sm:$0xff]
      %v440 = vld [vmem:[%s1 + $0x38] sm:$0xff]
      %v441 = vld [vmem:[%s1 + $0x40] sm:$0xff]
      %v442 = vld [vmem:[%s1 + $0x48] sm:$0xff]
      %v443 = vld [vmem:[%s1 + $0x50] sm:$0xff]
      %v444 = vld [vmem:[%s1 + $0x58] sm:$0xff]
      %v445 = vld [vmem:[%s2] sm:$0x3]
      %v447 = vlaneseq
      %v448 = vshrl.u32 %v447, 7
      %v449 = vsub.s32 0, %v448
      %v450 = vrot.slane %v445, %v449
      %v451 = vlaneseq
      %v452 = vshrl.u32 %v451, 7
      %v453 = vsub.s32 1, %v452
      %v454 = vrot.slane %v445, %v453
      %v713 = vunpack.c.l.b16 %v177
      %v714 = vunpack.c.l.b16 %v178
      %v715 = vunpack.c.l.b16 %v179
      %v716 = vunpack.c.l.b16 %v180
      %v717 = vunpack.c.l.b16 %v181
      %v718 = vunpack.c.l.b16 %v182
      %v719 = vunpack.c.l.b16 %v183
      %v720 = vunpack.c.l.b16 %v184
      %v721 = vunpack.c.l.b16 %v185
      %v722 = vunpack.c.l.b16 %v186
      %v723 = vunpack.c.l.b16 %v187
      %v724 = vunpack.c.l.b16 %v188
      %v725 = vunpack.c.l.b16 %v189
      %v726 = vunpack.c.l.b16 %v190
      %v727 = vunpack.c.l.b16 %v191
      %v728 = vunpack.c.l.b16 %v192
      %v729 = vunpack.c.l.b16 %v193
      %v730 = vunpack.c.l.b16 %v194
      %v731 = vunpack.c.l.b16 %v195
      %v732 = vunpack.c.l.b16 %v196
      %v733 = vunpack.c.l.b16 %v197
      %v734 = vunpack.c.l.b16 %v198
      %v735 = vunpack.c.l.b16 %v199
      %v736 = vunpack.c.l.b16 %v200
      %v737 = vunpack.c.l.b16 %v201
      %v738 = vunpack.c.l.b16 %v202
      %v739 = vunpack.c.l.b16 %v203
      %v740 = vunpack.c.l.b16 %v204
      %v741 = vunpack.c.l.b16 %v205
      %v742 = vunpack.c.l.b16 %v206
      %v743 = vunpack.c.l.b16 %v207
      %v744 = vunpack.c.l.b16 %v208
      %v745 = vunpack.c.l.b16 %v209
      %v746 = vunpack.c.l.b16 %v210
      %v747 = vunpack.c.l.b16 %v211
      %v748 = vunpack.c.l.b16 %v212
      %v749 = vunpack.c.l.b16 %v213
      %v750 = vunpack.c.l.b16 %v214
      %v751 = vunpack.c.l.b16 %v215
      %v752 = vunpack.c.l.b16 %v216
      %v753 = vunpack.c.l.b16 %v217
      %v754 = vunpack.c.l.b16 %v218
      %v755 = vunpack.c.l.b16 %v219
      %v756 = vunpack.c.l.b16 %v220
      %v757 = vunpack.c.l.b16 %v221
      %v758 = vunpack.c.l.b16 %v222
      %v759 = vunpack.c.l.b16 %v223
      %v760 = vunpack.c.l.b16 %v224
      %v761 = vunpack.c.l.b16 %v225
      %v762 = vunpack.c.l.b16 %v226
      %v763 = vunpack.c.l.b16 %v227
      %v764 = vunpack.c.l.b16 %v228
      %v765 = vunpack.c.l.b16 %v229
      %v766 = vunpack.c.l.b16 %v230
      %v767 = vunpack.c.l.b16 %v231
      %v768 = vunpack.c.l.b16 %v232
      %v769 = vunpack.c.l.b16 %v233
      %v770 = vunpack.c.l.b16 %v234
      %v771 = vunpack.c.l.b16 %v235
      %v772 = vunpack.c.l.b16 %v236
      %v773 = vunpack.c.l.b16 %v237
      %v774 = vunpack.c.l.b16 %v238
      %v775 = vunpack.c.l.b16 %v239
      %v776 = vunpack.c.l.b16 %v240
      %v777 = vunpack.c.l.b16 %v241
      %v778 = vunpack.c.l.b16 %v242
      %v779 = vunpack.c.l.b16 %v243
      %v780 = vunpack.c.l.b16 %v244
      %v781 = vunpack.c.l.b16 %v245
      %v782 = vunpack.c.l.b16 %v246
      %v783 = vunpack.c.l.b16 %v247
      %v784 = vunpack.c.l.b16 %v248
      %v785 = vunpack.c.l.b16 %v249
      %v786 = vunpack.c.l.b16 %v250
      %v787 = vunpack.c.l.b16 %v251
      %v788 = vunpack.c.l.b16 %v252
      %v789 = vunpack.c.l.b16 %v253
      %v790 = vunpack.c.l.b16 %v254
      %v791 = vunpack.c.l.b16 %v255
      %v792 = vunpack.c.l.b16 %v256
      %v793 = vunpack.c.l.b16 %v257
      %v794 = vunpack.c.l.b16 %v258
      %v795 = vunpack.c.l.b16 %v259
      %v796 = vunpack.c.l.b16 %v260
      %v797 = vunpack.c.l.b16 %v261
      %v798 = vunpack.c.l.b16 %v262
      %v799 = vunpack.c.l.b16 %v263
      %v800 = vunpack.c.l.b16 %v264
      %v801 = vunpack.c.l.b16 %v265
      %v802 = vunpack.c.l.b16 %v266
      %v803 = vunpack.c.l.b16 %v267
      %v804 = vunpack.c.l.b16 %v268
      %v805 = vunpack.c.l.b16 %v269
      %v806 = vunpack.c.l.b16 %v270
      %v807 = vunpack.c.l.b16 %v271
      %v808 = vunpack.c.l.b16 %v272
      %v809 = vunpack.c.l.b16 %v273
      %v810 = vunpack.c.l.b16 %v274
      %v811 = vunpack.c.l.b16 %v275
      %v812 = vunpack.c.l.b16 %v276
      %v813 = vunpack.c.l.b16 %v277
      %v814 = vunpack.c.l.b16 %v278
      %v815 = vunpack.c.l.b16 %v279
      %v816 = vunpack.c.l.b16 %v280
      %v817 = vunpack.c.l.b16 %v281
      %v818 = vunpack.c.l.b16 %v282
      %v819 = vunpack.c.l.b16 %v283
      %v820 = vunpack.c.l.b16 %v284
      %v821 = vunpack.c.l.b16 %v285
      %v822 = vunpack.c.l.b16 %v286
      %v823 = vunpack.c.l.b16 %v287
      %v824 = vunpack.c.l.b16 %v288
      %v825 = vunpack.c.l.b16 %v289
      %v826 = vunpack.c.l.b16 %v290
      %v827 = vunpack.c.l.b16 %v291
      %v828 = vunpack.c.l.b16 %v292
      %v829 = vunpack.c.l.b16 %v293
      %v830 = vunpack.c.l.b16 %v294
      %v831 = vunpack.c.l.b16 %v295
      %v832 = vunpack.c.l.b16 %v296
      %v833 = vunpack.c.l.b16 %v297
      %v834 = vunpack.c.l.b16 %v298
      %v835 = vunpack.c.l.b16 %v299
      %v836 = vunpack.c.l.b16 %v300
      %v837 = vunpack.c.l.b16 %v301
      %v838 = vunpack.c.l.b16 %v302
      %v839 = vunpack.c.l.b16 %v303
      %v840 = vunpack.c.l.b16 %v304
      %v841 = vunpack.c.l.b16 %v305
      %v842 = vunpack.c.l.b16 %v306
      %v843 = vunpack.c.l.b16 %v307
      %v844 = vunpack.c.l.b16 %v308
      %v845 = vunpack.c.l.b16 %v309
      %v846 = vunpack.c.l.b16 %v310
      %v847 = vunpack.c.l.b16 %v311
      %v848 = vunpack.c.l.b16 %v312
      %v849 = vunpack.c.l.b16 %v313
      %v850 = vunpack.c.l.b16 %v314
      %v851 = vunpack.c.l.b16 %v315
      %v852 = vunpack.c.l.b16 %v316
      %v853 = vunpack.c.l.b16 %v317
      %v854 = vunpack.c.l.b16 %v318
      %v855 = vunpack.c.l.b16 %v319
      %v856 = vunpack.c.l.b16 %v320
      %v857 = vunpack.c.l.b16 %v321
      %v858 = vunpack.c.l.b16 %v322
      %v859 = vunpack.c.l.b16 %v323
      %v860 = vunpack.c.l.b16 %v324
      %v861 = vunpack.c.l.b16 %v325
      %v862 = vunpack.c.l.b16 %v326
      %v863 = vunpack.c.l.b16 %v327
      %v864 = vunpack.c.l.b16 %v328
      %v865 = vunpack.c.l.b16 %v329
      %v866 = vunpack.c.l.b16 %v330
      %v867 = vunpack.c.l.b16 %v331
      %v868 = vunpack.c.l.b16 %v332
      %v869 = vunpack.c.l.b16 %v333
      %v870 = vunpack.c.l.b16 %v334
      %v871 = vunpack.c.l.b16 %v335
      %v872 = vunpack.c.l.b16 %v336
      %v873 = vunpack.c.l.b16 %v337
      %v874 = vunpack.c.l.b16 %v338
      %v875 = vunpack.c.l.b16 %v339
      %v876 = vunpack.c.l.b16 %v340
      %v877 = vunpack.c.l.b16 %v341
      %v878 = vunpack.c.l.b16 %v342
      %v879 = vunpack.c.l.b16 %v343
      %v880 = vunpack.c.l.b16 %v344
      %v881 = vunpack.c.l.b16 %v345
      %v882 = vunpack.c.l.b16 %v346
      %v883 = vunpack.c.l.b16 %v347
      %v884 = vunpack.c.l.b16 %v348
      %v885 = vunpack.c.l.b16 %v349
      %v886 = vunpack.c.l.b16 %v350
      %v887 = vunpack.c.l.b16 %v351
      %v888 = vunpack.c.l.b16 %v352
      %v889 = vunpack.c.l.b16 %v353
      %v890 = vunpack.c.l.b16 %v354
      %v891 = vunpack.c.l.b16 %v355
      %v892 = vunpack.c.l.b16 %v356
      %v893 = vunpack.c.l.b16 %v357
      %v894 = vunpack.c.l.b16 %v358
      %v895 = vunpack.c.l.b16 %v359
      %v896 = vunpack.c.l.b16 %v360
      %v897 = vunpack.c.l.b16 %v361
      %v898 = vunpack.c.l.b16 %v362
      %v899 = vunpack.c.l.b16 %v363
      %v900 = vunpack.c.l.b16 %v364
      %v901 = vunpack.c.l.b16 %v365
      %v902 = vunpack.c.l.b16 %v366
      %v903 = vunpack.c.l.b16 %v367
      %v904 = vunpack.c.l.b16 %v368
      %v905 = vunpack.c.l.b16 %v369
      %v906 = vunpack.c.l.b16 %v370
      %v907 = vunpack.c.l.b16 %v371
      %v908 = vunpack.c.l.b16 %v372
      %v909 = vunpack.c.l.b16 %v373
      %v910 = vunpack.c.l.b16 %v374
      %v911 = vunpack.c.l.b16 %v375
      %v912 = vunpack.c.l.b16 %v376
      %v913 = vunpack.c.l.b16 %v377
      %v914 = vunpack.c.l.b16 %v378
      %v915 = vunpack.c.l.b16 %v379
      %v916 = vunpack.c.l.b16 %v380
      %v917 = vunpack.c.l.b16 %v381
      %v918 = vunpack.c.l.b16 %v382
      %v919 = vunpack.c.l.b16 %v383
      %v920 = vunpack.c.l.b16 %v384
      %v921 = vunpack.c.l.b16 %v385
      %v922 = vunpack.c.l.b16 %v386
      %v923 = vunpack.c.l.b16 %v387
      %v924 = vunpack.c.l.b16 %v388
      %v925 = vunpack.c.l.b16 %v389
      %v926 = vunpack.c.l.b16 %v390
      %v927 = vunpack.c.l.b16 %v391
      %v928 = vunpack.c.l.b16 %v392
      %v929 = vunpack.c.l.b16 %v393
      %v930 = vunpack.c.l.b16 %v394
      %v931 = vunpack.c.l.b16 %v395
      %v932 = vunpack.c.l.b16 %v396
      %v933 = vunpack.c.l.b16 %v397
      %v934 = vunpack.c.l.b16 %v398
      %v935 = vunpack.c.l.b16 %v399
      %v936 = vunpack.c.l.b16 %v400
      %v937 = vunpack.c.l.b16 %v401
      %v938 = vunpack.c.l.b16 %v402
      %v939 = vunpack.c.l.b16 %v403
      %v940 = vunpack.c.l.b16 %v404
      %v941 = vunpack.c.l.b16 %v405
      %v942 = vunpack.c.l.b16 %v406
      %v943 = vunpack.c.l.b16 %v407
      %v944 = vunpack.c.l.b16 %v408
      %v945 = vunpack.c.l.b16 %v409
      %v946 = vunpack.c.l.b16 %v410
      %v947 = vunpack.c.l.b16 %v411
      %v948 = vunpack.c.l.b16 %v412
      %v949 = vunpack.c.l.b16 %v413
      %v950 = vunpack.c.l.b16 %v414
      %v951 = vunpack.c.l.b16 %v415
      %v952 = vunpack.c.l.b16 %v416
      %v953 = vunpack.c.l.b16 %v417
      %v954 = vunpack.c.l.b16 %v418
      %v955 = vunpack.c.l.b16 %v419
      %v956 = vunpack.c.l.b16 %v420
      %v957 = vunpack.c.l.b16 %v421
      %v958 = vunpack.c.l.b16 %v422
      %v959 = vunpack.c.l.b16 %v423
      %v960 = vunpack.c.l.b16 %v424
      %v961 = vunpack.c.l.b16 %v425
      %v962 = vunpack.c.l.b16 %v426
      %v963 = vunpack.c.l.b16 %v427
      %v964 = vunpack.c.l.b16 %v428
      %v965 = vunpack.c.l.b16 %v429
      %v966 = vunpack.c.l.b16 %v430
      %v967 = vunpack.c.l.b16 %v431
      %v968 = vunpack.c.l.b16 %v432
      %v969 = vpack.c.b16 %v714, %v713
      %v970 = vpack.c.b16 %v716, %v715
      %v971 = vpack.c.b16 %v718, %v717
      %v972 = vpack.c.b16 %v720, %v719
      %v973 = vpack.c.b16 %v722, %v721
      %v974 = vpack.c.b16 %v724, %v723
      %v975 = vpack.c.b16 %v726, %v725
      %v976 = vpack.c.b16 %v728, %v727
      %v977 = vpack.c.b16 %v730, %v729
      %v978 = vpack.c.b16 %v732, %v731
      %v979 = vpack.c.b16 %v734, %v733
      %v980 = vpack.c.b16 %v736, %v735
      %v981 = vpack.c.b16 %v738, %v737
      %v982 = vpack.c.b16 %v740, %v739
      %v983 = vpack.c.b16 %v742, %v741
      %v984 = vpack.c.b16 %v744, %v743
      %v985 = vpack.c.b16 %v746, %v745
      %v986 = vpack.c.b16 %v748, %v747
      %v987 = vpack.c.b16 %v750, %v749
      %v988 = vpack.c.b16 %v752, %v751
      %v989 = vpack.c.b16 %v754, %v753
      %v990 = vpack.c.b16 %v756, %v755
      %v991 = vpack.c.b16 %v758, %v757
      %v992 = vpack.c.b16 %v760, %v759
      %v993 = vpack.c.b16 %v762, %v761
      %v994 = vpack.c.b16 %v764, %v763
      %v995 = vpack.c.b16 %v766, %v765
      %v996 = vpack.c.b16 %v768, %v767
      %v997 = vpack.c.b16 %v770, %v769
      %v998 = vpack.c.b16 %v772, %v771
      %v999 = vpack.c.b16 %v774, %v773
      %v1000 = vpack.c.b16 %v776, %v775
      %v1001 = vpack.c.b16 %v778, %v777
      %v1002 = vpack.c.b16 %v780, %v779
      %v1003 = vpack.c.b16 %v782, %v781
      %v1004 = vpack.c.b16 %v784, %v783
      %v1005 = vpack.c.b16 %v786, %v785
      %v1006 = vpack.c.b16 %v788, %v787
      %v1007 = vpack.c.b16 %v790, %v789
      %v1008 = vpack.c.b16 %v792, %v791
      %v1009 = vpack.c.b16 %v794, %v793
      %v1010 = vpack.c.b16 %v796, %v795
      %v1011 = vpack.c.b16 %v798, %v797
      %v1012 = vpack.c.b16 %v800, %v799
      %v1013 = vpack.c.b16 %v802, %v801
      %v1014 = vpack.c.b16 %v804, %v803
      %v1015 = vpack.c.b16 %v806, %v805
      %v1016 = vpack.c.b16 %v808, %v807
      %v1017 = vpack.c.b16 %v810, %v809
      %v1018 = vpack.c.b16 %v812, %v811
      %v1019 = vpack.c.b16 %v814, %v813
      %v1020 = vpack.c.b16 %v816, %v815
      %v1021 = vpack.c.b16 %v818, %v817
      %v1022 = vpack.c.b16 %v820, %v819
      %v1023 = vpack.c.b16 %v822, %v821
      %v1024 = vpack.c.b16 %v824, %v823
      %v1025 = vpack.c.b16 %v826, %v825
      %v1026 = vpack.c.b16 %v828, %v827
      %v1027 = vpack.c.b16 %v830, %v829
      %v1028 = vpack.c.b16 %v832, %v831
      %v1029 = vpack.c.b16 %v834, %v833
      %v1030 = vpack.c.b16 %v836, %v835
      %v1031 = vpack.c.b16 %v838, %v837
      %v1032 = vpack.c.b16 %v840, %v839
      %v1033 = vpack.c.b16 %v842, %v841
      %v1034 = vpack.c.b16 %v844, %v843
      %v1035 = vpack.c.b16 %v846, %v845
      %v1036 = vpack.c.b16 %v848, %v847
      %v1037 = vpack.c.b16 %v850, %v849
      %v1038 = vpack.c.b16 %v852, %v851
      %v1039 = vpack.c.b16 %v854, %v853
      %v1040 = vpack.c.b16 %v856, %v855
      %v1041 = vpack.c.b16 %v858, %v857
      %v1042 = vpack.c.b16 %v860, %v859
      %v1043 = vpack.c.b16 %v862, %v861
      %v1044 = vpack.c.b16 %v864, %v863
      %v1045 = vpack.c.b16 %v866, %v865
      %v1046 = vpack.c.b16 %v868, %v867
      %v1047 = vpack.c.b16 %v870, %v869
      %v1048 = vpack.c.b16 %v872, %v871
      %v1049 = vpack.c.b16 %v874, %v873
      %v1050 = vpack.c.b16 %v876, %v875
      %v1051 = vpack.c.b16 %v878, %v877
      %v1052 = vpack.c.b16 %v880, %v879
      %v1053 = vpack.c.b16 %v882, %v881
      %v1054 = vpack.c.b16 %v884, %v883
      %v1055 = vpack.c.b16 %v886, %v885
      %v1056 = vpack.c.b16 %v888, %v887
      %v1057 = vpack.c.b16 %v890, %v889
      %v1058 = vpack.c.b16 %v892, %v891
      %v1059 = vpack.c.b16 %v894, %v893
      %v1060 = vpack.c.b16 %v896, %v895
      %v1061 = vpack.c.b16 %v898, %v897
      %v1062 = vpack.c.b16 %v900, %v899
      %v1063 = vpack.c.b16 %v902, %v901
      %v1064 = vpack.c.b16 %v904, %v903
      %v1065 = vpack.c.b16 %v906, %v905
      %v1066 = vpack.c.b16 %v908, %v907
      %v1067 = vpack.c.b16 %v910, %v909
      %v1068 = vpack.c.b16 %v912, %v911
      %v1069 = vpack.c.b16 %v914, %v913
      %v1070 = vpack.c.b16 %v916, %v915
      %v1071 = vpack.c.b16 %v918, %v917
      %v1072 = vpack.c.b16 %v920, %v919
      %v1073 = vpack.c.b16 %v922, %v921
      %v1074 = vpack.c.b16 %v924, %v923
      %v1075 = vpack.c.b16 %v926, %v925
      %v1076 = vpack.c.b16 %v928, %v927
      %v1077 = vpack.c.b16 %v930, %v929
      %v1078 = vpack.c.b16 %v932, %v931
      %v1079 = vpack.c.b16 %v934, %v933
      %v1080 = vpack.c.b16 %v936, %v935
      %v1081 = vpack.c.b16 %v938, %v937
      %v1082 = vpack.c.b16 %v940, %v939
      %v1083 = vpack.c.b16 %v942, %v941
      %v1084 = vpack.c.b16 %v944, %v943
      %v1085 = vpack.c.b16 %v946, %v945
      %v1086 = vpack.c.b16 %v948, %v947
      %v1087 = vpack.c.b16 %v950, %v949
      %v1088 = vpack.c.b16 %v952, %v951
      %v1089 = vpack.c.b16 %v954, %v953
      %v1090 = vpack.c.b16 %v956, %v955
      %v1091 = vpack.c.b16 %v958, %v957
      %v1092 = vpack.c.b16 %v960, %v959
      %v1093 = vpack.c.b16 %v962, %v961
      %v1094 = vpack.c.b16 %v964, %v963
      %v1095 = vpack.c.b16 %v966, %v965
      %v1096 = vpack.c.b16 %v968, %v967
      %v1109 = vunpack.c.l.b16 %v433
      %v1110 = vunpack.c.h.b16 %v433
      %v1111 = vunpack.c.l.b16 %v434
      %v1112 = vunpack.c.h.b16 %v434
      %v1113 = vunpack.c.l.b16 %v435
      %v1114 = vunpack.c.h.b16 %v435
      %v1115 = vunpack.c.l.b16 %v436
      %v1116 = vunpack.c.h.b16 %v436
      %v1117 = vunpack.c.l.b16 %v437
      %v1118 = vunpack.c.h.b16 %v437
      %v1119 = vunpack.c.l.b16 %v438
      %v1120 = vunpack.c.h.b16 %v438
      %v1121 = vunpack.c.l.b16 %v439
      %v1122 = vunpack.c.h.b16 %v439
      %v1123 = vunpack.c.l.b16 %v440
      %v1124 = vunpack.c.h.b16 %v440
      %v1125 = vunpack.c.l.b16 %v441
      %v1126 = vunpack.c.h.b16 %v441
      %v1127 = vunpack.c.l.b16 %v442
      %v1128 = vunpack.c.h.b16 %v442
      %v1129 = vunpack.c.l.b16 %v443
      %v1130 = vunpack.c.h.b16 %v443
      %v1131 = vunpack.c.l.b16 %v444
      %v1132 = vunpack.c.h.b16 %v444
      %v1133 = vpack.c.b16 %v1111, %v1109
      %v1134 = vpack.c.b16 %v1112, %v1110
      %v1135 = vpack.c.b16 %v1115, %v1113
      %v1136 = vpack.c.b16 %v1116, %v1114
      %v1137 = vpack.c.b16 %v1119, %v1117
      %v1138 = vpack.c.b16 %v1120, %v1118
      %v1139 = vpack.c.b16 %v1123, %v1121
      %v1140 = vpack.c.b16 %v1124, %v1122
      %v1141 = vpack.c.b16 %v1127, %v1125
      %v1142 = vpack.c.b16 %v1128, %v1126
      %v1143 = vpack.c.b16 %v1131, %v1129
      %v1144 = vpack.c.b16 %v1132, %v1130
      %vm1157 = vcmask 785408
      %v1159 = vsel %vm1157, %v969, 0
      %v1162 = vsel %vm1157, %v970, 0
      %v1165 = vsel %vm1157, %v971, 0
      %v1168 = vsel %vm1157, %v972, 0
      %v1171 = vsel %vm1157, %v973, 0
      %v1174 = vsel %vm1157, %v974, 0
      %v1177 = vsel %vm1157, %v975, 0
      %v1180 = vsel %vm1157, %v976, 0
      %v1183 = vsel %vm1157, %v977, 0
      %v1186 = vsel %vm1157, %v978, 0
      %v1189 = vsel %vm1157, %v979, 0
      %v1192 = vsel %vm1157, %v980, 0
      %v1195 = vsel %vm1157, %v981, 0
      %v1198 = vsel %vm1157, %v982, 0
      %v1201 = vsel %vm1157, %v983, 0
      %v1204 = vsel %vm1157, %v984, 0
      %v1207 = vsel %vm1157, %v985, 0
      %v1210 = vsel %vm1157, %v986, 0
      %v1213 = vsel %vm1157, %v987, 0
      %v1216 = vsel %vm1157, %v988, 0
      %v1219 = vsel %vm1157, %v989, 0
      %v1222 = vsel %vm1157, %v990, 0
      %v1225 = vsel %vm1157, %v991, 0
      %v1228 = vsel %vm1157, %v992, 0
      %v1231 = vsel %vm1157, %v993, 0
      %v1234 = vsel %vm1157, %v994, 0
      %v1237 = vsel %vm1157, %v995, 0
      %v1240 = vsel %vm1157, %v996, 0
      %v1243 = vsel %vm1157, %v997, 0
      %v1246 = vsel %vm1157, %v998, 0
      %v1249 = vsel %vm1157, %v999, 0
      %v1252 = vsel %vm1157, %v1000, 0
      %v1255 = vsel %vm1157, %v1001, 0
      %v1258 = vsel %vm1157, %v1002, 0
      %v1261 = vsel %vm1157, %v1003, 0
      %v1264 = vsel %vm1157, %v1004, 0
      %v1267 = vsel %vm1157, %v1005, 0
      %v1270 = vsel %vm1157, %v1006, 0
      %v1273 = vsel %vm1157, %v1007, 0
      %v1276 = vsel %vm1157, %v1008, 0
      %v1279 = vsel %vm1157, %v1009, 0
      %v1282 = vsel %vm1157, %v1010, 0
      %v1285 = vsel %vm1157, %v1011, 0
      %v1288 = vsel %vm1157, %v1012, 0
      %v1291 = vsel %vm1157, %v1013, 0
      %v1294 = vsel %vm1157, %v1014, 0
      %v1297 = vsel %vm1157, %v1015, 0
      %v1300 = vsel %vm1157, %v1016, 0
      %v1303 = vsel %vm1157, %v1017, 0
      %v1306 = vsel %vm1157, %v1018, 0
      %v1309 = vsel %vm1157, %v1019, 0
      %v1312 = vsel %vm1157, %v1020, 0
      %v1315 = vsel %vm1157, %v1021, 0
      %v1318 = vsel %vm1157, %v1022, 0
      %v1321 = vsel %vm1157, %v1023, 0
      %v1324 = vsel %vm1157, %v1024, 0
      %v1327 = vsel %vm1157, %v1025, 0
      %v1330 = vsel %vm1157, %v1026, 0
      %v1333 = vsel %vm1157, %v1027, 0
      %v1336 = vsel %vm1157, %v1028, 0
      %v1339 = vsel %vm1157, %v1029, 0
      %v1342 = vsel %vm1157, %v1030, 0
      %v1345 = vsel %vm1157, %v1031, 0
      %v1348 = vsel %vm1157, %v1032, 0
      %v1351 = vsel %vm1157, %v1033, 0
      %v1354 = vsel %vm1157, %v1034, 0
      %v1357 = vsel %vm1157, %v1035, 0
      %v1360 = vsel %vm1157, %v1036, 0
      %v1363 = vsel %vm1157, %v1037, 0
      %v1366 = vsel %vm1157, %v1038, 0
      %v1369 = vsel %vm1157, %v1039, 0
      %v1372 = vsel %vm1157, %v1040, 0
      %v1375 = vsel %vm1157, %v1041, 0
      %v1378 = vsel %vm1157, %v1042, 0
      %v1381 = vsel %vm1157, %v1043, 0
      %v1384 = vsel %vm1157, %v1044, 0
      %v1387 = vsel %vm1157, %v1045, 0
      %v1390 = vsel %vm1157, %v1046, 0
      %v1393 = vsel %vm1157, %v1047, 0
      %v1396 = vsel %vm1157, %v1048, 0
      %v1399 = vsel %vm1157, %v1049, 0
      %v1402 = vsel %vm1157, %v1050, 0
      %v1405 = vsel %vm1157, %v1051, 0
      %v1408 = vsel %vm1157, %v1052, 0
      %v1411 = vsel %vm1157, %v1053, 0
      %v1414 = vsel %vm1157, %v1054, 0
      %v1417 = vsel %vm1157, %v1055, 0
      %v1420 = vsel %vm1157, %v1056, 0
      %v1423 = vsel %vm1157, %v1057, 0
      %v1426 = vsel %vm1157, %v1058, 0
      %v1429 = vsel %vm1157, %v1059, 0
      %v1432 = vsel %vm1157, %v1060, 0
      %v1435 = vsel %vm1157, %v1061, 0
      %v1438 = vsel %vm1157, %v1062, 0
      %v1441 = vsel %vm1157, %v1063, 0
      %v1444 = vsel %vm1157, %v1064, 0
      %v1447 = vsel %vm1157, %v1065, 0
      %v1450 = vsel %vm1157, %v1066, 0
      %v1453 = vsel %vm1157, %v1067, 0
      %v1456 = vsel %vm1157, %v1068, 0
      %v1459 = vsel %vm1157, %v1069, 0
      %v1462 = vsel %vm1157, %v1070, 0
      %v1465 = vsel %vm1157, %v1071, 0
      %v1468 = vsel %vm1157, %v1072, 0
      %v1471 = vsel %vm1157, %v1073, 0
      %v1474 = vsel %vm1157, %v1074, 0
      %v1477 = vsel %vm1157, %v1075, 0
      %v1480 = vsel %vm1157, %v1076, 0
      %v1483 = vsel %vm1157, %v1077, 0
      %v1486 = vsel %vm1157, %v1078, 0
      %v1489 = vsel %vm1157, %v1079, 0
      %v1492 = vsel %vm1157, %v1080, 0
      %v1495 = vsel %vm1157, %v1081, 0
      %v1498 = vsel %vm1157, %v1082, 0
      %v1501 = vsel %vm1157, %v1083, 0
      %v1504 = vsel %vm1157, %v1084, 0
      %v1507 = vsel %vm1157, %v1085, 0
      %v1510 = vsel %vm1157, %v1086, 0
      %v1513 = vsel %vm1157, %v1087, 0
      %v1516 = vsel %vm1157, %v1088, 0
      %v1519 = vsel %vm1157, %v1089, 0
      %v1522 = vsel %vm1157, %v1090, 0
      %v1525 = vsel %vm1157, %v1091, 0
      %v1528 = vsel %vm1157, %v1092, 0
      %v1531 = vsel %vm1157, %v1093, 0
      %v1534 = vsel %vm1157, %v1094, 0
      %v1537 = vsel %vm1157, %v1095, 0
      %v1540 = vsel %vm1157, %v1096, 0
      %1542 = vmatprep.subr.bf16.mxu0 %v1134
      %1543 = vmatpush1.bf16.msra.mxu0 %v1133
      %1544 = vmatprep.subr.bf16.mxu0 %v1136
      %1545 = vmatpush1.bf16.msra.mxu0 %v1135
      %1546 = vmatprep.subr.bf16.mxu0 %v1138
      %1547 = vmatpush1.bf16.msra.mxu0 %v1137
      %1548 = vmatprep.subr.bf16.mxu0 %v1140
      %1549 = vmatpush1.bf16.msra.mxu0 %v1139
      %1550 = vmatprep.subr.bf16.mxu0 %v1142
      %1551 = vmatpush1.bf16.msra.mxu0 %v1141
      %1552 = vmatprep.subr.bf16.mxu0 %v1144
      %1553 = vmatpush1.bf16.msra.mxu0 %v1143
      %1554 = vmatprep.subr.bf16.mxu0 0
      %1555 = vmatpush1.bf16.msra.mxu0 0
      %1556 = vmatprep.subr.bf16.mxu0 0
      %1557 = vmatpush1.bf16.msra.mxu0 0
      %1558 = vmatprep.subr.bf16.mxu0 0
      %1559 = vmatpush1.bf16.msra.mxu0 0
      %1560 = vmatprep.subr.bf16.mxu0 0
      %1561 = vmatpush1.bf16.msra.mxu0 0
      %1562 = vmatprep.subr.bf16.mxu0 0
      %1563 = vmatpush1.bf16.msra.mxu0 0
      %1564 = vmatprep.subr.bf16.mxu0 0
      %1565 = vmatpush1.bf16.msra.mxu0 0
      %1566 = vmatprep.subr.bf16.mxu0 0
      %1567 = vmatpush1.bf16.msra.mxu0 0
      %1568 = vmatprep.subr.bf16.mxu0 0
      %1569 = vmatpush1.bf16.msra.mxu0 0
      %1570 = vmatprep.subr.bf16.mxu0 0
      %1571 = vmatpush1.bf16.msra.mxu0 0
      %1572 = vmatprep.subr.bf16.mxu0 0
      %1573 = vmatpush1.bf16.msra.mxu0 0
      %1574 = vmatprep.mubr.bf16.mxu0 0
      %1575 = vmatmul.mubr.bf16.gmra.mrb[0].mxu0 %v1159
      %v1576 = vpop.f32.mrb[0].mxu0
      %v1577 = vadd.f32 %v450, %v1576
      %v1578 = vpop.f32.mrb[0].mxu0
      %v1579 = vadd.f32 %v454, %v1578
      %v1580 = vpop.f32.mrb[0].mxu0
      %v1581 = vadd.f32 %v450, %v1580
      %v1582 = vpop.f32.mrb[0].mxu0
      %v1583 = vadd.f32 %v454, %v1582
      %1584 = vmatprep.mubr.bf16.mxu0 0
      %1585 = vmatmul.mubr.bf16.gmra.mrb[0].mxu0 %v1162
      %v1586 = vpop.f32.mrb[0].mxu0
      %v1587 = vadd.f32 %v450, %v1586
      %v1588 = vpop.f32.mrb[0].mxu0
      %v1589 = vadd.f32 %v454, %v1588
      %v1590 = vpop.f32.mrb[0].mxu0
      %v1591 = vadd.f32 %v450, %v1590
      %v1592 = vpop.f32.mrb[0].mxu0
      %v1593 = vadd.f32 %v454, %v1592
      %1594 = vmatprep.mubr.bf16.mxu0 0
      %1595 = vmatmul.mubr.bf16.gmra.mrb[0].mxu0 %v1165
      %v1596 = vpop.f32.mrb[0].mxu0
      %v1597 = vadd.f32 %v450, %v1596
      %v1598 = vpop.f32.mrb[0].mxu0
      %v1599 = vadd.f32 %v454, %v1598
      %v1600 = vpop.f32.mrb[0].mxu0
      %v1601 = vadd.f32 %v450, %v1600
      %v1602 = vpop.f32.mrb[0].mxu0
      %v1603 = vadd.f32 %v454, %v1602
      %1604 = vmatprep.mubr.bf16.mxu0 0
      %1605 = vmatmul.mubr.bf16.gmra.mrb[0].mxu0 %v1168
      %v1606 = vpop.f32.mrb[0].mxu0
      %v1607 = vadd.f32 %v450, %v1606
      %v1608 = vpop.f32.mrb[0].mxu0
      %v1609 = vadd.f32 %v454, %v1608
      %v1610 = vpop.f32.mrb[0].mxu0
      %v1611 = vadd.f32 %v450, %v1610
      %v1612 = vpop.f32.mrb[0].mxu0
      %v1613 = vadd.f32 %v454, %v1612
      %1614 = vmatprep.mubr.bf16.mxu0 0
      %1615 = vmatmul.mubr.bf16.gmra.mrb[0].mxu0 %v1171
      %v1616 = vpop.f32.mrb[0].mxu0
      %v1617 = vadd.f32 %v450, %v1616
      %v1618 = vpop.f32.mrb[0].mxu0
      %v1619 = vadd.f32 %v454, %v1618
      %v1620 = vpop.f32.mrb[0].mxu0
      %v1621 = vadd.f32 %v450, %v1620
      %v1622 = vpop.f32.mrb[0].mxu0
      %v1623 = vadd.f32 %v454, %v1622
      %1624 = vmatprep.mubr.bf16.mxu0 0
      %1625 = vmatmul.mubr.bf16.gmra.mrb[0].mxu0 %v1174
      %v1626 = vpop.f32.mrb[0].mxu0
      %v1627 = vadd.f32 %v450, %v1626
      %v1628 = vpop.f32.mrb[0].mxu0
      %v1629 = vadd.f32 %v454, %v1628
      %v1630 = vpop.f32.mrb[0].mxu0
      %v1631 = vadd.f32 %v450, %v1630
      %v1632 = vpop.f32.mrb[0].mxu0
      %v1633 = vadd.f32 %v454, %v1632
      %1634 = vmatprep.mubr.bf16.mxu0 0
      %1635 = vmatmul.mubr.bf16.gmra.mrb[0].mxu0 %v1177
      %v1636 = vpop.f32.mrb[0].mxu0
      %v1637 = vadd.f32 %v450, %v1636
      %v1638 = vpop.f32.mrb[0].mxu0
      %v1639 = vadd.f32 %v454, %v1638
      %v1640 = vpop.f32.mrb[0].mxu0
      %v1641 = vadd.f32 %v450, %v1640
      %v1642 = vpop.f32.mrb[0].mxu0
      %v1643 = vadd.f32 %v454, %v1642
      %1644 = vmatprep.mubr.bf16.mxu0 0
      %1645 = vmatmul.mubr.bf16.gmra.mrb[0].mxu0 %v1180
      %v1646 = vpop.f32.mrb[0].mxu0
      %v1647 = vadd.f32 %v450, %v1646
      %v1648 = vpop.f32.mrb[0].mxu0
      %v1649 = vadd.f32 %v454, %v1648
      %v1650 = vpop.f32.mrb[0].mxu0
      %v1651 = vadd.f32 %v450, %v1650
      %v1652 = vpop.f32.mrb[0].mxu0
      %v1653 = vadd.f32 %v454, %v1652
      %1654 = vmatprep.mubr.bf16.mxu0 0
      %1655 = vmatmul.mubr.bf16.gmra.mrb[0].mxu0 %v1183
      %v1656 = vpop.f32.mrb[0].mxu0
      %v1657 = vadd.f32 %v450, %v1656
      %v1658 = vpop.f32.mrb[0].mxu0
      %v1659 = vadd.f32 %v454, %v1658
      %v1660 = vpop.f32.mrb[0].mxu0
      %v1661 = vadd.f32 %v450, %v1660
      %v1662 = vpop.f32.mrb[0].mxu0
      %v1663 = vadd.f32 %v454, %v1662
      %1664 = vmatprep.mubr.bf16.mxu0 0
      %1665 = vmatmul.mubr.bf16.gmra.mrb[0].mxu0 %v1186
      %v1666 = vpop.f32.mrb[0].mxu0
      %v1667 = vadd.f32 %v450, %v1666
      %v1668 = vpop.f32.mrb[0].mxu0
      %v1669 = vadd.f32 %v454, %v1668
      %v1670 = vpop.f32.mrb[0].mxu0
      %v1671 = vadd.f32 %v450, %v1670
      %v1672 = vpop.f32.mrb[0].mxu0
      %v1673 = vadd.f32 %v454, %v1672
      %1674 = vmatprep.mubr.bf16.mxu0 0
      %1675 = vmatmul.mubr.bf16.gmra.mrb[0].mxu0 %v1189
      %v1676 = vpop.f32.mrb[0].mxu0
      %v1677 = vadd.f32 %v450, %v1676
      %v1678 = vpop.f32.mrb[0].mxu0
      %v1679 = vadd.f32 %v454, %v1678
      %v1680 = vpop.f32.mrb[0].mxu0
      %v1681 = vadd.f32 %v450, %v1680
      %v1682 = vpop.f32.mrb[0].mxu0
      %v1683 = vadd.f32 %v454, %v1682
      %1684 = vmatprep.mubr.bf16.mxu0 0
      %1685 = vmatmul.mubr.bf16.gmra.mrb[0].mxu0 %v1192
      %v1686 = vpop.f32.mrb[0].mxu0
      %v1687 = vadd.f32 %v450, %v1686
      %v1688 = vpop.f32.mrb[0].mxu0
      %v1689 = vadd.f32 %v454, %v1688
      %v1690 = vpop.f32.mrb[0].mxu0
      %v1691 = vadd.f32 %v450, %v1690
      %v1692 = vpop.f32.mrb[0].mxu0
      %v1693 = vadd.f32 %v454, %v1692
      %1694 = vmatprep.mubr.bf16.mxu0 0
      %1695 = vmatmul.mubr.bf16.gmra.mrb[0].mxu0 %v1195
      %v1696 = vpop.f32.mrb[0].mxu0
      %v1697 = vadd.f32 %v450, %v1696
      %v1698 = vpop.f32.mrb[0].mxu0
      %v1699 = vadd.f32 %v454, %v1698
      %v1700 = vpop.f32.mrb[0].mxu0
      %v1701 = vadd.f32 %v450, %v1700
      %v1702 = vpop.f32.mrb[0].mxu0
      %v1703 = vadd.f32 %v454, %v1702
      %1704 = vmatprep.mubr.bf16.mxu0 0
      %1705 = vmatmul.mubr.bf16.gmra.mrb[0].mxu0 %v1198
      %v1706 = vpop.f32.mrb[0].mxu0
      %v1707 = vadd.f32 %v450, %v1706
      %v1708 = vpop.f32.mrb[0].mxu0
      %v1709 = vadd.f32 %v454, %v1708
      %v1710 = vpop.f32.mrb[0].mxu0
      %v1711 = vadd.f32 %v450, %v1710
      %v1712 = vpop.f32.mrb[0].mxu0
      %v1713 = vadd.f32 %v454, %v1712
      %1714 = vmatprep.mubr.bf16.mxu0 0
      %1715 = vmatmul.mubr.bf16.gmra.mrb[0].mxu0 %v1201
      %v1716 = vpop.f32.mrb[0].mxu0
      %v1717 = vadd.f32 %v450, %v1716
      %v1718 = vpop.f32.mrb[0].mxu0
      %v1719 = vadd.f32 %v454, %v1718
      %v1720 = vpop.f32.mrb[0].mxu0
      %v1721 = vadd.f32 %v450, %v1720
      %v1722 = vpop.f32.mrb[0].mxu0
      %v1723 = vadd.f32 %v454, %v1722
      %1724 = vmatprep.mubr.bf16.mxu0 0
      %1725 = vmatmul.mubr.bf16.gmra.mrb[0].mxu0 %v1204
      %v1726 = vpop.f32.mrb[0].mxu0
      %v1727 = vadd.f32 %v450, %v1726
      %v1728 = vpop.f32.mrb[0].mxu0
      %v1729 = vadd.f32 %v454, %v1728
      %v1730 = vpop.f32.mrb[0].mxu0
      %v1731 = vadd.f32 %v450, %v1730
      %v1732 = vpop.f32.mrb[0].mxu0
      %v1733 = vadd.f32 %v454, %v1732
      %1734 = vmatprep.mubr.bf16.mxu0 0
      %1735 = vmatmul.mubr.bf16.gmra.mrb[0].mxu0 %v1207
      %v1736 = vpop.f32.mrb[0].mxu0
      %v1737 = vadd.f32 %v450, %v1736
      %v1738 = vpop.f32.mrb[0].mxu0
      %v1739 = vadd.f32 %v454, %v1738
      %v1740 = vpop.f32.mrb[0].mxu0
      %v1741 = vadd.f32 %v450, %v1740
      %v1742 = vpop.f32.mrb[0].mxu0
      %v1743 = vadd.f32 %v454, %v1742
      %1744 = vmatprep.mubr.bf16.mxu0 0
      %1745 = vmatmul.mubr.bf16.gmra.mrb[0].mxu0 %v1210
      %v1746 = vpop.f32.mrb[0].mxu0
      %v1747 = vadd.f32 %v450, %v1746
      %v1748 = vpop.f32.mrb[0].mxu0
      %v1749 = vadd.f32 %v454, %v1748
      %v1750 = vpop.f32.mrb[0].mxu0
      %v1751 = vadd.f32 %v450, %v1750
      %v1752 = vpop.f32.mrb[0].mxu0
      %v1753 = vadd.f32 %v454, %v1752
      %1754 = vmatprep.mubr.bf16.mxu0 0
      %1755 = vmatmul.mubr.bf16.gmra.mrb[0].mxu0 %v1213
      %v1756 = vpop.f32.mrb[0].mxu0
      %v1757 = vadd.f32 %v450, %v1756
      %v1758 = vpop.f32.mrb[0].mxu0
      %v1759 = vadd.f32 %v454, %v1758
      %v1760 = vpop.f32.mrb[0].mxu0
      %v1761 = vadd.f32 %v450, %v1760
      %v1762 = vpop.f32.mrb[0].mxu0
      %v1763 = vadd.f32 %v454, %v1762
      %1764 = vmatprep.mubr.bf16.mxu0 0
      %1765 = vmatmul.mubr.bf16.gmra.mrb[0].mxu0 %v1216
      %v1766 = vpop.f32.mrb[0].mxu0
      %v1767 = vadd.f32 %v450, %v1766
      %v1768 = vpop.f32.mrb[0].mxu0
      %v1769 = vadd.f32 %v454, %v1768
      %v1770 = vpop.f32.mrb[0].mxu0
      %v1771 = vadd.f32 %v450, %v1770
      %v1772 = vpop.f32.mrb[0].mxu0
      %v1773 = vadd.f32 %v454, %v1772
      %1774 = vmatprep.mubr.bf16.mxu0 0
      %1775 = vmatmul.mubr.bf16.gmra.mrb[0].mxu0 %v1219
      %v1776 = vpop.f32.mrb[0].mxu0
      %v1777 = vadd.f32 %v450, %v1776
      %v1778 = vpop.f32.mrb[0].mxu0
      %v1779 = vadd.f32 %v454, %v1778
      %v1780 = vpop.f32.mrb[0].mxu0
      %v1781 = vadd.f32 %v450, %v1780
      %v1782 = vpop.f32.mrb[0].mxu0
      %v1783 = vadd.f32 %v454, %v1782
      %1784 = vmatprep.mubr.bf16.mxu0 0
      %1785 = vmatmul.mubr.bf16.gmra.mrb[0].mxu0 %v1222
      %v1786 = vpop.f32.mrb[0].mxu0
      %v1787 = vadd.f32 %v450, %v1786
      %v1788 = vpop.f32.mrb[0].mxu0
      %v1789 = vadd.f32 %v454, %v1788
      %v1790 = vpop.f32.mrb[0].mxu0
      %v1791 = vadd.f32 %v450, %v1790
      %v1792 = vpop.f32.mrb[0].mxu0
      %v1793 = vadd.f32 %v454, %v1792
      %1794 = vmatprep.mubr.bf16.mxu0 0
      %1795 = vmatmul.mubr.bf16.gmra.mrb[0].mxu0 %v1225
      %v1796 = vpop.f32.mrb[0].mxu0
      %v1797 = vadd.f32 %v450, %v1796
      %v1798 = vpop.f32.mrb[0].mxu0
      %v1799 = vadd.f32 %v454, %v1798
      %v1800 = vpop.f32.mrb[0].mxu0
      %v1801 = vadd.f32 %v450, %v1800
      %v1802 = vpop.f32.mrb[0].mxu0
      %v1803 = vadd.f32 %v454, %v1802
      %1804 = vmatprep.mubr.bf16.mxu0 0
      %1805 = vmatmul.mubr.bf16.gmra.mrb[0].mxu0 %v1228
      %v1806 = vpop.f32.mrb[0].mxu0
      %v1807 = vadd.f32 %v450, %v1806
      %v1808 = vpop.f32.mrb[0].mxu0
      %v1809 = vadd.f32 %v454, %v1808
      %v1810 = vpop.f32.mrb[0].mxu0
      %v1811 = vadd.f32 %v450, %v1810
      %v1812 = vpop.f32.mrb[0].mxu0
      %v1813 = vadd.f32 %v454, %v1812
      %1814 = vmatprep.mubr.bf16.mxu0 0
      %1815 = vmatmul.mubr.bf16.gmra.mrb[0].mxu0 %v1231
      %v1816 = vpop.f32.mrb[0].mxu0
      %v1817 = vadd.f32 %v450, %v1816
      %v1818 = vpop.f32.mrb[0].mxu0
      %v1819 = vadd.f32 %v454, %v1818
      %v1820 = vpop.f32.mrb[0].mxu0
      %v1821 = vadd.f32 %v450, %v1820
      %v1822 = vpop.f32.mrb[0].mxu0
      %v1823 = vadd.f32 %v454, %v1822
      %1824 = vmatprep.mubr.bf16.mxu0 0
      %1825 = vmatmul.mubr.bf16.gmra.mrb[0].mxu0 %v1234
      %v1826 = vpop.f32.mrb[0].mxu0
      %v1827 = vadd.f32 %v450, %v1826
      %v1828 = vpop.f32.mrb[0].mxu0
      %v1829 = vadd.f32 %v454, %v1828
      %v1830 = vpop.f32.mrb[0].mxu0
      %v1831 = vadd.f32 %v450, %v1830
      %v1832 = vpop.f32.mrb[0].mxu0
      %v1833 = vadd.f32 %v454, %v1832
      %1834 = vmatprep.mubr.bf16.mxu0 0
      %1835 = vmatmul.mubr.bf16.gmra.mrb[0].mxu0 %v1237
      %v1836 = vpop.f32.mrb[0].mxu0
      %v1837 = vadd.f32 %v450, %v1836
      %v1838 = vpop.f32.mrb[0].mxu0
      %v1839 = vadd.f32 %v454, %v1838
      %v1840 = vpop.f32.mrb[0].mxu0
      %v1841 = vadd.f32 %v450, %v1840
      %v1842 = vpop.f32.mrb[0].mxu0
      %v1843 = vadd.f32 %v454, %v1842
      %1844 = vmatprep.mubr.bf16.mxu0 0
      %1845 = vmatmul.mubr.bf16.gmra.mrb[0].mxu0 %v1240
      %v1846 = vpop.f32.mrb[0].mxu0
      %v1847 = vadd.f32 %v450, %v1846
      %v1848 = vpop.f32.mrb[0].mxu0
      %v1849 = vadd.f32 %v454, %v1848
      %v1850 = vpop.f32.mrb[0].mxu0
      %v1851 = vadd.f32 %v450, %v1850
      %v1852 = vpop.f32.mrb[0].mxu0
      %v1853 = vadd.f32 %v454, %v1852
      %1854 = vmatprep.mubr.bf16.mxu0 0
      %1855 = vmatmul.mubr.bf16.gmra.mrb[0].mxu0 %v1243
      %v1856 = vpop.f32.mrb[0].mxu0
      %v1857 = vadd.f32 %v450, %v1856
      %v1858 = vpop.f32.mrb[0].mxu0
      %v1859 = vadd.f32 %v454, %v1858
      %v1860 = vpop.f32.mrb[0].mxu0
      %v1861 = vadd.f32 %v450, %v1860
      %v1862 = vpop.f32.mrb[0].mxu0
      %v1863 = vadd.f32 %v454, %v1862
      %1864 = vmatprep.mubr.bf16.mxu0 0
      %1865 = vmatmul.mubr.bf16.gmra.mrb[0].mxu0 %v1246
      %v1866 = vpop.f32.mrb[0].mxu0
      %v1867 = vadd.f32 %v450, %v1866
      %v1868 = vpop.f32.mrb[0].mxu0
      %v1869 = vadd.f32 %v454, %v1868
      %v1870 = vpop.f32.mrb[0].mxu0
      %v1871 = vadd.f32 %v450, %v1870
      %v1872 = vpop.f32.mrb[0].mxu0
      %v1873 = vadd.f32 %v454, %v1872
      %1874 = vmatprep.mubr.bf16.mxu0 0
      %1875 = vmatmul.mubr.bf16.gmra.mrb[0].mxu0 %v1249
      %v1876 = vpop.f32.mrb[0].mxu0
      %v1877 = vadd.f32 %v450, %v1876
      %v1878 = vpop.f32.mrb[0].mxu0
      %v1879 = vadd.f32 %v454, %v1878
      %v1880 = vpop.f32.mrb[0].mxu0
      %v1881 = vadd.f32 %v450, %v1880
      %v1882 = vpop.f32.mrb[0].mxu0
      %v1883 = vadd.f32 %v454, %v1882
      %1884 = vmatprep.mubr.bf16.mxu0 0
      %1885 = vmatmul.mubr.bf16.gmra.mrb[0].mxu0 %v1252
      %v1886 = vpop.f32.mrb[0].mxu0
      %v1887 = vadd.f32 %v450, %v1886
      %v1888 = vpop.f32.mrb[0].mxu0
      %v1889 = vadd.f32 %v454, %v1888
      %v1890 = vpop.f32.mrb[0].mxu0
      %v1891 = vadd.f32 %v450, %v1890
      %v1892 = vpop.f32.mrb[0].mxu0
      %v1893 = vadd.f32 %v454, %v1892
      %1894 = vmatprep.mubr.bf16.mxu0 0
      %1895 = vmatmul.mubr.bf16.gmra.mrb[0].mxu0 %v1255
      %v1896 = vpop.f32.mrb[0].mxu0
      %v1897 = vadd.f32 %v450, %v1896
      %v1898 = vpop.f32.mrb[0].mxu0
      %v1899 = vadd.f32 %v454, %v1898
      %v1900 = vpop.f32.mrb[0].mxu0
      %v1901 = vadd.f32 %v450, %v1900
      %v1902 = vpop.f32.mrb[0].mxu0
      %v1903 = vadd.f32 %v454, %v1902
      %1904 = vmatprep.mubr.bf16.mxu0 0
      %1905 = vmatmul.mubr.bf16.gmra.mrb[0].mxu0 %v1258
      %v1906 = vpop.f32.mrb[0].mxu0
      %v1907 = vadd.f32 %v450, %v1906
      %v1908 = vpop.f32.mrb[0].mxu0
      %v1909 = vadd.f32 %v454, %v1908
      %v1910 = vpop.f32.mrb[0].mxu0
      %v1911 = vadd.f32 %v450, %v1910
      %v1912 = vpop.f32.mrb[0].mxu0
      %v1913 = vadd.f32 %v454, %v1912
      %1914 = vmatprep.mubr.bf16.mxu0 0
      %1915 = vmatmul.mubr.bf16.gmra.mrb[0].mxu0 %v1261
      %v1916 = vpop.f32.mrb[0].mxu0
      %v1917 = vadd.f32 %v450, %v1916
      %v1918 = vpop.f32.mrb[0].mxu0
      %v1919 = vadd.f32 %v454, %v1918
      %v1920 = vpop.f32.mrb[0].mxu0
      %v1921 = vadd.f32 %v450, %v1920
      %v1922 = vpop.f32.mrb[0].mxu0
      %v1923 = vadd.f32 %v454, %v1922
      %1924 = vmatprep.mubr.bf16.mxu0 0
      %1925 = vmatmul.mubr.bf16.gmra.mrb[0].mxu0 %v1264
      %v1926 = vpop.f32.mrb[0].mxu0
      %v1927 = vadd.f32 %v450, %v1926
      %v1928 = vpop.f32.mrb[0].mxu0
      %v1929 = vadd.f32 %v454, %v1928
      %v1930 = vpop.f32.mrb[0].mxu0
      %v1931 = vadd.f32 %v450, %v1930
      %v1932 = vpop.f32.mrb[0].mxu0
      %v1933 = vadd.f32 %v454, %v1932
      %1934 = vmatprep.mubr.bf16.mxu0 0
      %1935 = vmatmul.mubr.bf16.gmra.mrb[0].mxu0 %v1267
      %v1936 = vpop.f32.mrb[0].mxu0
      %v1937 = vadd.f32 %v450, %v1936
      %v1938 = vpop.f32.mrb[0].mxu0
      %v1939 = vadd.f32 %v454, %v1938
      %v1940 = vpop.f32.mrb[0].mxu0
      %v1941 = vadd.f32 %v450, %v1940
      %v1942 = vpop.f32.mrb[0].mxu0
      %v1943 = vadd.f32 %v454, %v1942
      %1944 = vmatprep.mubr.bf16.mxu0 0
      %1945 = vmatmul.mubr.bf16.gmra.mrb[0].mxu0 %v1270
      %v1946 = vpop.f32.mrb[0].mxu0
      %v1947 = vadd.f32 %v450, %v1946
      %v1948 = vpop.f32.mrb[0].mxu0
      %v1949 = vadd.f32 %v454, %v1948
      %v1950 = vpop.f32.mrb[0].mxu0
      %v1951 = vadd.f32 %v450, %v1950
      %v1952 = vpop.f32.mrb[0].mxu0
      %v1953 = vadd.f32 %v454, %v1952
      %1954 = vmatprep.mubr.bf16.mxu0 0
      %1955 = vmatmul.mubr.bf16.gmra.mrb[0].mxu0 %v1273
      %v1956 = vpop.f32.mrb[0].mxu0
      %v1957 = vadd.f32 %v450, %v1956
      %v1958 = vpop.f32.mrb[0].mxu0
      %v1959 = vadd.f32 %v454, %v1958
      %v1960 = vpop.f32.mrb[0].mxu0
      %v1961 = vadd.f32 %v450, %v1960
      %v1962 = vpop.f32.mrb[0].mxu0
      %v1963 = vadd.f32 %v454, %v1962
      %1964 = vmatprep.mubr.bf16.mxu0 0
      %1965 = vmatmul.mubr.bf16.gmra.mrb[0].mxu0 %v1276
      %v1966 = vpop.f32.mrb[0].mxu0
      %v1967 = vadd.f32 %v450, %v1966
      %v1968 = vpop.f32.mrb[0].mxu0
      %v1969 = vadd.f32 %v454, %v1968
      %v1970 = vpop.f32.mrb[0].mxu0
      %v1971 = vadd.f32 %v450, %v1970
      %v1972 = vpop.f32.mrb[0].mxu0
      %v1973 = vadd.f32 %v454, %v1972
      %1974 = vmatprep.mubr.bf16.mxu0 0
      %1975 = vmatmul.mubr.bf16.gmra.mrb[0].mxu0 %v1279
      %v1976 = vpop.f32.mrb[0].mxu0
      %v1977 = vadd.f32 %v450, %v1976
      %v1978 = vpop.f32.mrb[0].mxu0
      %v1979 = vadd.f32 %v454, %v1978
      %v1980 = vpop.f32.mrb[0].mxu0
      %v1981 = vadd.f32 %v450, %v1980
      %v1982 = vpop.f32.mrb[0].mxu0
      %v1983 = vadd.f32 %v454, %v1982
      %1984 = vmatprep.mubr.bf16.mxu0 0
      %1985 = vmatmul.mubr.bf16.gmra.mrb[0].mxu0 %v1282
      %v1986 = vpop.f32.mrb[0].mxu0
      %v1987 = vadd.f32 %v450, %v1986
      %v1988 = vpop.f32.mrb[0].mxu0
      %v1989 = vadd.f32 %v454, %v1988
      %v1990 = vpop.f32.mrb[0].mxu0
      %v1991 = vadd.f32 %v450, %v1990
      %v1992 = vpop.f32.mrb[0].mxu0
      %v1993 = vadd.f32 %v454, %v1992
      %1994 = vmatprep.mubr.bf16.mxu0 0
      %1995 = vmatmul.mubr.bf16.gmra.mrb[0].mxu0 %v1285
      %v1996 = vpop.f32.mrb[0].mxu0
      %v1997 = vadd.f32 %v450, %v1996
      %v1998 = vpop.f32.mrb[0].mxu0
      %v1999 = vadd.f32 %v454, %v1998
      %v2000 = vpop.f32.mrb[0].mxu0
      %v2001 = vadd.f32 %v450, %v2000
      %v2002 = vpop.f32.mrb[0].mxu0
      %v2003 = vadd.f32 %v454, %v2002
      %2004 = vmatprep.mubr.bf16.mxu0 0
      %2005 = vmatmul.mubr.bf16.gmra.mrb[0].mxu0 %v1288
      %v2006 = vpop.f32.mrb[0].mxu0
      %v2007 = vadd.f32 %v450, %v2006
      %v2008 = vpop.f32.mrb[0].mxu0
      %v2009 = vadd.f32 %v454, %v2008
      %v2010 = vpop.f32.mrb[0].mxu0
      %v2011 = vadd.f32 %v450, %v2010
      %v2012 = vpop.f32.mrb[0].mxu0
      %v2013 = vadd.f32 %v454, %v2012
      %2014 = vmatprep.mubr.bf16.mxu0 0
      %2015 = vmatmul.mubr.bf16.gmra.mrb[0].mxu0 %v1291
      %v2016 = vpop.f32.mrb[0].mxu0
      %v2017 = vadd.f32 %v450, %v2016
      %v2018 = vpop.f32.mrb[0].mxu0
      %v2019 = vadd.f32 %v454, %v2018
      %v2020 = vpop.f32.mrb[0].mxu0
      %v2021 = vadd.f32 %v450, %v2020
      %v2022 = vpop.f32.mrb[0].mxu0
      %v2023 = vadd.f32 %v454, %v2022
      %2024 = vmatprep.mubr.bf16.mxu0 0
      %2025 = vmatmul.mubr.bf16.gmra.mrb[0].mxu0 %v1294
      %v2026 = vpop.f32.mrb[0].mxu0
      %v2027 = vadd.f32 %v450, %v2026
      %v2028 = vpop.f32.mrb[0].mxu0
      %v2029 = vadd.f32 %v454, %v2028
      %v2030 = vpop.f32.mrb[0].mxu0
      %v2031 = vadd.f32 %v450, %v2030
      %v2032 = vpop.f32.mrb[0].mxu0
      %v2033 = vadd.f32 %v454, %v2032
      %2034 = vmatprep.mubr.bf16.mxu0 0
      %2035 = vmatmul.mubr.bf16.gmra.mrb[0].mxu0 %v1297
      %v2036 = vpop.f32.mrb[0].mxu0
      %v2037 = vadd.f32 %v450, %v2036
      %v2038 = vpop.f32.mrb[0].mxu0
      %v2039 = vadd.f32 %v454, %v2038
      %v2040 = vpop.f32.mrb[0].mxu0
      %v2041 = vadd.f32 %v450, %v2040
      %v2042 = vpop.f32.mrb[0].mxu0
      %v2043 = vadd.f32 %v454, %v2042
      %2044 = vmatprep.mubr.bf16.mxu0 0
      %2045 = vmatmul.mubr.bf16.gmra.mrb[0].mxu0 %v1300
      %v2046 = vpop.f32.mrb[0].mxu0
      %v2047 = vadd.f32 %v450, %v2046
      %v2048 = vpop.f32.mrb[0].mxu0
      %v2049 = vadd.f32 %v454, %v2048
      %v2050 = vpop.f32.mrb[0].mxu0
      %v2051 = vadd.f32 %v450, %v2050
      %v2052 = vpop.f32.mrb[0].mxu0
      %v2053 = vadd.f32 %v454, %v2052
      %2054 = vmatprep.mubr.bf16.mxu0 0
      %2055 = vmatmul.mubr.bf16.gmra.mrb[0].mxu0 %v1303
      %v2056 = vpop.f32.mrb[0].mxu0
      %v2057 = vadd.f32 %v450, %v2056
      %v2058 = vpop.f32.mrb[0].mxu0
      %v2059 = vadd.f32 %v454, %v2058
      %v2060 = vpop.f32.mrb[0].mxu0
      %v2061 = vadd.f32 %v450, %v2060
      %v2062 = vpop.f32.mrb[0].mxu0
      %v2063 = vadd.f32 %v454, %v2062
      %2064 = vmatprep.mubr.bf16.mxu0 0
      %2065 = vmatmul.mubr.bf16.gmra.mrb[0].mxu0 %v1306
      %v2066 = vpop.f32.mrb[0].mxu0
      %v2067 = vadd.f32 %v450, %v2066
      %v2068 = vpop.f32.mrb[0].mxu0
      %v2069 = vadd.f32 %v454, %v2068
      %v2070 = vpop.f32.mrb[0].mxu0
      %v2071 = vadd.f32 %v450, %v2070
      %v2072 = vpop.f32.mrb[0].mxu0
      %v2073 = vadd.f32 %v454, %v2072
      %2074 = vmatprep.mubr.bf16.mxu0 0
      %2075 = vmatmul.mubr.bf16.gmra.mrb[0].mxu0 %v1309
      %v2076 = vpop.f32.mrb[0].mxu0
      %v2077 = vadd.f32 %v450, %v2076
      %v2078 = vpop.f32.mrb[0].mxu0
      %v2079 = vadd.f32 %v454, %v2078
      %v2080 = vpop.f32.mrb[0].mxu0
      %v2081 = vadd.f32 %v450, %v2080
      %v2082 = vpop.f32.mrb[0].mxu0
      %v2083 = vadd.f32 %v454, %v2082
      %2084 = vmatprep.mubr.bf16.mxu0 0
      %2085 = vmatmul.mubr.bf16.gmra.mrb[0].mxu0 %v1312
      %v2086 = vpop.f32.mrb[0].mxu0
      %v2087 = vadd.f32 %v450, %v2086
      %v2088 = vpop.f32.mrb[0].mxu0
      %v2089 = vadd.f32 %v454, %v2088
      %v2090 = vpop.f32.mrb[0].mxu0
      %v2091 = vadd.f32 %v450, %v2090
      %v2092 = vpop.f32.mrb[0].mxu0
      %v2093 = vadd.f32 %v454, %v2092
      %2094 = vmatprep.mubr.bf16.mxu0 0
      %2095 = vmatmul.mubr.bf16.gmra.mrb[0].mxu0 %v1315
      %v2096 = vpop.f32.mrb[0].mxu0
      %v2097 = vadd.f32 %v450, %v2096
      %v2098 = vpop.f32.mrb[0].mxu0
      %v2099 = vadd.f32 %v454, %v2098
      %v2100 = vpop.f32.mrb[0].mxu0
      %v2101 = vadd.f32 %v450, %v2100
      %v2102 = vpop.f32.mrb[0].mxu0
      %v2103 = vadd.f32 %v454, %v2102
      %2104 = vmatprep.mubr.bf16.mxu0 0
      %2105 = vmatmul.mubr.bf16.gmra.mrb[0].mxu0 %v1318
      %v2106 = vpop.f32.mrb[0].mxu0
      %v2107 = vadd.f32 %v450, %v2106
      %v2108 = vpop.f32.mrb[0].mxu0
      %v2109 = vadd.f32 %v454, %v2108
      %v2110 = vpop.f32.mrb[0].mxu0
      %v2111 = vadd.f32 %v450, %v2110
      %v2112 = vpop.f32.mrb[0].mxu0
      %v2113 = vadd.f32 %v454, %v2112
      %2114 = vmatprep.mubr.bf16.mxu0 0
      %2115 = vmatmul.mubr.bf16.gmra.mrb[0].mxu0 %v1321
      %v2116 = vpop.f32.mrb[0].mxu0
      %v2117 = vadd.f32 %v450, %v2116
      %v2118 = vpop.f32.mrb[0].mxu0
      %v2119 = vadd.f32 %v454, %v2118
      %v2120 = vpop.f32.mrb[0].mxu0
      %v2121 = vadd.f32 %v450, %v2120
      %v2122 = vpop.f32.mrb[0].mxu0
      %v2123 = vadd.f32 %v454, %v2122
      %2124 = vmatprep.mubr.bf16.mxu0 0
      %2125 = vmatmul.mubr.bf16.gmra.mrb[0].mxu0 %v1324
      %v2126 = vpop.f32.mrb[0].mxu0
      %v2127 = vadd.f32 %v450, %v2126
      %v2128 = vpop.f32.mrb[0].mxu0
      %v2129 = vadd.f32 %v454, %v2128
      %v2130 = vpop.f32.mrb[0].mxu0
      %v2131 = vadd.f32 %v450, %v2130
      %v2132 = vpop.f32.mrb[0].mxu0
      %v2133 = vadd.f32 %v454, %v2132
      %2134 = vmatprep.mubr.bf16.mxu0 0
      %2135 = vmatmul.mubr.bf16.gmra.mrb[0].mxu0 %v1327
      %v2136 = vpop.f32.mrb[0].mxu0
      %v2137 = vadd.f32 %v450, %v2136
      %v2138 = vpop.f32.mrb[0].mxu0
      %v2139 = vadd.f32 %v454, %v2138
      %v2140 = vpop.f32.mrb[0].mxu0
      %v2141 = vadd.f32 %v450, %v2140
      %v2142 = vpop.f32.mrb[0].mxu0
      %v2143 = vadd.f32 %v454, %v2142
      %2144 = vmatprep.mubr.bf16.mxu0 0
      %2145 = vmatmul.mubr.bf16.gmra.mrb[0].mxu0 %v1330
      %v2146 = vpop.f32.mrb[0].mxu0
      %v2147 = vadd.f32 %v450, %v2146
      %v2148 = vpop.f32.mrb[0].mxu0
      %v2149 = vadd.f32 %v454, %v2148
      %v2150 = vpop.f32.mrb[0].mxu0
      %v2151 = vadd.f32 %v450, %v2150
      %v2152 = vpop.f32.mrb[0].mxu0
      %v2153 = vadd.f32 %v454, %v2152
      %2154 = vmatprep.mubr.bf16.mxu0 0
      %2155 = vmatmul.mubr.bf16.gmra.mrb[0].mxu0 %v1333
      %v2156 = vpop.f32.mrb[0].mxu0
      %v2157 = vadd.f32 %v450, %v2156
      %v2158 = vpop.f32.mrb[0].mxu0
      %v2159 = vadd.f32 %v454, %v2158
      %v2160 = vpop.f32.mrb[0].mxu0
      %v2161 = vadd.f32 %v450, %v2160
      %v2162 = vpop.f32.mrb[0].mxu0
      %v2163 = vadd.f32 %v454, %v2162
      %2164 = vmatprep.mubr.bf16.mxu0 0
      %2165 = vmatmul.mubr.bf16.gmra.mrb[0].mxu0 %v1336
      %v2166 = vpop.f32.mrb[0].mxu0
      %v2167 = vadd.f32 %v450, %v2166
      %v2168 = vpop.f32.mrb[0].mxu0
      %v2169 = vadd.f32 %v454, %v2168
      %v2170 = vpop.f32.mrb[0].mxu0
      %v2171 = vadd.f32 %v450, %v2170
      %v2172 = vpop.f32.mrb[0].mxu0
      %v2173 = vadd.f32 %v454, %v2172
      %2174 = vmatprep.mubr.bf16.mxu0 0
      %2175 = vmatmul.mubr.bf16.gmra.mrb[0].mxu0 %v1339
      %v2176 = vpop.f32.mrb[0].mxu0
      %v2177 = vadd.f32 %v450, %v2176
      %v2178 = vpop.f32.mrb[0].mxu0
      %v2179 = vadd.f32 %v454, %v2178
      %v2180 = vpop.f32.mrb[0].mxu0
      %v2181 = vadd.f32 %v450, %v2180
      %v2182 = vpop.f32.mrb[0].mxu0
      %v2183 = vadd.f32 %v454, %v2182
      %2184 = vmatprep.mubr.bf16.mxu0 0
      %2185 = vmatmul.mubr.bf16.gmra.mrb[0].mxu0 %v1342
      %v2186 = vpop.f32.mrb[0].mxu0
      %v2187 = vadd.f32 %v450, %v2186
      %v2188 = vpop.f32.mrb[0].mxu0
      %v2189 = vadd.f32 %v454, %v2188
      %v2190 = vpop.f32.mrb[0].mxu0
      %v2191 = vadd.f32 %v450, %v2190
      %v2192 = vpop.f32.mrb[0].mxu0
      %v2193 = vadd.f32 %v454, %v2192
      %2194 = vmatprep.mubr.bf16.mxu0 0
      %2195 = vmatmul.mubr.bf16.gmra.mrb[0].mxu0 %v1345
      %v2196 = vpop.f32.mrb[0].mxu0
      %v2197 = vadd.f32 %v450, %v2196
      %v2198 = vpop.f32.mrb[0].mxu0
      %v2199 = vadd.f32 %v454, %v2198
      %v2200 = vpop.f32.mrb[0].mxu0
      %v2201 = vadd.f32 %v450, %v2200
      %v2202 = vpop.f32.mrb[0].mxu0
      %v2203 = vadd.f32 %v454, %v2202
      %2204 = vmatprep.mubr.bf16.mxu0 0
      %2205 = vmatmul.mubr.bf16.gmra.mrb[0].mxu0 %v1348
      %v2206 = vpop.f32.mrb[0].mxu0
      %v2207 = vadd.f32 %v450, %v2206
      %v2208 = vpop.f32.mrb[0].mxu0
      %v2209 = vadd.f32 %v454, %v2208
      %v2210 = vpop.f32.mrb[0].mxu0
      %v2211 = vadd.f32 %v450, %v2210
      %v2212 = vpop.f32.mrb[0].mxu0
      %v2213 = vadd.f32 %v454, %v2212
      %2214 = vmatprep.mubr.bf16.mxu0 0
      %2215 = vmatmul.mubr.bf16.gmra.mrb[0].mxu0 %v1351
      %v2216 = vpop.f32.mrb[0].mxu0
      %v2217 = vadd.f32 %v450, %v2216
      %v2218 = vpop.f32.mrb[0].mxu0
      %v2219 = vadd.f32 %v454, %v2218
      %v2220 = vpop.f32.mrb[0].mxu0
      %v2221 = vadd.f32 %v450, %v2220
      %v2222 = vpop.f32.mrb[0].mxu0
      %v2223 = vadd.f32 %v454, %v2222
      %2224 = vmatprep.mubr.bf16.mxu0 0
      %2225 = vmatmul.mubr.bf16.gmra.mrb[0].mxu0 %v1354
      %v2226 = vpop.f32.mrb[0].mxu0
      %v2227 = vadd.f32 %v450, %v2226
      %v2228 = vpop.f32.mrb[0].mxu0
      %v2229 = vadd.f32 %v454, %v2228
      %v2230 = vpop.f32.mrb[0].mxu0
      %v2231 = vadd.f32 %v450, %v2230
      %v2232 = vpop.f32.mrb[0].mxu0
      %v2233 = vadd.f32 %v454, %v2232
      %2234 = vmatprep.mubr.bf16.mxu0 0
      %2235 = vmatmul.mubr.bf16.gmra.mrb[0].mxu0 %v1357
      %v2236 = vpop.f32.mrb[0].mxu0
      %v2237 = vadd.f32 %v450, %v2236
      %v2238 = vpop.f32.mrb[0].mxu0
      %v2239 = vadd.f32 %v454, %v2238
      %v2240 = vpop.f32.mrb[0].mxu0
      %v2241 = vadd.f32 %v450, %v2240
      %v2242 = vpop.f32.mrb[0].mxu0
      %v2243 = vadd.f32 %v454, %v2242
      %2244 = vmatprep.mubr.bf16.mxu0 0
      %2245 = vmatmul.mubr.bf16.gmra.mrb[0].mxu0 %v1360
      %v2246 = vpop.f32.mrb[0].mxu0
      %v2247 = vadd.f32 %v450, %v2246
      %v2248 = vpop.f32.mrb[0].mxu0
      %v2249 = vadd.f32 %v454, %v2248
      %v2250 = vpop.f32.mrb[0].mxu0
      %v2251 = vadd.f32 %v450, %v2250
      %v2252 = vpop.f32.mrb[0].mxu0
      %v2253 = vadd.f32 %v454, %v2252
      %2254 = vmatprep.mubr.bf16.mxu0 0
      %2255 = vmatmul.mubr.bf16.gmra.mrb[0].mxu0 %v1363
      %v2256 = vpop.f32.mrb[0].mxu0
      %v2257 = vadd.f32 %v450, %v2256
      %v2258 = vpop.f32.mrb[0].mxu0
      %v2259 = vadd.f32 %v454, %v2258
      %v2260 = vpop.f32.mrb[0].mxu0
      %v2261 = vadd.f32 %v450, %v2260
      %v2262 = vpop.f32.mrb[0].mxu0
      %v2263 = vadd.f32 %v454, %v2262
      %2264 = vmatprep.mubr.bf16.mxu0 0
      %2265 = vmatmul.mubr.bf16.gmra.mrb[0].mxu0 %v1366
      %v2266 = vpop.f32.mrb[0].mxu0
      %v2267 = vadd.f32 %v450, %v2266
      %v2268 = vpop.f32.mrb[0].mxu0
      %v2269 = vadd.f32 %v454, %v2268
      %v2270 = vpop.f32.mrb[0].mxu0
      %v2271 = vadd.f32 %v450, %v2270
      %v2272 = vpop.f32.mrb[0].mxu0
      %v2273 = vadd.f32 %v454, %v2272
      %2274 = vmatprep.mubr.bf16.mxu0 0
      %2275 = vmatmul.mubr.bf16.gmra.mrb[0].mxu0 %v1369
      %v2276 = vpop.f32.mrb[0].mxu0
      %v2277 = vadd.f32 %v450, %v2276
      %v2278 = vpop.f32.mrb[0].mxu0
      %v2279 = vadd.f32 %v454, %v2278
      %v2280 = vpop.f32.mrb[0].mxu0
      %v2281 = vadd.f32 %v450, %v2280
      %v2282 = vpop.f32.mrb[0].mxu0
      %v2283 = vadd.f32 %v454, %v2282
      %2284 = vmatprep.mubr.bf16.mxu0 0
      %2285 = vmatmul.mubr.bf16.gmra.mrb[0].mxu0 %v1372
      %v2286 = vpop.f32.mrb[0].mxu0
      %v2287 = vadd.f32 %v450, %v2286
      %v2288 = vpop.f32.mrb[0].mxu0
      %v2289 = vadd.f32 %v454, %v2288
      %v2290 = vpop.f32.mrb[0].mxu0
      %v2291 = vadd.f32 %v450, %v2290
      %v2292 = vpop.f32.mrb[0].mxu0
      %v2293 = vadd.f32 %v454, %v2292
      %2294 = vmatprep.mubr.bf16.mxu0 0
      %2295 = vmatmul.mubr.bf16.gmra.mrb[0].mxu0 %v1375
      %v2296 = vpop.f32.mrb[0].mxu0
      %v2297 = vadd.f32 %v450, %v2296
      %v2298 = vpop.f32.mrb[0].mxu0
      %v2299 = vadd.f32 %v454, %v2298
      %v2300 = vpop.f32.mrb[0].mxu0
      %v2301 = vadd.f32 %v450, %v2300
      %v2302 = vpop.f32.mrb[0].mxu0
      %v2303 = vadd.f32 %v454, %v2302
      %2304 = vmatprep.mubr.bf16.mxu0 0
      %2305 = vmatmul.mubr.bf16.gmra.mrb[0].mxu0 %v1378
      %v2306 = vpop.f32.mrb[0].mxu0
      %v2307 = vadd.f32 %v450, %v2306
      %v2308 = vpop.f32.mrb[0].mxu0
      %v2309 = vadd.f32 %v454, %v2308
      %v2310 = vpop.f32.mrb[0].mxu0
      %v2311 = vadd.f32 %v450, %v2310
      %v2312 = vpop.f32.mrb[0].mxu0
      %v2313 = vadd.f32 %v454, %v2312
      %2314 = vmatprep.mubr.bf16.mxu0 0
      %2315 = vmatmul.mubr.bf16.gmra.mrb[0].mxu0 %v1381
      %v2316 = vpop.f32.mrb[0].mxu0
      %v2317 = vadd.f32 %v450, %v2316
      %v2318 = vpop.f32.mrb[0].mxu0
      %v2319 = vadd.f32 %v454, %v2318
      %v2320 = vpop.f32.mrb[0].mxu0
      %v2321 = vadd.f32 %v450, %v2320
      %v2322 = vpop.f32.mrb[0].mxu0
      %v2323 = vadd.f32 %v454, %v2322
      %2324 = vmatprep.mubr.bf16.mxu0 0
      %2325 = vmatmul.mubr.bf16.gmra.mrb[0].mxu0 %v1384
      %v2326 = vpop.f32.mrb[0].mxu0
      %v2327 = vadd.f32 %v450, %v2326
      %v2328 = vpop.f32.mrb[0].mxu0
      %v2329 = vadd.f32 %v454, %v2328
      %v2330 = vpop.f32.mrb[0].mxu0
      %v2331 = vadd.f32 %v450, %v2330
      %v2332 = vpop.f32.mrb[0].mxu0
      %v2333 = vadd.f32 %v454, %v2332
      %2334 = vmatprep.mubr.bf16.mxu0 0
      %2335 = vmatmul.mubr.bf16.gmra.mrb[0].mxu0 %v1387
      %v2336 = vpop.f32.mrb[0].mxu0
      %v2337 = vadd.f32 %v450, %v2336
      %v2338 = vpop.f32.mrb[0].mxu0
      %v2339 = vadd.f32 %v454, %v2338
      %v2340 = vpop.f32.mrb[0].mxu0
      %v2341 = vadd.f32 %v450, %v2340
      %v2342 = vpop.f32.mrb[0].mxu0
      %v2343 = vadd.f32 %v454, %v2342
      %2344 = vmatprep.mubr.bf16.mxu0 0
      %2345 = vmatmul.mubr.bf16.gmra.mrb[0].mxu0 %v1390
      %v2346 = vpop.f32.mrb[0].mxu0
      %v2347 = vadd.f32 %v450, %v2346
      %v2348 = vpop.f32.mrb[0].mxu0
      %v2349 = vadd.f32 %v454, %v2348
      %v2350 = vpop.f32.mrb[0].mxu0
      %v2351 = vadd.f32 %v450, %v2350
      %v2352 = vpop.f32.mrb[0].mxu0
      %v2353 = vadd.f32 %v454, %v2352
      %2354 = vmatprep.mubr.bf16.mxu0 0
      %2355 = vmatmul.mubr.bf16.gmra.mrb[0].mxu0 %v1393
      %v2356 = vpop.f32.mrb[0].mxu0
      %v2357 = vadd.f32 %v450, %v2356
      %v2358 = vpop.f32.mrb[0].mxu0
      %v2359 = vadd.f32 %v454, %v2358
      %v2360 = vpop.f32.mrb[0].mxu0
      %v2361 = vadd.f32 %v450, %v2360
      %v2362 = vpop.f32.mrb[0].mxu0
      %v2363 = vadd.f32 %v454, %v2362
      %2364 = vmatprep.mubr.bf16.mxu0 0
      %2365 = vmatmul.mubr.bf16.gmra.mrb[0].mxu0 %v1396
      %v2366 = vpop.f32.mrb[0].mxu0
      %v2367 = vadd.f32 %v450, %v2366
      %v2368 = vpop.f32.mrb[0].mxu0
      %v2369 = vadd.f32 %v454, %v2368
      %v2370 = vpop.f32.mrb[0].mxu0
      %v2371 = vadd.f32 %v450, %v2370
      %v2372 = vpop.f32.mrb[0].mxu0
      %v2373 = vadd.f32 %v454, %v2372
      %2374 = vmatprep.mubr.bf16.mxu0 0
      %2375 = vmatmul.mubr.bf16.gmra.mrb[0].mxu0 %v1399
      %v2376 = vpop.f32.mrb[0].mxu0
      %v2377 = vadd.f32 %v450, %v2376
      %v2378 = vpop.f32.mrb[0].mxu0
      %v2379 = vadd.f32 %v454, %v2378
      %v2380 = vpop.f32.mrb[0].mxu0
      %v2381 = vadd.f32 %v450, %v2380
      %v2382 = vpop.f32.mrb[0].mxu0
      %v2383 = vadd.f32 %v454, %v2382
      %2384 = vmatprep.mubr.bf16.mxu0 0
      %2385 = vmatmul.mubr.bf16.gmra.mrb[0].mxu0 %v1402
      %v2386 = vpop.f32.mrb[0].mxu0
      %v2387 = vadd.f32 %v450, %v2386
      %v2388 = vpop.f32.mrb[0].mxu0
      %v2389 = vadd.f32 %v454, %v2388
      %v2390 = vpop.f32.mrb[0].mxu0
      %v2391 = vadd.f32 %v450, %v2390
      %v2392 = vpop.f32.mrb[0].mxu0
      %v2393 = vadd.f32 %v454, %v2392
      %2394 = vmatprep.mubr.bf16.mxu0 0
      %2395 = vmatmul.mubr.bf16.gmra.mrb[0].mxu0 %v1405
      %v2396 = vpop.f32.mrb[0].mxu0
      %v2397 = vadd.f32 %v450, %v2396
      %v2398 = vpop.f32.mrb[0].mxu0
      %v2399 = vadd.f32 %v454, %v2398
      %v2400 = vpop.f32.mrb[0].mxu0
      %v2401 = vadd.f32 %v450, %v2400
      %v2402 = vpop.f32.mrb[0].mxu0
      %v2403 = vadd.f32 %v454, %v2402
      %2404 = vmatprep.mubr.bf16.mxu0 0
      %2405 = vmatmul.mubr.bf16.gmra.mrb[0].mxu0 %v1408
      %v2406 = vpop.f32.mrb[0].mxu0
      %v2407 = vadd.f32 %v450, %v2406
      %v2408 = vpop.f32.mrb[0].mxu0
      %v2409 = vadd.f32 %v454, %v2408
      %v2410 = vpop.f32.mrb[0].mxu0
      %v2411 = vadd.f32 %v450, %v2410
      %v2412 = vpop.f32.mrb[0].mxu0
      %v2413 = vadd.f32 %v454, %v2412
      %2414 = vmatprep.mubr.bf16.mxu0 0
      %2415 = vmatmul.mubr.bf16.gmra.mrb[0].mxu0 %v1411
      %v2416 = vpop.f32.mrb[0].mxu0
      %v2417 = vadd.f32 %v450, %v2416
      %v2418 = vpop.f32.mrb[0].mxu0
      %v2419 = vadd.f32 %v454, %v2418
      %v2420 = vpop.f32.mrb[0].mxu0
      %v2421 = vadd.f32 %v450, %v2420
      %v2422 = vpop.f32.mrb[0].mxu0
      %v2423 = vadd.f32 %v454, %v2422
      %2424 = vmatprep.mubr.bf16.mxu0 0
      %2425 = vmatmul.mubr.bf16.gmra.mrb[0].mxu0 %v1414
      %v2426 = vpop.f32.mrb[0].mxu0
      %v2427 = vadd.f32 %v450, %v2426
      %v2428 = vpop.f32.mrb[0].mxu0
      %v2429 = vadd.f32 %v454, %v2428
      %v2430 = vpop.f32.mrb[0].mxu0
      %v2431 = vadd.f32 %v450, %v2430
      %v2432 = vpop.f32.mrb[0].mxu0
      %v2433 = vadd.f32 %v454, %v2432
      %2434 = vmatprep.mubr.bf16.mxu0 0
      %2435 = vmatmul.mubr.bf16.gmra.mrb[0].mxu0 %v1417
      %v2436 = vpop.f32.mrb[0].mxu0
      %v2437 = vadd.f32 %v450, %v2436
      %v2438 = vpop.f32.mrb[0].mxu0
      %v2439 = vadd.f32 %v454, %v2438
      %v2440 = vpop.f32.mrb[0].mxu0
      %v2441 = vadd.f32 %v450, %v2440
      %v2442 = vpop.f32.mrb[0].mxu0
      %v2443 = vadd.f32 %v454, %v2442
      %2444 = vmatprep.mubr.bf16.mxu0 0
      %2445 = vmatmul.mubr.bf16.gmra.mrb[0].mxu0 %v1420
      %v2446 = vpop.f32.mrb[0].mxu0
      %v2447 = vadd.f32 %v450, %v2446
      %v2448 = vpop.f32.mrb[0].mxu0
      %v2449 = vadd.f32 %v454, %v2448
      %v2450 = vpop.f32.mrb[0].mxu0
      %v2451 = vadd.f32 %v450, %v2450
      %v2452 = vpop.f32.mrb[0].mxu0
      %v2453 = vadd.f32 %v454, %v2452
      %2454 = vmatprep.mubr.bf16.mxu0 0
      %2455 = vmatmul.mubr.bf16.gmra.mrb[0].mxu0 %v1423
      %v2456 = vpop.f32.mrb[0].mxu0
      %v2457 = vadd.f32 %v450, %v2456
      %v2458 = vpop.f32.mrb[0].mxu0
      %v2459 = vadd.f32 %v454, %v2458
      %v2460 = vpop.f32.mrb[0].mxu0
      %v2461 = vadd.f32 %v450, %v2460
      %v2462 = vpop.f32.mrb[0].mxu0
      %v2463 = vadd.f32 %v454, %v2462
      %2464 = vmatprep.mubr.bf16.mxu0 0
      %2465 = vmatmul.mubr.bf16.gmra.mrb[0].mxu0 %v1426
      %v2466 = vpop.f32.mrb[0].mxu0
      %v2467 = vadd.f32 %v450, %v2466
      %v2468 = vpop.f32.mrb[0].mxu0
      %v2469 = vadd.f32 %v454, %v2468
      %v2470 = vpop.f32.mrb[0].mxu0
      %v2471 = vadd.f32 %v450, %v2470
      %v2472 = vpop.f32.mrb[0].mxu0
      %v2473 = vadd.f32 %v454, %v2472
      %2474 = vmatprep.mubr.bf16.mxu0 0
      %2475 = vmatmul.mubr.bf16.gmra.mrb[0].mxu0 %v1429
      %v2476 = vpop.f32.mrb[0].mxu0
      %v2477 = vadd.f32 %v450, %v2476
      %v2478 = vpop.f32.mrb[0].mxu0
      %v2479 = vadd.f32 %v454, %v2478
      %v2480 = vpop.f32.mrb[0].mxu0
      %v2481 = vadd.f32 %v450, %v2480
      %v2482 = vpop.f32.mrb[0].mxu0
      %v2483 = vadd.f32 %v454, %v2482
      %2484 = vmatprep.mubr.bf16.mxu0 0
      %2485 = vmatmul.mubr.bf16.gmra.mrb[0].mxu0 %v1432
      %v2486 = vpop.f32.mrb[0].mxu0
      %v2487 = vadd.f32 %v450, %v2486
      %v2488 = vpop.f32.mrb[0].mxu0
      %v2489 = vadd.f32 %v454, %v2488
      %v2490 = vpop.f32.mrb[0].mxu0
      %v2491 = vadd.f32 %v450, %v2490
      %v2492 = vpop.f32.mrb[0].mxu0
      %v2493 = vadd.f32 %v454, %v2492
      %2494 = vmatprep.mubr.bf16.mxu0 0
      %2495 = vmatmul.mubr.bf16.gmra.mrb[0].mxu0 %v1435
      %v2496 = vpop.f32.mrb[0].mxu0
      %v2497 = vadd.f32 %v450, %v2496
      %v2498 = vpop.f32.mrb[0].mxu0
      %v2499 = vadd.f32 %v454, %v2498
      %v2500 = vpop.f32.mrb[0].mxu0
      %v2501 = vadd.f32 %v450, %v2500
      %v2502 = vpop.f32.mrb[0].mxu0
      %v2503 = vadd.f32 %v454, %v2502
      %2504 = vmatprep.mubr.bf16.mxu0 0
      %2505 = vmatmul.mubr.bf16.gmra.mrb[0].mxu0 %v1438
      %v2506 = vpop.f32.mrb[0].mxu0
      %v2507 = vadd.f32 %v450, %v2506
      %v2508 = vpop.f32.mrb[0].mxu0
      %v2509 = vadd.f32 %v454, %v2508
      %v2510 = vpop.f32.mrb[0].mxu0
      %v2511 = vadd.f32 %v450, %v2510
      %v2512 = vpop.f32.mrb[0].mxu0
      %v2513 = vadd.f32 %v454, %v2512
      %2514 = vmatprep.mubr.bf16.mxu0 0
      %2515 = vmatmul.mubr.bf16.gmra.mrb[0].mxu0 %v1441
      %v2516 = vpop.f32.mrb[0].mxu0
      %v2517 = vadd.f32 %v450, %v2516
      %v2518 = vpop.f32.mrb[0].mxu0
      %v2519 = vadd.f32 %v454, %v2518
      %v2520 = vpop.f32.mrb[0].mxu0
      %v2521 = vadd.f32 %v450, %v2520
      %v2522 = vpop.f32.mrb[0].mxu0
      %v2523 = vadd.f32 %v454, %v2522
      %2524 = vmatprep.mubr.bf16.mxu0 0
      %2525 = vmatmul.mubr.bf16.gmra.mrb[0].mxu0 %v1444
      %v2526 = vpop.f32.mrb[0].mxu0
      %v2527 = vadd.f32 %v450, %v2526
      %v2528 = vpop.f32.mrb[0].mxu0
      %v2529 = vadd.f32 %v454, %v2528
      %v2530 = vpop.f32.mrb[0].mxu0
      %v2531 = vadd.f32 %v450, %v2530
      %v2532 = vpop.f32.mrb[0].mxu0
      %v2533 = vadd.f32 %v454, %v2532
      %2534 = vmatprep.mubr.bf16.mxu0 0
      %2535 = vmatmul.mubr.bf16.gmra.mrb[0].mxu0 %v1447
      %v2536 = vpop.f32.mrb[0].mxu0
      %v2537 = vadd.f32 %v450, %v2536
      %v2538 = vpop.f32.mrb[0].mxu0
      %v2539 = vadd.f32 %v454, %v2538
      %v2540 = vpop.f32.mrb[0].mxu0
      %v2541 = vadd.f32 %v450, %v2540
      %v2542 = vpop.f32.mrb[0].mxu0
      %v2543 = vadd.f32 %v454, %v2542
      %2544 = vmatprep.mubr.bf16.mxu0 0
      %2545 = vmatmul.mubr.bf16.gmra.mrb[0].mxu0 %v1450
      %v2546 = vpop.f32.mrb[0].mxu0
      %v2547 = vadd.f32 %v450, %v2546
      %v2548 = vpop.f32.mrb[0].mxu0
      %v2549 = vadd.f32 %v454, %v2548
      %v2550 = vpop.f32.mrb[0].mxu0
      %v2551 = vadd.f32 %v450, %v2550
      %v2552 = vpop.f32.mrb[0].mxu0
      %v2553 = vadd.f32 %v454, %v2552
      %2554 = vmatprep.mubr.bf16.mxu0 0
      %2555 = vmatmul.mubr.bf16.gmra.mrb[0].mxu0 %v1453
      %v2556 = vpop.f32.mrb[0].mxu0
      %v2557 = vadd.f32 %v450, %v2556
      %v2558 = vpop.f32.mrb[0].mxu0
      %v2559 = vadd.f32 %v454, %v2558
      %v2560 = vpop.f32.mrb[0].mxu0
      %v2561 = vadd.f32 %v450, %v2560
      %v2562 = vpop.f32.mrb[0].mxu0
      %v2563 = vadd.f32 %v454, %v2562
      %2564 = vmatprep.mubr.bf16.mxu0 0
      %2565 = vmatmul.mubr.bf16.gmra.mrb[0].mxu0 %v1456
      %v2566 = vpop.f32.mrb[0].mxu0
      %v2567 = vadd.f32 %v450, %v2566
      %v2568 = vpop.f32.mrb[0].mxu0
      %v2569 = vadd.f32 %v454, %v2568
      %v2570 = vpop.f32.mrb[0].mxu0
      %v2571 = vadd.f32 %v450, %v2570
      %v2572 = vpop.f32.mrb[0].mxu0
      %v2573 = vadd.f32 %v454, %v2572
      %2574 = vmatprep.mubr.bf16.mxu0 0
      %2575 = vmatmul.mubr.bf16.gmra.mrb[0].mxu0 %v1459
      %v2576 = vpop.f32.mrb[0].mxu0
      %v2577 = vadd.f32 %v450, %v2576
      %v2578 = vpop.f32.mrb[0].mxu0
      %v2579 = vadd.f32 %v454, %v2578
      %v2580 = vpop.f32.mrb[0].mxu0
      %v2581 = vadd.f32 %v450, %v2580
      %v2582 = vpop.f32.mrb[0].mxu0
      %v2583 = vadd.f32 %v454, %v2582
      %2584 = vmatprep.mubr.bf16.mxu0 0
      %2585 = vmatmul.mubr.bf16.gmra.mrb[0].mxu0 %v1462
      %v2586 = vpop.f32.mrb[0].mxu0
      %v2587 = vadd.f32 %v450, %v2586
      %v2588 = vpop.f32.mrb[0].mxu0
      %v2589 = vadd.f32 %v454, %v2588
      %v2590 = vpop.f32.mrb[0].mxu0
      %v2591 = vadd.f32 %v450, %v2590
      %v2592 = vpop.f32.mrb[0].mxu0
      %v2593 = vadd.f32 %v454, %v2592
      %2594 = vmatprep.mubr.bf16.mxu0 0
      %2595 = vmatmul.mubr.bf16.gmra.mrb[0].mxu0 %v1465
      %v2596 = vpop.f32.mrb[0].mxu0
      %v2597 = vadd.f32 %v450, %v2596
      %v2598 = vpop.f32.mrb[0].mxu0
      %v2599 = vadd.f32 %v454, %v2598
      %v2600 = vpop.f32.mrb[0].mxu0
      %v2601 = vadd.f32 %v450, %v2600
      %v2602 = vpop.f32.mrb[0].mxu0
      %v2603 = vadd.f32 %v454, %v2602
      %2604 = vmatprep.mubr.bf16.mxu0 0
      %2605 = vmatmul.mubr.bf16.gmra.mrb[0].mxu0 %v1468
      %v2606 = vpop.f32.mrb[0].mxu0
      %v2607 = vadd.f32 %v450, %v2606
      %v2608 = vpop.f32.mrb[0].mxu0
      %v2609 = vadd.f32 %v454, %v2608
      %v2610 = vpop.f32.mrb[0].mxu0
      %v2611 = vadd.f32 %v450, %v2610
      %v2612 = vpop.f32.mrb[0].mxu0
      %v2613 = vadd.f32 %v454, %v2612
      %2614 = vmatprep.mubr.bf16.mxu0 0
      %2615 = vmatmul.mubr.bf16.gmra.mrb[0].mxu0 %v1471
      %v2616 = vpop.f32.mrb[0].mxu0
      %v2617 = vadd.f32 %v450, %v2616
      %v2618 = vpop.f32.mrb[0].mxu0
      %v2619 = vadd.f32 %v454, %v2618
      %v2620 = vpop.f32.mrb[0].mxu0
      %v2621 = vadd.f32 %v450, %v2620
      %v2622 = vpop.f32.mrb[0].mxu0
      %v2623 = vadd.f32 %v454, %v2622
      %2624 = vmatprep.mubr.bf16.mxu0 0
      %2625 = vmatmul.mubr.bf16.gmra.mrb[0].mxu0 %v1474
      %v2626 = vpop.f32.mrb[0].mxu0
      %v2627 = vadd.f32 %v450, %v2626
      %v2628 = vpop.f32.mrb[0].mxu0
      %v2629 = vadd.f32 %v454, %v2628
      %v2630 = vpop.f32.mrb[0].mxu0
      %v2631 = vadd.f32 %v450, %v2630
      %v2632 = vpop.f32.mrb[0].mxu0
      %v2633 = vadd.f32 %v454, %v2632
      %2634 = vmatprep.mubr.bf16.mxu0 0
      %2635 = vmatmul.mubr.bf16.gmra.mrb[0].mxu0 %v1477
      %v2636 = vpop.f32.mrb[0].mxu0
      %v2637 = vadd.f32 %v450, %v2636
      %v2638 = vpop.f32.mrb[0].mxu0
      %v2639 = vadd.f32 %v454, %v2638
      %v2640 = vpop.f32.mrb[0].mxu0
      %v2641 = vadd.f32 %v450, %v2640
      %v2642 = vpop.f32.mrb[0].mxu0
      %v2643 = vadd.f32 %v454, %v2642
      %2644 = vmatprep.mubr.bf16.mxu0 0
      %2645 = vmatmul.mubr.bf16.gmra.mrb[0].mxu0 %v1480
      %v2646 = vpop.f32.mrb[0].mxu0
      %v2647 = vadd.f32 %v450, %v2646
      %v2648 = vpop.f32.mrb[0].mxu0
      %v2649 = vadd.f32 %v454, %v2648
      %v2650 = vpop.f32.mrb[0].mxu0
      %v2651 = vadd.f32 %v450, %v2650
      %v2652 = vpop.f32.mrb[0].mxu0
      %v2653 = vadd.f32 %v454, %v2652
      %2654 = vmatprep.mubr.bf16.mxu0 0
      %2655 = vmatmul.mubr.bf16.gmra.mrb[0].mxu0 %v1483
      %v2656 = vpop.f32.mrb[0].mxu0
      %v2657 = vadd.f32 %v450, %v2656
      %v2658 = vpop.f32.mrb[0].mxu0
      %v2659 = vadd.f32 %v454, %v2658
      %v2660 = vpop.f32.mrb[0].mxu0
      %v2661 = vadd.f32 %v450, %v2660
      %v2662 = vpop.f32.mrb[0].mxu0
      %v2663 = vadd.f32 %v454, %v2662
      %2664 = vmatprep.mubr.bf16.mxu0 0
      %2665 = vmatmul.mubr.bf16.gmra.mrb[0].mxu0 %v1486
      %v2666 = vpop.f32.mrb[0].mxu0
      %v2667 = vadd.f32 %v450, %v2666
      %v2668 = vpop.f32.mrb[0].mxu0
      %v2669 = vadd.f32 %v454, %v2668
      %v2670 = vpop.f32.mrb[0].mxu0
      %v2671 = vadd.f32 %v450, %v2670
      %v2672 = vpop.f32.mrb[0].mxu0
      %v2673 = vadd.f32 %v454, %v2672
      %2674 = vmatprep.mubr.bf16.mxu0 0
      %2675 = vmatmul.mubr.bf16.gmra.mrb[0].mxu0 %v1489
      %v2676 = vpop.f32.mrb[0].mxu0
      %v2677 = vadd.f32 %v450, %v2676
      %v2678 = vpop.f32.mrb[0].mxu0
      %v2679 = vadd.f32 %v454, %v2678
      %v2680 = vpop.f32.mrb[0].mxu0
      %v2681 = vadd.f32 %v450, %v2680
      %v2682 = vpop.f32.mrb[0].mxu0
      %v2683 = vadd.f32 %v454, %v2682
      %2684 = vmatprep.mubr.bf16.mxu0 0
      %2685 = vmatmul.mubr.bf16.gmra.mrb[0].mxu0 %v1492
      %v2686 = vpop.f32.mrb[0].mxu0
      %v2687 = vadd.f32 %v450, %v2686
      %v2688 = vpop.f32.mrb[0].mxu0
      %v2689 = vadd.f32 %v454, %v2688
      %v2690 = vpop.f32.mrb[0].mxu0
      %v2691 = vadd.f32 %v450, %v2690
      %v2692 = vpop.f32.mrb[0].mxu0
      %v2693 = vadd.f32 %v454, %v2692
      %2694 = vmatprep.mubr.bf16.mxu0 0
      %2695 = vmatmul.mubr.bf16.gmra.mrb[0].mxu0 %v1495
      %v2696 = vpop.f32.mrb[0].mxu0
      %v2697 = vadd.f32 %v450, %v2696
      %v2698 = vpop.f32.mrb[0].mxu0
      %v2699 = vadd.f32 %v454, %v2698
      %v2700 = vpop.f32.mrb[0].mxu0
      %v2701 = vadd.f32 %v450, %v2700
      %v2702 = vpop.f32.mrb[0].mxu0
      %v2703 = vadd.f32 %v454, %v2702
      %2704 = vmatprep.mubr.bf16.mxu0 0
      %2705 = vmatmul.mubr.bf16.gmra.mrb[0].mxu0 %v1498
      %v2706 = vpop.f32.mrb[0].mxu0
      %v2707 = vadd.f32 %v450, %v2706
      %v2708 = vpop.f32.mrb[0].mxu0
      %v2709 = vadd.f32 %v454, %v2708
      %v2710 = vpop.f32.mrb[0].mxu0
      %v2711 = vadd.f32 %v450, %v2710
      %v2712 = vpop.f32.mrb[0].mxu0
      %v2713 = vadd.f32 %v454, %v2712
      %2714 = vmatprep.mubr.bf16.mxu0 0
      %2715 = vmatmul.mubr.bf16.gmra.mrb[0].mxu0 %v1501
      %v2716 = vpop.f32.mrb[0].mxu0
      %v2717 = vadd.f32 %v450, %v2716
      %v2718 = vpop.f32.mrb[0].mxu0
      %v2719 = vadd.f32 %v454, %v2718
      %v2720 = vpop.f32.mrb[0].mxu0
      %v2721 = vadd.f32 %v450, %v2720
      %v2722 = vpop.f32.mrb[0].mxu0
      %v2723 = vadd.f32 %v454, %v2722
      %2724 = vmatprep.mubr.bf16.mxu0 0
      %2725 = vmatmul.mubr.bf16.gmra.mrb[0].mxu0 %v1504
      %v2726 = vpop.f32.mrb[0].mxu0
      %v2727 = vadd.f32 %v450, %v2726
      %v2728 = vpop.f32.mrb[0].mxu0
      %v2729 = vadd.f32 %v454, %v2728
      %v2730 = vpop.f32.mrb[0].mxu0
      %v2731 = vadd.f32 %v450, %v2730
      %v2732 = vpop.f32.mrb[0].mxu0
      %v2733 = vadd.f32 %v454, %v2732
      %2734 = vmatprep.mubr.bf16.mxu0 0
      %2735 = vmatmul.mubr.bf16.gmra.mrb[0].mxu0 %v1507
      %v2736 = vpop.f32.mrb[0].mxu0
      %v2737 = vadd.f32 %v450, %v2736
      %v2738 = vpop.f32.mrb[0].mxu0
      %v2739 = vadd.f32 %v454, %v2738
      %v2740 = vpop.f32.mrb[0].mxu0
      %v2741 = vadd.f32 %v450, %v2740
      %v2742 = vpop.f32.mrb[0].mxu0
      %v2743 = vadd.f32 %v454, %v2742
      %2744 = vmatprep.mubr.bf16.mxu0 0
      %2745 = vmatmul.mubr.bf16.gmra.mrb[0].mxu0 %v1510
      %v2746 = vpop.f32.mrb[0].mxu0
      %v2747 = vadd.f32 %v450, %v2746
      %v2748 = vpop.f32.mrb[0].mxu0
      %v2749 = vadd.f32 %v454, %v2748
      %v2750 = vpop.f32.mrb[0].mxu0
      %v2751 = vadd.f32 %v450, %v2750
      %v2752 = vpop.f32.mrb[0].mxu0
      %v2753 = vadd.f32 %v454, %v2752
      %2754 = vmatprep.mubr.bf16.mxu0 0
      %2755 = vmatmul.mubr.bf16.gmra.mrb[0].mxu0 %v1513
      %v2756 = vpop.f32.mrb[0].mxu0
      %v2757 = vadd.f32 %v450, %v2756
      %v2758 = vpop.f32.mrb[0].mxu0
      %v2759 = vadd.f32 %v454, %v2758
      %v2760 = vpop.f32.mrb[0].mxu0
      %v2761 = vadd.f32 %v450, %v2760
      %v2762 = vpop.f32.mrb[0].mxu0
      %v2763 = vadd.f32 %v454, %v2762
      %2764 = vmatprep.mubr.bf16.mxu0 0
      %2765 = vmatmul.mubr.bf16.gmra.mrb[0].mxu0 %v1516
      %v2766 = vpop.f32.mrb[0].mxu0
      %v2767 = vadd.f32 %v450, %v2766
      %v2768 = vpop.f32.mrb[0].mxu0
      %v2769 = vadd.f32 %v454, %v2768
      %v2770 = vpop.f32.mrb[0].mxu0
      %v2771 = vadd.f32 %v450, %v2770
      %v2772 = vpop.f32.mrb[0].mxu0
      %v2773 = vadd.f32 %v454, %v2772
      %2774 = vmatprep.mubr.bf16.mxu0 0
      %2775 = vmatmul.mubr.bf16.gmra.mrb[0].mxu0 %v1519
      %v2776 = vpop.f32.mrb[0].mxu0
      %v2777 = vadd.f32 %v450, %v2776
      %v2778 = vpop.f32.mrb[0].mxu0
      %v2779 = vadd.f32 %v454, %v2778
      %v2780 = vpop.f32.mrb[0].mxu0
      %v2781 = vadd.f32 %v450, %v2780
      %v2782 = vpop.f32.mrb[0].mxu0
      %v2783 = vadd.f32 %v454, %v2782
      %2784 = vmatprep.mubr.bf16.mxu0 0
      %2785 = vmatmul.mubr.bf16.gmra.mrb[0].mxu0 %v1522
      %v2786 = vpop.f32.mrb[0].mxu0
      %v2787 = vadd.f32 %v450, %v2786
      %v2788 = vpop.f32.mrb[0].mxu0
      %v2789 = vadd.f32 %v454, %v2788
      %v2790 = vpop.f32.mrb[0].mxu0
      %v2791 = vadd.f32 %v450, %v2790
      %v2792 = vpop.f32.mrb[0].mxu0
      %v2793 = vadd.f32 %v454, %v2792
      %2794 = vmatprep.mubr.bf16.mxu0 0
      %2795 = vmatmul.mubr.bf16.gmra.mrb[0].mxu0 %v1525
      %v2796 = vpop.f32.mrb[0].mxu0
      %v2797 = vadd.f32 %v450, %v2796
      %v2798 = vpop.f32.mrb[0].mxu0
      %v2799 = vadd.f32 %v454, %v2798
      %v2800 = vpop.f32.mrb[0].mxu0
      %v2801 = vadd.f32 %v450, %v2800
      %v2802 = vpop.f32.mrb[0].mxu0
      %v2803 = vadd.f32 %v454, %v2802
      %2804 = vmatprep.mubr.bf16.mxu0 0
      %2805 = vmatmul.mubr.bf16.gmra.mrb[0].mxu0 %v1528
      %v2806 = vpop.f32.mrb[0].mxu0
      %v2807 = vadd.f32 %v450, %v2806
      %v2808 = vpop.f32.mrb[0].mxu0
      %v2809 = vadd.f32 %v454, %v2808
      %v2810 = vpop.f32.mrb[0].mxu0
      %v2811 = vadd.f32 %v450, %v2810
      %v2812 = vpop.f32.mrb[0].mxu0
      %v2813 = vadd.f32 %v454, %v2812
      %2814 = vmatprep.mubr.bf16.mxu0 0
      %2815 = vmatmul.mubr.bf16.gmra.mrb[0].mxu0 %v1531
      %v2816 = vpop.f32.mrb[0].mxu0
      %v2817 = vadd.f32 %v450, %v2816
      %v2818 = vpop.f32.mrb[0].mxu0
      %v2819 = vadd.f32 %v454, %v2818
      %v2820 = vpop.f32.mrb[0].mxu0
      %v2821 = vadd.f32 %v450, %v2820
      %v2822 = vpop.f32.mrb[0].mxu0
      %v2823 = vadd.f32 %v454, %v2822
      %2824 = vmatprep.mubr.bf16.mxu0 0
      %2825 = vmatmul.mubr.bf16.gmra.mrb[0].mxu0 %v1534
      %v2826 = vpop.f32.mrb[0].mxu0
      %v2827 = vadd.f32 %v450, %v2826
      %v2828 = vpop.f32.mrb[0].mxu0
      %v2829 = vadd.f32 %v454, %v2828
      %v2830 = vpop.f32.mrb[0].mxu0
      %v2831 = vadd.f32 %v450, %v2830
      %v2832 = vpop.f32.mrb[0].mxu0
      %v2833 = vadd.f32 %v454, %v2832
      %2834 = vmatprep.mubr.bf16.mxu0 0
      %2835 = vmatmul.mubr.bf16.gmra.mrb[0].mxu0 %v1537
      %v2836 = vpop.f32.mrb[0].mxu0
      %v2837 = vadd.f32 %v450, %v2836
      %v2838 = vpop.f32.mrb[0].mxu0
      %v2839 = vadd.f32 %v454, %v2838
      %v2840 = vpop.f32.mrb[0].mxu0
      %v2841 = vadd.f32 %v450, %v2840
      %v2842 = vpop.f32.mrb[0].mxu0
      %v2843 = vadd.f32 %v454, %v2842
      %2844 = vmatprep.mubr.bf16.mxu0 0
      %2845 = vmatmul.mubr.bf16.gmra.mrb[0].mxu0 %v1540
      %v2846 = vpop.f32.mrb[0].mxu0
      %v2847 = vadd.f32 %v450, %v2846
      %v2848 = vpop.f32.mrb[0].mxu0
      %v2849 = vadd.f32 %v454, %v2848
      %v2850 = vpop.f32.mrb[0].mxu0
      %v2851 = vadd.f32 %v450, %v2850
      %v2852 = vpop.f32.mrb[0].mxu0
      %v2853 = vadd.f32 %v454, %v2852
      %2854 = vdwg.mxu0
      %2855 = vst [vmem:[%s174] sm:$0xff] %v1577
      %vm2856 = vcmask 261120
      %2857 = vst.msk [vmem:[%s174 + $0x8] sm:$0xff] %vm2856, %v1579
      %2858 = vst [vmem:[%s174 + $0x10] sm:$0xff] %v1581
      %2859 = vst.msk [vmem:[%s174 + $0x18] sm:$0xff] %vm2856, %v1583
      %2860 = vst [vmem:[%s174 + $0x20] sm:$0xff] %v1587
      %2861 = vst.msk [vmem:[%s174 + $0x28] sm:$0xff] %vm2856, %v1589
      %2862 = vst [vmem:[%s174 + $0x30] sm:$0xff] %v1591
      %2863 = vst.msk [vmem:[%s174 + $0x38] sm:$0xff] %vm2856, %v1593
      %2864 = vst [vmem:[%s174 + $0x40] sm:$0xff] %v1597
      %2865 = vst.msk [vmem:[%s174 + $0x48] sm:$0xff] %vm2856, %v1599
      %2866 = vst [vmem:[%s174 + $0x50] sm:$0xff] %v1601
      %2867 = vst.msk [vmem:[%s174 + $0x58] sm:$0xff] %vm2856, %v1603
      %2868 = vst [vmem:[%s174 + $0x60] sm:$0xff] %v1607
      %2869 = vst.msk [vmem:[%s174 + $0x68] sm:$0xff] %vm2856, %v1609
      %2870 = vst [vmem:[%s174 + $0x70] sm:$0xff] %v1611
      %2871 = vst.msk [vmem:[%s174 + $0x78] sm:$0xff] %vm2856, %v1613
      %2872 = vst [vmem:[%s174 + $0x80] sm:$0xff] %v1617
      %2873 = vst.msk [vmem:[%s174 + $0x88] sm:$0xff] %vm2856, %v1619
      %2874 = vst [vmem:[%s174 + $0x90] sm:$0xff] %v1621
      %2875 = vst.msk [vmem:[%s174 + $0x98] sm:$0xff] %vm2856, %v1623
      %2876 = vst [vmem:[%s174 + $0xa0] sm:$0xff] %v1627
      %2877 = vst.msk [vmem:[%s174 + $0xa8] sm:$0xff] %vm2856, %v1629
      %2878 = vst [vmem:[%s174 + $0xb0] sm:$0xff] %v1631
      %2879 = vst.msk [vmem:[%s174 + $0xb8] sm:$0xff] %vm2856, %v1633
      %2880 = vst [vmem:[%s174 + $0xc0] sm:$0xff] %v1637
      %2881 = vst.msk [vmem:[%s174 + $0xc8] sm:$0xff] %vm2856, %v1639
      %2882 = vst [vmem:[%s174 + $0xd0] sm:$0xff] %v1641
      %2883 = vst.msk [vmem:[%s174 + $0xd8] sm:$0xff] %vm2856, %v1643
      %2884 = vst [vmem:[%s174 + $0xe0] sm:$0xff] %v1647
      %2885 = vst.msk [vmem:[%s174 + $0xe8] sm:$0xff] %vm2856, %v1649
      %2886 = vst [vmem:[%s174 + $0xf0] sm:$0xff] %v1651
      %2887 = vst.msk [vmem:[%s174 + $0xf8] sm:$0xff] %vm2856, %v1653
      %2888 = vst [vmem:[%s174 + $0x100] sm:$0xff] %v1657
      %2889 = vst.msk [vmem:[%s174 + $0x108] sm:$0xff] %vm2856, %v1659
      %2890 = vst [vmem:[%s174 + $0x110] sm:$0xff] %v1661
      %2891 = vst.msk [vmem:[%s174 + $0x118] sm:$0xff] %vm2856, %v1663
      %2892 = vst [vmem:[%s174 + $0x120] sm:$0xff] %v1667
      %2893 = vst.msk [vmem:[%s174 + $0x128] sm:$0xff] %vm2856, %v1669
      %2894 = vst [vmem:[%s174 + $0x130] sm:$0xff] %v1671
      %2895 = vst.msk [vmem:[%s174 + $0x138] sm:$0xff] %vm2856, %v1673
      %2896 = vst [vmem:[%s174 + $0x140] sm:$0xff] %v1677
      %2897 = vst.msk [vmem:[%s174 + $0x148] sm:$0xff] %vm2856, %v1679
      %2898 = vst [vmem:[%s174 + $0x150] sm:$0xff] %v1681
      %2899 = vst.msk [vmem:[%s174 + $0x158] sm:$0xff] %vm2856, %v1683
      %2900 = vst [vmem:[%s174 + $0x160] sm:$0xff] %v1687
      %2901 = vst.msk [vmem:[%s174 + $0x168] sm:$0xff] %vm2856, %v1689
      %2902 = vst [vmem:[%s174 + $0x170] sm:$0xff] %v1691
      %2903 = vst.msk [vmem:[%s174 + $0x178] sm:$0xff] %vm2856, %v1693
      %2904 = vst [vmem:[%s174 + $0x180] sm:$0xff] %v1697
      %2905 = vst.msk [vmem:[%s174 + $0x188] sm:$0xff] %vm2856, %v1699
      %2906 = vst [vmem:[%s174 + $0x190] sm:$0xff] %v1701
      %2907 = vst.msk [vmem:[%s174 + $0x198] sm:$0xff] %vm2856, %v1703
      %2908 = vst [vmem:[%s174 + $0x1a0] sm:$0xff] %v1707
      %2909 = vst.msk [vmem:[%s174 + $0x1a8] sm:$0xff] %vm2856, %v1709
      %2910 = vst [vmem:[%s174 + $0x1b0] sm:$0xff] %v1711
      %2911 = vst.msk [vmem:[%s174 + $0x1b8] sm:$0xff] %vm2856, %v1713
      %2912 = vst [vmem:[%s174 + $0x1c0] sm:$0xff] %v1717
      %2913 = vst.msk [vmem:[%s174 + $0x1c8] sm:$0xff] %vm2856, %v1719
      %2914 = vst [vmem:[%s174 + $0x1d0] sm:$0xff] %v1721
      %2915 = vst.msk [vmem:[%s174 + $0x1d8] sm:$0xff] %vm2856, %v1723
      %2916 = vst [vmem:[%s174 + $0x1e0] sm:$0xff] %v1727
      %2917 = vst.msk [vmem:[%s174 + $0x1e8] sm:$0xff] %vm2856, %v1729
      %2918 = vst [vmem:[%s174 + $0x1f0] sm:$0xff] %v1731
      %2919 = vst.msk [vmem:[%s174 + $0x1f8] sm:$0xff] %vm2856, %v1733
      %2920 = vst [vmem:[%s174 + $0x200] sm:$0xff] %v1737
      %2921 = vst.msk [vmem:[%s174 + $0x208] sm:$0xff] %vm2856, %v1739
      %2922 = vst [vmem:[%s174 + $0x210] sm:$0xff] %v1741
      %2923 = vst.msk [vmem:[%s174 + $0x218] sm:$0xff] %vm2856, %v1743
      %2924 = vst [vmem:[%s174 + $0x220] sm:$0xff] %v1747
      %2925 = vst.msk [vmem:[%s174 + $0x228] sm:$0xff] %vm2856, %v1749
      %2926 = vst [vmem:[%s174 + $0x230] sm:$0xff] %v1751
      %2927 = vst.msk [vmem:[%s174 + $0x238] sm:$0xff] %vm2856, %v1753
      %2928 = vst [vmem:[%s174 + $0x240] sm:$0xff] %v1757
      %2929 = vst.msk [vmem:[%s174 + $0x248] sm:$0xff] %vm2856, %v1759
      %2930 = vst [vmem:[%s174 + $0x250] sm:$0xff] %v1761
      %2931 = vst.msk [vmem:[%s174 + $0x258] sm:$0xff] %vm2856, %v1763
      %2932 = vst [vmem:[%s174 + $0x260] sm:$0xff] %v1767
      %2933 = vst.msk [vmem:[%s174 + $0x268] sm:$0xff] %vm2856, %v1769
      %2934 = vst [vmem:[%s174 + $0x270] sm:$0xff] %v1771
      %2935 = vst.msk [vmem:[%s174 + $0x278] sm:$0xff] %vm2856, %v1773
      %2936 = vst [vmem:[%s174 + $0x280] sm:$0xff] %v1777
      %2937 = vst.msk [vmem:[%s174 + $0x288] sm:$0xff] %vm2856, %v1779
      %2938 = vst [vmem:[%s174 + $0x290] sm:$0xff] %v1781
      %2939 = vst.msk [vmem:[%s174 + $0x298] sm:$0xff] %vm2856, %v1783
      %2940 = vst [vmem:[%s174 + $0x2a0] sm:$0xff] %v1787
      %2941 = vst.msk [vmem:[%s174 + $0x2a8] sm:$0xff] %vm2856, %v1789
      %2942 = vst [vmem:[%s174 + $0x2b0] sm:$0xff] %v1791
      %2943 = vst.msk [vmem:[%s174 + $0x2b8] sm:$0xff] %vm2856, %v1793
      %2944 = vst [vmem:[%s174 + $0x2c0] sm:$0xff] %v1797
      %2945 = vst.msk [vmem:[%s174 + $0x2c8] sm:$0xff] %vm2856, %v1799
      %2946 = vst [vmem:[%s174 + $0x2d0] sm:$0xff] %v1801
      %2947 = vst.msk [vmem:[%s174 + $0x2d8] sm:$0xff] %vm2856, %v1803
      %2948 = vst [vmem:[%s174 + $0x2e0] sm:$0xff] %v1807
      %2949 = vst.msk [vmem:[%s174 + $0x2e8] sm:$0xff] %vm2856, %v1809
      %2950 = vst [vmem:[%s174 + $0x2f0] sm:$0xff] %v1811
      %2951 = vst.msk [vmem:[%s174 + $0x2f8] sm:$0xff] %vm2856, %v1813
      %2952 = vst [vmem:[%s174 + $0x300] sm:$0xff] %v1817
      %2953 = vst.msk [vmem:[%s174 + $0x308] sm:$0xff] %vm2856, %v1819
      %2954 = vst [vmem:[%s174 + $0x310] sm:$0xff] %v1821
      %2955 = vst.msk [vmem:[%s174 + $0x318] sm:$0xff] %vm2856, %v1823
      %2956 = vst [vmem:[%s174 + $0x320] sm:$0xff] %v1827
      %2957 = vst.msk [vmem:[%s174 + $0x328] sm:$0xff] %vm2856, %v1829
      %2958 = vst [vmem:[%s174 + $0x330] sm:$0xff] %v1831
      %2959 = vst.msk [vmem:[%s174 + $0x338] sm:$0xff] %vm2856, %v1833
      %2960 = vst [vmem:[%s174 + $0x340] sm:$0xff] %v1837
      %2961 = vst.msk [vmem:[%s174 + $0x348] sm:$0xff] %vm2856, %v1839
      %2962 = vst [vmem:[%s174 + $0x350] sm:$0xff] %v1841
      %2963 = vst.msk [vmem:[%s174 + $0x358] sm:$0xff] %vm2856, %v1843
      %2964 = vst [vmem:[%s174 + $0x360] sm:$0xff] %v1847
      %2965 = vst.msk [vmem:[%s174 + $0x368] sm:$0xff] %vm2856, %v1849
      %2966 = vst [vmem:[%s174 + $0x370] sm:$0xff] %v1851
      %2967 = vst.msk [vmem:[%s174 + $0x378] sm:$0xff] %vm2856, %v1853
      %2968 = vst [vmem:[%s174 + $0x380] sm:$0xff] %v1857
      %2969 = vst.msk [vmem:[%s174 + $0x388] sm:$0xff] %vm2856, %v1859
      %2970 = vst [vmem:[%s174 + $0x390] sm:$0xff] %v1861
      %2971 = vst.msk [vmem:[%s174 + $0x398] sm:$0xff] %vm2856, %v1863
      %2972 = vst [vmem:[%s174 + $0x3a0] sm:$0xff] %v1867
      %2973 = vst.msk [vmem:[%s174 + $0x3a8] sm:$0xff] %vm2856, %v1869
      %2974 = vst [vmem:[%s174 + $0x3b0] sm:$0xff] %v1871
      %2975 = vst.msk [vmem:[%s174 + $0x3b8] sm:$0xff] %vm2856, %v1873
      %2976 = vst [vmem:[%s174 + $0x3c0] sm:$0xff] %v1877
      %2977 = vst.msk [vmem:[%s174 + $0x3c8] sm:$0xff] %vm2856, %v1879
      %2978 = vst [vmem:[%s174 + $0x3d0] sm:$0xff] %v1881
      %2979 = vst.msk [vmem:[%s174 + $0x3d8] sm:$0xff] %vm2856, %v1883
      %2980 = vst [vmem:[%s174 + $0x3e0] sm:$0xff] %v1887
      %2981 = vst.msk [vmem:[%s174 + $0x3e8] sm:$0xff] %vm2856, %v1889
      %2982 = vst [vmem:[%s174 + $0x3f0] sm:$0xff] %v1891
      %2983 = vst.msk [vmem:[%s174 + $0x3f8] sm:$0xff] %vm2856, %v1893
      %2984 = vst [vmem:[%s174 + $0x400] sm:$0xff] %v1897
      %2985 = vst.msk [vmem:[%s174 + $0x408] sm:$0xff] %vm2856, %v1899
      %2986 = vst [vmem:[%s174 + $0x410] sm:$0xff] %v1901
      %2987 = vst.msk [vmem:[%s174 + $0x418] sm:$0xff] %vm2856, %v1903
      %2988 = vst [vmem:[%s174 + $0x420] sm:$0xff] %v1907
      %2989 = vst.msk [vmem:[%s174 + $0x428] sm:$0xff] %vm2856, %v1909
      %2990 = vst [vmem:[%s174 + $0x430] sm:$0xff] %v1911
      %2991 = vst.msk [vmem:[%s174 + $0x438] sm:$0xff] %vm2856, %v1913
      %2992 = vst [vmem:[%s174 + $0x440] sm:$0xff] %v1917
      %2993 = vst.msk [vmem:[%s174 + $0x448] sm:$0xff] %vm2856, %v1919
      %2994 = vst [vmem:[%s174 + $0x450] sm:$0xff] %v1921
      %2995 = vst.msk [vmem:[%s174 + $0x458] sm:$0xff] %vm2856, %v1923
      %2996 = vst [vmem:[%s174 + $0x460] sm:$0xff] %v1927
      %2997 = vst.msk [vmem:[%s174 + $0x468] sm:$0xff] %vm2856, %v1929
      %2998 = vst [vmem:[%s174 + $0x470] sm:$0xff] %v1931
      %2999 = vst.msk [vmem:[%s174 + $0x478] sm:$0xff] %vm2856, %v1933
      %3000 = vst [vmem:[%s174 + $0x480] sm:$0xff] %v1937
      %3001 = vst.msk [vmem:[%s174 + $0x488] sm:$0xff] %vm2856, %v1939
      %3002 = vst [vmem:[%s174 + $0x490] sm:$0xff] %v1941
      %3003 = vst.msk [vmem:[%s174 + $0x498] sm:$0xff] %vm2856, %v1943
      %3004 = vst [vmem:[%s174 + $0x4a0] sm:$0xff] %v1947
      %3005 = vst.msk [vmem:[%s174 + $0x4a8] sm:$0xff] %vm2856, %v1949
      %3006 = vst [vmem:[%s174 + $0x4b0] sm:$0xff] %v1951
      %3007 = vst.msk [vmem:[%s174 + $0x4b8] sm:$0xff] %vm2856, %v1953
      %3008 = vst [vmem:[%s174 + $0x4c0] sm:$0xff] %v1957
      %3009 = vst.msk [vmem:[%s174 + $0x4c8] sm:$0xff] %vm2856, %v1959
      %3010 = vst [vmem:[%s174 + $0x4d0] sm:$0xff] %v1961
      %3011 = vst.msk [vmem:[%s174 + $0x4d8] sm:$0xff] %vm2856, %v1963
      %3012 = vst [vmem:[%s174 + $0x4e0] sm:$0xff] %v1967
      %3013 = vst.msk [vmem:[%s174 + $0x4e8] sm:$0xff] %vm2856, %v1969
      %3014 = vst [vmem:[%s174 + $0x4f0] sm:$0xff] %v1971
      %3015 = vst.msk [vmem:[%s174 + $0x4f8] sm:$0xff] %vm2856, %v1973
      %3016 = vst [vmem:[%s174 + $0x500] sm:$0xff] %v1977
      %3017 = vst.msk [vmem:[%s174 + $0x508] sm:$0xff] %vm2856, %v1979
      %3018 = vst [vmem:[%s174 + $0x510] sm:$0xff] %v1981
      %3019 = vst.msk [vmem:[%s174 + $0x518] sm:$0xff] %vm2856, %v1983
      %3020 = vst [vmem:[%s174 + $0x520] sm:$0xff] %v1987
      %3021 = vst.msk [vmem:[%s174 + $0x528] sm:$0xff] %vm2856, %v1989
      %3022 = vst [vmem:[%s174 + $0x530] sm:$0xff] %v1991
      %3023 = vst.msk [vmem:[%s174 + $0x538] sm:$0xff] %vm2856, %v1993
      %3024 = vst [vmem:[%s174 + $0x540] sm:$0xff] %v1997
      %3025 = vst.msk [vmem:[%s174 + $0x548] sm:$0xff] %vm2856, %v1999
      %3026 = vst [vmem:[%s174 + $0x550] sm:$0xff] %v2001
      %3027 = vst.msk [vmem:[%s174 + $0x558] sm:$0xff] %vm2856, %v2003
      %3028 = vst [vmem:[%s174 + $0x560] sm:$0xff] %v2007
      %3029 = vst.msk [vmem:[%s174 + $0x568] sm:$0xff] %vm2856, %v2009
      %3030 = vst [vmem:[%s174 + $0x570] sm:$0xff] %v2011
      %3031 = vst.msk [vmem:[%s174 + $0x578] sm:$0xff] %vm2856, %v2013
      %3032 = vst [vmem:[%s174 + $0x580] sm:$0xff] %v2017
      %3033 = vst.msk [vmem:[%s174 + $0x588] sm:$0xff] %vm2856, %v2019
      %3034 = vst [vmem:[%s174 + $0x590] sm:$0xff] %v2021
      %3035 = vst.msk [vmem:[%s174 + $0x598] sm:$0xff] %vm2856, %v2023
      %3036 = vst [vmem:[%s174 + $0x5a0] sm:$0xff] %v2027
      %3037 = vst.msk [vmem:[%s174 + $0x5a8] sm:$0xff] %vm2856, %v2029
      %3038 = vst [vmem:[%s174 + $0x5b0] sm:$0xff] %v2031
      %3039 = vst.msk [vmem:[%s174 + $0x5b8] sm:$0xff] %vm2856, %v2033
      %3040 = vst [vmem:[%s174 + $0x5c0] sm:$0xff] %v2037
      %3041 = vst.msk [vmem:[%s174 + $0x5c8] sm:$0xff] %vm2856, %v2039
      %3042 = vst [vmem:[%s174 + $0x5d0] sm:$0xff] %v2041
      %3043 = vst.msk [vmem:[%s174 + $0x5d8] sm:$0xff] %vm2856, %v2043
      %3044 = vst [vmem:[%s174 + $0x5e0] sm:$0xff] %v2047
      %3045 = vst.msk [vmem:[%s174 + $0x5e8] sm:$0xff] %vm2856, %v2049
      %3046 = vst [vmem:[%s174 + $0x5f0] sm:$0xff] %v2051
      %3047 = vst.msk [vmem:[%s174 + $0x5f8] sm:$0xff] %vm2856, %v2053
      %3048 = vst [vmem:[%s174 + $0x600] sm:$0xff] %v2057
      %3049 = vst.msk [vmem:[%s174 + $0x608] sm:$0xff] %vm2856, %v2059
      %3050 = vst [vmem:[%s174 + $0x610] sm:$0xff] %v2061
      %3051 = vst.msk [vmem:[%s174 + $0x618] sm:$0xff] %vm2856, %v2063
      %3052 = vst [vmem:[%s174 + $0x620] sm:$0xff] %v2067
      %3053 = vst.msk [vmem:[%s174 + $0x628] sm:$0xff] %vm2856, %v2069
      %3054 = vst [vmem:[%s174 + $0x630] sm:$0xff] %v2071
      %3055 = vst.msk [vmem:[%s174 + $0x638] sm:$0xff] %vm2856, %v2073
      %3056 = vst [vmem:[%s174 + $0x640] sm:$0xff] %v2077
      %3057 = vst.msk [vmem:[%s174 + $0x648] sm:$0xff] %vm2856, %v2079
      %3058 = vst [vmem:[%s174 + $0x650] sm:$0xff] %v2081
      %3059 = vst.msk [vmem:[%s174 + $0x658] sm:$0xff] %vm2856, %v2083
      %3060 = vst [vmem:[%s174 + $0x660] sm:$0xff] %v2087
      %3061 = vst.msk [vmem:[%s174 + $0x668] sm:$0xff] %vm2856, %v2089
      %3062 = vst [vmem:[%s174 + $0x670] sm:$0xff] %v2091
      %3063 = vst.msk [vmem:[%s174 + $0x678] sm:$0xff] %vm2856, %v2093
      %3064 = vst [vmem:[%s174 + $0x680] sm:$0xff] %v2097
      %3065 = vst.msk [vmem:[%s174 + $0x688] sm:$0xff] %vm2856, %v2099
      %3066 = vst [vmem:[%s174 + $0x690] sm:$0xff] %v2101
      %3067 = vst.msk [vmem:[%s174 + $0x698] sm:$0xff] %vm2856, %v2103
      %3068 = vst [vmem:[%s174 + $0x6a0] sm:$0xff] %v2107
      %3069 = vst.msk [vmem:[%s174 + $0x6a8] sm:$0xff] %vm2856, %v2109
      %3070 = vst [vmem:[%s174 + $0x6b0] sm:$0xff] %v2111
      %3071 = vst.msk [vmem:[%s174 + $0x6b8] sm:$0xff] %vm2856, %v2113
      %3072 = vst [vmem:[%s174 + $0x6c0] sm:$0xff] %v2117
      %3073 = vst.msk [vmem:[%s174 + $0x6c8] sm:$0xff] %vm2856, %v2119
      %3074 = vst [vmem:[%s174 + $0x6d0] sm:$0xff] %v2121
      %3075 = vst.msk [vmem:[%s174 + $0x6d8] sm:$0xff] %vm2856, %v2123
      %3076 = vst [vmem:[%s174 + $0x6e0] sm:$0xff] %v2127
      %3077 = vst.msk [vmem:[%s174 + $0x6e8] sm:$0xff] %vm2856, %v2129
      %3078 = vst [vmem:[%s174 + $0x6f0] sm:$0xff] %v2131
      %3079 = vst.msk [vmem:[%s174 + $0x6f8] sm:$0xff] %vm2856, %v2133
      %3080 = vst [vmem:[%s174 + $0x700] sm:$0xff] %v2137
      %3081 = vst.msk [vmem:[%s174 + $0x708] sm:$0xff] %vm2856, %v2139
      %3082 = vst [vmem:[%s174 + $0x710] sm:$0xff] %v2141
      %3083 = vst.msk [vmem:[%s174 + $0x718] sm:$0xff] %vm2856, %v2143
      %3084 = vst [vmem:[%s174 + $0x720] sm:$0xff] %v2147
      %3085 = vst.msk [vmem:[%s174 + $0x728] sm:$0xff] %vm2856, %v2149
      %3086 = vst [vmem:[%s174 + $0x730] sm:$0xff] %v2151
      %3087 = vst.msk [vmem:[%s174 + $0x738] sm:$0xff] %vm2856, %v2153
      %3088 = vst [vmem:[%s174 + $0x740] sm:$0xff] %v2157
      %3089 = vst.msk [vmem:[%s174 + $0x748] sm:$0xff] %vm2856, %v2159
      %3090 = vst [vmem:[%s174 + $0x750] sm:$0xff] %v2161
      %3091 = vst.msk [vmem:[%s174 + $0x758] sm:$0xff] %vm2856, %v2163
      %3092 = vst [vmem:[%s174 + $0x760] sm:$0xff] %v2167
      %3093 = vst.msk [vmem:[%s174 + $0x768] sm:$0xff] %vm2856, %v2169
      %3094 = vst [vmem:[%s174 + $0x770] sm:$0xff] %v2171
      %3095 = vst.msk [vmem:[%s174 + $0x778] sm:$0xff] %vm2856, %v2173
      %3096 = vst [vmem:[%s174 + $0x780] sm:$0xff] %v2177
      %3097 = vst.msk [vmem:[%s174 + $0x788] sm:$0xff] %vm2856, %v2179
      %3098 = vst [vmem:[%s174 + $0x790] sm:$0xff] %v2181
      %3099 = vst.msk [vmem:[%s174 + $0x798] sm:$0xff] %vm2856, %v2183
      %3100 = vst [vmem:[%s174 + $0x7a0] sm:$0xff] %v2187
      %3101 = vst.msk [vmem:[%s174 + $0x7a8] sm:$0xff] %vm2856, %v2189
      %3102 = vst [vmem:[%s174 + $0x7b0] sm:$0xff] %v2191
      %3103 = vst.msk [vmem:[%s174 + $0x7b8] sm:$0xff] %vm2856, %v2193
      %3104 = vst [vmem:[%s174 + $0x7c0] sm:$0xff] %v2197
      %3105 = vst.msk [vmem:[%s174 + $0x7c8] sm:$0xff] %vm2856, %v2199
      %3106 = vst [vmem:[%s174 + $0x7d0] sm:$0xff] %v2201
      %3107 = vst.msk [vmem:[%s174 + $0x7d8] sm:$0xff] %vm2856, %v2203
      %3108 = vst [vmem:[%s174 + $0x7e0] sm:$0xff] %v2207
      %3109 = vst.msk [vmem:[%s174 + $0x7e8] sm:$0xff] %vm2856, %v2209
      %3110 = vst [vmem:[%s174 + $0x7f0] sm:$0xff] %v2211
      %3111 = vst.msk [vmem:[%s174 + $0x7f8] sm:$0xff] %vm2856, %v2213
      %3112 = vst [vmem:[%s174 + $0x800] sm:$0xff] %v2217
      %3113 = vst.msk [vmem:[%s174 + $0x808] sm:$0xff] %vm2856, %v2219
      %3114 = vst [vmem:[%s174 + $0x810] sm:$0xff] %v2221
      %3115 = vst.msk [vmem:[%s174 + $0x818] sm:$0xff] %vm2856, %v2223
      %3116 = vst [vmem:[%s174 + $0x820] sm:$0xff] %v2227
      %3117 = vst.msk [vmem:[%s174 + $0x828] sm:$0xff] %vm2856, %v2229
      %3118 = vst [vmem:[%s174 + $0x830] sm:$0xff] %v2231
      %3119 = vst.msk [vmem:[%s174 + $0x838] sm:$0xff] %vm2856, %v2233
      %3120 = vst [vmem:[%s174 + $0x840] sm:$0xff] %v2237
      %3121 = vst.msk [vmem:[%s174 + $0x848] sm:$0xff] %vm2856, %v2239
      %3122 = vst [vmem:[%s174 + $0x850] sm:$0xff] %v2241
      %3123 = vst.msk [vmem:[%s174 + $0x858] sm:$0xff] %vm2856, %v2243
      %3124 = vst [vmem:[%s174 + $0x860] sm:$0xff] %v2247
      %3125 = vst.msk [vmem:[%s174 + $0x868] sm:$0xff] %vm2856, %v2249
      %3126 = vst [vmem:[%s174 + $0x870] sm:$0xff] %v2251
      %3127 = vst.msk [vmem:[%s174 + $0x878] sm:$0xff] %vm2856, %v2253
      %3128 = vst [vmem:[%s174 + $0x880] sm:$0xff] %v2257
      %3129 = vst.msk [vmem:[%s174 + $0x888] sm:$0xff] %vm2856, %v2259
      %3130 = vst [vmem:[%s174 + $0x890] sm:$0xff] %v2261
      %3131 = vst.msk [vmem:[%s174 + $0x898] sm:$0xff] %vm2856, %v2263
      %3132 = vst [vmem:[%s174 + $0x8a0] sm:$0xff] %v2267
      %3133 = vst.msk [vmem:[%s174 + $0x8a8] sm:$0xff] %vm2856, %v2269
      %3134 = vst [vmem:[%s174 + $0x8b0] sm:$0xff] %v2271
      %3135 = vst.msk [vmem:[%s174 + $0x8b8] sm:$0xff] %vm2856, %v2273
      %3136 = vst [vmem:[%s174 + $0x8c0] sm:$0xff] %v2277
      %3137 = vst.msk [vmem:[%s174 + $0x8c8] sm:$0xff] %vm2856, %v2279
      %3138 = vst [vmem:[%s174 + $0x8d0] sm:$0xff] %v2281
      %3139 = vst.msk [vmem:[%s174 + $0x8d8] sm:$0xff] %vm2856, %v2283
      %3140 = vst [vmem:[%s174 + $0x8e0] sm:$0xff] %v2287
      %3141 = vst.msk [vmem:[%s174 + $0x8e8] sm:$0xff] %vm2856, %v2289
      %3142 = vst [vmem:[%s174 + $0x8f0] sm:$0xff] %v2291
      %3143 = vst.msk [vmem:[%s174 + $0x8f8] sm:$0xff] %vm2856, %v2293
      %3144 = vst [vmem:[%s174 + $0x900] sm:$0xff] %v2297
      %3145 = vst.msk [vmem:[%s174 + $0x908] sm:$0xff] %vm2856, %v2299
      %3146 = vst [vmem:[%s174 + $0x910] sm:$0xff] %v2301
      %3147 = vst.msk [vmem:[%s174 + $0x918] sm:$0xff] %vm2856, %v2303
      %3148 = vst [vmem:[%s174 + $0x920] sm:$0xff] %v2307
      %3149 = vst.msk [vmem:[%s174 + $0x928] sm:$0xff] %vm2856, %v2309
      %3150 = vst [vmem:[%s174 + $0x930] sm:$0xff] %v2311
      %3151 = vst.msk [vmem:[%s174 + $0x938] sm:$0xff] %vm2856, %v2313
      %3152 = vst [vmem:[%s174 + $0x940] sm:$0xff] %v2317
      %3153 = vst.msk [vmem:[%s174 + $0x948] sm:$0xff] %vm2856, %v2319
      %3154 = vst [vmem:[%s174 + $0x950] sm:$0xff] %v2321
      %3155 = vst.msk [vmem:[%s174 + $0x958] sm:$0xff] %vm2856, %v2323
      %3156 = vst [vmem:[%s174 + $0x960] sm:$0xff] %v2327
      %3157 = vst.msk [vmem:[%s174 + $0x968] sm:$0xff] %vm2856, %v2329
      %3158 = vst [vmem:[%s174 + $0x970] sm:$0xff] %v2331
      %3159 = vst.msk [vmem:[%s174 + $0x978] sm:$0xff] %vm2856, %v2333
      %3160 = vst [vmem:[%s174 + $0x980] sm:$0xff] %v2337
      %3161 = vst.msk [vmem:[%s174 + $0x988] sm:$0xff] %vm2856, %v2339
      %3162 = vst [vmem:[%s174 + $0x990] sm:$0xff] %v2341
      %3163 = vst.msk [vmem:[%s174 + $0x998] sm:$0xff] %vm2856, %v2343
      %3164 = vst [vmem:[%s174 + $0x9a0] sm:$0xff] %v2347
      %3165 = vst.msk [vmem:[%s174 + $0x9a8] sm:$0xff] %vm2856, %v2349
      %3166 = vst [vmem:[%s174 + $0x9b0] sm:$0xff] %v2351
      %3167 = vst.msk [vmem:[%s174 + $0x9b8] sm:$0xff] %vm2856, %v2353
      %3168 = vst [vmem:[%s174 + $0x9c0] sm:$0xff] %v2357
      %3169 = vst.msk [vmem:[%s174 + $0x9c8] sm:$0xff] %vm2856, %v2359
      %3170 = vst [vmem:[%s174 + $0x9d0] sm:$0xff] %v2361
      %3171 = vst.msk [vmem:[%s174 + $0x9d8] sm:$0xff] %vm2856, %v2363
      %3172 = vst [vmem:[%s174 + $0x9e0] sm:$0xff] %v2367
      %3173 = vst.msk [vmem:[%s174 + $0x9e8] sm:$0xff] %vm2856, %v2369
      %3174 = vst [vmem:[%s174 + $0x9f0] sm:$0xff] %v2371
      %3175 = vst.msk [vmem:[%s174 + $0x9f8] sm:$0xff] %vm2856, %v2373
      %3176 = vst [vmem:[%s174 + $0xa00] sm:$0xff] %v2377
      %3177 = vst.msk [vmem:[%s174 + $0xa08] sm:$0xff] %vm2856, %v2379
      %3178 = vst [vmem:[%s174 + $0xa10] sm:$0xff] %v2381
      %3179 = vst.msk [vmem:[%s174 + $0xa18] sm:$0xff] %vm2856, %v2383
      %3180 = vst [vmem:[%s174 + $0xa20] sm:$0xff] %v2387
      %3181 = vst.msk [vmem:[%s174 + $0xa28] sm:$0xff] %vm2856, %v2389
      %3182 = vst [vmem:[%s174 + $0xa30] sm:$0xff] %v2391
      %3183 = vst.msk [vmem:[%s174 + $0xa38] sm:$0xff] %vm2856, %v2393
      %3184 = vst [vmem:[%s174 + $0xa40] sm:$0xff] %v2397
      %3185 = vst.msk [vmem:[%s174 + $0xa48] sm:$0xff] %vm2856, %v2399
      %3186 = vst [vmem:[%s174 + $0xa50] sm:$0xff] %v2401
      %3187 = vst.msk [vmem:[%s174 + $0xa58] sm:$0xff] %vm2856, %v2403
      %3188 = vst [vmem:[%s174 + $0xa60] sm:$0xff] %v2407
      %3189 = vst.msk [vmem:[%s174 + $0xa68] sm:$0xff] %vm2856, %v2409
      %3190 = vst [vmem:[%s174 + $0xa70] sm:$0xff] %v2411
      %3191 = vst.msk [vmem:[%s174 + $0xa78] sm:$0xff] %vm2856, %v2413
      %3192 = vst [vmem:[%s174 + $0xa80] sm:$0xff] %v2417
      %3193 = vst.msk [vmem:[%s174 + $0xa88] sm:$0xff] %vm2856, %v2419
      %3194 = vst [vmem:[%s174 + $0xa90] sm:$0xff] %v2421
      %3195 = vst.msk [vmem:[%s174 + $0xa98] sm:$0xff] %vm2856, %v2423
      %3196 = vst [vmem:[%s174 + $0xaa0] sm:$0xff] %v2427
      %3197 = vst.msk [vmem:[%s174 + $0xaa8] sm:$0xff] %vm2856, %v2429
      %3198 = vst [vmem:[%s174 + $0xab0] sm:$0xff] %v2431
      %3199 = vst.msk [vmem:[%s174 + $0xab8] sm:$0xff] %vm2856, %v2433
      %3200 = vst [vmem:[%s174 + $0xac0] sm:$0xff] %v2437
      %3201 = vst.msk [vmem:[%s174 + $0xac8] sm:$0xff] %vm2856, %v2439
      %3202 = vst [vmem:[%s174 + $0xad0] sm:$0xff] %v2441
      %3203 = vst.msk [vmem:[%s174 + $0xad8] sm:$0xff] %vm2856, %v2443
      %3204 = vst [vmem:[%s174 + $0xae0] sm:$0xff] %v2447
      %3205 = vst.msk [vmem:[%s174 + $0xae8] sm:$0xff] %vm2856, %v2449
      %3206 = vst [vmem:[%s174 + $0xaf0] sm:$0xff] %v2451
      %3207 = vst.msk [vmem:[%s174 + $0xaf8] sm:$0xff] %vm2856, %v2453
      %3208 = vst [vmem:[%s174 + $0xb00] sm:$0xff] %v2457
      %3209 = vst.msk [vmem:[%s174 + $0xb08] sm:$0xff] %vm2856, %v2459
      %3210 = vst [vmem:[%s174 + $0xb10] sm:$0xff] %v2461
      %3211 = vst.msk [vmem:[%s174 + $0xb18] sm:$0xff] %vm2856, %v2463
      %3212 = vst [vmem:[%s174 + $0xb20] sm:$0xff] %v2467
      %3213 = vst.msk [vmem:[%s174 + $0xb28] sm:$0xff] %vm2856, %v2469
      %3214 = vst [vmem:[%s174 + $0xb30] sm:$0xff] %v2471
      %3215 = vst.msk [vmem:[%s174 + $0xb38] sm:$0xff] %vm2856, %v2473
      %3216 = vst [vmem:[%s174 + $0xb40] sm:$0xff] %v2477
      %3217 = vst.msk [vmem:[%s174 + $0xb48] sm:$0xff] %vm2856, %v2479
      %3218 = vst [vmem:[%s174 + $0xb50] sm:$0xff] %v2481
      %3219 = vst.msk [vmem:[%s174 + $0xb58] sm:$0xff] %vm2856, %v2483
      %3220 = vst [vmem:[%s174 + $0xb60] sm:$0xff] %v2487
      %3221 = vst.msk [vmem:[%s174 + $0xb68] sm:$0xff] %vm2856, %v2489
      %3222 = vst [vmem:[%s174 + $0xb70] sm:$0xff] %v2491
      %3223 = vst.msk [vmem:[%s174 + $0xb78] sm:$0xff] %vm2856, %v2493
      %3224 = vst [vmem:[%s174 + $0xb80] sm:$0xff] %v2497
      %3225 = vst.msk [vmem:[%s174 + $0xb88] sm:$0xff] %vm2856, %v2499
      %3226 = vst [vmem:[%s174 + $0xb90] sm:$0xff] %v2501
      %3227 = vst.msk [vmem:[%s174 + $0xb98] sm:$0xff] %vm2856, %v2503
      %3228 = vst [vmem:[%s174 + $0xba0] sm:$0xff] %v2507
      %3229 = vst.msk [vmem:[%s174 + $0xba8] sm:$0xff] %vm2856, %v2509
      %3230 = vst [vmem:[%s174 + $0xbb0] sm:$0xff] %v2511
      %3231 = vst.msk [vmem:[%s174 + $0xbb8] sm:$0xff] %vm2856, %v2513
      %3232 = vst [vmem:[%s174 + $0xbc0] sm:$0xff] %v2517
      %3233 = vst.msk [vmem:[%s174 + $0xbc8] sm:$0xff] %vm2856, %v2519
      %3234 = vst [vmem:[%s174 + $0xbd0] sm:$0xff] %v2521
      %3235 = vst.msk [vmem:[%s174 + $0xbd8] sm:$0xff] %vm2856, %v2523
      %3236 = vst [vmem:[%s174 + $0xbe0] sm:$0xff] %v2527
      %3237 = vst.msk [vmem:[%s174 + $0xbe8] sm:$0xff] %vm2856, %v2529
      %3238 = vst [vmem:[%s174 + $0xbf0] sm:$0xff] %v2531
      %3239 = vst.msk [vmem:[%s174 + $0xbf8] sm:$0xff] %vm2856, %v2533
      %3240 = vst [vmem:[%s174 + $0xc00] sm:$0xff] %v2537
      %3241 = vst.msk [vmem:[%s174 + $0xc08] sm:$0xff] %vm2856, %v2539
      %3242 = vst [vmem:[%s174 + $0xc10] sm:$0xff] %v2541
      %3243 = vst.msk [vmem:[%s174 + $0xc18] sm:$0xff] %vm2856, %v2543
      %3244 = vst [vmem:[%s174 + $0xc20] sm:$0xff] %v2547
      %3245 = vst.msk [vmem:[%s174 + $0xc28] sm:$0xff] %vm2856, %v2549
      %3246 = vst [vmem:[%s174 + $0xc30] sm:$0xff] %v2551
      %3247 = vst.msk [vmem:[%s174 + $0xc38] sm:$0xff] %vm2856, %v2553
      %3248 = vst [vmem:[%s174 + $0xc40] sm:$0xff] %v2557
      %3249 = vst.msk [vmem:[%s174 + $0xc48] sm:$0xff] %vm2856, %v2559
      %3250 = vst [vmem:[%s174 + $0xc50] sm:$0xff] %v2561
      %3251 = vst.msk [vmem:[%s174 + $0xc58] sm:$0xff] %vm2856, %v2563
      %3252 = vst [vmem:[%s174 + $0xc60] sm:$0xff] %v2567
      %3253 = vst.msk [vmem:[%s174 + $0xc68] sm:$0xff] %vm2856, %v2569
      %3254 = vst [vmem:[%s174 + $0xc70] sm:$0xff] %v2571
      %3255 = vst.msk [vmem:[%s174 + $0xc78] sm:$0xff] %vm2856, %v2573
      %3256 = vst [vmem:[%s174 + $0xc80] sm:$0xff] %v2577
      %3257 = vst.msk [vmem:[%s174 + $0xc88] sm:$0xff] %vm2856, %v2579
      %3258 = vst [vmem:[%s174 + $0xc90] sm:$0xff] %v2581
      %3259 = vst.msk [vmem:[%s174 + $0xc98] sm:$0xff] %vm2856, %v2583
      %3260 = vst [vmem:[%s174 + $0xca0] sm:$0xff] %v2587
      %3261 = vst.msk [vmem:[%s174 + $0xca8] sm:$0xff] %vm2856, %v2589
      %3262 = vst [vmem:[%s174 + $0xcb0] sm:$0xff] %v2591
      %3263 = vst.msk [vmem:[%s174 + $0xcb8] sm:$0xff] %vm2856, %v2593
      %3264 = vst [vmem:[%s174 + $0xcc0] sm:$0xff] %v2597
      %3265 = vst.msk [vmem:[%s174 + $0xcc8] sm:$0xff] %vm2856, %v2599
      %3266 = vst [vmem:[%s174 + $0xcd0] sm:$0xff] %v2601
      %3267 = vst.msk [vmem:[%s174 + $0xcd8] sm:$0xff] %vm2856, %v2603
      %3268 = vst [vmem:[%s174 + $0xce0] sm:$0xff] %v2607
      %3269 = vst.msk [vmem:[%s174 + $0xce8] sm:$0xff] %vm2856, %v2609
      %3270 = vst [vmem:[%s174 + $0xcf0] sm:$0xff] %v2611
      %3271 = vst.msk [vmem:[%s174 + $0xcf8] sm:$0xff] %vm2856, %v2613
      %3272 = vst [vmem:[%s174 + $0xd00] sm:$0xff] %v2617
      %3273 = vst.msk [vmem:[%s174 + $0xd08] sm:$0xff] %vm2856, %v2619
      %3274 = vst [vmem:[%s174 + $0xd10] sm:$0xff] %v2621
      %3275 = vst.msk [vmem:[%s174 + $0xd18] sm:$0xff] %vm2856, %v2623
      %3276 = vst [vmem:[%s174 + $0xd20] sm:$0xff] %v2627
      %3277 = vst.msk [vmem:[%s174 + $0xd28] sm:$0xff] %vm2856, %v2629
      %3278 = vst [vmem:[%s174 + $0xd30] sm:$0xff] %v2631
      %3279 = vst.msk [vmem:[%s174 + $0xd38] sm:$0xff] %vm2856, %v2633
      %3280 = vst [vmem:[%s174 + $0xd40] sm:$0xff] %v2637
      %3281 = vst.msk [vmem:[%s174 + $0xd48] sm:$0xff] %vm2856, %v2639
      %3282 = vst [vmem:[%s174 + $0xd50] sm:$0xff] %v2641
      %3283 = vst.msk [vmem:[%s174 + $0xd58] sm:$0xff] %vm2856, %v2643
      %3284 = vst [vmem:[%s174 + $0xd60] sm:$0xff] %v2647
      %3285 = vst.msk [vmem:[%s174 + $0xd68] sm:$0xff] %vm2856, %v2649
      %3286 = vst [vmem:[%s174 + $0xd70] sm:$0xff] %v2651
      %3287 = vst.msk [vmem:[%s174 + $0xd78] sm:$0xff] %vm2856, %v2653
      %3288 = vst [vmem:[%s174 + $0xd80] sm:$0xff] %v2657
      %3289 = vst.msk [vmem:[%s174 + $0xd88] sm:$0xff] %vm2856, %v2659
      %3290 = vst [vmem:[%s174 + $0xd90] sm:$0xff] %v2661
      %3291 = vst.msk [vmem:[%s174 + $0xd98] sm:$0xff] %vm2856, %v2663
      %3292 = vst [vmem:[%s174 + $0xda0] sm:$0xff] %v2667
      %3293 = vst.msk [vmem:[%s174 + $0xda8] sm:$0xff] %vm2856, %v2669
      %3294 = vst [vmem:[%s174 + $0xdb0] sm:$0xff] %v2671
      %3295 = vst.msk [vmem:[%s174 + $0xdb8] sm:$0xff] %vm2856, %v2673
      %3296 = vst [vmem:[%s174 + $0xdc0] sm:$0xff] %v2677
      %3297 = vst.msk [vmem:[%s174 + $0xdc8] sm:$0xff] %vm2856, %v2679
      %3298 = vst [vmem:[%s174 + $0xdd0] sm:$0xff] %v2681
      %3299 = vst.msk [vmem:[%s174 + $0xdd8] sm:$0xff] %vm2856, %v2683
      %3300 = vst [vmem:[%s174 + $0xde0] sm:$0xff] %v2687
      %3301 = vst.msk [vmem:[%s174 + $0xde8] sm:$0xff] %vm2856, %v2689
      %3302 = vst [vmem:[%s174 + $0xdf0] sm:$0xff] %v2691
      %3303 = vst.msk [vmem:[%s174 + $0xdf8] sm:$0xff] %vm2856, %v2693
      %3304 = vst [vmem:[%s174 + $0xe00] sm:$0xff] %v2697
      %3305 = vst.msk [vmem:[%s174 + $0xe08] sm:$0xff] %vm2856, %v2699
      %3306 = vst [vmem:[%s174 + $0xe10] sm:$0xff] %v2701
      %3307 = vst.msk [vmem:[%s174 + $0xe18] sm:$0xff] %vm2856, %v2703
      %3308 = vst [vmem:[%s174 + $0xe20] sm:$0xff] %v2707
      %3309 = vst.msk [vmem:[%s174 + $0xe28] sm:$0xff] %vm2856, %v2709
      %3310 = vst [vmem:[%s174 + $0xe30] sm:$0xff] %v2711
      %3311 = vst.msk [vmem:[%s174 + $0xe38] sm:$0xff] %vm2856, %v2713
      %3312 = vst [vmem:[%s174 + $0xe40] sm:$0xff] %v2717
      %3313 = vst.msk [vmem:[%s174 + $0xe48] sm:$0xff] %vm2856, %v2719
      %3314 = vst [vmem:[%s174 + $0xe50] sm:$0xff] %v2721
      %3315 = vst.msk [vmem:[%s174 + $0xe58] sm:$0xff] %vm2856, %v2723
      %3316 = vst [vmem:[%s174 + $0xe60] sm:$0xff] %v2727
      %3317 = vst.msk [vmem:[%s174 + $0xe68] sm:$0xff] %vm2856, %v2729
      %3318 = vst [vmem:[%s174 + $0xe70] sm:$0xff] %v2731
      %3319 = vst.msk [vmem:[%s174 + $0xe78] sm:$0xff] %vm2856, %v2733
      %3320 = vst [vmem:[%s174 + $0xe80] sm:$0xff] %v2737
      %3321 = vst.msk [vmem:[%s174 + $0xe88] sm:$0xff] %vm2856, %v2739
      %3322 = vst [vmem:[%s174 + $0xe90] sm:$0xff] %v2741
      %3323 = vst.msk [vmem:[%s174 + $0xe98] sm:$0xff] %vm2856, %v2743
      %3324 = vst [vmem:[%s174 + $0xea0] sm:$0xff] %v2747
      %3325 = vst.msk [vmem:[%s174 + $0xea8] sm:$0xff] %vm2856, %v2749
      %3326 = vst [vmem:[%s174 + $0xeb0] sm:$0xff] %v2751
      %3327 = vst.msk [vmem:[%s174 + $0xeb8] sm:$0xff] %vm2856, %v2753
      %3328 = vst [vmem:[%s174 + $0xec0] sm:$0xff] %v2757
      %3329 = vst.msk [vmem:[%s174 + $0xec8] sm:$0xff] %vm2856, %v2759
      %3330 = vst [vmem:[%s174 + $0xed0] sm:$0xff] %v2761
      %3331 = vst.msk [vmem:[%s174 + $0xed8] sm:$0xff] %vm2856, %v2763
      %3332 = vst [vmem:[%s174 + $0xee0] sm:$0xff] %v2767
      %3333 = vst.msk [vmem:[%s174 + $0xee8] sm:$0xff] %vm2856, %v2769
      %3334 = vst [vmem:[%s174 + $0xef0] sm:$0xff] %v2771
      %3335 = vst.msk [vmem:[%s174 + $0xef8] sm:$0xff] %vm2856, %v2773
      %3336 = vst [vmem:[%s174 + $0xf00] sm:$0xff] %v2777
      %3337 = vst.msk [vmem:[%s174 + $0xf08] sm:$0xff] %vm2856, %v2779
      %3338 = vst [vmem:[%s174 + $0xf10] sm:$0xff] %v2781
      %3339 = vst.msk [vmem:[%s174 + $0xf18] sm:$0xff] %vm2856, %v2783
      %3340 = vst [vmem:[%s174 + $0xf20] sm:$0xff] %v2787
      %3341 = vst.msk [vmem:[%s174 + $0xf28] sm:$0xff] %vm2856, %v2789
      %3342 = vst [vmem:[%s174 + $0xf30] sm:$0xff] %v2791
      %3343 = vst.msk [vmem:[%s174 + $0xf38] sm:$0xff] %vm2856, %v2793
      %3344 = vst [vmem:[%s174 + $0xf40] sm:$0xff] %v2797
      %3345 = vst.msk [vmem:[%s174 + $0xf48] sm:$0xff] %vm2856, %v2799
      %3346 = vst [vmem:[%s174 + $0xf50] sm:$0xff] %v2801
      %3347 = vst.msk [vmem:[%s174 + $0xf58] sm:$0xff] %vm2856, %v2803
      %3348 = vst [vmem:[%s174 + $0xf60] sm:$0xff] %v2807
      %3349 = vst.msk [vmem:[%s174 + $0xf68] sm:$0xff] %vm2856, %v2809
      %3350 = vst [vmem:[%s174 + $0xf70] sm:$0xff] %v2811
      %3351 = vst.msk [vmem:[%s174 + $0xf78] sm:$0xff] %vm2856, %v2813
      %3352 = vst [vmem:[%s174 + $0xf80] sm:$0xff] %v2817
      %3353 = vst.msk [vmem:[%s174 + $0xf88] sm:$0xff] %vm2856, %v2819
      %3354 = vst [vmem:[%s174 + $0xf90] sm:$0xff] %v2821
      %3355 = vst.msk [vmem:[%s174 + $0xf98] sm:$0xff] %vm2856, %v2823
      %3356 = vst [vmem:[%s174 + $0xfa0] sm:$0xff] %v2827
      %3357 = vst.msk [vmem:[%s174 + $0xfa8] sm:$0xff] %vm2856, %v2829
      %3358 = vst [vmem:[%s174 + $0xfb0] sm:$0xff] %v2831
      %3359 = vst.msk [vmem:[%s174 + $0xfb8] sm:$0xff] %vm2856, %v2833
      %3360 = vst [vmem:[%s174 + $0xfc0] sm:$0xff] %v2837
      %3361 = vst.msk [vmem:[%s174 + $0xfc8] sm:$0xff] %vm2856, %v2839
      %3362 = vst [vmem:[%s174 + $0xfd0] sm:$0xff] %v2841
      %3363 = vst.msk [vmem:[%s174 + $0xfd8] sm:$0xff] %vm2856, %v2843
      %3364 = vst [vmem:[%s174 + $0xfe0] sm:$0xff] %v2847
      %3365 = vst.msk [vmem:[%s174 + $0xfe8] sm:$0xff] %vm2856, %v2849
      %3366 = vst [vmem:[%s174 + $0xff0] sm:$0xff] %v2851
      %3367 = vst.msk [vmem:[%s174 + $0xff8] sm:$0xff] %vm2856, %v2853
      %s3368 = smul.u32 256, %s14
      %p3369 = scmp.lt.s32.totalorder %s3368, 2303
      %s3370 = scalar_select %p3369, %s3368, 2303
      %s3371 = smul.addr %s3370, 2
      %s3372 = smul.addr %s3371, 8
      %s3373 = scalar_lea.vmem %s3, %s3372
      // Predicated region
      $region33: #{very_small_decoder_forward.6} parent=31 // pred_check
        %p3374 = pneg %p100
      $region34: #{very_small_decoder_forward.6} parent=31 // pred_check_branch
        %3376 = sbr.rel (%p3374) target = $region36
      $region35: #{very_small_decoder_forward.6} parent=31 // pred_region
        %s3377 = smul.u32 256, %s14
      $region36: #{very_small_decoder_forward.6} parent=31 // pred_fallthru
        _
    $region32: #{very_small_decoder_forward.6} parent=5 // pred_fallthru
      _
    %p3378 = scmp.le.s32.totalorder 2, %s9
    // Predicated region
    $region37: #{very_small_decoder_forward.6} parent=5 // pred_check
      %p3379 = pneg %p3378
    $region38: #{very_small_decoder_forward.6} parent=5 // pred_check_branch
      %3381 = sbr.rel (%p3379) target = $region40
    $region39: #{very_small_decoder_forward.6} parent=5 // pred_region
      %s3382 = ssub.s32 %s9, 2
      // Predicated region
      $region41: #{very_small_decoder_forward.6} parent=39 // pred_check
        %p3383 = pneg %p106
      $region42: #{very_small_decoder_forward.6} parent=39 // pred_check_branch
        %3385 = sbr.rel (%p3383) target = $region44
      $region43: #{very_small_decoder_forward.6} parent=39 // pred_region
        %s3386 = smul.u32 256, %s15
        %p3387 = scmp.lt.s32.totalorder %s3386, 2303
        %s3388 = scalar_select %p3387, %s3386, 2303
        %s3389 = smul.addr %s3388, 2
        %s3390 = smul.addr %s3389, 8
        %s3391 = scalar_lea.vmem %s3, %s3390
      $region44: #{very_small_decoder_forward.6} parent=39 // pred_fallthru
        _
    $region40: #{very_small_decoder_forward.6} parent=5 // pred_fallthru
      _
  $region6: #{very_small_decoder_forward.6} parent=0 // loop_footer
    %s13 = sadd.s32 1, %s9
  $region7: #{very_small_decoder_forward.6} parent=0 // loop_footer_branch
    %8 = sbr.rel target = $region3
  $region8: #{very_small_decoder_forward.6} parent=0 // loop_exit
    _

// kernel: very_small_decoder_forward.7
$region0: #{very_small_decoder_forward.7}
  #allocation0 [shape = 'u32[]', space=smem, size = 0x4, offset = 0x4, fixed_abs, tag = 'smem constant byte address 0x4 - core index']
  #allocation1 [shape = 'u32[144,128]{1,0:T(1,128)}', space=vmem, size = 0x12000, scoped, tag = 'internal scratch']
  %s0 = inlined_call_operand.vmem [shape: bf16[20480,80], index: 0, kind: input, shape index: {}]
  %s1 = inlined_call_operand.vmem [shape: bf16[80,80], index: 1, kind: input, shape index: {}]
  %s2 = inlined_call_operand.vmem [shape: f32[1,80], index: 2, kind: input, shape index: {}]
  %s3 = inlined_call_operand.vmem [shape: f32[20480,80], index: 3, kind: output, shape index: {}]
  %s4 = sld [smem:[#allocation0]]
  $region45: #{very_small_decoder_forward.7} parent=0
    _
  %s6 = ssub.s32 1, %s4
  %s7 = scalar_select 0, %s6, %s4
  loop: start=0, step=1, limit=12
  $region2: #{very_small_decoder_forward.7} parent=0 // loop_pre_header
    _
  $region3: #{very_small_decoder_forward.7} parent=0 // loop_header
    %s9 = sphi 0, %s13
    %p10 = scmp.ge.s32.totalorder %s9, 12
    %s19 = sphi 0, %s21
    %s22 = sphi 0, %s19
    %s23 = sphi 0, %s22
    %s39 = sphi 0, %s23
    %s43 = sphi 0, %s43
    %s45 = sphi 0, %s43
    %s46 = sphi 0, %s45
    %s60 = sphi 0, %s46
    %s64 = sphi 0, %s64
    %s66 = sphi 0, %s64
    %s67 = sphi 0, %s66
    %s81 = sphi 0, %s67
    %s87 = sphi 0, %s89
    %s90 = sphi 0, %s87
    %s91 = sphi 0, %s90
    %s107 = sphi 0, %s91
  $region4: #{very_small_decoder_forward.7} parent=0 // loop_header_branch
    %12 = sbr.rel (%p10) target = $region8
  $region5: #{very_small_decoder_forward.7} parent=0 // loop_body
    %s14 = ssub.s32 %s9, 1
    %s15 = ssub.s32 %s9, 2
    %s16 = sadd.s32 %s9, 1
    %s17 = ssub.s32 %s9, %s16
    %p18 = scmp.eq.s32.totalorder %s17, 0
    %s20 = sadd.s32 %s19, 1
    %s21 = scalar_select %p18, %s19, %s20
    %p24 = pneg %p18
    %p25 = scmp.eq.s32.totalorder %s9, 9
    %p26 = por %p24, %p25
    %p27 = scmp.ne.s32.totalorder %s19, %s22
    %p28 = scmp.eq.s32.totalorder %s9, 0
    %p29 = por %p27, %p28
    %p30 = scmp.ne.s32.totalorder %s19, %s22
    %p31 = scmp.eq.s32.totalorder %s14, 9
    %p32 = por %p30, %p31
    %p33 = scmp.ne.s32.totalorder %s22, %s23
    %p34 = scmp.eq.s32.totalorder %s14, 0
    %p35 = por %p33, %p34
    %p36 = scmp.ne.s32.totalorder %s22, %s23
    %p37 = scmp.eq.s32.totalorder %s15, 9
    %p38 = por %p36, %p37
    %p40 = scmp.ne.s32.totalorder %s23, %s39
    %p41 = scmp.eq.s32.totalorder %s15, 0
    %p42 = por %p40, %p41
    %s44 = sadd.s32 %s43, 1
    %p47 = scmp.eq.s32.totalorder %s9, 9
    %p48 = scmp.ne.s32.totalorder %s43, %s45
    %p49 = scmp.eq.s32.totalorder %s9, 0
    %p50 = por %p48, %p49
    %p51 = scmp.ne.s32.totalorder %s43, %s45
    %p52 = scmp.eq.s32.totalorder %s14, 9
    %p53 = por %p51, %p52
    %p54 = scmp.ne.s32.totalorder %s45, %s46
    %p55 = scmp.eq.s32.totalorder %s14, 0
    %p56 = por %p54, %p55
    %p57 = scmp.ne.s32.totalorder %s45, %s46
    %p58 = scmp.eq.s32.totalorder %s15, 9
    %p59 = por %p57, %p58
    %p61 = scmp.ne.s32.totalorder %s46, %s60
    %p62 = scmp.eq.s32.totalorder %s15, 0
    %p63 = por %p61, %p62
    %s65 = sadd.s32 %s64, 1
    %p68 = scmp.eq.s32.totalorder %s9, 9
    %p69 = scmp.ne.s32.totalorder %s64, %s66
    %p70 = scmp.eq.s32.totalorder %s9, 0
    %p71 = por %p69, %p70
    %p72 = scmp.ne.s32.totalorder %s64, %s66
    %p73 = scmp.eq.s32.totalorder %s14, 9
    %p74 = por %p72, %p73
    %p75 = scmp.ne.s32.totalorder %s66, %s67
    %p76 = scmp.eq.s32.totalorder %s14, 0
    %p77 = por %p75, %p76
    %p78 = scmp.ne.s32.totalorder %s66, %s67
    %p79 = scmp.eq.s32.totalorder %s15, 9
    %p80 = por %p78, %p79
    %p82 = scmp.ne.s32.totalorder %s67, %s81
    %p83 = scmp.eq.s32.totalorder %s15, 0
    %p84 = por %p82, %p83
    %s85 = ssub.s32 %s9, %s16
    %p86 = scmp.eq.s32.totalorder %s85, 0
    %s88 = sadd.s32 %s87, 1
    %s89 = scalar_select %p86, %s87, %s88
    %p92 = pneg %p86
    %p93 = scmp.eq.s32.totalorder %s9, 9
    %p94 = por %p92, %p93
    %p95 = scmp.ne.s32.totalorder %s87, %s90
    %p96 = scmp.eq.s32.totalorder %s9, 0
    %p97 = por %p95, %p96
    %p98 = scmp.ne.s32.totalorder %s87, %s90
    %p99 = scmp.eq.s32.totalorder %s14, 9
    %p100 = por %p98, %p99
    %p101 = scmp.ne.s32.totalorder %s90, %s91
    %p102 = scmp.eq.s32.totalorder %s14, 0
    %p103 = por %p101, %p102
    %p104 = scmp.ne.s32.totalorder %s90, %s91
    %p105 = scmp.eq.s32.totalorder %s15, 9
    %p106 = por %p104, %p105
    %p108 = scmp.ne.s32.totalorder %s91, %s107
    %p109 = scmp.eq.s32.totalorder %s15, 0
    %p110 = por %p108, %p109
    %p111 = scmp.le.s32.totalorder 1, %s9
    %p112 = scmp.lt.s32.totalorder %s9, 11
    %p113 = pnand %p111, %p112
    %p114 = pneg %p113
    // Predicated region
    $region9: #{very_small_decoder_forward.7} parent=5 // pred_check
      _
    $region10: #{very_small_decoder_forward.7} parent=5 // pred_check_branch
      %116 = sbr.rel (%p113) target = $region12
    $region11: #{very_small_decoder_forward.7} parent=5 // pred_region
      %s117 = ssub.s32 %s9, 1
      // Predicated region
      $region13: #{very_small_decoder_forward.7} parent=11 // pred_check
        %p118 = pneg %p56
      $region14: #{very_small_decoder_forward.7} parent=11 // pred_check_branch
        %120 = sbr.rel (%p118) target = $region16
      $region15: #{very_small_decoder_forward.7} parent=11 // pred_region
        _
      $region16: #{very_small_decoder_forward.7} parent=11 // pred_fallthru
        _
      // Predicated region
      $region17: #{very_small_decoder_forward.7} parent=11 // pred_check
        %p121 = pneg %p77
      $region18: #{very_small_decoder_forward.7} parent=11 // pred_check_branch
        %123 = sbr.rel (%p121) target = $region20
      $region19: #{very_small_decoder_forward.7} parent=11 // pred_region
        _
      $region20: #{very_small_decoder_forward.7} parent=11 // pred_fallthru
        _
    $region12: #{very_small_decoder_forward.7} parent=5 // pred_fallthru
      _
    %p124 = scmp.lt.s32.totalorder %s9, 10
    // Predicated region
    $region21: #{very_small_decoder_forward.7} parent=5 // pred_check
      %p125 = pneg %p124
    $region22: #{very_small_decoder_forward.7} parent=5 // pred_check_branch
      %127 = sbr.rel (%p125) target = $region24
    $region23: #{very_small_decoder_forward.7} parent=5 // pred_region
      // Predicated region
      $region25: #{very_small_decoder_forward.7} parent=23 // pred_check
        %p128 = pneg %p29
      $region26: #{very_small_decoder_forward.7} parent=23 // pred_check_branch
        %130 = sbr.rel (%p128) target = $region28
      $region27: #{very_small_decoder_forward.7} parent=23 // pred_region
        %s131 = smul.u32 256, %s9
        %p132 = scmp.lt.s32.totalorder %s131, 2559
        %s133 = scalar_select %p132, %s131, 2559
        %s134 = smul.addr %s133, 4
        %s135 = scalar_lea.vmem %s0, %s134
        %s136 = smul.u32 256, %s9
      $region28: #{very_small_decoder_forward.7} parent=23 // pred_fallthru
        _
    $region24: #{very_small_decoder_forward.7} parent=5 // pred_fallthru
      _
    %p137 = scmp.le.s32.totalorder 1, %s9
    %p138 = scmp.lt.s32.totalorder %s9, 11
    %p139 = pnand %p137, %p138
    %p140 = pneg %p139
    // Predicated region
    $region29: #{very_small_decoder_forward.7} parent=5 // pred_check
      _
    $region30: #{very_small_decoder_forward.7} parent=5 // pred_check_branch
      %142 = sbr.rel (%p139) target = $region32
    $region31: #{very_small_decoder_forward.7} parent=5 // pred_region
      %s143 = ssub.s32 %s9, 1
      %s144 = smul.u32 256, %s14
      %p145 = scmp.lt.s32.totalorder %s144, 2559
      %s146 = scalar_select %p145, %s144, 2559
      %s147 = smul.addr %s146, 4
      %s148 = scalar_lea.vmem %s0, %s147
      %p149 = pneg %p35
      %p150 = pneg %p32
      %p151 = pneg %p56
      %p152 = pneg %p53
      %p153 = pneg %p77
      %p154 = pneg %p74
      %p155 = pneg %p103
      %p156 = pneg %p100
      %s157 = smul.u32 256, %s14
      %p158 = scmp.lt.s32.totalorder %s157, 2559
      %s159 = scalar_select %p158, %s157, 2559
      %s160 = smul.addr %s159, 8
      %s161 = scalar_lea.vmem %s3, %s160
      %s162 = smul.u32 256, %s14
      %p163 = scmp.lt.s32.totalorder %s162, 2559
      %s164 = scalar_select %p163, %s162, 2559
      %s165 = smul.addr %s164, 4
      %s166 = scalar_lea.vmem %s0, %s165
      %s167 = smul.u32 256, %s14
      %s168 = smul.u32 256, %s14
      %p169 = scmp.lt.s32.totalorder %s168, 2559
      %s170 = scalar_select %p169, %s168, 2559
      %s171 = smul.addr %s170, 8
      %s172 = scalar_lea.vmem %s3, %s171
      %s173 = smul.u32 256, %s14
      %v175 = vld [vmem:[%s166] sm:$0xf]
      %v176 = vld [vmem:[%s166 + $0x4] sm:$0xf]
      %v177 = vld [vmem:[%s166 + $0x8] sm:$0xf]
      %v178 = vld [vmem:[%s166 + $0xc] sm:$0xf]
      %v179 = vld [vmem:[%s166 + $0x10] sm:$0xf]
      %v180 = vld [vmem:[%s166 + $0x14] sm:$0xf]
      %v181 = vld [vmem:[%s166 + $0x18] sm:$0xf]
      %v182 = vld [vmem:[%s166 + $0x1c] sm:$0xf]
      %v183 = vld [vmem:[%s166 + $0x20] sm:$0xf]
      %v184 = vld [vmem:[%s166 + $0x24] sm:$0xf]
      %v185 = vld [vmem:[%s166 + $0x28] sm:$0xf]
      %v186 = vld [vmem:[%s166 + $0x2c] sm:$0xf]
      %v187 = vld [vmem:[%s166 + $0x30] sm:$0xf]
      %v188 = vld [vmem:[%s166 + $0x34] sm:$0xf]
      %v189 = vld [vmem:[%s166 + $0x38] sm:$0xf]
      %v190 = vld [vmem:[%s166 + $0x3c] sm:$0xf]
      %v191 = vld [vmem:[%s166 + $0x40] sm:$0xf]
      %v192 = vld [vmem:[%s166 + $0x44] sm:$0xf]
      %v193 = vld [vmem:[%s166 + $0x48] sm:$0xf]
      %v194 = vld [vmem:[%s166 + $0x4c] sm:$0xf]
      %v195 = vld [vmem:[%s166 + $0x50] sm:$0xf]
      %v196 = vld [vmem:[%s166 + $0x54] sm:$0xf]
      %v197 = vld [vmem:[%s166 + $0x58] sm:$0xf]
      %v198 = vld [vmem:[%s166 + $0x5c] sm:$0xf]
      %v199 = vld [vmem:[%s166 + $0x60] sm:$0xf]
      %v200 = vld [vmem:[%s166 + $0x64] sm:$0xf]
      %v201 = vld [vmem:[%s166 + $0x68] sm:$0xf]
      %v202 = vld [vmem:[%s166 + $0x6c] sm:$0xf]
      %v203 = vld [vmem:[%s166 + $0x70] sm:$0xf]
      %v204 = vld [vmem:[%s166 + $0x74] sm:$0xf]
      %v205 = vld [vmem:[%s166 + $0x78] sm:$0xf]
      %v206 = vld [vmem:[%s166 + $0x7c] sm:$0xf]
      %v207 = vld [vmem:[%s166 + $0x80] sm:$0xf]
      %v208 = vld [vmem:[%s166 + $0x84] sm:$0xf]
      %v209 = vld [vmem:[%s166 + $0x88] sm:$0xf]
      %v210 = vld [vmem:[%s166 + $0x8c] sm:$0xf]
      %v211 = vld [vmem:[%s166 + $0x90] sm:$0xf]
      %v212 = vld [vmem:[%s166 + $0x94] sm:$0xf]
      %v213 = vld [vmem:[%s166 + $0x98] sm:$0xf]
      %v214 = vld [vmem:[%s166 + $0x9c] sm:$0xf]
      %v215 = vld [vmem:[%s166 + $0xa0] sm:$0xf]
      %v216 = vld [vmem:[%s166 + $0xa4] sm:$0xf]
      %v217 = vld [vmem:[%s166 + $0xa8] sm:$0xf]
      %v218 = vld [vmem:[%s166 + $0xac] sm:$0xf]
      %v219 = vld [vmem:[%s166 + $0xb0] sm:$0xf]
      %v220 = vld [vmem:[%s166 + $0xb4] sm:$0xf]
      %v221 = vld [vmem:[%s166 + $0xb8] sm:$0xf]
      %v222 = vld [vmem:[%s166 + $0xbc] sm:$0xf]
      %v223 = vld [vmem:[%s166 + $0xc0] sm:$0xf]
      %v224 = vld [vmem:[%s166 + $0xc4] sm:$0xf]
      %v225 = vld [vmem:[%s166 + $0xc8] sm:$0xf]
      %v226 = vld [vmem:[%s166 + $0xcc] sm:$0xf]
      %v227 = vld [vmem:[%s166 + $0xd0] sm:$0xf]
      %v228 = vld [vmem:[%s166 + $0xd4] sm:$0xf]
      %v229 = vld [vmem:[%s166 + $0xd8] sm:$0xf]
      %v230 = vld [vmem:[%s166 + $0xdc] sm:$0xf]
      %v231 = vld [vmem:[%s166 + $0xe0] sm:$0xf]
      %v232 = vld [vmem:[%s166 + $0xe4] sm:$0xf]
      %v233 = vld [vmem:[%s166 + $0xe8] sm:$0xf]
      %v234 = vld [vmem:[%s166 + $0xec] sm:$0xf]
      %v235 = vld [vmem:[%s166 + $0xf0] sm:$0xf]
      %v236 = vld [vmem:[%s166 + $0xf4] sm:$0xf]
      %v237 = vld [vmem:[%s166 + $0xf8] sm:$0xf]
      %v238 = vld [vmem:[%s166 + $0xfc] sm:$0xf]
      %v239 = vld [vmem:[%s166 + $0x100] sm:$0xf]
      %v240 = vld [vmem:[%s166 + $0x104] sm:$0xf]
      %v241 = vld [vmem:[%s166 + $0x108] sm:$0xf]
      %v242 = vld [vmem:[%s166 + $0x10c] sm:$0xf]
      %v243 = vld [vmem:[%s166 + $0x110] sm:$0xf]
      %v244 = vld [vmem:[%s166 + $0x114] sm:$0xf]
      %v245 = vld [vmem:[%s166 + $0x118] sm:$0xf]
      %v246 = vld [vmem:[%s166 + $0x11c] sm:$0xf]
      %v247 = vld [vmem:[%s166 + $0x120] sm:$0xf]
      %v248 = vld [vmem:[%s166 + $0x124] sm:$0xf]
      %v249 = vld [vmem:[%s166 + $0x128] sm:$0xf]
      %v250 = vld [vmem:[%s166 + $0x12c] sm:$0xf]
      %v251 = vld [vmem:[%s166 + $0x130] sm:$0xf]
      %v252 = vld [vmem:[%s166 + $0x134] sm:$0xf]
      %v253 = vld [vmem:[%s166 + $0x138] sm:$0xf]
      %v254 = vld [vmem:[%s166 + $0x13c] sm:$0xf]
      %v255 = vld [vmem:[%s166 + $0x140] sm:$0xf]
      %v256 = vld [vmem:[%s166 + $0x144] sm:$0xf]
      %v257 = vld [vmem:[%s166 + $0x148] sm:$0xf]
      %v258 = vld [vmem:[%s166 + $0x14c] sm:$0xf]
      %v259 = vld [vmem:[%s166 + $0x150] sm:$0xf]
      %v260 = vld [vmem:[%s166 + $0x154] sm:$0xf]
      %v261 = vld [vmem:[%s166 + $0x158] sm:$0xf]
      %v262 = vld [vmem:[%s166 + $0x15c] sm:$0xf]
      %v263 = vld [vmem:[%s166 + $0x160] sm:$0xf]
      %v264 = vld [vmem:[%s166 + $0x164] sm:$0xf]
      %v265 = vld [vmem:[%s166 + $0x168] sm:$0xf]
      %v266 = vld [vmem:[%s166 + $0x16c] sm:$0xf]
      %v267 = vld [vmem:[%s166 + $0x170] sm:$0xf]
      %v268 = vld [vmem:[%s166 + $0x174] sm:$0xf]
      %v269 = vld [vmem:[%s166 + $0x178] sm:$0xf]
      %v270 = vld [vmem:[%s166 + $0x17c] sm:$0xf]
      %v271 = vld [vmem:[%s166 + $0x180] sm:$0xf]
      %v272 = vld [vmem:[%s166 + $0x184] sm:$0xf]
      %v273 = vld [vmem:[%s166 + $0x188] sm:$0xf]
      %v274 = vld [vmem:[%s166 + $0x18c] sm:$0xf]
      %v275 = vld [vmem:[%s166 + $0x190] sm:$0xf]
      %v276 = vld [vmem:[%s166 + $0x194] sm:$0xf]
      %v277 = vld [vmem:[%s166 + $0x198] sm:$0xf]
      %v278 = vld [vmem:[%s166 + $0x19c] sm:$0xf]
      %v279 = vld [vmem:[%s166 + $0x1a0] sm:$0xf]
      %v280 = vld [vmem:[%s166 + $0x1a4] sm:$0xf]
      %v281 = vld [vmem:[%s166 + $0x1a8] sm:$0xf]
      %v282 = vld [vmem:[%s166 + $0x1ac] sm:$0xf]
      %v283 = vld [vmem:[%s166 + $0x1b0] sm:$0xf]
      %v284 = vld [vmem:[%s166 + $0x1b4] sm:$0xf]
      %v285 = vld [vmem:[%s166 + $0x1b8] sm:$0xf]
      %v286 = vld [vmem:[%s166 + $0x1bc] sm:$0xf]
      %v287 = vld [vmem:[%s166 + $0x1c0] sm:$0xf]
      %v288 = vld [vmem:[%s166 + $0x1c4] sm:$0xf]
      %v289 = vld [vmem:[%s166 + $0x1c8] sm:$0xf]
      %v290 = vld [vmem:[%s166 + $0x1cc] sm:$0xf]
      %v291 = vld [vmem:[%s166 + $0x1d0] sm:$0xf]
      %v292 = vld [vmem:[%s166 + $0x1d4] sm:$0xf]
      %v293 = vld [vmem:[%s166 + $0x1d8] sm:$0xf]
      %v294 = vld [vmem:[%s166 + $0x1dc] sm:$0xf]
      %v295 = vld [vmem:[%s166 + $0x1e0] sm:$0xf]
      %v296 = vld [vmem:[%s166 + $0x1e4] sm:$0xf]
      %v297 = vld [vmem:[%s166 + $0x1e8] sm:$0xf]
      %v298 = vld [vmem:[%s166 + $0x1ec] sm:$0xf]
      %v299 = vld [vmem:[%s166 + $0x1f0] sm:$0xf]
      %v300 = vld [vmem:[%s166 + $0x1f4] sm:$0xf]
      %v301 = vld [vmem:[%s166 + $0x1f8] sm:$0xf]
      %v302 = vld [vmem:[%s166 + $0x1fc] sm:$0xf]
      %v303 = vld [vmem:[%s166 + $0x200] sm:$0xf]
      %v304 = vld [vmem:[%s166 + $0x204] sm:$0xf]
      %v305 = vld [vmem:[%s166 + $0x208] sm:$0xf]
      %v306 = vld [vmem:[%s166 + $0x20c] sm:$0xf]
      %v307 = vld [vmem:[%s166 + $0x210] sm:$0xf]
      %v308 = vld [vmem:[%s166 + $0x214] sm:$0xf]
      %v309 = vld [vmem:[%s166 + $0x218] sm:$0xf]
      %v310 = vld [vmem:[%s166 + $0x21c] sm:$0xf]
      %v311 = vld [vmem:[%s166 + $0x220] sm:$0xf]
      %v312 = vld [vmem:[%s166 + $0x224] sm:$0xf]
      %v313 = vld [vmem:[%s166 + $0x228] sm:$0xf]
      %v314 = vld [vmem:[%s166 + $0x22c] sm:$0xf]
      %v315 = vld [vmem:[%s166 + $0x230] sm:$0xf]
      %v316 = vld [vmem:[%s166 + $0x234] sm:$0xf]
      %v317 = vld [vmem:[%s166 + $0x238] sm:$0xf]
      %v318 = vld [vmem:[%s166 + $0x23c] sm:$0xf]
      %v319 = vld [vmem:[%s166 + $0x240] sm:$0xf]
      %v320 = vld [vmem:[%s166 + $0x244] sm:$0xf]
      %v321 = vld [vmem:[%s166 + $0x248] sm:$0xf]
      %v322 = vld [vmem:[%s166 + $0x24c] sm:$0xf]
      %v323 = vld [vmem:[%s166 + $0x250] sm:$0xf]
      %v324 = vld [vmem:[%s166 + $0x254] sm:$0xf]
      %v325 = vld [vmem:[%s166 + $0x258] sm:$0xf]
      %v326 = vld [vmem:[%s166 + $0x25c] sm:$0xf]
      %v327 = vld [vmem:[%s166 + $0x260] sm:$0xf]
      %v328 = vld [vmem:[%s166 + $0x264] sm:$0xf]
      %v329 = vld [vmem:[%s166 + $0x268] sm:$0xf]
      %v330 = vld [vmem:[%s166 + $0x26c] sm:$0xf]
      %v331 = vld [vmem:[%s166 + $0x270] sm:$0xf]
      %v332 = vld [vmem:[%s166 + $0x274] sm:$0xf]
      %v333 = vld [vmem:[%s166 + $0x278] sm:$0xf]
      %v334 = vld [vmem:[%s166 + $0x27c] sm:$0xf]
      %v335 = vld [vmem:[%s166 + $0x280] sm:$0xf]
      %v336 = vld [vmem:[%s166 + $0x284] sm:$0xf]
      %v337 = vld [vmem:[%s166 + $0x288] sm:$0xf]
      %v338 = vld [vmem:[%s166 + $0x28c] sm:$0xf]
      %v339 = vld [vmem:[%s166 + $0x290] sm:$0xf]
      %v340 = vld [vmem:[%s166 + $0x294] sm:$0xf]
      %v341 = vld [vmem:[%s166 + $0x298] sm:$0xf]
      %v342 = vld [vmem:[%s166 + $0x29c] sm:$0xf]
      %v343 = vld [vmem:[%s166 + $0x2a0] sm:$0xf]
      %v344 = vld [vmem:[%s166 + $0x2a4] sm:$0xf]
      %v345 = vld [vmem:[%s166 + $0x2a8] sm:$0xf]
      %v346 = vld [vmem:[%s166 + $0x2ac] sm:$0xf]
      %v347 = vld [vmem:[%s166 + $0x2b0] sm:$0xf]
      %v348 = vld [vmem:[%s166 + $0x2b4] sm:$0xf]
      %v349 = vld [vmem:[%s166 + $0x2b8] sm:$0xf]
      %v350 = vld [vmem:[%s166 + $0x2bc] sm:$0xf]
      %v351 = vld [vmem:[%s166 + $0x2c0] sm:$0xf]
      %v352 = vld [vmem:[%s166 + $0x2c4] sm:$0xf]
      %v353 = vld [vmem:[%s166 + $0x2c8] sm:$0xf]
      %v354 = vld [vmem:[%s166 + $0x2cc] sm:$0xf]
      %v355 = vld [vmem:[%s166 + $0x2d0] sm:$0xf]
      %v356 = vld [vmem:[%s166 + $0x2d4] sm:$0xf]
      %v357 = vld [vmem:[%s166 + $0x2d8] sm:$0xf]
      %v358 = vld [vmem:[%s166 + $0x2dc] sm:$0xf]
      %v359 = vld [vmem:[%s166 + $0x2e0] sm:$0xf]
      %v360 = vld [vmem:[%s166 + $0x2e4] sm:$0xf]
      %v361 = vld [vmem:[%s166 + $0x2e8] sm:$0xf]
      %v362 = vld [vmem:[%s166 + $0x2ec] sm:$0xf]
      %v363 = vld [vmem:[%s166 + $0x2f0] sm:$0xf]
      %v364 = vld [vmem:[%s166 + $0x2f4] sm:$0xf]
      %v365 = vld [vmem:[%s166 + $0x2f8] sm:$0xf]
      %v366 = vld [vmem:[%s166 + $0x2fc] sm:$0xf]
      %v367 = vld [vmem:[%s166 + $0x300] sm:$0xf]
      %v368 = vld [vmem:[%s166 + $0x304] sm:$0xf]
      %v369 = vld [vmem:[%s166 + $0x308] sm:$0xf]
      %v370 = vld [vmem:[%s166 + $0x30c] sm:$0xf]
      %v371 = vld [vmem:[%s166 + $0x310] sm:$0xf]
      %v372 = vld [vmem:[%s166 + $0x314] sm:$0xf]
      %v373 = vld [vmem:[%s166 + $0x318] sm:$0xf]
      %v374 = vld [vmem:[%s166 + $0x31c] sm:$0xf]
      %v375 = vld [vmem:[%s166 + $0x320] sm:$0xf]
      %v376 = vld [vmem:[%s166 + $0x324] sm:$0xf]
      %v377 = vld [vmem:[%s166 + $0x328] sm:$0xf]
      %v378 = vld [vmem:[%s166 + $0x32c] sm:$0xf]
      %v379 = vld [vmem:[%s166 + $0x330] sm:$0xf]
      %v380 = vld [vmem:[%s166 + $0x334] sm:$0xf]
      %v381 = vld [vmem:[%s166 + $0x338] sm:$0xf]
      %v382 = vld [vmem:[%s166 + $0x33c] sm:$0xf]
      %v383 = vld [vmem:[%s166 + $0x340] sm:$0xf]
      %v384 = vld [vmem:[%s166 + $0x344] sm:$0xf]
      %v385 = vld [vmem:[%s166 + $0x348] sm:$0xf]
      %v386 = vld [vmem:[%s166 + $0x34c] sm:$0xf]
      %v387 = vld [vmem:[%s166 + $0x350] sm:$0xf]
      %v388 = vld [vmem:[%s166 + $0x354] sm:$0xf]
      %v389 = vld [vmem:[%s166 + $0x358] sm:$0xf]
      %v390 = vld [vmem:[%s166 + $0x35c] sm:$0xf]
      %v391 = vld [vmem:[%s166 + $0x360] sm:$0xf]
      %v392 = vld [vmem:[%s166 + $0x364] sm:$0xf]
      %v393 = vld [vmem:[%s166 + $0x368] sm:$0xf]
      %v394 = vld [vmem:[%s166 + $0x36c] sm:$0xf]
      %v395 = vld [vmem:[%s166 + $0x370] sm:$0xf]
      %v396 = vld [vmem:[%s166 + $0x374] sm:$0xf]
      %v397 = vld [vmem:[%s166 + $0x378] sm:$0xf]
      %v398 = vld [vmem:[%s166 + $0x37c] sm:$0xf]
      %v399 = vld [vmem:[%s166 + $0x380] sm:$0xf]
      %v400 = vld [vmem:[%s166 + $0x384] sm:$0xf]
      %v401 = vld [vmem:[%s166 + $0x388] sm:$0xf]
      %v402 = vld [vmem:[%s166 + $0x38c] sm:$0xf]
      %v403 = vld [vmem:[%s166 + $0x390] sm:$0xf]
      %v404 = vld [vmem:[%s166 + $0x394] sm:$0xf]
      %v405 = vld [vmem:[%s166 + $0x398] sm:$0xf]
      %v406 = vld [vmem:[%s166 + $0x39c] sm:$0xf]
      %v407 = vld [vmem:[%s166 + $0x3a0] sm:$0xf]
      %v408 = vld [vmem:[%s166 + $0x3a4] sm:$0xf]
      %v409 = vld [vmem:[%s166 + $0x3a8] sm:$0xf]
      %v410 = vld [vmem:[%s166 + $0x3ac] sm:$0xf]
      %v411 = vld [vmem:[%s166 + $0x3b0] sm:$0xf]
      %v412 = vld [vmem:[%s166 + $0x3b4] sm:$0xf]
      %v413 = vld [vmem:[%s166 + $0x3b8] sm:$0xf]
      %v414 = vld [vmem:[%s166 + $0x3bc] sm:$0xf]
      %v415 = vld [vmem:[%s166 + $0x3c0] sm:$0xf]
      %v416 = vld [vmem:[%s166 + $0x3c4] sm:$0xf]
      %v417 = vld [vmem:[%s166 + $0x3c8] sm:$0xf]
      %v418 = vld [vmem:[%s166 + $0x3cc] sm:$0xf]
      %v419 = vld [vmem:[%s166 + $0x3d0] sm:$0xf]
      %v420 = vld [vmem:[%s166 + $0x3d4] sm:$0xf]
      %v421 = vld [vmem:[%s166 + $0x3d8] sm:$0xf]
      %v422 = vld [vmem:[%s166 + $0x3dc] sm:$0xf]
      %v423 = vld [vmem:[%s166 + $0x3e0] sm:$0xf]
      %v424 = vld [vmem:[%s166 + $0x3e4] sm:$0xf]
      %v425 = vld [vmem:[%s166 + $0x3e8] sm:$0xf]
      %v426 = vld [vmem:[%s166 + $0x3ec] sm:$0xf]
      %v427 = vld [vmem:[%s166 + $0x3f0] sm:$0xf]
      %v428 = vld [vmem:[%s166 + $0x3f4] sm:$0xf]
      %v429 = vld [vmem:[%s166 + $0x3f8] sm:$0xf]
      %v430 = vld [vmem:[%s166 + $0x3fc] sm:$0xf]
      %v431 = vld [vmem:[%s1] sm:$0xf]
      %v432 = vld [vmem:[%s1 + $0x4] sm:$0xf]
      %v433 = vld [vmem:[%s1 + $0x8] sm:$0xf]
      %v434 = vld [vmem:[%s1 + $0xc] sm:$0xf]
      %v435 = vld [vmem:[%s1 + $0x10] sm:$0xf]
      %v436 = vld [vmem:[%s1 + $0x14] sm:$0xf]
      %v437 = vld [vmem:[%s1 + $0x18] sm:$0xf]
      %v438 = vld [vmem:[%s1 + $0x1c] sm:$0xf]
      %v439 = vld [vmem:[%s1 + $0x20] sm:$0xf]
      %v440 = vld [vmem:[%s1 + $0x24] sm:$0xf]
      %v441 = vld [vmem:[%s2] sm:$0x1]
      %v443 = vlaneseq
      %v444 = vshrl.u32 %v443, 7
      %v445 = vsub.s32 0, %v444
      %v446 = vrot.slane %v441, %v445
      %v704 = vunpack.c.l.b16 %v175
      %v705 = vunpack.c.l.b16 %v176
      %v706 = vunpack.c.l.b16 %v177
      %v707 = vunpack.c.l.b16 %v178
      %v708 = vunpack.c.l.b16 %v179
      %v709 = vunpack.c.l.b16 %v180
      %v710 = vunpack.c.l.b16 %v181
      %v711 = vunpack.c.l.b16 %v182
      %v712 = vunpack.c.l.b16 %v183
      %v713 = vunpack.c.l.b16 %v184
      %v714 = vunpack.c.l.b16 %v185
      %v715 = vunpack.c.l.b16 %v186
      %v716 = vunpack.c.l.b16 %v187
      %v717 = vunpack.c.l.b16 %v188
      %v718 = vunpack.c.l.b16 %v189
      %v719 = vunpack.c.l.b16 %v190
      %v720 = vunpack.c.l.b16 %v191
      %v721 = vunpack.c.l.b16 %v192
      %v722 = vunpack.c.l.b16 %v193
      %v723 = vunpack.c.l.b16 %v194
      %v724 = vunpack.c.l.b16 %v195
      %v725 = vunpack.c.l.b16 %v196
      %v726 = vunpack.c.l.b16 %v197
      %v727 = vunpack.c.l.b16 %v198
      %v728 = vunpack.c.l.b16 %v199
      %v729 = vunpack.c.l.b16 %v200
      %v730 = vunpack.c.l.b16 %v201
      %v731 = vunpack.c.l.b16 %v202
      %v732 = vunpack.c.l.b16 %v203
      %v733 = vunpack.c.l.b16 %v204
      %v734 = vunpack.c.l.b16 %v205
      %v735 = vunpack.c.l.b16 %v206
      %v736 = vunpack.c.l.b16 %v207
      %v737 = vunpack.c.l.b16 %v208
      %v738 = vunpack.c.l.b16 %v209
      %v739 = vunpack.c.l.b16 %v210
      %v740 = vunpack.c.l.b16 %v211
      %v741 = vunpack.c.l.b16 %v212
      %v742 = vunpack.c.l.b16 %v213
      %v743 = vunpack.c.l.b16 %v214
      %v744 = vunpack.c.l.b16 %v215
      %v745 = vunpack.c.l.b16 %v216
      %v746 = vunpack.c.l.b16 %v217
      %v747 = vunpack.c.l.b16 %v218
      %v748 = vunpack.c.l.b16 %v219
      %v749 = vunpack.c.l.b16 %v220
      %v750 = vunpack.c.l.b16 %v221
      %v751 = vunpack.c.l.b16 %v222
      %v752 = vunpack.c.l.b16 %v223
      %v753 = vunpack.c.l.b16 %v224
      %v754 = vunpack.c.l.b16 %v225
      %v755 = vunpack.c.l.b16 %v226
      %v756 = vunpack.c.l.b16 %v227
      %v757 = vunpack.c.l.b16 %v228
      %v758 = vunpack.c.l.b16 %v229
      %v759 = vunpack.c.l.b16 %v230
      %v760 = vunpack.c.l.b16 %v231
      %v761 = vunpack.c.l.b16 %v232
      %v762 = vunpack.c.l.b16 %v233
      %v763 = vunpack.c.l.b16 %v234
      %v764 = vunpack.c.l.b16 %v235
      %v765 = vunpack.c.l.b16 %v236
      %v766 = vunpack.c.l.b16 %v237
      %v767 = vunpack.c.l.b16 %v238
      %v768 = vunpack.c.l.b16 %v239
      %v769 = vunpack.c.l.b16 %v240
      %v770 = vunpack.c.l.b16 %v241
      %v771 = vunpack.c.l.b16 %v242
      %v772 = vunpack.c.l.b16 %v243
      %v773 = vunpack.c.l.b16 %v244
      %v774 = vunpack.c.l.b16 %v245
      %v775 = vunpack.c.l.b16 %v246
      %v776 = vunpack.c.l.b16 %v247
      %v777 = vunpack.c.l.b16 %v248
      %v778 = vunpack.c.l.b16 %v249
      %v779 = vunpack.c.l.b16 %v250
      %v780 = vunpack.c.l.b16 %v251
      %v781 = vunpack.c.l.b16 %v252
      %v782 = vunpack.c.l.b16 %v253
      %v783 = vunpack.c.l.b16 %v254
      %v784 = vunpack.c.l.b16 %v255
      %v785 = vunpack.c.l.b16 %v256
      %v786 = vunpack.c.l.b16 %v257
      %v787 = vunpack.c.l.b16 %v258
      %v788 = vunpack.c.l.b16 %v259
      %v789 = vunpack.c.l.b16 %v260
      %v790 = vunpack.c.l.b16 %v261
      %v791 = vunpack.c.l.b16 %v262
      %v792 = vunpack.c.l.b16 %v263
      %v793 = vunpack.c.l.b16 %v264
      %v794 = vunpack.c.l.b16 %v265
      %v795 = vunpack.c.l.b16 %v266
      %v796 = vunpack.c.l.b16 %v267
      %v797 = vunpack.c.l.b16 %v268
      %v798 = vunpack.c.l.b16 %v269
      %v799 = vunpack.c.l.b16 %v270
      %v800 = vunpack.c.l.b16 %v271
      %v801 = vunpack.c.l.b16 %v272
      %v802 = vunpack.c.l.b16 %v273
      %v803 = vunpack.c.l.b16 %v274
      %v804 = vunpack.c.l.b16 %v275
      %v805 = vunpack.c.l.b16 %v276
      %v806 = vunpack.c.l.b16 %v277
      %v807 = vunpack.c.l.b16 %v278
      %v808 = vunpack.c.l.b16 %v279
      %v809 = vunpack.c.l.b16 %v280
      %v810 = vunpack.c.l.b16 %v281
      %v811 = vunpack.c.l.b16 %v282
      %v812 = vunpack.c.l.b16 %v283
      %v813 = vunpack.c.l.b16 %v284
      %v814 = vunpack.c.l.b16 %v285
      %v815 = vunpack.c.l.b16 %v286
      %v816 = vunpack.c.l.b16 %v287
      %v817 = vunpack.c.l.b16 %v288
      %v818 = vunpack.c.l.b16 %v289
      %v819 = vunpack.c.l.b16 %v290
      %v820 = vunpack.c.l.b16 %v291
      %v821 = vunpack.c.l.b16 %v292
      %v822 = vunpack.c.l.b16 %v293
      %v823 = vunpack.c.l.b16 %v294
      %v824 = vunpack.c.l.b16 %v295
      %v825 = vunpack.c.l.b16 %v296
      %v826 = vunpack.c.l.b16 %v297
      %v827 = vunpack.c.l.b16 %v298
      %v828 = vunpack.c.l.b16 %v299
      %v829 = vunpack.c.l.b16 %v300
      %v830 = vunpack.c.l.b16 %v301
      %v831 = vunpack.c.l.b16 %v302
      %v832 = vunpack.c.l.b16 %v303
      %v833 = vunpack.c.l.b16 %v304
      %v834 = vunpack.c.l.b16 %v305
      %v835 = vunpack.c.l.b16 %v306
      %v836 = vunpack.c.l.b16 %v307
      %v837 = vunpack.c.l.b16 %v308
      %v838 = vunpack.c.l.b16 %v309
      %v839 = vunpack.c.l.b16 %v310
      %v840 = vunpack.c.l.b16 %v311
      %v841 = vunpack.c.l.b16 %v312
      %v842 = vunpack.c.l.b16 %v313
      %v843 = vunpack.c.l.b16 %v314
      %v844 = vunpack.c.l.b16 %v315
      %v845 = vunpack.c.l.b16 %v316
      %v846 = vunpack.c.l.b16 %v317
      %v847 = vunpack.c.l.b16 %v318
      %v848 = vunpack.c.l.b16 %v319
      %v849 = vunpack.c.l.b16 %v320
      %v850 = vunpack.c.l.b16 %v321
      %v851 = vunpack.c.l.b16 %v322
      %v852 = vunpack.c.l.b16 %v323
      %v853 = vunpack.c.l.b16 %v324
      %v854 = vunpack.c.l.b16 %v325
      %v855 = vunpack.c.l.b16 %v326
      %v856 = vunpack.c.l.b16 %v327
      %v857 = vunpack.c.l.b16 %v328
      %v858 = vunpack.c.l.b16 %v329
      %v859 = vunpack.c.l.b16 %v330
      %v860 = vunpack.c.l.b16 %v331
      %v861 = vunpack.c.l.b16 %v332
      %v862 = vunpack.c.l.b16 %v333
      %v863 = vunpack.c.l.b16 %v334
      %v864 = vunpack.c.l.b16 %v335
      %v865 = vunpack.c.l.b16 %v336
      %v866 = vunpack.c.l.b16 %v337
      %v867 = vunpack.c.l.b16 %v338
      %v868 = vunpack.c.l.b16 %v339
      %v869 = vunpack.c.l.b16 %v340
      %v870 = vunpack.c.l.b16 %v341
      %v871 = vunpack.c.l.b16 %v342
      %v872 = vunpack.c.l.b16 %v343
      %v873 = vunpack.c.l.b16 %v344
      %v874 = vunpack.c.l.b16 %v345
      %v875 = vunpack.c.l.b16 %v346
      %v876 = vunpack.c.l.b16 %v347
      %v877 = vunpack.c.l.b16 %v348
      %v878 = vunpack.c.l.b16 %v349
      %v879 = vunpack.c.l.b16 %v350
      %v880 = vunpack.c.l.b16 %v351
      %v881 = vunpack.c.l.b16 %v352
      %v882 = vunpack.c.l.b16 %v353
      %v883 = vunpack.c.l.b16 %v354
      %v884 = vunpack.c.l.b16 %v355
      %v885 = vunpack.c.l.b16 %v356
      %v886 = vunpack.c.l.b16 %v357
      %v887 = vunpack.c.l.b16 %v358
      %v888 = vunpack.c.l.b16 %v359
      %v889 = vunpack.c.l.b16 %v360
      %v890 = vunpack.c.l.b16 %v361
      %v891 = vunpack.c.l.b16 %v362
      %v892 = vunpack.c.l.b16 %v363
      %v893 = vunpack.c.l.b16 %v364
      %v894 = vunpack.c.l.b16 %v365
      %v895 = vunpack.c.l.b16 %v366
      %v896 = vunpack.c.l.b16 %v367
      %v897 = vunpack.c.l.b16 %v368
      %v898 = vunpack.c.l.b16 %v369
      %v899 = vunpack.c.l.b16 %v370
      %v900 = vunpack.c.l.b16 %v371
      %v901 = vunpack.c.l.b16 %v372
      %v902 = vunpack.c.l.b16 %v373
      %v903 = vunpack.c.l.b16 %v374
      %v904 = vunpack.c.l.b16 %v375
      %v905 = vunpack.c.l.b16 %v376
      %v906 = vunpack.c.l.b16 %v377
      %v907 = vunpack.c.l.b16 %v378
      %v908 = vunpack.c.l.b16 %v379
      %v909 = vunpack.c.l.b16 %v380
      %v910 = vunpack.c.l.b16 %v381
      %v911 = vunpack.c.l.b16 %v382
      %v912 = vunpack.c.l.b16 %v383
      %v913 = vunpack.c.l.b16 %v384
      %v914 = vunpack.c.l.b16 %v385
      %v915 = vunpack.c.l.b16 %v386
      %v916 = vunpack.c.l.b16 %v387
      %v917 = vunpack.c.l.b16 %v388
      %v918 = vunpack.c.l.b16 %v389
      %v919 = vunpack.c.l.b16 %v390
      %v920 = vunpack.c.l.b16 %v391
      %v921 = vunpack.c.l.b16 %v392
      %v922 = vunpack.c.l.b16 %v393
      %v923 = vunpack.c.l.b16 %v394
      %v924 = vunpack.c.l.b16 %v395
      %v925 = vunpack.c.l.b16 %v396
      %v926 = vunpack.c.l.b16 %v397
      %v927 = vunpack.c.l.b16 %v398
      %v928 = vunpack.c.l.b16 %v399
      %v929 = vunpack.c.l.b16 %v400
      %v930 = vunpack.c.l.b16 %v401
      %v931 = vunpack.c.l.b16 %v402
      %v932 = vunpack.c.l.b16 %v403
      %v933 = vunpack.c.l.b16 %v404
      %v934 = vunpack.c.l.b16 %v405
      %v935 = vunpack.c.l.b16 %v406
      %v936 = vunpack.c.l.b16 %v407
      %v937 = vunpack.c.l.b16 %v408
      %v938 = vunpack.c.l.b16 %v409
      %v939 = vunpack.c.l.b16 %v410
      %v940 = vunpack.c.l.b16 %v411
      %v941 = vunpack.c.l.b16 %v412
      %v942 = vunpack.c.l.b16 %v413
      %v943 = vunpack.c.l.b16 %v414
      %v944 = vunpack.c.l.b16 %v415
      %v945 = vunpack.c.l.b16 %v416
      %v946 = vunpack.c.l.b16 %v417
      %v947 = vunpack.c.l.b16 %v418
      %v948 = vunpack.c.l.b16 %v419
      %v949 = vunpack.c.l.b16 %v420
      %v950 = vunpack.c.l.b16 %v421
      %v951 = vunpack.c.l.b16 %v422
      %v952 = vunpack.c.l.b16 %v423
      %v953 = vunpack.c.l.b16 %v424
      %v954 = vunpack.c.l.b16 %v425
      %v955 = vunpack.c.l.b16 %v426
      %v956 = vunpack.c.l.b16 %v427
      %v957 = vunpack.c.l.b16 %v428
      %v958 = vunpack.c.l.b16 %v429
      %v959 = vunpack.c.l.b16 %v430
      %v960 = vpack.c.b16 %v705, %v704
      %v961 = vpack.c.b16 %v707, %v706
      %v962 = vpack.c.b16 %v709, %v708
      %v963 = vpack.c.b16 %v711, %v710
      %v964 = vpack.c.b16 %v713, %v712
      %v965 = vpack.c.b16 %v715, %v714
      %v966 = vpack.c.b16 %v717, %v716
      %v967 = vpack.c.b16 %v719, %v718
      %v968 = vpack.c.b16 %v721, %v720
      %v969 = vpack.c.b16 %v723, %v722
      %v970 = vpack.c.b16 %v725, %v724
      %v971 = vpack.c.b16 %v727, %v726
      %v972 = vpack.c.b16 %v729, %v728
      %v973 = vpack.c.b16 %v731, %v730
      %v974 = vpack.c.b16 %v733, %v732
      %v975 = vpack.c.b16 %v735, %v734
      %v976 = vpack.c.b16 %v737, %v736
      %v977 = vpack.c.b16 %v739, %v738
      %v978 = vpack.c.b16 %v741, %v740
      %v979 = vpack.c.b16 %v743, %v742
      %v980 = vpack.c.b16 %v745, %v744
      %v981 = vpack.c.b16 %v747, %v746
      %v982 = vpack.c.b16 %v749, %v748
      %v983 = vpack.c.b16 %v751, %v750
      %v984 = vpack.c.b16 %v753, %v752
      %v985 = vpack.c.b16 %v755, %v754
      %v986 = vpack.c.b16 %v757, %v756
      %v987 = vpack.c.b16 %v759, %v758
      %v988 = vpack.c.b16 %v761, %v760
      %v989 = vpack.c.b16 %v763, %v762
      %v990 = vpack.c.b16 %v765, %v764
      %v991 = vpack.c.b16 %v767, %v766
      %v992 = vpack.c.b16 %v769, %v768
      %v993 = vpack.c.b16 %v771, %v770
      %v994 = vpack.c.b16 %v773, %v772
      %v995 = vpack.c.b16 %v775, %v774
      %v996 = vpack.c.b16 %v777, %v776
      %v997 = vpack.c.b16 %v779, %v778
      %v998 = vpack.c.b16 %v781, %v780
      %v999 = vpack.c.b16 %v783, %v782
      %v1000 = vpack.c.b16 %v785, %v784
      %v1001 = vpack.c.b16 %v787, %v786
      %v1002 = vpack.c.b16 %v789, %v788
      %v1003 = vpack.c.b16 %v791, %v790
      %v1004 = vpack.c.b16 %v793, %v792
      %v1005 = vpack.c.b16 %v795, %v794
      %v1006 = vpack.c.b16 %v797, %v796
      %v1007 = vpack.c.b16 %v799, %v798
      %v1008 = vpack.c.b16 %v801, %v800
      %v1009 = vpack.c.b16 %v803, %v802
      %v1010 = vpack.c.b16 %v805, %v804
      %v1011 = vpack.c.b16 %v807, %v806
      %v1012 = vpack.c.b16 %v809, %v808
      %v1013 = vpack.c.b16 %v811, %v810
      %v1014 = vpack.c.b16 %v813, %v812
      %v1015 = vpack.c.b16 %v815, %v814
      %v1016 = vpack.c.b16 %v817, %v816
      %v1017 = vpack.c.b16 %v819, %v818
      %v1018 = vpack.c.b16 %v821, %v820
      %v1019 = vpack.c.b16 %v823, %v822
      %v1020 = vpack.c.b16 %v825, %v824
      %v1021 = vpack.c.b16 %v827, %v826
      %v1022 = vpack.c.b16 %v829, %v828
      %v1023 = vpack.c.b16 %v831, %v830
      %v1024 = vpack.c.b16 %v833, %v832
      %v1025 = vpack.c.b16 %v835, %v834
      %v1026 = vpack.c.b16 %v837, %v836
      %v1027 = vpack.c.b16 %v839, %v838
      %v1028 = vpack.c.b16 %v841, %v840
      %v1029 = vpack.c.b16 %v843, %v842
      %v1030 = vpack.c.b16 %v845, %v844
      %v1031 = vpack.c.b16 %v847, %v846
      %v1032 = vpack.c.b16 %v849, %v848
      %v1033 = vpack.c.b16 %v851, %v850
      %v1034 = vpack.c.b16 %v853, %v852
      %v1035 = vpack.c.b16 %v855, %v854
      %v1036 = vpack.c.b16 %v857, %v856
      %v1037 = vpack.c.b16 %v859, %v858
      %v1038 = vpack.c.b16 %v861, %v860
      %v1039 = vpack.c.b16 %v863, %v862
      %v1040 = vpack.c.b16 %v865, %v864
      %v1041 = vpack.c.b16 %v867, %v866
      %v1042 = vpack.c.b16 %v869, %v868
      %v1043 = vpack.c.b16 %v871, %v870
      %v1044 = vpack.c.b16 %v873, %v872
      %v1045 = vpack.c.b16 %v875, %v874
      %v1046 = vpack.c.b16 %v877, %v876
      %v1047 = vpack.c.b16 %v879, %v878
      %v1048 = vpack.c.b16 %v881, %v880
      %v1049 = vpack.c.b16 %v883, %v882
      %v1050 = vpack.c.b16 %v885, %v884
      %v1051 = vpack.c.b16 %v887, %v886
      %v1052 = vpack.c.b16 %v889, %v888
      %v1053 = vpack.c.b16 %v891, %v890
      %v1054 = vpack.c.b16 %v893, %v892
      %v1055 = vpack.c.b16 %v895, %v894
      %v1056 = vpack.c.b16 %v897, %v896
      %v1057 = vpack.c.b16 %v899, %v898
      %v1058 = vpack.c.b16 %v901, %v900
      %v1059 = vpack.c.b16 %v903, %v902
      %v1060 = vpack.c.b16 %v905, %v904
      %v1061 = vpack.c.b16 %v907, %v906
      %v1062 = vpack.c.b16 %v909, %v908
      %v1063 = vpack.c.b16 %v911, %v910
      %v1064 = vpack.c.b16 %v913, %v912
      %v1065 = vpack.c.b16 %v915, %v914
      %v1066 = vpack.c.b16 %v917, %v916
      %v1067 = vpack.c.b16 %v919, %v918
      %v1068 = vpack.c.b16 %v921, %v920
      %v1069 = vpack.c.b16 %v923, %v922
      %v1070 = vpack.c.b16 %v925, %v924
      %v1071 = vpack.c.b16 %v927, %v926
      %v1072 = vpack.c.b16 %v929, %v928
      %v1073 = vpack.c.b16 %v931, %v930
      %v1074 = vpack.c.b16 %v933, %v932
      %v1075 = vpack.c.b16 %v935, %v934
      %v1076 = vpack.c.b16 %v937, %v936
      %v1077 = vpack.c.b16 %v939, %v938
      %v1078 = vpack.c.b16 %v941, %v940
      %v1079 = vpack.c.b16 %v943, %v942
      %v1080 = vpack.c.b16 %v945, %v944
      %v1081 = vpack.c.b16 %v947, %v946
      %v1082 = vpack.c.b16 %v949, %v948
      %v1083 = vpack.c.b16 %v951, %v950
      %v1084 = vpack.c.b16 %v953, %v952
      %v1085 = vpack.c.b16 %v955, %v954
      %v1086 = vpack.c.b16 %v957, %v956
      %v1087 = vpack.c.b16 %v959, %v958
      %v1098 = vunpack.c.l.b16 %v431
      %v1099 = vunpack.c.l.b16 %v432
      %v1100 = vunpack.c.l.b16 %v433
      %v1101 = vunpack.c.l.b16 %v434
      %v1102 = vunpack.c.l.b16 %v435
      %v1103 = vunpack.c.l.b16 %v436
      %v1104 = vunpack.c.l.b16 %v437
      %v1105 = vunpack.c.l.b16 %v438
      %v1106 = vunpack.c.l.b16 %v439
      %v1107 = vunpack.c.l.b16 %v440
      %v1108 = vpack.c.b16 %v1099, %v1098
      %v1109 = vpack.c.b16 %v1101, %v1100
      %v1110 = vpack.c.b16 %v1103, %v1102
      %v1111 = vpack.c.b16 %v1105, %v1104
      %v1112 = vpack.c.b16 %v1107, %v1106
      %vm1118 = vcmask 654336
      %v1120 = vsel %vm1118, %v960, 0
      %v1123 = vsel %vm1118, %v961, 0
      %v1126 = vsel %vm1118, %v962, 0
      %v1129 = vsel %vm1118, %v963, 0
      %v1132 = vsel %vm1118, %v964, 0
      %v1135 = vsel %vm1118, %v965, 0
      %v1138 = vsel %vm1118, %v966, 0
      %v1141 = vsel %vm1118, %v967, 0
      %v1144 = vsel %vm1118, %v968, 0
      %v1147 = vsel %vm1118, %v969, 0
      %v1150 = vsel %vm1118, %v970, 0
      %v1153 = vsel %vm1118, %v971, 0
      %v1156 = vsel %vm1118, %v972, 0
      %v1159 = vsel %vm1118, %v973, 0
      %v1162 = vsel %vm1118, %v974, 0
      %v1165 = vsel %vm1118, %v975, 0
      %v1168 = vsel %vm1118, %v976, 0
      %v1171 = vsel %vm1118, %v977, 0
      %v1174 = vsel %vm1118, %v978, 0
      %v1177 = vsel %vm1118, %v979, 0
      %v1180 = vsel %vm1118, %v980, 0
      %v1183 = vsel %vm1118, %v981, 0
      %v1186 = vsel %vm1118, %v982, 0
      %v1189 = vsel %vm1118, %v983, 0
      %v1192 = vsel %vm1118, %v984, 0
      %v1195 = vsel %vm1118, %v985, 0
      %v1198 = vsel %vm1118, %v986, 0
      %v1201 = vsel %vm1118, %v987, 0
      %v1204 = vsel %vm1118, %v988, 0
      %v1207 = vsel %vm1118, %v989, 0
      %v1210 = vsel %vm1118, %v990, 0
      %v1213 = vsel %vm1118, %v991, 0
      %v1216 = vsel %vm1118, %v992, 0
      %v1219 = vsel %vm1118, %v993, 0
      %v1222 = vsel %vm1118, %v994, 0
      %v1225 = vsel %vm1118, %v995, 0
      %v1228 = vsel %vm1118, %v996, 0
      %v1231 = vsel %vm1118, %v997, 0
      %v1234 = vsel %vm1118, %v998, 0
      %v1237 = vsel %vm1118, %v999, 0
      %v1240 = vsel %vm1118, %v1000, 0
      %v1243 = vsel %vm1118, %v1001, 0
      %v1246 = vsel %vm1118, %v1002, 0
      %v1249 = vsel %vm1118, %v1003, 0
      %v1252 = vsel %vm1118, %v1004, 0
      %v1255 = vsel %vm1118, %v1005, 0
      %v1258 = vsel %vm1118, %v1006, 0
      %v1261 = vsel %vm1118, %v1007, 0
      %v1264 = vsel %vm1118, %v1008, 0
      %v1267 = vsel %vm1118, %v1009, 0
      %v1270 = vsel %vm1118, %v1010, 0
      %v1273 = vsel %vm1118, %v1011, 0
      %v1276 = vsel %vm1118, %v1012, 0
      %v1279 = vsel %vm1118, %v1013, 0
      %v1282 = vsel %vm1118, %v1014, 0
      %v1285 = vsel %vm1118, %v1015, 0
      %v1288 = vsel %vm1118, %v1016, 0
      %v1291 = vsel %vm1118, %v1017, 0
      %v1294 = vsel %vm1118, %v1018, 0
      %v1297 = vsel %vm1118, %v1019, 0
      %v1300 = vsel %vm1118, %v1020, 0
      %v1303 = vsel %vm1118, %v1021, 0
      %v1306 = vsel %vm1118, %v1022, 0
      %v1309 = vsel %vm1118, %v1023, 0
      %v1312 = vsel %vm1118, %v1024, 0
      %v1315 = vsel %vm1118, %v1025, 0
      %v1318 = vsel %vm1118, %v1026, 0
      %v1321 = vsel %vm1118, %v1027, 0
      %v1324 = vsel %vm1118, %v1028, 0
      %v1327 = vsel %vm1118, %v1029, 0
      %v1330 = vsel %vm1118, %v1030, 0
      %v1333 = vsel %vm1118, %v1031, 0
      %v1336 = vsel %vm1118, %v1032, 0
      %v1339 = vsel %vm1118, %v1033, 0
      %v1342 = vsel %vm1118, %v1034, 0
      %v1345 = vsel %vm1118, %v1035, 0
      %v1348 = vsel %vm1118, %v1036, 0
      %v1351 = vsel %vm1118, %v1037, 0
      %v1354 = vsel %vm1118, %v1038, 0
      %v1357 = vsel %vm1118, %v1039, 0
      %v1360 = vsel %vm1118, %v1040, 0
      %v1363 = vsel %vm1118, %v1041, 0
      %v1366 = vsel %vm1118, %v1042, 0
      %v1369 = vsel %vm1118, %v1043, 0
      %v1372 = vsel %vm1118, %v1044, 0
      %v1375 = vsel %vm1118, %v1045, 0
      %v1378 = vsel %vm1118, %v1046, 0
      %v1381 = vsel %vm1118, %v1047, 0
      %v1384 = vsel %vm1118, %v1048, 0
      %v1387 = vsel %vm1118, %v1049, 0
      %v1390 = vsel %vm1118, %v1050, 0
      %v1393 = vsel %vm1118, %v1051, 0
      %v1396 = vsel %vm1118, %v1052, 0
      %v1399 = vsel %vm1118, %v1053, 0
      %v1402 = vsel %vm1118, %v1054, 0
      %v1405 = vsel %vm1118, %v1055, 0
      %v1408 = vsel %vm1118, %v1056, 0
      %v1411 = vsel %vm1118, %v1057, 0
      %v1414 = vsel %vm1118, %v1058, 0
      %v1417 = vsel %vm1118, %v1059, 0
      %v1420 = vsel %vm1118, %v1060, 0
      %v1423 = vsel %vm1118, %v1061, 0
      %v1426 = vsel %vm1118, %v1062, 0
      %v1429 = vsel %vm1118, %v1063, 0
      %v1432 = vsel %vm1118, %v1064, 0
      %v1435 = vsel %vm1118, %v1065, 0
      %v1438 = vsel %vm1118, %v1066, 0
      %v1441 = vsel %vm1118, %v1067, 0
      %v1444 = vsel %vm1118, %v1068, 0
      %v1447 = vsel %vm1118, %v1069, 0
      %v1450 = vsel %vm1118, %v1070, 0
      %v1453 = vsel %vm1118, %v1071, 0
      %v1456 = vsel %vm1118, %v1072, 0
      %v1459 = vsel %vm1118, %v1073, 0
      %v1462 = vsel %vm1118, %v1074, 0
      %v1465 = vsel %vm1118, %v1075, 0
      %v1468 = vsel %vm1118, %v1076, 0
      %v1471 = vsel %vm1118, %v1077, 0
      %v1474 = vsel %vm1118, %v1078, 0
      %v1477 = vsel %vm1118, %v1079, 0
      %v1480 = vsel %vm1118, %v1080, 0
      %v1483 = vsel %vm1118, %v1081, 0
      %v1486 = vsel %vm1118, %v1082, 0
      %v1489 = vsel %vm1118, %v1083, 0
      %v1492 = vsel %vm1118, %v1084, 0
      %v1495 = vsel %vm1118, %v1085, 0
      %v1498 = vsel %vm1118, %v1086, 0
      %v1501 = vsel %vm1118, %v1087, 0
      %1503 = vmatprep.subr.bf16.mxu0 0
      %1504 = vmatpush1.bf16.msra.mxu0 %v1108
      %1505 = vmatprep.subr.bf16.mxu0 0
      %1506 = vmatpush1.bf16.msra.mxu0 %v1109
      %1507 = vmatprep.subr.bf16.mxu0 0
      %1508 = vmatpush1.bf16.msra.mxu0 %v1110
      %1509 = vmatprep.subr.bf16.mxu0 0
      %1510 = vmatpush1.bf16.msra.mxu0 %v1111
      %1511 = vmatprep.subr.bf16.mxu0 0
      %1512 = vmatpush1.bf16.msra.mxu0 %v1112
      %1513 = vmatprep.subr.bf16.mxu0 0
      %1514 = vmatpush1.bf16.msra.mxu0 0
      %1515 = vmatprep.subr.bf16.mxu0 0
      %1516 = vmatpush1.bf16.msra.mxu0 0
      %1517 = vmatprep.subr.bf16.mxu0 0
      %1518 = vmatpush1.bf16.msra.mxu0 0
      %1519 = vmatprep.subr.bf16.mxu0 0
      %1520 = vmatpush1.bf16.msra.mxu0 0
      %1521 = vmatprep.subr.bf16.mxu0 0
      %1522 = vmatpush1.bf16.msra.mxu0 0
      %1523 = vmatprep.subr.bf16.mxu0 0
      %1524 = vmatpush1.bf16.msra.mxu0 0
      %1525 = vmatprep.subr.bf16.mxu0 0
      %1526 = vmatpush1.bf16.msra.mxu0 0
      %1527 = vmatprep.subr.bf16.mxu0 0
      %1528 = vmatpush1.bf16.msra.mxu0 0
      %1529 = vmatprep.subr.bf16.mxu0 0
      %1530 = vmatpush1.bf16.msra.mxu0 0
      %1531 = vmatprep.subr.bf16.mxu0 0
      %1532 = vmatpush1.bf16.msra.mxu0 0
      %1533 = vmatprep.subr.bf16.mxu0 0
      %1534 = vmatpush1.bf16.msra.mxu0 0
      %1535 = vmatprep.mubr.bf16.mxu0 0
      %1536 = vmatmul.mubr.bf16.gmra.mrb[0].mxu0 %v1120
      %v1537 = vpop.f32.mrb[0].mxu0
      %v1538 = vadd.f32 %v446, %v1537
      %v1539 = vpop.f32.mrb[0].mxu0
      %v1540 = vpop.f32.mrb[0].mxu0
      %v1541 = vadd.f32 %v446, %v1540
      %v1542 = vpop.f32.mrb[0].mxu0
      %1543 = vmatprep.mubr.bf16.mxu0 0
      %1544 = vmatmul.mubr.bf16.gmra.mrb[0].mxu0 %v1123
      %v1545 = vpop.f32.mrb[0].mxu0
      %v1546 = vadd.f32 %v446, %v1545
      %v1547 = vpop.f32.mrb[0].mxu0
      %v1548 = vpop.f32.mrb[0].mxu0
      %v1549 = vadd.f32 %v446, %v1548
      %v1550 = vpop.f32.mrb[0].mxu0
      %1551 = vmatprep.mubr.bf16.mxu0 0
      %1552 = vmatmul.mubr.bf16.gmra.mrb[0].mxu0 %v1126
      %v1553 = vpop.f32.mrb[0].mxu0
      %v1554 = vadd.f32 %v446, %v1553
      %v1555 = vpop.f32.mrb[0].mxu0
      %v1556 = vpop.f32.mrb[0].mxu0
      %v1557 = vadd.f32 %v446, %v1556
      %v1558 = vpop.f32.mrb[0].mxu0
      %1559 = vmatprep.mubr.bf16.mxu0 0
      %1560 = vmatmul.mubr.bf16.gmra.mrb[0].mxu0 %v1129
      %v1561 = vpop.f32.mrb[0].mxu0
      %v1562 = vadd.f32 %v446, %v1561
      %v1563 = vpop.f32.mrb[0].mxu0
      %v1564 = vpop.f32.mrb[0].mxu0
      %v1565 = vadd.f32 %v446, %v1564
      %v1566 = vpop.f32.mrb[0].mxu0
      %1567 = vmatprep.mubr.bf16.mxu0 0
      %1568 = vmatmul.mubr.bf16.gmra.mrb[0].mxu0 %v1132
      %v1569 = vpop.f32.mrb[0].mxu0
      %v1570 = vadd.f32 %v446, %v1569
      %v1571 = vpop.f32.mrb[0].mxu0
      %v1572 = vpop.f32.mrb[0].mxu0
      %v1573 = vadd.f32 %v446, %v1572
      %v1574 = vpop.f32.mrb[0].mxu0
      %1575 = vmatprep.mubr.bf16.mxu0 0
      %1576 = vmatmul.mubr.bf16.gmra.mrb[0].mxu0 %v1135
      %v1577 = vpop.f32.mrb[0].mxu0
      %v1578 = vadd.f32 %v446, %v1577
      %v1579 = vpop.f32.mrb[0].mxu0
      %v1580 = vpop.f32.mrb[0].mxu0
      %v1581 = vadd.f32 %v446, %v1580
      %v1582 = vpop.f32.mrb[0].mxu0
      %1583 = vmatprep.mubr.bf16.mxu0 0
      %1584 = vmatmul.mubr.bf16.gmra.mrb[0].mxu0 %v1138
      %v1585 = vpop.f32.mrb[0].mxu0
      %v1586 = vadd.f32 %v446, %v1585
      %v1587 = vpop.f32.mrb[0].mxu0
      %v1588 = vpop.f32.mrb[0].mxu0
      %v1589 = vadd.f32 %v446, %v1588
      %v1590 = vpop.f32.mrb[0].mxu0
      %1591 = vmatprep.mubr.bf16.mxu0 0
      %1592 = vmatmul.mubr.bf16.gmra.mrb[0].mxu0 %v1141
      %v1593 = vpop.f32.mrb[0].mxu0
      %v1594 = vadd.f32 %v446, %v1593
      %v1595 = vpop.f32.mrb[0].mxu0
      %v1596 = vpop.f32.mrb[0].mxu0
      %v1597 = vadd.f32 %v446, %v1596
      %v1598 = vpop.f32.mrb[0].mxu0
      %1599 = vmatprep.mubr.bf16.mxu0 0
      %1600 = vmatmul.mubr.bf16.gmra.mrb[0].mxu0 %v1144
      %v1601 = vpop.f32.mrb[0].mxu0
      %v1602 = vadd.f32 %v446, %v1601
      %v1603 = vpop.f32.mrb[0].mxu0
      %v1604 = vpop.f32.mrb[0].mxu0
      %v1605 = vadd.f32 %v446, %v1604
      %v1606 = vpop.f32.mrb[0].mxu0
      %1607 = vmatprep.mubr.bf16.mxu0 0
      %1608 = vmatmul.mubr.bf16.gmra.mrb[0].mxu0 %v1147
      %v1609 = vpop.f32.mrb[0].mxu0
      %v1610 = vadd.f32 %v446, %v1609
      %v1611 = vpop.f32.mrb[0].mxu0
      %v1612 = vpop.f32.mrb[0].mxu0
      %v1613 = vadd.f32 %v446, %v1612
      %v1614 = vpop.f32.mrb[0].mxu0
      %1615 = vmatprep.mubr.bf16.mxu0 0
      %1616 = vmatmul.mubr.bf16.gmra.mrb[0].mxu0 %v1150
      %v1617 = vpop.f32.mrb[0].mxu0
      %v1618 = vadd.f32 %v446, %v1617
      %v1619 = vpop.f32.mrb[0].mxu0
      %v1620 = vpop.f32.mrb[0].mxu0
      %v1621 = vadd.f32 %v446, %v1620
      %v1622 = vpop.f32.mrb[0].mxu0
      %1623 = vmatprep.mubr.bf16.mxu0 0
      %1624 = vmatmul.mubr.bf16.gmra.mrb[0].mxu0 %v1153
      %v1625 = vpop.f32.mrb[0].mxu0
      %v1626 = vadd.f32 %v446, %v1625
      %v1627 = vpop.f32.mrb[0].mxu0
      %v1628 = vpop.f32.mrb[0].mxu0
      %v1629 = vadd.f32 %v446, %v1628
      %v1630 = vpop.f32.mrb[0].mxu0
      %1631 = vmatprep.mubr.bf16.mxu0 0
      %1632 = vmatmul.mubr.bf16.gmra.mrb[0].mxu0 %v1156
      %v1633 = vpop.f32.mrb[0].mxu0
      %v1634 = vadd.f32 %v446, %v1633
      %v1635 = vpop.f32.mrb[0].mxu0
      %v1636 = vpop.f32.mrb[0].mxu0
      %v1637 = vadd.f32 %v446, %v1636
      %v1638 = vpop.f32.mrb[0].mxu0
      %1639 = vmatprep.mubr.bf16.mxu0 0
      %1640 = vmatmul.mubr.bf16.gmra.mrb[0].mxu0 %v1159
      %v1641 = vpop.f32.mrb[0].mxu0
      %v1642 = vadd.f32 %v446, %v1641
      %v1643 = vpop.f32.mrb[0].mxu0
      %v1644 = vpop.f32.mrb[0].mxu0
      %v1645 = vadd.f32 %v446, %v1644
      %v1646 = vpop.f32.mrb[0].mxu0
      %1647 = vmatprep.mubr.bf16.mxu0 0
      %1648 = vmatmul.mubr.bf16.gmra.mrb[0].mxu0 %v1162
      %v1649 = vpop.f32.mrb[0].mxu0
      %v1650 = vadd.f32 %v446, %v1649
      %v1651 = vpop.f32.mrb[0].mxu0
      %v1652 = vpop.f32.mrb[0].mxu0
      %v1653 = vadd.f32 %v446, %v1652
      %v1654 = vpop.f32.mrb[0].mxu0
      %1655 = vmatprep.mubr.bf16.mxu0 0
      %1656 = vmatmul.mubr.bf16.gmra.mrb[0].mxu0 %v1165
      %v1657 = vpop.f32.mrb[0].mxu0
      %v1658 = vadd.f32 %v446, %v1657
      %v1659 = vpop.f32.mrb[0].mxu0
      %v1660 = vpop.f32.mrb[0].mxu0
      %v1661 = vadd.f32 %v446, %v1660
      %v1662 = vpop.f32.mrb[0].mxu0
      %1663 = vmatprep.mubr.bf16.mxu0 0
      %1664 = vmatmul.mubr.bf16.gmra.mrb[0].mxu0 %v1168
      %v1665 = vpop.f32.mrb[0].mxu0
      %v1666 = vadd.f32 %v446, %v1665
      %v1667 = vpop.f32.mrb[0].mxu0
      %v1668 = vpop.f32.mrb[0].mxu0
      %v1669 = vadd.f32 %v446, %v1668
      %v1670 = vpop.f32.mrb[0].mxu0
      %1671 = vmatprep.mubr.bf16.mxu0 0
      %1672 = vmatmul.mubr.bf16.gmra.mrb[0].mxu0 %v1171
      %v1673 = vpop.f32.mrb[0].mxu0
      %v1674 = vadd.f32 %v446, %v1673
      %v1675 = vpop.f32.mrb[0].mxu0
      %v1676 = vpop.f32.mrb[0].mxu0
      %v1677 = vadd.f32 %v446, %v1676
      %v1678 = vpop.f32.mrb[0].mxu0
      %1679 = vmatprep.mubr.bf16.mxu0 0
      %1680 = vmatmul.mubr.bf16.gmra.mrb[0].mxu0 %v1174
      %v1681 = vpop.f32.mrb[0].mxu0
      %v1682 = vadd.f32 %v446, %v1681
      %v1683 = vpop.f32.mrb[0].mxu0
      %v1684 = vpop.f32.mrb[0].mxu0
      %v1685 = vadd.f32 %v446, %v1684
      %v1686 = vpop.f32.mrb[0].mxu0
      %1687 = vmatprep.mubr.bf16.mxu0 0
      %1688 = vmatmul.mubr.bf16.gmra.mrb[0].mxu0 %v1177
      %v1689 = vpop.f32.mrb[0].mxu0
      %v1690 = vadd.f32 %v446, %v1689
      %v1691 = vpop.f32.mrb[0].mxu0
      %v1692 = vpop.f32.mrb[0].mxu0
      %v1693 = vadd.f32 %v446, %v1692
      %v1694 = vpop.f32.mrb[0].mxu0
      %1695 = vmatprep.mubr.bf16.mxu0 0
      %1696 = vmatmul.mubr.bf16.gmra.mrb[0].mxu0 %v1180
      %v1697 = vpop.f32.mrb[0].mxu0
      %v1698 = vadd.f32 %v446, %v1697
      %v1699 = vpop.f32.mrb[0].mxu0
      %v1700 = vpop.f32.mrb[0].mxu0
      %v1701 = vadd.f32 %v446, %v1700
      %v1702 = vpop.f32.mrb[0].mxu0
      %1703 = vmatprep.mubr.bf16.mxu0 0
      %1704 = vmatmul.mubr.bf16.gmra.mrb[0].mxu0 %v1183
      %v1705 = vpop.f32.mrb[0].mxu0
      %v1706 = vadd.f32 %v446, %v1705
      %v1707 = vpop.f32.mrb[0].mxu0
      %v1708 = vpop.f32.mrb[0].mxu0
      %v1709 = vadd.f32 %v446, %v1708
      %v1710 = vpop.f32.mrb[0].mxu0
      %1711 = vmatprep.mubr.bf16.mxu0 0
      %1712 = vmatmul.mubr.bf16.gmra.mrb[0].mxu0 %v1186
      %v1713 = vpop.f32.mrb[0].mxu0
      %v1714 = vadd.f32 %v446, %v1713
      %v1715 = vpop.f32.mrb[0].mxu0
      %v1716 = vpop.f32.mrb[0].mxu0
      %v1717 = vadd.f32 %v446, %v1716
      %v1718 = vpop.f32.mrb[0].mxu0
      %1719 = vmatprep.mubr.bf16.mxu0 0
      %1720 = vmatmul.mubr.bf16.gmra.mrb[0].mxu0 %v1189
      %v1721 = vpop.f32.mrb[0].mxu0
      %v1722 = vadd.f32 %v446, %v1721
      %v1723 = vpop.f32.mrb[0].mxu0
      %v1724 = vpop.f32.mrb[0].mxu0
      %v1725 = vadd.f32 %v446, %v1724
      %v1726 = vpop.f32.mrb[0].mxu0
      %1727 = vmatprep.mubr.bf16.mxu0 0
      %1728 = vmatmul.mubr.bf16.gmra.mrb[0].mxu0 %v1192
      %v1729 = vpop.f32.mrb[0].mxu0
      %v1730 = vadd.f32 %v446, %v1729
      %v1731 = vpop.f32.mrb[0].mxu0
      %v1732 = vpop.f32.mrb[0].mxu0
      %v1733 = vadd.f32 %v446, %v1732
      %v1734 = vpop.f32.mrb[0].mxu0
      %1735 = vmatprep.mubr.bf16.mxu0 0
      %1736 = vmatmul.mubr.bf16.gmra.mrb[0].mxu0 %v1195
      %v1737 = vpop.f32.mrb[0].mxu0
      %v1738 = vadd.f32 %v446, %v1737
      %v1739 = vpop.f32.mrb[0].mxu0
      %v1740 = vpop.f32.mrb[0].mxu0
      %v1741 = vadd.f32 %v446, %v1740
      %v1742 = vpop.f32.mrb[0].mxu0
      %1743 = vmatprep.mubr.bf16.mxu0 0
      %1744 = vmatmul.mubr.bf16.gmra.mrb[0].mxu0 %v1198
      %v1745 = vpop.f32.mrb[0].mxu0
      %v1746 = vadd.f32 %v446, %v1745
      %v1747 = vpop.f32.mrb[0].mxu0
      %v1748 = vpop.f32.mrb[0].mxu0
      %v1749 = vadd.f32 %v446, %v1748
      %v1750 = vpop.f32.mrb[0].mxu0
      %1751 = vmatprep.mubr.bf16.mxu0 0
      %1752 = vmatmul.mubr.bf16.gmra.mrb[0].mxu0 %v1201
      %v1753 = vpop.f32.mrb[0].mxu0
      %v1754 = vadd.f32 %v446, %v1753
      %v1755 = vpop.f32.mrb[0].mxu0
      %v1756 = vpop.f32.mrb[0].mxu0
      %v1757 = vadd.f32 %v446, %v1756
      %v1758 = vpop.f32.mrb[0].mxu0
      %1759 = vmatprep.mubr.bf16.mxu0 0
      %1760 = vmatmul.mubr.bf16.gmra.mrb[0].mxu0 %v1204
      %v1761 = vpop.f32.mrb[0].mxu0
      %v1762 = vadd.f32 %v446, %v1761
      %v1763 = vpop.f32.mrb[0].mxu0
      %v1764 = vpop.f32.mrb[0].mxu0
      %v1765 = vadd.f32 %v446, %v1764
      %v1766 = vpop.f32.mrb[0].mxu0
      %1767 = vmatprep.mubr.bf16.mxu0 0
      %1768 = vmatmul.mubr.bf16.gmra.mrb[0].mxu0 %v1207
      %v1769 = vpop.f32.mrb[0].mxu0
      %v1770 = vadd.f32 %v446, %v1769
      %v1771 = vpop.f32.mrb[0].mxu0
      %v1772 = vpop.f32.mrb[0].mxu0
      %v1773 = vadd.f32 %v446, %v1772
      %v1774 = vpop.f32.mrb[0].mxu0
      %1775 = vmatprep.mubr.bf16.mxu0 0
      %1776 = vmatmul.mubr.bf16.gmra.mrb[0].mxu0 %v1210
      %v1777 = vpop.f32.mrb[0].mxu0
      %v1778 = vadd.f32 %v446, %v1777
      %v1779 = vpop.f32.mrb[0].mxu0
      %v1780 = vpop.f32.mrb[0].mxu0
      %v1781 = vadd.f32 %v446, %v1780
      %v1782 = vpop.f32.mrb[0].mxu0
      %1783 = vmatprep.mubr.bf16.mxu0 0
      %1784 = vmatmul.mubr.bf16.gmra.mrb[0].mxu0 %v1213
      %v1785 = vpop.f32.mrb[0].mxu0
      %v1786 = vadd.f32 %v446, %v1785
      %v1787 = vpop.f32.mrb[0].mxu0
      %v1788 = vpop.f32.mrb[0].mxu0
      %v1789 = vadd.f32 %v446, %v1788
      %v1790 = vpop.f32.mrb[0].mxu0
      %1791 = vmatprep.mubr.bf16.mxu0 0
      %1792 = vmatmul.mubr.bf16.gmra.mrb[0].mxu0 %v1216
      %v1793 = vpop.f32.mrb[0].mxu0
      %v1794 = vadd.f32 %v446, %v1793
      %v1795 = vpop.f32.mrb[0].mxu0
      %v1796 = vpop.f32.mrb[0].mxu0
      %v1797 = vadd.f32 %v446, %v1796
      %v1798 = vpop.f32.mrb[0].mxu0
      %1799 = vmatprep.mubr.bf16.mxu0 0
      %1800 = vmatmul.mubr.bf16.gmra.mrb[0].mxu0 %v1219
      %v1801 = vpop.f32.mrb[0].mxu0
      %v1802 = vadd.f32 %v446, %v1801
      %v1803 = vpop.f32.mrb[0].mxu0
      %v1804 = vpop.f32.mrb[0].mxu0
      %v1805 = vadd.f32 %v446, %v1804
      %v1806 = vpop.f32.mrb[0].mxu0
      %1807 = vmatprep.mubr.bf16.mxu0 0
      %1808 = vmatmul.mubr.bf16.gmra.mrb[0].mxu0 %v1222
      %v1809 = vpop.f32.mrb[0].mxu0
      %v1810 = vadd.f32 %v446, %v1809
      %v1811 = vpop.f32.mrb[0].mxu0
      %v1812 = vpop.f32.mrb[0].mxu0
      %v1813 = vadd.f32 %v446, %v1812
      %v1814 = vpop.f32.mrb[0].mxu0
      %1815 = vmatprep.mubr.bf16.mxu0 0
      %1816 = vmatmul.mubr.bf16.gmra.mrb[0].mxu0 %v1225
      %v1817 = vpop.f32.mrb[0].mxu0
      %v1818 = vadd.f32 %v446, %v1817
      %v1819 = vpop.f32.mrb[0].mxu0
      %v1820 = vpop.f32.mrb[0].mxu0
      %v1821 = vadd.f32 %v446, %v1820
      %v1822 = vpop.f32.mrb[0].mxu0
      %1823 = vmatprep.mubr.bf16.mxu0 0
      %1824 = vmatmul.mubr.bf16.gmra.mrb[0].mxu0 %v1228
      %v1825 = vpop.f32.mrb[0].mxu0
      %v1826 = vadd.f32 %v446, %v1825
      %v1827 = vpop.f32.mrb[0].mxu0
      %v1828 = vpop.f32.mrb[0].mxu0
      %v1829 = vadd.f32 %v446, %v1828
      %v1830 = vpop.f32.mrb[0].mxu0
      %1831 = vmatprep.mubr.bf16.mxu0 0
      %1832 = vmatmul.mubr.bf16.gmra.mrb[0].mxu0 %v1231
      %v1833 = vpop.f32.mrb[0].mxu0
      %v1834 = vadd.f32 %v446, %v1833
      %v1835 = vpop.f32.mrb[0].mxu0
      %v1836 = vpop.f32.mrb[0].mxu0
      %v1837 = vadd.f32 %v446, %v1836
      %v1838 = vpop.f32.mrb[0].mxu0
      %1839 = vmatprep.mubr.bf16.mxu0 0
      %1840 = vmatmul.mubr.bf16.gmra.mrb[0].mxu0 %v1234
      %v1841 = vpop.f32.mrb[0].mxu0
      %v1842 = vadd.f32 %v446, %v1841
      %v1843 = vpop.f32.mrb[0].mxu0
      %v1844 = vpop.f32.mrb[0].mxu0
      %v1845 = vadd.f32 %v446, %v1844
      %v1846 = vpop.f32.mrb[0].mxu0
      %1847 = vmatprep.mubr.bf16.mxu0 0
      %1848 = vmatmul.mubr.bf16.gmra.mrb[0].mxu0 %v1237
      %v1849 = vpop.f32.mrb[0].mxu0
      %v1850 = vadd.f32 %v446, %v1849
      %v1851 = vpop.f32.mrb[0].mxu0
      %v1852 = vpop.f32.mrb[0].mxu0
      %v1853 = vadd.f32 %v446, %v1852
      %v1854 = vpop.f32.mrb[0].mxu0
      %1855 = vmatprep.mubr.bf16.mxu0 0
      %1856 = vmatmul.mubr.bf16.gmra.mrb[0].mxu0 %v1240
      %v1857 = vpop.f32.mrb[0].mxu0
      %v1858 = vadd.f32 %v446, %v1857
      %v1859 = vpop.f32.mrb[0].mxu0
      %v1860 = vpop.f32.mrb[0].mxu0
      %v1861 = vadd.f32 %v446, %v1860
      %v1862 = vpop.f32.mrb[0].mxu0
      %1863 = vmatprep.mubr.bf16.mxu0 0
      %1864 = vmatmul.mubr.bf16.gmra.mrb[0].mxu0 %v1243
      %v1865 = vpop.f32.mrb[0].mxu0
      %v1866 = vadd.f32 %v446, %v1865
      %v1867 = vpop.f32.mrb[0].mxu0
      %v1868 = vpop.f32.mrb[0].mxu0
      %v1869 = vadd.f32 %v446, %v1868
      %v1870 = vpop.f32.mrb[0].mxu0
      %1871 = vmatprep.mubr.bf16.mxu0 0
      %1872 = vmatmul.mubr.bf16.gmra.mrb[0].mxu0 %v1246
      %v1873 = vpop.f32.mrb[0].mxu0
      %v1874 = vadd.f32 %v446, %v1873
      %v1875 = vpop.f32.mrb[0].mxu0
      %v1876 = vpop.f32.mrb[0].mxu0
      %v1877 = vadd.f32 %v446, %v1876
      %v1878 = vpop.f32.mrb[0].mxu0
      %1879 = vmatprep.mubr.bf16.mxu0 0
      %1880 = vmatmul.mubr.bf16.gmra.mrb[0].mxu0 %v1249
      %v1881 = vpop.f32.mrb[0].mxu0
      %v1882 = vadd.f32 %v446, %v1881
      %v1883 = vpop.f32.mrb[0].mxu0
      %v1884 = vpop.f32.mrb[0].mxu0
      %v1885 = vadd.f32 %v446, %v1884
      %v1886 = vpop.f32.mrb[0].mxu0
      %1887 = vmatprep.mubr.bf16.mxu0 0
      %1888 = vmatmul.mubr.bf16.gmra.mrb[0].mxu0 %v1252
      %v1889 = vpop.f32.mrb[0].mxu0
      %v1890 = vadd.f32 %v446, %v1889
      %v1891 = vpop.f32.mrb[0].mxu0
      %v1892 = vpop.f32.mrb[0].mxu0
      %v1893 = vadd.f32 %v446, %v1892
      %v1894 = vpop.f32.mrb[0].mxu0
      %1895 = vmatprep.mubr.bf16.mxu0 0
      %1896 = vmatmul.mubr.bf16.gmra.mrb[0].mxu0 %v1255
      %v1897 = vpop.f32.mrb[0].mxu0
      %v1898 = vadd.f32 %v446, %v1897
      %v1899 = vpop.f32.mrb[0].mxu0
      %v1900 = vpop.f32.mrb[0].mxu0
      %v1901 = vadd.f32 %v446, %v1900
      %v1902 = vpop.f32.mrb[0].mxu0
      %1903 = vmatprep.mubr.bf16.mxu0 0
      %1904 = vmatmul.mubr.bf16.gmra.mrb[0].mxu0 %v1258
      %v1905 = vpop.f32.mrb[0].mxu0
      %v1906 = vadd.f32 %v446, %v1905
      %v1907 = vpop.f32.mrb[0].mxu0
      %v1908 = vpop.f32.mrb[0].mxu0
      %v1909 = vadd.f32 %v446, %v1908
      %v1910 = vpop.f32.mrb[0].mxu0
      %1911 = vmatprep.mubr.bf16.mxu0 0
      %1912 = vmatmul.mubr.bf16.gmra.mrb[0].mxu0 %v1261
      %v1913 = vpop.f32.mrb[0].mxu0
      %v1914 = vadd.f32 %v446, %v1913
      %v1915 = vpop.f32.mrb[0].mxu0
      %v1916 = vpop.f32.mrb[0].mxu0
      %v1917 = vadd.f32 %v446, %v1916
      %v1918 = vpop.f32.mrb[0].mxu0
      %1919 = vmatprep.mubr.bf16.mxu0 0
      %1920 = vmatmul.mubr.bf16.gmra.mrb[0].mxu0 %v1264
      %v1921 = vpop.f32.mrb[0].mxu0
      %v1922 = vadd.f32 %v446, %v1921
      %v1923 = vpop.f32.mrb[0].mxu0
      %v1924 = vpop.f32.mrb[0].mxu0
      %v1925 = vadd.f32 %v446, %v1924
      %v1926 = vpop.f32.mrb[0].mxu0
      %1927 = vmatprep.mubr.bf16.mxu0 0
      %1928 = vmatmul.mubr.bf16.gmra.mrb[0].mxu0 %v1267
      %v1929 = vpop.f32.mrb[0].mxu0
      %v1930 = vadd.f32 %v446, %v1929
      %v1931 = vpop.f32.mrb[0].mxu0
      %v1932 = vpop.f32.mrb[0].mxu0
      %v1933 = vadd.f32 %v446, %v1932
      %v1934 = vpop.f32.mrb[0].mxu0
      %1935 = vmatprep.mubr.bf16.mxu0 0
      %1936 = vmatmul.mubr.bf16.gmra.mrb[0].mxu0 %v1270
      %v1937 = vpop.f32.mrb[0].mxu0
      %v1938 = vadd.f32 %v446, %v1937
      %v1939 = vpop.f32.mrb[0].mxu0
      %v1940 = vpop.f32.mrb[0].mxu0
      %v1941 = vadd.f32 %v446, %v1940
      %v1942 = vpop.f32.mrb[0].mxu0
      %1943 = vmatprep.mubr.bf16.mxu0 0
      %1944 = vmatmul.mubr.bf16.gmra.mrb[0].mxu0 %v1273
      %v1945 = vpop.f32.mrb[0].mxu0
      %v1946 = vadd.f32 %v446, %v1945
      %v1947 = vpop.f32.mrb[0].mxu0
      %v1948 = vpop.f32.mrb[0].mxu0
      %v1949 = vadd.f32 %v446, %v1948
      %v1950 = vpop.f32.mrb[0].mxu0
      %1951 = vmatprep.mubr.bf16.mxu0 0
      %1952 = vmatmul.mubr.bf16.gmra.mrb[0].mxu0 %v1276
      %v1953 = vpop.f32.mrb[0].mxu0
      %v1954 = vadd.f32 %v446, %v1953
      %v1955 = vpop.f32.mrb[0].mxu0
      %v1956 = vpop.f32.mrb[0].mxu0
      %v1957 = vadd.f32 %v446, %v1956
      %v1958 = vpop.f32.mrb[0].mxu0
      %1959 = vmatprep.mubr.bf16.mxu0 0
      %1960 = vmatmul.mubr.bf16.gmra.mrb[0].mxu0 %v1279
      %v1961 = vpop.f32.mrb[0].mxu0
      %v1962 = vadd.f32 %v446, %v1961
      %v1963 = vpop.f32.mrb[0].mxu0
      %v1964 = vpop.f32.mrb[0].mxu0
      %v1965 = vadd.f32 %v446, %v1964
      %v1966 = vpop.f32.mrb[0].mxu0
      %1967 = vmatprep.mubr.bf16.mxu0 0
      %1968 = vmatmul.mubr.bf16.gmra.mrb[0].mxu0 %v1282
      %v1969 = vpop.f32.mrb[0].mxu0
      %v1970 = vadd.f32 %v446, %v1969
      %v1971 = vpop.f32.mrb[0].mxu0
      %v1972 = vpop.f32.mrb[0].mxu0
      %v1973 = vadd.f32 %v446, %v1972
      %v1974 = vpop.f32.mrb[0].mxu0
      %1975 = vmatprep.mubr.bf16.mxu0 0
      %1976 = vmatmul.mubr.bf16.gmra.mrb[0].mxu0 %v1285
      %v1977 = vpop.f32.mrb[0].mxu0
      %v1978 = vadd.f32 %v446, %v1977
      %v1979 = vpop.f32.mrb[0].mxu0
      %v1980 = vpop.f32.mrb[0].mxu0
      %v1981 = vadd.f32 %v446, %v1980
      %v1982 = vpop.f32.mrb[0].mxu0
      %1983 = vmatprep.mubr.bf16.mxu0 0
      %1984 = vmatmul.mubr.bf16.gmra.mrb[0].mxu0 %v1288
      %v1985 = vpop.f32.mrb[0].mxu0
      %v1986 = vadd.f32 %v446, %v1985
      %v1987 = vpop.f32.mrb[0].mxu0
      %v1988 = vpop.f32.mrb[0].mxu0
      %v1989 = vadd.f32 %v446, %v1988
      %v1990 = vpop.f32.mrb[0].mxu0
      %1991 = vmatprep.mubr.bf16.mxu0 0
      %1992 = vmatmul.mubr.bf16.gmra.mrb[0].mxu0 %v1291
      %v1993 = vpop.f32.mrb[0].mxu0
      %v1994 = vadd.f32 %v446, %v1993
      %v1995 = vpop.f32.mrb[0].mxu0
      %v1996 = vpop.f32.mrb[0].mxu0
      %v1997 = vadd.f32 %v446, %v1996
      %v1998 = vpop.f32.mrb[0].mxu0
      %1999 = vmatprep.mubr.bf16.mxu0 0
      %2000 = vmatmul.mubr.bf16.gmra.mrb[0].mxu0 %v1294
      %v2001 = vpop.f32.mrb[0].mxu0
      %v2002 = vadd.f32 %v446, %v2001
      %v2003 = vpop.f32.mrb[0].mxu0
      %v2004 = vpop.f32.mrb[0].mxu0
      %v2005 = vadd.f32 %v446, %v2004
      %v2006 = vpop.f32.mrb[0].mxu0
      %2007 = vmatprep.mubr.bf16.mxu0 0
      %2008 = vmatmul.mubr.bf16.gmra.mrb[0].mxu0 %v1297
      %v2009 = vpop.f32.mrb[0].mxu0
      %v2010 = vadd.f32 %v446, %v2009
      %v2011 = vpop.f32.mrb[0].mxu0
      %v2012 = vpop.f32.mrb[0].mxu0
      %v2013 = vadd.f32 %v446, %v2012
      %v2014 = vpop.f32.mrb[0].mxu0
      %2015 = vmatprep.mubr.bf16.mxu0 0
      %2016 = vmatmul.mubr.bf16.gmra.mrb[0].mxu0 %v1300
      %v2017 = vpop.f32.mrb[0].mxu0
      %v2018 = vadd.f32 %v446, %v2017
      %v2019 = vpop.f32.mrb[0].mxu0
      %v2020 = vpop.f32.mrb[0].mxu0
      %v2021 = vadd.f32 %v446, %v2020
      %v2022 = vpop.f32.mrb[0].mxu0
      %2023 = vmatprep.mubr.bf16.mxu0 0
      %2024 = vmatmul.mubr.bf16.gmra.mrb[0].mxu0 %v1303
      %v2025 = vpop.f32.mrb[0].mxu0
      %v2026 = vadd.f32 %v446, %v2025
      %v2027 = vpop.f32.mrb[0].mxu0
      %v2028 = vpop.f32.mrb[0].mxu0
      %v2029 = vadd.f32 %v446, %v2028
      %v2030 = vpop.f32.mrb[0].mxu0
      %2031 = vmatprep.mubr.bf16.mxu0 0
      %2032 = vmatmul.mubr.bf16.gmra.mrb[0].mxu0 %v1306
      %v2033 = vpop.f32.mrb[0].mxu0
      %v2034 = vadd.f32 %v446, %v2033
      %v2035 = vpop.f32.mrb[0].mxu0
      %v2036 = vpop.f32.mrb[0].mxu0
      %v2037 = vadd.f32 %v446, %v2036
      %v2038 = vpop.f32.mrb[0].mxu0
      %2039 = vmatprep.mubr.bf16.mxu0 0
      %2040 = vmatmul.mubr.bf16.gmra.mrb[0].mxu0 %v1309
      %v2041 = vpop.f32.mrb[0].mxu0
      %v2042 = vadd.f32 %v446, %v2041
      %v2043 = vpop.f32.mrb[0].mxu0
      %v2044 = vpop.f32.mrb[0].mxu0
      %v2045 = vadd.f32 %v446, %v2044
      %v2046 = vpop.f32.mrb[0].mxu0
      %2047 = vmatprep.mubr.bf16.mxu0 0
      %2048 = vmatmul.mubr.bf16.gmra.mrb[0].mxu0 %v1312
      %v2049 = vpop.f32.mrb[0].mxu0
      %v2050 = vadd.f32 %v446, %v2049
      %v2051 = vpop.f32.mrb[0].mxu0
      %v2052 = vpop.f32.mrb[0].mxu0
      %v2053 = vadd.f32 %v446, %v2052
      %v2054 = vpop.f32.mrb[0].mxu0
      %2055 = vmatprep.mubr.bf16.mxu0 0
      %2056 = vmatmul.mubr.bf16.gmra.mrb[0].mxu0 %v1315
      %v2057 = vpop.f32.mrb[0].mxu0
      %v2058 = vadd.f32 %v446, %v2057
      %v2059 = vpop.f32.mrb[0].mxu0
      %v2060 = vpop.f32.mrb[0].mxu0
      %v2061 = vadd.f32 %v446, %v2060
      %v2062 = vpop.f32.mrb[0].mxu0
      %2063 = vmatprep.mubr.bf16.mxu0 0
      %2064 = vmatmul.mubr.bf16.gmra.mrb[0].mxu0 %v1318
      %v2065 = vpop.f32.mrb[0].mxu0
      %v2066 = vadd.f32 %v446, %v2065
      %v2067 = vpop.f32.mrb[0].mxu0
      %v2068 = vpop.f32.mrb[0].mxu0
      %v2069 = vadd.f32 %v446, %v2068
      %v2070 = vpop.f32.mrb[0].mxu0
      %2071 = vmatprep.mubr.bf16.mxu0 0
      %2072 = vmatmul.mubr.bf16.gmra.mrb[0].mxu0 %v1321
      %v2073 = vpop.f32.mrb[0].mxu0
      %v2074 = vadd.f32 %v446, %v2073
      %v2075 = vpop.f32.mrb[0].mxu0
      %v2076 = vpop.f32.mrb[0].mxu0
      %v2077 = vadd.f32 %v446, %v2076
      %v2078 = vpop.f32.mrb[0].mxu0
      %2079 = vmatprep.mubr.bf16.mxu0 0
      %2080 = vmatmul.mubr.bf16.gmra.mrb[0].mxu0 %v1324
      %v2081 = vpop.f32.mrb[0].mxu0
      %v2082 = vadd.f32 %v446, %v2081
      %v2083 = vpop.f32.mrb[0].mxu0
      %v2084 = vpop.f32.mrb[0].mxu0
      %v2085 = vadd.f32 %v446, %v2084
      %v2086 = vpop.f32.mrb[0].mxu0
      %2087 = vmatprep.mubr.bf16.mxu0 0
      %2088 = vmatmul.mubr.bf16.gmra.mrb[0].mxu0 %v1327
      %v2089 = vpop.f32.mrb[0].mxu0
      %v2090 = vadd.f32 %v446, %v2089
      %v2091 = vpop.f32.mrb[0].mxu0
      %v2092 = vpop.f32.mrb[0].mxu0
      %v2093 = vadd.f32 %v446, %v2092
      %v2094 = vpop.f32.mrb[0].mxu0
      %2095 = vmatprep.mubr.bf16.mxu0 0
      %2096 = vmatmul.mubr.bf16.gmra.mrb[0].mxu0 %v1330
      %v2097 = vpop.f32.mrb[0].mxu0
      %v2098 = vadd.f32 %v446, %v2097
      %v2099 = vpop.f32.mrb[0].mxu0
      %v2100 = vpop.f32.mrb[0].mxu0
      %v2101 = vadd.f32 %v446, %v2100
      %v2102 = vpop.f32.mrb[0].mxu0
      %2103 = vmatprep.mubr.bf16.mxu0 0
      %2104 = vmatmul.mubr.bf16.gmra.mrb[0].mxu0 %v1333
      %v2105 = vpop.f32.mrb[0].mxu0
      %v2106 = vadd.f32 %v446, %v2105
      %v2107 = vpop.f32.mrb[0].mxu0
      %v2108 = vpop.f32.mrb[0].mxu0
      %v2109 = vadd.f32 %v446, %v2108
      %v2110 = vpop.f32.mrb[0].mxu0
      %2111 = vmatprep.mubr.bf16.mxu0 0
      %2112 = vmatmul.mubr.bf16.gmra.mrb[0].mxu0 %v1336
      %v2113 = vpop.f32.mrb[0].mxu0
      %v2114 = vadd.f32 %v446, %v2113
      %v2115 = vpop.f32.mrb[0].mxu0
      %v2116 = vpop.f32.mrb[0].mxu0
      %v2117 = vadd.f32 %v446, %v2116
      %v2118 = vpop.f32.mrb[0].mxu0
      %2119 = vmatprep.mubr.bf16.mxu0 0
      %2120 = vmatmul.mubr.bf16.gmra.mrb[0].mxu0 %v1339
      %v2121 = vpop.f32.mrb[0].mxu0
      %v2122 = vadd.f32 %v446, %v2121
      %v2123 = vpop.f32.mrb[0].mxu0
      %v2124 = vpop.f32.mrb[0].mxu0
      %v2125 = vadd.f32 %v446, %v2124
      %v2126 = vpop.f32.mrb[0].mxu0
      %2127 = vmatprep.mubr.bf16.mxu0 0
      %2128 = vmatmul.mubr.bf16.gmra.mrb[0].mxu0 %v1342
      %v2129 = vpop.f32.mrb[0].mxu0
      %v2130 = vadd.f32 %v446, %v2129
      %v2131 = vpop.f32.mrb[0].mxu0
      %v2132 = vpop.f32.mrb[0].mxu0
      %v2133 = vadd.f32 %v446, %v2132
      %v2134 = vpop.f32.mrb[0].mxu0
      %2135 = vmatprep.mubr.bf16.mxu0 0
      %2136 = vmatmul.mubr.bf16.gmra.mrb[0].mxu0 %v1345
      %v2137 = vpop.f32.mrb[0].mxu0
      %v2138 = vadd.f32 %v446, %v2137
      %v2139 = vpop.f32.mrb[0].mxu0
      %v2140 = vpop.f32.mrb[0].mxu0
      %v2141 = vadd.f32 %v446, %v2140
      %v2142 = vpop.f32.mrb[0].mxu0
      %2143 = vmatprep.mubr.bf16.mxu0 0
      %2144 = vmatmul.mubr.bf16.gmra.mrb[0].mxu0 %v1348
      %v2145 = vpop.f32.mrb[0].mxu0
      %v2146 = vadd.f32 %v446, %v2145
      %v2147 = vpop.f32.mrb[0].mxu0
      %v2148 = vpop.f32.mrb[0].mxu0
      %v2149 = vadd.f32 %v446, %v2148
      %v2150 = vpop.f32.mrb[0].mxu0
      %2151 = vmatprep.mubr.bf16.mxu0 0
      %2152 = vmatmul.mubr.bf16.gmra.mrb[0].mxu0 %v1351
      %v2153 = vpop.f32.mrb[0].mxu0
      %v2154 = vadd.f32 %v446, %v2153
      %v2155 = vpop.f32.mrb[0].mxu0
      %v2156 = vpop.f32.mrb[0].mxu0
      %v2157 = vadd.f32 %v446, %v2156
      %v2158 = vpop.f32.mrb[0].mxu0
      %2159 = vmatprep.mubr.bf16.mxu0 0
      %2160 = vmatmul.mubr.bf16.gmra.mrb[0].mxu0 %v1354
      %v2161 = vpop.f32.mrb[0].mxu0
      %v2162 = vadd.f32 %v446, %v2161
      %v2163 = vpop.f32.mrb[0].mxu0
      %v2164 = vpop.f32.mrb[0].mxu0
      %v2165 = vadd.f32 %v446, %v2164
      %v2166 = vpop.f32.mrb[0].mxu0
      %2167 = vmatprep.mubr.bf16.mxu0 0
      %2168 = vmatmul.mubr.bf16.gmra.mrb[0].mxu0 %v1357
      %v2169 = vpop.f32.mrb[0].mxu0
      %v2170 = vadd.f32 %v446, %v2169
      %v2171 = vpop.f32.mrb[0].mxu0
      %v2172 = vpop.f32.mrb[0].mxu0
      %v2173 = vadd.f32 %v446, %v2172
      %v2174 = vpop.f32.mrb[0].mxu0
      %2175 = vmatprep.mubr.bf16.mxu0 0
      %2176 = vmatmul.mubr.bf16.gmra.mrb[0].mxu0 %v1360
      %v2177 = vpop.f32.mrb[0].mxu0
      %v2178 = vadd.f32 %v446, %v2177
      %v2179 = vpop.f32.mrb[0].mxu0
      %v2180 = vpop.f32.mrb[0].mxu0
      %v2181 = vadd.f32 %v446, %v2180
      %v2182 = vpop.f32.mrb[0].mxu0
      %2183 = vmatprep.mubr.bf16.mxu0 0
      %2184 = vmatmul.mubr.bf16.gmra.mrb[0].mxu0 %v1363
      %v2185 = vpop.f32.mrb[0].mxu0
      %v2186 = vadd.f32 %v446, %v2185
      %v2187 = vpop.f32.mrb[0].mxu0
      %v2188 = vpop.f32.mrb[0].mxu0
      %v2189 = vadd.f32 %v446, %v2188
      %v2190 = vpop.f32.mrb[0].mxu0
      %2191 = vmatprep.mubr.bf16.mxu0 0
      %2192 = vmatmul.mubr.bf16.gmra.mrb[0].mxu0 %v1366
      %v2193 = vpop.f32.mrb[0].mxu0
      %v2194 = vadd.f32 %v446, %v2193
      %v2195 = vpop.f32.mrb[0].mxu0
      %v2196 = vpop.f32.mrb[0].mxu0
      %v2197 = vadd.f32 %v446, %v2196
      %v2198 = vpop.f32.mrb[0].mxu0
      %2199 = vmatprep.mubr.bf16.mxu0 0
      %2200 = vmatmul.mubr.bf16.gmra.mrb[0].mxu0 %v1369
      %v2201 = vpop.f32.mrb[0].mxu0
      %v2202 = vadd.f32 %v446, %v2201
      %v2203 = vpop.f32.mrb[0].mxu0
      %v2204 = vpop.f32.mrb[0].mxu0
      %v2205 = vadd.f32 %v446, %v2204
      %v2206 = vpop.f32.mrb[0].mxu0
      %2207 = vmatprep.mubr.bf16.mxu0 0
      %2208 = vmatmul.mubr.bf16.gmra.mrb[0].mxu0 %v1372
      %v2209 = vpop.f32.mrb[0].mxu0
      %v2210 = vadd.f32 %v446, %v2209
      %v2211 = vpop.f32.mrb[0].mxu0
      %v2212 = vpop.f32.mrb[0].mxu0
      %v2213 = vadd.f32 %v446, %v2212
      %v2214 = vpop.f32.mrb[0].mxu0
      %2215 = vmatprep.mubr.bf16.mxu0 0
      %2216 = vmatmul.mubr.bf16.gmra.mrb[0].mxu0 %v1375
      %v2217 = vpop.f32.mrb[0].mxu0
      %v2218 = vadd.f32 %v446, %v2217
      %v2219 = vpop.f32.mrb[0].mxu0
      %v2220 = vpop.f32.mrb[0].mxu0
      %v2221 = vadd.f32 %v446, %v2220
      %v2222 = vpop.f32.mrb[0].mxu0
      %2223 = vmatprep.mubr.bf16.mxu0 0
      %2224 = vmatmul.mubr.bf16.gmra.mrb[0].mxu0 %v1378
      %v2225 = vpop.f32.mrb[0].mxu0
      %v2226 = vadd.f32 %v446, %v2225
      %v2227 = vpop.f32.mrb[0].mxu0
      %v2228 = vpop.f32.mrb[0].mxu0
      %v2229 = vadd.f32 %v446, %v2228
      %v2230 = vpop.f32.mrb[0].mxu0
      %2231 = vmatprep.mubr.bf16.mxu0 0
      %2232 = vmatmul.mubr.bf16.gmra.mrb[0].mxu0 %v1381
      %v2233 = vpop.f32.mrb[0].mxu0
      %v2234 = vadd.f32 %v446, %v2233
      %v2235 = vpop.f32.mrb[0].mxu0
      %v2236 = vpop.f32.mrb[0].mxu0
      %v2237 = vadd.f32 %v446, %v2236
      %v2238 = vpop.f32.mrb[0].mxu0
      %2239 = vmatprep.mubr.bf16.mxu0 0
      %2240 = vmatmul.mubr.bf16.gmra.mrb[0].mxu0 %v1384
      %v2241 = vpop.f32.mrb[0].mxu0
      %v2242 = vadd.f32 %v446, %v2241
      %v2243 = vpop.f32.mrb[0].mxu0
      %v2244 = vpop.f32.mrb[0].mxu0
      %v2245 = vadd.f32 %v446, %v2244
      %v2246 = vpop.f32.mrb[0].mxu0
      %2247 = vmatprep.mubr.bf16.mxu0 0
      %2248 = vmatmul.mubr.bf16.gmra.mrb[0].mxu0 %v1387
      %v2249 = vpop.f32.mrb[0].mxu0
      %v2250 = vadd.f32 %v446, %v2249
      %v2251 = vpop.f32.mrb[0].mxu0
      %v2252 = vpop.f32.mrb[0].mxu0
      %v2253 = vadd.f32 %v446, %v2252
      %v2254 = vpop.f32.mrb[0].mxu0
      %2255 = vmatprep.mubr.bf16.mxu0 0
      %2256 = vmatmul.mubr.bf16.gmra.mrb[0].mxu0 %v1390
      %v2257 = vpop.f32.mrb[0].mxu0
      %v2258 = vadd.f32 %v446, %v2257
      %v2259 = vpop.f32.mrb[0].mxu0
      %v2260 = vpop.f32.mrb[0].mxu0
      %v2261 = vadd.f32 %v446, %v2260
      %v2262 = vpop.f32.mrb[0].mxu0
      %2263 = vmatprep.mubr.bf16.mxu0 0
      %2264 = vmatmul.mubr.bf16.gmra.mrb[0].mxu0 %v1393
      %v2265 = vpop.f32.mrb[0].mxu0
      %v2266 = vadd.f32 %v446, %v2265
      %v2267 = vpop.f32.mrb[0].mxu0
      %v2268 = vpop.f32.mrb[0].mxu0
      %v2269 = vadd.f32 %v446, %v2268
      %v2270 = vpop.f32.mrb[0].mxu0
      %2271 = vmatprep.mubr.bf16.mxu0 0
      %2272 = vmatmul.mubr.bf16.gmra.mrb[0].mxu0 %v1396
      %v2273 = vpop.f32.mrb[0].mxu0
      %v2274 = vadd.f32 %v446, %v2273
      %v2275 = vpop.f32.mrb[0].mxu0
      %v2276 = vpop.f32.mrb[0].mxu0
      %v2277 = vadd.f32 %v446, %v2276
      %v2278 = vpop.f32.mrb[0].mxu0
      %2279 = vmatprep.mubr.bf16.mxu0 0
      %2280 = vmatmul.mubr.bf16.gmra.mrb[0].mxu0 %v1399
      %v2281 = vpop.f32.mrb[0].mxu0
      %v2282 = vadd.f32 %v446, %v2281
      %v2283 = vpop.f32.mrb[0].mxu0
      %v2284 = vpop.f32.mrb[0].mxu0
      %v2285 = vadd.f32 %v446, %v2284
      %v2286 = vpop.f32.mrb[0].mxu0
      %2287 = vmatprep.mubr.bf16.mxu0 0
      %2288 = vmatmul.mubr.bf16.gmra.mrb[0].mxu0 %v1402
      %v2289 = vpop.f32.mrb[0].mxu0
      %v2290 = vadd.f32 %v446, %v2289
      %v2291 = vpop.f32.mrb[0].mxu0
      %v2292 = vpop.f32.mrb[0].mxu0
      %v2293 = vadd.f32 %v446, %v2292
      %v2294 = vpop.f32.mrb[0].mxu0
      %2295 = vmatprep.mubr.bf16.mxu0 0
      %2296 = vmatmul.mubr.bf16.gmra.mrb[0].mxu0 %v1405
      %v2297 = vpop.f32.mrb[0].mxu0
      %v2298 = vadd.f32 %v446, %v2297
      %v2299 = vpop.f32.mrb[0].mxu0
      %v2300 = vpop.f32.mrb[0].mxu0
      %v2301 = vadd.f32 %v446, %v2300
      %v2302 = vpop.f32.mrb[0].mxu0
      %2303 = vmatprep.mubr.bf16.mxu0 0
      %2304 = vmatmul.mubr.bf16.gmra.mrb[0].mxu0 %v1408
      %v2305 = vpop.f32.mrb[0].mxu0
      %v2306 = vadd.f32 %v446, %v2305
      %v2307 = vpop.f32.mrb[0].mxu0
      %v2308 = vpop.f32.mrb[0].mxu0
      %v2309 = vadd.f32 %v446, %v2308
      %v2310 = vpop.f32.mrb[0].mxu0
      %2311 = vmatprep.mubr.bf16.mxu0 0
      %2312 = vmatmul.mubr.bf16.gmra.mrb[0].mxu0 %v1411
      %v2313 = vpop.f32.mrb[0].mxu0
      %v2314 = vadd.f32 %v446, %v2313
      %v2315 = vpop.f32.mrb[0].mxu0
      %v2316 = vpop.f32.mrb[0].mxu0
      %v2317 = vadd.f32 %v446, %v2316
      %v2318 = vpop.f32.mrb[0].mxu0
      %2319 = vmatprep.mubr.bf16.mxu0 0
      %2320 = vmatmul.mubr.bf16.gmra.mrb[0].mxu0 %v1414
      %v2321 = vpop.f32.mrb[0].mxu0
      %v2322 = vadd.f32 %v446, %v2321
      %v2323 = vpop.f32.mrb[0].mxu0
      %v2324 = vpop.f32.mrb[0].mxu0
      %v2325 = vadd.f32 %v446, %v2324
      %v2326 = vpop.f32.mrb[0].mxu0
      %2327 = vmatprep.mubr.bf16.mxu0 0
      %2328 = vmatmul.mubr.bf16.gmra.mrb[0].mxu0 %v1417
      %v2329 = vpop.f32.mrb[0].mxu0
      %v2330 = vadd.f32 %v446, %v2329
      %v2331 = vpop.f32.mrb[0].mxu0
      %v2332 = vpop.f32.mrb[0].mxu0
      %v2333 = vadd.f32 %v446, %v2332
      %v2334 = vpop.f32.mrb[0].mxu0
      %2335 = vmatprep.mubr.bf16.mxu0 0
      %2336 = vmatmul.mubr.bf16.gmra.mrb[0].mxu0 %v1420
      %v2337 = vpop.f32.mrb[0].mxu0
      %v2338 = vadd.f32 %v446, %v2337
      %v2339 = vpop.f32.mrb[0].mxu0
      %v2340 = vpop.f32.mrb[0].mxu0
      %v2341 = vadd.f32 %v446, %v2340
      %v2342 = vpop.f32.mrb[0].mxu0
      %2343 = vmatprep.mubr.bf16.mxu0 0
      %2344 = vmatmul.mubr.bf16.gmra.mrb[0].mxu0 %v1423
      %v2345 = vpop.f32.mrb[0].mxu0
      %v2346 = vadd.f32 %v446, %v2345
      %v2347 = vpop.f32.mrb[0].mxu0
      %v2348 = vpop.f32.mrb[0].mxu0
      %v2349 = vadd.f32 %v446, %v2348
      %v2350 = vpop.f32.mrb[0].mxu0
      %2351 = vmatprep.mubr.bf16.mxu0 0
      %2352 = vmatmul.mubr.bf16.gmra.mrb[0].mxu0 %v1426
      %v2353 = vpop.f32.mrb[0].mxu0
      %v2354 = vadd.f32 %v446, %v2353
      %v2355 = vpop.f32.mrb[0].mxu0
      %v2356 = vpop.f32.mrb[0].mxu0
      %v2357 = vadd.f32 %v446, %v2356
      %v2358 = vpop.f32.mrb[0].mxu0
      %2359 = vmatprep.mubr.bf16.mxu0 0
      %2360 = vmatmul.mubr.bf16.gmra.mrb[0].mxu0 %v1429
      %v2361 = vpop.f32.mrb[0].mxu0
      %v2362 = vadd.f32 %v446, %v2361
      %v2363 = vpop.f32.mrb[0].mxu0
      %v2364 = vpop.f32.mrb[0].mxu0
      %v2365 = vadd.f32 %v446, %v2364
      %v2366 = vpop.f32.mrb[0].mxu0
      %2367 = vmatprep.mubr.bf16.mxu0 0
      %2368 = vmatmul.mubr.bf16.gmra.mrb[0].mxu0 %v1432
      %v2369 = vpop.f32.mrb[0].mxu0
      %v2370 = vadd.f32 %v446, %v2369
      %v2371 = vpop.f32.mrb[0].mxu0
      %v2372 = vpop.f32.mrb[0].mxu0
      %v2373 = vadd.f32 %v446, %v2372
      %v2374 = vpop.f32.mrb[0].mxu0
      %2375 = vmatprep.mubr.bf16.mxu0 0
      %2376 = vmatmul.mubr.bf16.gmra.mrb[0].mxu0 %v1435
      %v2377 = vpop.f32.mrb[0].mxu0
      %v2378 = vadd.f32 %v446, %v2377
      %v2379 = vpop.f32.mrb[0].mxu0
      %v2380 = vpop.f32.mrb[0].mxu0
      %v2381 = vadd.f32 %v446, %v2380
      %v2382 = vpop.f32.mrb[0].mxu0
      %2383 = vmatprep.mubr.bf16.mxu0 0
      %2384 = vmatmul.mubr.bf16.gmra.mrb[0].mxu0 %v1438
      %v2385 = vpop.f32.mrb[0].mxu0
      %v2386 = vadd.f32 %v446, %v2385
      %v2387 = vpop.f32.mrb[0].mxu0
      %v2388 = vpop.f32.mrb[0].mxu0
      %v2389 = vadd.f32 %v446, %v2388
      %v2390 = vpop.f32.mrb[0].mxu0
      %2391 = vmatprep.mubr.bf16.mxu0 0
      %2392 = vmatmul.mubr.bf16.gmra.mrb[0].mxu0 %v1441
      %v2393 = vpop.f32.mrb[0].mxu0
      %v2394 = vadd.f32 %v446, %v2393
      %v2395 = vpop.f32.mrb[0].mxu0
      %v2396 = vpop.f32.mrb[0].mxu0
      %v2397 = vadd.f32 %v446, %v2396
      %v2398 = vpop.f32.mrb[0].mxu0
      %2399 = vmatprep.mubr.bf16.mxu0 0
      %2400 = vmatmul.mubr.bf16.gmra.mrb[0].mxu0 %v1444
      %v2401 = vpop.f32.mrb[0].mxu0
      %v2402 = vadd.f32 %v446, %v2401
      %v2403 = vpop.f32.mrb[0].mxu0
      %v2404 = vpop.f32.mrb[0].mxu0
      %v2405 = vadd.f32 %v446, %v2404
      %v2406 = vpop.f32.mrb[0].mxu0
      %2407 = vmatprep.mubr.bf16.mxu0 0
      %2408 = vmatmul.mubr.bf16.gmra.mrb[0].mxu0 %v1447
      %v2409 = vpop.f32.mrb[0].mxu0
      %v2410 = vadd.f32 %v446, %v2409
      %v2411 = vpop.f32.mrb[0].mxu0
      %v2412 = vpop.f32.mrb[0].mxu0
      %v2413 = vadd.f32 %v446, %v2412
      %v2414 = vpop.f32.mrb[0].mxu0
      %2415 = vmatprep.mubr.bf16.mxu0 0
      %2416 = vmatmul.mubr.bf16.gmra.mrb[0].mxu0 %v1450
      %v2417 = vpop.f32.mrb[0].mxu0
      %v2418 = vadd.f32 %v446, %v2417
      %v2419 = vpop.f32.mrb[0].mxu0
      %v2420 = vpop.f32.mrb[0].mxu0
      %v2421 = vadd.f32 %v446, %v2420
      %v2422 = vpop.f32.mrb[0].mxu0
      %2423 = vmatprep.mubr.bf16.mxu0 0
      %2424 = vmatmul.mubr.bf16.gmra.mrb[0].mxu0 %v1453
      %v2425 = vpop.f32.mrb[0].mxu0
      %v2426 = vadd.f32 %v446, %v2425
      %v2427 = vpop.f32.mrb[0].mxu0
      %v2428 = vpop.f32.mrb[0].mxu0
      %v2429 = vadd.f32 %v446, %v2428
      %v2430 = vpop.f32.mrb[0].mxu0
      %2431 = vmatprep.mubr.bf16.mxu0 0
      %2432 = vmatmul.mubr.bf16.gmra.mrb[0].mxu0 %v1456
      %v2433 = vpop.f32.mrb[0].mxu0
      %v2434 = vadd.f32 %v446, %v2433
      %v2435 = vpop.f32.mrb[0].mxu0
      %v2436 = vpop.f32.mrb[0].mxu0
      %v2437 = vadd.f32 %v446, %v2436
      %v2438 = vpop.f32.mrb[0].mxu0
      %2439 = vmatprep.mubr.bf16.mxu0 0
      %2440 = vmatmul.mubr.bf16.gmra.mrb[0].mxu0 %v1459
      %v2441 = vpop.f32.mrb[0].mxu0
      %v2442 = vadd.f32 %v446, %v2441
      %v2443 = vpop.f32.mrb[0].mxu0
      %v2444 = vpop.f32.mrb[0].mxu0
      %v2445 = vadd.f32 %v446, %v2444
      %v2446 = vpop.f32.mrb[0].mxu0
      %2447 = vmatprep.mubr.bf16.mxu0 0
      %2448 = vmatmul.mubr.bf16.gmra.mrb[0].mxu0 %v1462
      %v2449 = vpop.f32.mrb[0].mxu0
      %v2450 = vadd.f32 %v446, %v2449
      %v2451 = vpop.f32.mrb[0].mxu0
      %v2452 = vpop.f32.mrb[0].mxu0
      %v2453 = vadd.f32 %v446, %v2452
      %v2454 = vpop.f32.mrb[0].mxu0
      %2455 = vmatprep.mubr.bf16.mxu0 0
      %2456 = vmatmul.mubr.bf16.gmra.mrb[0].mxu0 %v1465
      %v2457 = vpop.f32.mrb[0].mxu0
      %v2458 = vadd.f32 %v446, %v2457
      %v2459 = vpop.f32.mrb[0].mxu0
      %v2460 = vpop.f32.mrb[0].mxu0
      %v2461 = vadd.f32 %v446, %v2460
      %v2462 = vpop.f32.mrb[0].mxu0
      %2463 = vmatprep.mubr.bf16.mxu0 0
      %2464 = vmatmul.mubr.bf16.gmra.mrb[0].mxu0 %v1468
      %v2465 = vpop.f32.mrb[0].mxu0
      %v2466 = vadd.f32 %v446, %v2465
      %v2467 = vpop.f32.mrb[0].mxu0
      %v2468 = vpop.f32.mrb[0].mxu0
      %v2469 = vadd.f32 %v446, %v2468
      %v2470 = vpop.f32.mrb[0].mxu0
      %2471 = vmatprep.mubr.bf16.mxu0 0
      %2472 = vmatmul.mubr.bf16.gmra.mrb[0].mxu0 %v1471
      %v2473 = vpop.f32.mrb[0].mxu0
      %v2474 = vadd.f32 %v446, %v2473
      %v2475 = vpop.f32.mrb[0].mxu0
      %v2476 = vpop.f32.mrb[0].mxu0
      %v2477 = vadd.f32 %v446, %v2476
      %v2478 = vpop.f32.mrb[0].mxu0
      %2479 = vmatprep.mubr.bf16.mxu0 0
      %2480 = vmatmul.mubr.bf16.gmra.mrb[0].mxu0 %v1474
      %v2481 = vpop.f32.mrb[0].mxu0
      %v2482 = vadd.f32 %v446, %v2481
      %v2483 = vpop.f32.mrb[0].mxu0
      %v2484 = vpop.f32.mrb[0].mxu0
      %v2485 = vadd.f32 %v446, %v2484
      %v2486 = vpop.f32.mrb[0].mxu0
      %2487 = vmatprep.mubr.bf16.mxu0 0
      %2488 = vmatmul.mubr.bf16.gmra.mrb[0].mxu0 %v1477
      %v2489 = vpop.f32.mrb[0].mxu0
      %v2490 = vadd.f32 %v446, %v2489
      %v2491 = vpop.f32.mrb[0].mxu0
      %v2492 = vpop.f32.mrb[0].mxu0
      %v2493 = vadd.f32 %v446, %v2492
      %v2494 = vpop.f32.mrb[0].mxu0
      %2495 = vmatprep.mubr.bf16.mxu0 0
      %2496 = vmatmul.mubr.bf16.gmra.mrb[0].mxu0 %v1480
      %v2497 = vpop.f32.mrb[0].mxu0
      %v2498 = vadd.f32 %v446, %v2497
      %v2499 = vpop.f32.mrb[0].mxu0
      %v2500 = vpop.f32.mrb[0].mxu0
      %v2501 = vadd.f32 %v446, %v2500
      %v2502 = vpop.f32.mrb[0].mxu0
      %2503 = vmatprep.mubr.bf16.mxu0 0
      %2504 = vmatmul.mubr.bf16.gmra.mrb[0].mxu0 %v1483
      %v2505 = vpop.f32.mrb[0].mxu0
      %v2506 = vadd.f32 %v446, %v2505
      %v2507 = vpop.f32.mrb[0].mxu0
      %v2508 = vpop.f32.mrb[0].mxu0
      %v2509 = vadd.f32 %v446, %v2508
      %v2510 = vpop.f32.mrb[0].mxu0
      %2511 = vmatprep.mubr.bf16.mxu0 0
      %2512 = vmatmul.mubr.bf16.gmra.mrb[0].mxu0 %v1486
      %v2513 = vpop.f32.mrb[0].mxu0
      %v2514 = vadd.f32 %v446, %v2513
      %v2515 = vpop.f32.mrb[0].mxu0
      %v2516 = vpop.f32.mrb[0].mxu0
      %v2517 = vadd.f32 %v446, %v2516
      %v2518 = vpop.f32.mrb[0].mxu0
      %2519 = vmatprep.mubr.bf16.mxu0 0
      %2520 = vmatmul.mubr.bf16.gmra.mrb[0].mxu0 %v1489
      %v2521 = vpop.f32.mrb[0].mxu0
      %v2522 = vadd.f32 %v446, %v2521
      %v2523 = vpop.f32.mrb[0].mxu0
      %v2524 = vpop.f32.mrb[0].mxu0
      %v2525 = vadd.f32 %v446, %v2524
      %v2526 = vpop.f32.mrb[0].mxu0
      %2527 = vmatprep.mubr.bf16.mxu0 0
      %2528 = vmatmul.mubr.bf16.gmra.mrb[0].mxu0 %v1492
      %v2529 = vpop.f32.mrb[0].mxu0
      %v2530 = vadd.f32 %v446, %v2529
      %v2531 = vpop.f32.mrb[0].mxu0
      %v2532 = vpop.f32.mrb[0].mxu0
      %v2533 = vadd.f32 %v446, %v2532
      %v2534 = vpop.f32.mrb[0].mxu0
      %2535 = vmatprep.mubr.bf16.mxu0 0
      %2536 = vmatmul.mubr.bf16.gmra.mrb[0].mxu0 %v1495
      %v2537 = vpop.f32.mrb[0].mxu0
      %v2538 = vadd.f32 %v446, %v2537
      %v2539 = vpop.f32.mrb[0].mxu0
      %v2540 = vpop.f32.mrb[0].mxu0
      %v2541 = vadd.f32 %v446, %v2540
      %v2542 = vpop.f32.mrb[0].mxu0
      %2543 = vmatprep.mubr.bf16.mxu0 0
      %2544 = vmatmul.mubr.bf16.gmra.mrb[0].mxu0 %v1498
      %v2545 = vpop.f32.mrb[0].mxu0
      %v2546 = vadd.f32 %v446, %v2545
      %v2547 = vpop.f32.mrb[0].mxu0
      %v2548 = vpop.f32.mrb[0].mxu0
      %v2549 = vadd.f32 %v446, %v2548
      %v2550 = vpop.f32.mrb[0].mxu0
      %2551 = vmatprep.mubr.bf16.mxu0 0
      %2552 = vmatmul.mubr.bf16.gmra.mrb[0].mxu0 %v1501
      %v2553 = vpop.f32.mrb[0].mxu0
      %v2554 = vadd.f32 %v446, %v2553
      %v2555 = vpop.f32.mrb[0].mxu0
      %v2556 = vpop.f32.mrb[0].mxu0
      %v2557 = vadd.f32 %v446, %v2556
      %v2558 = vpop.f32.mrb[0].mxu0
      %2559 = vdwg.mxu0
      %2560 = vst.msk [vmem:[%s172] sm:$0xff] %vm1118, %v1538
      %2561 = vst.msk [vmem:[%s172 + $0x8] sm:$0xff] %vm1118, %v1541
      %2562 = vst.msk [vmem:[%s172 + $0x10] sm:$0xff] %vm1118, %v1546
      %2563 = vst.msk [vmem:[%s172 + $0x18] sm:$0xff] %vm1118, %v1549
      %2564 = vst.msk [vmem:[%s172 + $0x20] sm:$0xff] %vm1118, %v1554
      %2565 = vst.msk [vmem:[%s172 + $0x28] sm:$0xff] %vm1118, %v1557
      %2566 = vst.msk [vmem:[%s172 + $0x30] sm:$0xff] %vm1118, %v1562
      %2567 = vst.msk [vmem:[%s172 + $0x38] sm:$0xff] %vm1118, %v1565
      %2568 = vst.msk [vmem:[%s172 + $0x40] sm:$0xff] %vm1118, %v1570
      %2569 = vst.msk [vmem:[%s172 + $0x48] sm:$0xff] %vm1118, %v1573
      %2570 = vst.msk [vmem:[%s172 + $0x50] sm:$0xff] %vm1118, %v1578
      %2571 = vst.msk [vmem:[%s172 + $0x58] sm:$0xff] %vm1118, %v1581
      %2572 = vst.msk [vmem:[%s172 + $0x60] sm:$0xff] %vm1118, %v1586
      %2573 = vst.msk [vmem:[%s172 + $0x68] sm:$0xff] %vm1118, %v1589
      %2574 = vst.msk [vmem:[%s172 + $0x70] sm:$0xff] %vm1118, %v1594
      %2575 = vst.msk [vmem:[%s172 + $0x78] sm:$0xff] %vm1118, %v1597
      %2576 = vst.msk [vmem:[%s172 + $0x80] sm:$0xff] %vm1118, %v1602
      %2577 = vst.msk [vmem:[%s172 + $0x88] sm:$0xff] %vm1118, %v1605
      %2578 = vst.msk [vmem:[%s172 + $0x90] sm:$0xff] %vm1118, %v1610
      %2579 = vst.msk [vmem:[%s172 + $0x98] sm:$0xff] %vm1118, %v1613
      %2580 = vst.msk [vmem:[%s172 + $0xa0] sm:$0xff] %vm1118, %v1618
      %2581 = vst.msk [vmem:[%s172 + $0xa8] sm:$0xff] %vm1118, %v1621
      %2582 = vst.msk [vmem:[%s172 + $0xb0] sm:$0xff] %vm1118, %v1626
      %2583 = vst.msk [vmem:[%s172 + $0xb8] sm:$0xff] %vm1118, %v1629
      %2584 = vst.msk [vmem:[%s172 + $0xc0] sm:$0xff] %vm1118, %v1634
      %2585 = vst.msk [vmem:[%s172 + $0xc8] sm:$0xff] %vm1118, %v1637
      %2586 = vst.msk [vmem:[%s172 + $0xd0] sm:$0xff] %vm1118, %v1642
      %2587 = vst.msk [vmem:[%s172 + $0xd8] sm:$0xff] %vm1118, %v1645
      %2588 = vst.msk [vmem:[%s172 + $0xe0] sm:$0xff] %vm1118, %v1650
      %2589 = vst.msk [vmem:[%s172 + $0xe8] sm:$0xff] %vm1118, %v1653
      %2590 = vst.msk [vmem:[%s172 + $0xf0] sm:$0xff] %vm1118, %v1658
      %2591 = vst.msk [vmem:[%s172 + $0xf8] sm:$0xff] %vm1118, %v1661
      %2592 = vst.msk [vmem:[%s172 + $0x100] sm:$0xff] %vm1118, %v1666
      %2593 = vst.msk [vmem:[%s172 + $0x108] sm:$0xff] %vm1118, %v1669
      %2594 = vst.msk [vmem:[%s172 + $0x110] sm:$0xff] %vm1118, %v1674
      %2595 = vst.msk [vmem:[%s172 + $0x118] sm:$0xff] %vm1118, %v1677
      %2596 = vst.msk [vmem:[%s172 + $0x120] sm:$0xff] %vm1118, %v1682
      %2597 = vst.msk [vmem:[%s172 + $0x128] sm:$0xff] %vm1118, %v1685
      %2598 = vst.msk [vmem:[%s172 + $0x130] sm:$0xff] %vm1118, %v1690
      %2599 = vst.msk [vmem:[%s172 + $0x138] sm:$0xff] %vm1118, %v1693
      %2600 = vst.msk [vmem:[%s172 + $0x140] sm:$0xff] %vm1118, %v1698
      %2601 = vst.msk [vmem:[%s172 + $0x148] sm:$0xff] %vm1118, %v1701
      %2602 = vst.msk [vmem:[%s172 + $0x150] sm:$0xff] %vm1118, %v1706
      %2603 = vst.msk [vmem:[%s172 + $0x158] sm:$0xff] %vm1118, %v1709
      %2604 = vst.msk [vmem:[%s172 + $0x160] sm:$0xff] %vm1118, %v1714
      %2605 = vst.msk [vmem:[%s172 + $0x168] sm:$0xff] %vm1118, %v1717
      %2606 = vst.msk [vmem:[%s172 + $0x170] sm:$0xff] %vm1118, %v1722
      %2607 = vst.msk [vmem:[%s172 + $0x178] sm:$0xff] %vm1118, %v1725
      %2608 = vst.msk [vmem:[%s172 + $0x180] sm:$0xff] %vm1118, %v1730
      %2609 = vst.msk [vmem:[%s172 + $0x188] sm:$0xff] %vm1118, %v1733
      %2610 = vst.msk [vmem:[%s172 + $0x190] sm:$0xff] %vm1118, %v1738
      %2611 = vst.msk [vmem:[%s172 + $0x198] sm:$0xff] %vm1118, %v1741
      %2612 = vst.msk [vmem:[%s172 + $0x1a0] sm:$0xff] %vm1118, %v1746
      %2613 = vst.msk [vmem:[%s172 + $0x1a8] sm:$0xff] %vm1118, %v1749
      %2614 = vst.msk [vmem:[%s172 + $0x1b0] sm:$0xff] %vm1118, %v1754
      %2615 = vst.msk [vmem:[%s172 + $0x1b8] sm:$0xff] %vm1118, %v1757
      %2616 = vst.msk [vmem:[%s172 + $0x1c0] sm:$0xff] %vm1118, %v1762
      %2617 = vst.msk [vmem:[%s172 + $0x1c8] sm:$0xff] %vm1118, %v1765
      %2618 = vst.msk [vmem:[%s172 + $0x1d0] sm:$0xff] %vm1118, %v1770
      %2619 = vst.msk [vmem:[%s172 + $0x1d8] sm:$0xff] %vm1118, %v1773
      %2620 = vst.msk [vmem:[%s172 + $0x1e0] sm:$0xff] %vm1118, %v1778
      %2621 = vst.msk [vmem:[%s172 + $0x1e8] sm:$0xff] %vm1118, %v1781
      %2622 = vst.msk [vmem:[%s172 + $0x1f0] sm:$0xff] %vm1118, %v1786
      %2623 = vst.msk [vmem:[%s172 + $0x1f8] sm:$0xff] %vm1118, %v1789
      %2624 = vst.msk [vmem:[%s172 + $0x200] sm:$0xff] %vm1118, %v1794
      %2625 = vst.msk [vmem:[%s172 + $0x208] sm:$0xff] %vm1118, %v1797
      %2626 = vst.msk [vmem:[%s172 + $0x210] sm:$0xff] %vm1118, %v1802
      %2627 = vst.msk [vmem:[%s172 + $0x218] sm:$0xff] %vm1118, %v1805
      %2628 = vst.msk [vmem:[%s172 + $0x220] sm:$0xff] %vm1118, %v1810
      %2629 = vst.msk [vmem:[%s172 + $0x228] sm:$0xff] %vm1118, %v1813
      %2630 = vst.msk [vmem:[%s172 + $0x230] sm:$0xff] %vm1118, %v1818
      %2631 = vst.msk [vmem:[%s172 + $0x238] sm:$0xff] %vm1118, %v1821
      %2632 = vst.msk [vmem:[%s172 + $0x240] sm:$0xff] %vm1118, %v1826
      %2633 = vst.msk [vmem:[%s172 + $0x248] sm:$0xff] %vm1118, %v1829
      %2634 = vst.msk [vmem:[%s172 + $0x250] sm:$0xff] %vm1118, %v1834
      %2635 = vst.msk [vmem:[%s172 + $0x258] sm:$0xff] %vm1118, %v1837
      %2636 = vst.msk [vmem:[%s172 + $0x260] sm:$0xff] %vm1118, %v1842
      %2637 = vst.msk [vmem:[%s172 + $0x268] sm:$0xff] %vm1118, %v1845
      %2638 = vst.msk [vmem:[%s172 + $0x270] sm:$0xff] %vm1118, %v1850
      %2639 = vst.msk [vmem:[%s172 + $0x278] sm:$0xff] %vm1118, %v1853
      %2640 = vst.msk [vmem:[%s172 + $0x280] sm:$0xff] %vm1118, %v1858
      %2641 = vst.msk [vmem:[%s172 + $0x288] sm:$0xff] %vm1118, %v1861
      %2642 = vst.msk [vmem:[%s172 + $0x290] sm:$0xff] %vm1118, %v1866
      %2643 = vst.msk [vmem:[%s172 + $0x298] sm:$0xff] %vm1118, %v1869
      %2644 = vst.msk [vmem:[%s172 + $0x2a0] sm:$0xff] %vm1118, %v1874
      %2645 = vst.msk [vmem:[%s172 + $0x2a8] sm:$0xff] %vm1118, %v1877
      %2646 = vst.msk [vmem:[%s172 + $0x2b0] sm:$0xff] %vm1118, %v1882
      %2647 = vst.msk [vmem:[%s172 + $0x2b8] sm:$0xff] %vm1118, %v1885
      %2648 = vst.msk [vmem:[%s172 + $0x2c0] sm:$0xff] %vm1118, %v1890
      %2649 = vst.msk [vmem:[%s172 + $0x2c8] sm:$0xff] %vm1118, %v1893
      %2650 = vst.msk [vmem:[%s172 + $0x2d0] sm:$0xff] %vm1118, %v1898
      %2651 = vst.msk [vmem:[%s172 + $0x2d8] sm:$0xff] %vm1118, %v1901
      %2652 = vst.msk [vmem:[%s172 + $0x2e0] sm:$0xff] %vm1118, %v1906
      %2653 = vst.msk [vmem:[%s172 + $0x2e8] sm:$0xff] %vm1118, %v1909
      %2654 = vst.msk [vmem:[%s172 + $0x2f0] sm:$0xff] %vm1118, %v1914
      %2655 = vst.msk [vmem:[%s172 + $0x2f8] sm:$0xff] %vm1118, %v1917
      %2656 = vst.msk [vmem:[%s172 + $0x300] sm:$0xff] %vm1118, %v1922
      %2657 = vst.msk [vmem:[%s172 + $0x308] sm:$0xff] %vm1118, %v1925
      %2658 = vst.msk [vmem:[%s172 + $0x310] sm:$0xff] %vm1118, %v1930
      %2659 = vst.msk [vmem:[%s172 + $0x318] sm:$0xff] %vm1118, %v1933
      %2660 = vst.msk [vmem:[%s172 + $0x320] sm:$0xff] %vm1118, %v1938
      %2661 = vst.msk [vmem:[%s172 + $0x328] sm:$0xff] %vm1118, %v1941
      %2662 = vst.msk [vmem:[%s172 + $0x330] sm:$0xff] %vm1118, %v1946
      %2663 = vst.msk [vmem:[%s172 + $0x338] sm:$0xff] %vm1118, %v1949
      %2664 = vst.msk [vmem:[%s172 + $0x340] sm:$0xff] %vm1118, %v1954
      %2665 = vst.msk [vmem:[%s172 + $0x348] sm:$0xff] %vm1118, %v1957
      %2666 = vst.msk [vmem:[%s172 + $0x350] sm:$0xff] %vm1118, %v1962
      %2667 = vst.msk [vmem:[%s172 + $0x358] sm:$0xff] %vm1118, %v1965
      %2668 = vst.msk [vmem:[%s172 + $0x360] sm:$0xff] %vm1118, %v1970
      %2669 = vst.msk [vmem:[%s172 + $0x368] sm:$0xff] %vm1118, %v1973
      %2670 = vst.msk [vmem:[%s172 + $0x370] sm:$0xff] %vm1118, %v1978
      %2671 = vst.msk [vmem:[%s172 + $0x378] sm:$0xff] %vm1118, %v1981
      %2672 = vst.msk [vmem:[%s172 + $0x380] sm:$0xff] %vm1118, %v1986
      %2673 = vst.msk [vmem:[%s172 + $0x388] sm:$0xff] %vm1118, %v1989
      %2674 = vst.msk [vmem:[%s172 + $0x390] sm:$0xff] %vm1118, %v1994
      %2675 = vst.msk [vmem:[%s172 + $0x398] sm:$0xff] %vm1118, %v1997
      %2676 = vst.msk [vmem:[%s172 + $0x3a0] sm:$0xff] %vm1118, %v2002
      %2677 = vst.msk [vmem:[%s172 + $0x3a8] sm:$0xff] %vm1118, %v2005
      %2678 = vst.msk [vmem:[%s172 + $0x3b0] sm:$0xff] %vm1118, %v2010
      %2679 = vst.msk [vmem:[%s172 + $0x3b8] sm:$0xff] %vm1118, %v2013
      %2680 = vst.msk [vmem:[%s172 + $0x3c0] sm:$0xff] %vm1118, %v2018
      %2681 = vst.msk [vmem:[%s172 + $0x3c8] sm:$0xff] %vm1118, %v2021
      %2682 = vst.msk [vmem:[%s172 + $0x3d0] sm:$0xff] %vm1118, %v2026
      %2683 = vst.msk [vmem:[%s172 + $0x3d8] sm:$0xff] %vm1118, %v2029
      %2684 = vst.msk [vmem:[%s172 + $0x3e0] sm:$0xff] %vm1118, %v2034
      %2685 = vst.msk [vmem:[%s172 + $0x3e8] sm:$0xff] %vm1118, %v2037
      %2686 = vst.msk [vmem:[%s172 + $0x3f0] sm:$0xff] %vm1118, %v2042
      %2687 = vst.msk [vmem:[%s172 + $0x3f8] sm:$0xff] %vm1118, %v2045
      %2688 = vst.msk [vmem:[%s172 + $0x400] sm:$0xff] %vm1118, %v2050
      %2689 = vst.msk [vmem:[%s172 + $0x408] sm:$0xff] %vm1118, %v2053
      %2690 = vst.msk [vmem:[%s172 + $0x410] sm:$0xff] %vm1118, %v2058
      %2691 = vst.msk [vmem:[%s172 + $0x418] sm:$0xff] %vm1118, %v2061
      %2692 = vst.msk [vmem:[%s172 + $0x420] sm:$0xff] %vm1118, %v2066
      %2693 = vst.msk [vmem:[%s172 + $0x428] sm:$0xff] %vm1118, %v2069
      %2694 = vst.msk [vmem:[%s172 + $0x430] sm:$0xff] %vm1118, %v2074
      %2695 = vst.msk [vmem:[%s172 + $0x438] sm:$0xff] %vm1118, %v2077
      %2696 = vst.msk [vmem:[%s172 + $0x440] sm:$0xff] %vm1118, %v2082
      %2697 = vst.msk [vmem:[%s172 + $0x448] sm:$0xff] %vm1118, %v2085
      %2698 = vst.msk [vmem:[%s172 + $0x450] sm:$0xff] %vm1118, %v2090
      %2699 = vst.msk [vmem:[%s172 + $0x458] sm:$0xff] %vm1118, %v2093
      %2700 = vst.msk [vmem:[%s172 + $0x460] sm:$0xff] %vm1118, %v2098
      %2701 = vst.msk [vmem:[%s172 + $0x468] sm:$0xff] %vm1118, %v2101
      %2702 = vst.msk [vmem:[%s172 + $0x470] sm:$0xff] %vm1118, %v2106
      %2703 = vst.msk [vmem:[%s172 + $0x478] sm:$0xff] %vm1118, %v2109
      %2704 = vst.msk [vmem:[%s172 + $0x480] sm:$0xff] %vm1118, %v2114
      %2705 = vst.msk [vmem:[%s172 + $0x488] sm:$0xff] %vm1118, %v2117
      %2706 = vst.msk [vmem:[%s172 + $0x490] sm:$0xff] %vm1118, %v2122
      %2707 = vst.msk [vmem:[%s172 + $0x498] sm:$0xff] %vm1118, %v2125
      %2708 = vst.msk [vmem:[%s172 + $0x4a0] sm:$0xff] %vm1118, %v2130
      %2709 = vst.msk [vmem:[%s172 + $0x4a8] sm:$0xff] %vm1118, %v2133
      %2710 = vst.msk [vmem:[%s172 + $0x4b0] sm:$0xff] %vm1118, %v2138
      %2711 = vst.msk [vmem:[%s172 + $0x4b8] sm:$0xff] %vm1118, %v2141
      %2712 = vst.msk [vmem:[%s172 + $0x4c0] sm:$0xff] %vm1118, %v2146
      %2713 = vst.msk [vmem:[%s172 + $0x4c8] sm:$0xff] %vm1118, %v2149
      %2714 = vst.msk [vmem:[%s172 + $0x4d0] sm:$0xff] %vm1118, %v2154
      %2715 = vst.msk [vmem:[%s172 + $0x4d8] sm:$0xff] %vm1118, %v2157
      %2716 = vst.msk [vmem:[%s172 + $0x4e0] sm:$0xff] %vm1118, %v2162
      %2717 = vst.msk [vmem:[%s172 + $0x4e8] sm:$0xff] %vm1118, %v2165
      %2718 = vst.msk [vmem:[%s172 + $0x4f0] sm:$0xff] %vm1118, %v2170
      %2719 = vst.msk [vmem:[%s172 + $0x4f8] sm:$0xff] %vm1118, %v2173
      %2720 = vst.msk [vmem:[%s172 + $0x500] sm:$0xff] %vm1118, %v2178
      %2721 = vst.msk [vmem:[%s172 + $0x508] sm:$0xff] %vm1118, %v2181
      %2722 = vst.msk [vmem:[%s172 + $0x510] sm:$0xff] %vm1118, %v2186
      %2723 = vst.msk [vmem:[%s172 + $0x518] sm:$0xff] %vm1118, %v2189
      %2724 = vst.msk [vmem:[%s172 + $0x520] sm:$0xff] %vm1118, %v2194
      %2725 = vst.msk [vmem:[%s172 + $0x528] sm:$0xff] %vm1118, %v2197
      %2726 = vst.msk [vmem:[%s172 + $0x530] sm:$0xff] %vm1118, %v2202
      %2727 = vst.msk [vmem:[%s172 + $0x538] sm:$0xff] %vm1118, %v2205
      %2728 = vst.msk [vmem:[%s172 + $0x540] sm:$0xff] %vm1118, %v2210
      %2729 = vst.msk [vmem:[%s172 + $0x548] sm:$0xff] %vm1118, %v2213
      %2730 = vst.msk [vmem:[%s172 + $0x550] sm:$0xff] %vm1118, %v2218
      %2731 = vst.msk [vmem:[%s172 + $0x558] sm:$0xff] %vm1118, %v2221
      %2732 = vst.msk [vmem:[%s172 + $0x560] sm:$0xff] %vm1118, %v2226
      %2733 = vst.msk [vmem:[%s172 + $0x568] sm:$0xff] %vm1118, %v2229
      %2734 = vst.msk [vmem:[%s172 + $0x570] sm:$0xff] %vm1118, %v2234
      %2735 = vst.msk [vmem:[%s172 + $0x578] sm:$0xff] %vm1118, %v2237
      %2736 = vst.msk [vmem:[%s172 + $0x580] sm:$0xff] %vm1118, %v2242
      %2737 = vst.msk [vmem:[%s172 + $0x588] sm:$0xff] %vm1118, %v2245
      %2738 = vst.msk [vmem:[%s172 + $0x590] sm:$0xff] %vm1118, %v2250
      %2739 = vst.msk [vmem:[%s172 + $0x598] sm:$0xff] %vm1118, %v2253
      %2740 = vst.msk [vmem:[%s172 + $0x5a0] sm:$0xff] %vm1118, %v2258
      %2741 = vst.msk [vmem:[%s172 + $0x5a8] sm:$0xff] %vm1118, %v2261
      %2742 = vst.msk [vmem:[%s172 + $0x5b0] sm:$0xff] %vm1118, %v2266
      %2743 = vst.msk [vmem:[%s172 + $0x5b8] sm:$0xff] %vm1118, %v2269
      %2744 = vst.msk [vmem:[%s172 + $0x5c0] sm:$0xff] %vm1118, %v2274
      %2745 = vst.msk [vmem:[%s172 + $0x5c8] sm:$0xff] %vm1118, %v2277
      %2746 = vst.msk [vmem:[%s172 + $0x5d0] sm:$0xff] %vm1118, %v2282
      %2747 = vst.msk [vmem:[%s172 + $0x5d8] sm:$0xff] %vm1118, %v2285
      %2748 = vst.msk [vmem:[%s172 + $0x5e0] sm:$0xff] %vm1118, %v2290
      %2749 = vst.msk [vmem:[%s172 + $0x5e8] sm:$0xff] %vm1118, %v2293
      %2750 = vst.msk [vmem:[%s172 + $0x5f0] sm:$0xff] %vm1118, %v2298
      %2751 = vst.msk [vmem:[%s172 + $0x5f8] sm:$0xff] %vm1118, %v2301
      %2752 = vst.msk [vmem:[%s172 + $0x600] sm:$0xff] %vm1118, %v2306
      %2753 = vst.msk [vmem:[%s172 + $0x608] sm:$0xff] %vm1118, %v2309
      %2754 = vst.msk [vmem:[%s172 + $0x610] sm:$0xff] %vm1118, %v2314
      %2755 = vst.msk [vmem:[%s172 + $0x618] sm:$0xff] %vm1118, %v2317
      %2756 = vst.msk [vmem:[%s172 + $0x620] sm:$0xff] %vm1118, %v2322
      %2757 = vst.msk [vmem:[%s172 + $0x628] sm:$0xff] %vm1118, %v2325
      %2758 = vst.msk [vmem:[%s172 + $0x630] sm:$0xff] %vm1118, %v2330
      %2759 = vst.msk [vmem:[%s172 + $0x638] sm:$0xff] %vm1118, %v2333
      %2760 = vst.msk [vmem:[%s172 + $0x640] sm:$0xff] %vm1118, %v2338
      %2761 = vst.msk [vmem:[%s172 + $0x648] sm:$0xff] %vm1118, %v2341
      %2762 = vst.msk [vmem:[%s172 + $0x650] sm:$0xff] %vm1118, %v2346
      %2763 = vst.msk [vmem:[%s172 + $0x658] sm:$0xff] %vm1118, %v2349
      %2764 = vst.msk [vmem:[%s172 + $0x660] sm:$0xff] %vm1118, %v2354
      %2765 = vst.msk [vmem:[%s172 + $0x668] sm:$0xff] %vm1118, %v2357
      %2766 = vst.msk [vmem:[%s172 + $0x670] sm:$0xff] %vm1118, %v2362
      %2767 = vst.msk [vmem:[%s172 + $0x678] sm:$0xff] %vm1118, %v2365
      %2768 = vst.msk [vmem:[%s172 + $0x680] sm:$0xff] %vm1118, %v2370
      %2769 = vst.msk [vmem:[%s172 + $0x688] sm:$0xff] %vm1118, %v2373
      %2770 = vst.msk [vmem:[%s172 + $0x690] sm:$0xff] %vm1118, %v2378
      %2771 = vst.msk [vmem:[%s172 + $0x698] sm:$0xff] %vm1118, %v2381
      %2772 = vst.msk [vmem:[%s172 + $0x6a0] sm:$0xff] %vm1118, %v2386
      %2773 = vst.msk [vmem:[%s172 + $0x6a8] sm:$0xff] %vm1118, %v2389
      %2774 = vst.msk [vmem:[%s172 + $0x6b0] sm:$0xff] %vm1118, %v2394
      %2775 = vst.msk [vmem:[%s172 + $0x6b8] sm:$0xff] %vm1118, %v2397
      %2776 = vst.msk [vmem:[%s172 + $0x6c0] sm:$0xff] %vm1118, %v2402
      %2777 = vst.msk [vmem:[%s172 + $0x6c8] sm:$0xff] %vm1118, %v2405
      %2778 = vst.msk [vmem:[%s172 + $0x6d0] sm:$0xff] %vm1118, %v2410
      %2779 = vst.msk [vmem:[%s172 + $0x6d8] sm:$0xff] %vm1118, %v2413
      %2780 = vst.msk [vmem:[%s172 + $0x6e0] sm:$0xff] %vm1118, %v2418
      %2781 = vst.msk [vmem:[%s172 + $0x6e8] sm:$0xff] %vm1118, %v2421
      %2782 = vst.msk [vmem:[%s172 + $0x6f0] sm:$0xff] %vm1118, %v2426
      %2783 = vst.msk [vmem:[%s172 + $0x6f8] sm:$0xff] %vm1118, %v2429
      %2784 = vst.msk [vmem:[%s172 + $0x700] sm:$0xff] %vm1118, %v2434
      %2785 = vst.msk [vmem:[%s172 + $0x708] sm:$0xff] %vm1118, %v2437
      %2786 = vst.msk [vmem:[%s172 + $0x710] sm:$0xff] %vm1118, %v2442
      %2787 = vst.msk [vmem:[%s172 + $0x718] sm:$0xff] %vm1118, %v2445
      %2788 = vst.msk [vmem:[%s172 + $0x720] sm:$0xff] %vm1118, %v2450
      %2789 = vst.msk [vmem:[%s172 + $0x728] sm:$0xff] %vm1118, %v2453
      %2790 = vst.msk [vmem:[%s172 + $0x730] sm:$0xff] %vm1118, %v2458
      %2791 = vst.msk [vmem:[%s172 + $0x738] sm:$0xff] %vm1118, %v2461
      %2792 = vst.msk [vmem:[%s172 + $0x740] sm:$0xff] %vm1118, %v2466
      %2793 = vst.msk [vmem:[%s172 + $0x748] sm:$0xff] %vm1118, %v2469
      %2794 = vst.msk [vmem:[%s172 + $0x750] sm:$0xff] %vm1118, %v2474
      %2795 = vst.msk [vmem:[%s172 + $0x758] sm:$0xff] %vm1118, %v2477
      %2796 = vst.msk [vmem:[%s172 + $0x760] sm:$0xff] %vm1118, %v2482
      %2797 = vst.msk [vmem:[%s172 + $0x768] sm:$0xff] %vm1118, %v2485
      %2798 = vst.msk [vmem:[%s172 + $0x770] sm:$0xff] %vm1118, %v2490
      %2799 = vst.msk [vmem:[%s172 + $0x778] sm:$0xff] %vm1118, %v2493
      %2800 = vst.msk [vmem:[%s172 + $0x780] sm:$0xff] %vm1118, %v2498
      %2801 = vst.msk [vmem:[%s172 + $0x788] sm:$0xff] %vm1118, %v2501
      %2802 = vst.msk [vmem:[%s172 + $0x790] sm:$0xff] %vm1118, %v2506
      %2803 = vst.msk [vmem:[%s172 + $0x798] sm:$0xff] %vm1118, %v2509
      %2804 = vst.msk [vmem:[%s172 + $0x7a0] sm:$0xff] %vm1118, %v2514
      %2805 = vst.msk [vmem:[%s172 + $0x7a8] sm:$0xff] %vm1118, %v2517
      %2806 = vst.msk [vmem:[%s172 + $0x7b0] sm:$0xff] %vm1118, %v2522
      %2807 = vst.msk [vmem:[%s172 + $0x7b8] sm:$0xff] %vm1118, %v2525
      %2808 = vst.msk [vmem:[%s172 + $0x7c0] sm:$0xff] %vm1118, %v2530
      %2809 = vst.msk [vmem:[%s172 + $0x7c8] sm:$0xff] %vm1118, %v2533
      %2810 = vst.msk [vmem:[%s172 + $0x7d0] sm:$0xff] %vm1118, %v2538
      %2811 = vst.msk [vmem:[%s172 + $0x7d8] sm:$0xff] %vm1118, %v2541
      %2812 = vst.msk [vmem:[%s172 + $0x7e0] sm:$0xff] %vm1118, %v2546
      %2813 = vst.msk [vmem:[%s172 + $0x7e8] sm:$0xff] %vm1118, %v2549
      %2814 = vst.msk [vmem:[%s172 + $0x7f0] sm:$0xff] %vm1118, %v2554
      %2815 = vst.msk [vmem:[%s172 + $0x7f8] sm:$0xff] %vm1118, %v2557
      %s2816 = smul.u32 256, %s14
      %p2817 = scmp.lt.s32.totalorder %s2816, 2559
      %s2818 = scalar_select %p2817, %s2816, 2559
      %s2819 = smul.addr %s2818, 8
      %s2820 = scalar_lea.vmem %s3, %s2819
      // Predicated region
      $region33: #{very_small_decoder_forward.7} parent=31 // pred_check
        %p2821 = pneg %p100
      $region34: #{very_small_decoder_forward.7} parent=31 // pred_check_branch
        %2823 = sbr.rel (%p2821) target = $region36
      $region35: #{very_small_decoder_forward.7} parent=31 // pred_region
        %s2824 = smul.u32 256, %s14
      $region36: #{very_small_decoder_forward.7} parent=31 // pred_fallthru
        _
    $region32: #{very_small_decoder_forward.7} parent=5 // pred_fallthru
      _
    %p2825 = scmp.le.s32.totalorder 2, %s9
    // Predicated region
    $region37: #{very_small_decoder_forward.7} parent=5 // pred_check
      %p2826 = pneg %p2825
    $region38: #{very_small_decoder_forward.7} parent=5 // pred_check_branch
      %2828 = sbr.rel (%p2826) target = $region40
    $region39: #{very_small_decoder_forward.7} parent=5 // pred_region
      %s2829 = ssub.s32 %s9, 2
      // Predicated region
      $region41: #{very_small_decoder_forward.7} parent=39 // pred_check
        %p2830 = pneg %p106
      $region42: #{very_small_decoder_forward.7} parent=39 // pred_check_branch
        %2832 = sbr.rel (%p2830) target = $region44
      $region43: #{very_small_decoder_forward.7} parent=39 // pred_region
        %s2833 = smul.u32 256, %s15
        %p2834 = scmp.lt.s32.totalorder %s2833, 2559
        %s2835 = scalar_select %p2834, %s2833, 2559
        %s2836 = smul.addr %s2835, 8
        %s2837 = scalar_lea.vmem %s3, %s2836
      $region44: #{very_small_decoder_forward.7} parent=39 // pred_fallthru
        _
    $region40: #{very_small_decoder_forward.7} parent=5 // pred_fallthru
      _
  $region6: #{very_small_decoder_forward.7} parent=0 // loop_footer
    %s13 = sadd.s32 1, %s9
  $region7: #{very_small_decoder_forward.7} parent=0 // loop_footer_branch
    %8 = sbr.rel target = $region3
  $region8: #{very_small_decoder_forward.7} parent=0 // loop_exit
    _

// kernel: very_small_decoder_forward.8
$region0: #{very_small_decoder_forward.8}
  #allocation0 [shape = 'u32[]', space=smem, size = 0x4, offset = 0x4, fixed_abs, tag = 'smem constant byte address 0x4 - core index']
  #allocation1 [shape = 'u32[144,128]{1,0:T(1,128)}', space=vmem, size = 0x12000, scoped, tag = 'internal scratch']
  %s0 = inlined_call_operand.vmem [shape: bf16[40960,80], index: 0, kind: input, shape index: {}]
  %s1 = inlined_call_operand.vmem [shape: bf16[80,80], index: 1, kind: input, shape index: {}]
  %s2 = inlined_call_operand.vmem [shape: f32[1,80], index: 2, kind: input, shape index: {}]
  %s3 = inlined_call_operand.vmem [shape: f32[40960,80], index: 3, kind: output, shape index: {}]
  %s4 = sld [smem:[#allocation0]]
  $region45: #{very_small_decoder_forward.8} parent=0
    _
  %s6 = ssub.s32 1, %s4
  %s7 = scalar_select 0, %s6, %s4
  loop: start=0, step=1, limit=22
  $region2: #{very_small_decoder_forward.8} parent=0 // loop_pre_header
    _
  $region3: #{very_small_decoder_forward.8} parent=0 // loop_header
    %s9 = sphi 0, %s13
    %p10 = scmp.ge.s32.totalorder %s9, 22
    %s19 = sphi 0, %s21
    %s22 = sphi 0, %s19
    %s23 = sphi 0, %s22
    %s39 = sphi 0, %s23
    %s43 = sphi 0, %s43
    %s45 = sphi 0, %s43
    %s46 = sphi 0, %s45
    %s60 = sphi 0, %s46
    %s64 = sphi 0, %s64
    %s66 = sphi 0, %s64
    %s67 = sphi 0, %s66
    %s81 = sphi 0, %s67
    %s87 = sphi 0, %s89
    %s90 = sphi 0, %s87
    %s91 = sphi 0, %s90
    %s107 = sphi 0, %s91
  $region4: #{very_small_decoder_forward.8} parent=0 // loop_header_branch
    %12 = sbr.rel (%p10) target = $region8
  $region5: #{very_small_decoder_forward.8} parent=0 // loop_body
    %s14 = ssub.s32 %s9, 1
    %s15 = ssub.s32 %s9, 2
    %s16 = sadd.s32 %s9, 1
    %s17 = ssub.s32 %s9, %s16
    %p18 = scmp.eq.s32.totalorder %s17, 0
    %s20 = sadd.s32 %s19, 1
    %s21 = scalar_select %p18, %s19, %s20
    %p24 = pneg %p18
    %p25 = scmp.eq.s32.totalorder %s9, 19
    %p26 = por %p24, %p25
    %p27 = scmp.ne.s32.totalorder %s19, %s22
    %p28 = scmp.eq.s32.totalorder %s9, 0
    %p29 = por %p27, %p28
    %p30 = scmp.ne.s32.totalorder %s19, %s22
    %p31 = scmp.eq.s32.totalorder %s14, 19
    %p32 = por %p30, %p31
    %p33 = scmp.ne.s32.totalorder %s22, %s23
    %p34 = scmp.eq.s32.totalorder %s14, 0
    %p35 = por %p33, %p34
    %p36 = scmp.ne.s32.totalorder %s22, %s23
    %p37 = scmp.eq.s32.totalorder %s15, 19
    %p38 = por %p36, %p37
    %p40 = scmp.ne.s32.totalorder %s23, %s39
    %p41 = scmp.eq.s32.totalorder %s15, 0
    %p42 = por %p40, %p41
    %s44 = sadd.s32 %s43, 1
    %p47 = scmp.eq.s32.totalorder %s9, 19
    %p48 = scmp.ne.s32.totalorder %s43, %s45
    %p49 = scmp.eq.s32.totalorder %s9, 0
    %p50 = por %p48, %p49
    %p51 = scmp.ne.s32.totalorder %s43, %s45
    %p52 = scmp.eq.s32.totalorder %s14, 19
    %p53 = por %p51, %p52
    %p54 = scmp.ne.s32.totalorder %s45, %s46
    %p55 = scmp.eq.s32.totalorder %s14, 0
    %p56 = por %p54, %p55
    %p57 = scmp.ne.s32.totalorder %s45, %s46
    %p58 = scmp.eq.s32.totalorder %s15, 19
    %p59 = por %p57, %p58
    %p61 = scmp.ne.s32.totalorder %s46, %s60
    %p62 = scmp.eq.s32.totalorder %s15, 0
    %p63 = por %p61, %p62
    %s65 = sadd.s32 %s64, 1
    %p68 = scmp.eq.s32.totalorder %s9, 19
    %p69 = scmp.ne.s32.totalorder %s64, %s66
    %p70 = scmp.eq.s32.totalorder %s9, 0
    %p71 = por %p69, %p70
    %p72 = scmp.ne.s32.totalorder %s64, %s66
    %p73 = scmp.eq.s32.totalorder %s14, 19
    %p74 = por %p72, %p73
    %p75 = scmp.ne.s32.totalorder %s66, %s67
    %p76 = scmp.eq.s32.totalorder %s14, 0
    %p77 = por %p75, %p76
    %p78 = scmp.ne.s32.totalorder %s66, %s67
    %p79 = scmp.eq.s32.totalorder %s15, 19
    %p80 = por %p78, %p79
    %p82 = scmp.ne.s32.totalorder %s67, %s81
    %p83 = scmp.eq.s32.totalorder %s15, 0
    %p84 = por %p82, %p83
    %s85 = ssub.s32 %s9, %s16
    %p86 = scmp.eq.s32.totalorder %s85, 0
    %s88 = sadd.s32 %s87, 1
    %s89 = scalar_select %p86, %s87, %s88
    %p92 = pneg %p86
    %p93 = scmp.eq.s32.totalorder %s9, 19
    %p94 = por %p92, %p93
    %p95 = scmp.ne.s32.totalorder %s87, %s90
    %p96 = scmp.eq.s32.totalorder %s9, 0
    %p97 = por %p95, %p96
    %p98 = scmp.ne.s32.totalorder %s87, %s90
    %p99 = scmp.eq.s32.totalorder %s14, 19
    %p100 = por %p98, %p99
    %p101 = scmp.ne.s32.totalorder %s90, %s91
    %p102 = scmp.eq.s32.totalorder %s14, 0
    %p103 = por %p101, %p102
    %p104 = scmp.ne.s32.totalorder %s90, %s91
    %p105 = scmp.eq.s32.totalorder %s15, 19
    %p106 = por %p104, %p105
    %p108 = scmp.ne.s32.totalorder %s91, %s107
    %p109 = scmp.eq.s32.totalorder %s15, 0
    %p110 = por %p108, %p109
    %p111 = scmp.le.s32.totalorder 1, %s9
    %p112 = scmp.lt.s32.totalorder %s9, 21
    %p113 = pnand %p111, %p112
    %p114 = pneg %p113
    // Predicated region
    $region9: #{very_small_decoder_forward.8} parent=5 // pred_check
      _
    $region10: #{very_small_decoder_forward.8} parent=5 // pred_check_branch
      %116 = sbr.rel (%p113) target = $region12
    $region11: #{very_small_decoder_forward.8} parent=5 // pred_region
      %s117 = ssub.s32 %s9, 1
      // Predicated region
      $region13: #{very_small_decoder_forward.8} parent=11 // pred_check
        %p118 = pneg %p56
      $region14: #{very_small_decoder_forward.8} parent=11 // pred_check_branch
        %120 = sbr.rel (%p118) target = $region16
      $region15: #{very_small_decoder_forward.8} parent=11 // pred_region
        _
      $region16: #{very_small_decoder_forward.8} parent=11 // pred_fallthru
        _
      // Predicated region
      $region17: #{very_small_decoder_forward.8} parent=11 // pred_check
        %p121 = pneg %p77
      $region18: #{very_small_decoder_forward.8} parent=11 // pred_check_branch
        %123 = sbr.rel (%p121) target = $region20
      $region19: #{very_small_decoder_forward.8} parent=11 // pred_region
        _
      $region20: #{very_small_decoder_forward.8} parent=11 // pred_fallthru
        _
    $region12: #{very_small_decoder_forward.8} parent=5 // pred_fallthru
      _
    %p124 = scmp.lt.s32.totalorder %s9, 20
    // Predicated region
    $region21: #{very_small_decoder_forward.8} parent=5 // pred_check
      %p125 = pneg %p124
    $region22: #{very_small_decoder_forward.8} parent=5 // pred_check_branch
      %127 = sbr.rel (%p125) target = $region24
    $region23: #{very_small_decoder_forward.8} parent=5 // pred_region
      // Predicated region
      $region25: #{very_small_decoder_forward.8} parent=23 // pred_check
        %p128 = pneg %p29
      $region26: #{very_small_decoder_forward.8} parent=23 // pred_check_branch
        %130 = sbr.rel (%p128) target = $region28
      $region27: #{very_small_decoder_forward.8} parent=23 // pred_region
        %s131 = smul.u32 256, %s9
        %p132 = scmp.lt.s32.totalorder %s131, 5119
        %s133 = scalar_select %p132, %s131, 5119
        %s134 = smul.addr %s133, 4
        %s135 = scalar_lea.vmem %s0, %s134
        %s136 = smul.u32 256, %s9
      $region28: #{very_small_decoder_forward.8} parent=23 // pred_fallthru
        _
    $region24: #{very_small_decoder_forward.8} parent=5 // pred_fallthru
      _
    %p137 = scmp.le.s32.totalorder 1, %s9
    %p138 = scmp.lt.s32.totalorder %s9, 21
    %p139 = pnand %p137, %p138
    %p140 = pneg %p139
    // Predicated region
    $region29: #{very_small_decoder_forward.8} parent=5 // pred_check
      _
    $region30: #{very_small_decoder_forward.8} parent=5 // pred_check_branch
      %142 = sbr.rel (%p139) target = $region32
    $region31: #{very_small_decoder_forward.8} parent=5 // pred_region
      %s143 = ssub.s32 %s9, 1
      %s144 = smul.u32 256, %s14
      %p145 = scmp.lt.s32.totalorder %s144, 5119
      %s146 = scalar_select %p145, %s144, 5119
      %s147 = smul.addr %s146, 4
      %s148 = scalar_lea.vmem %s0, %s147
      %p149 = pneg %p35
      %p150 = pneg %p32
      %p151 = pneg %p56
      %p152 = pneg %p53
      %p153 = pneg %p77
      %p154 = pneg %p74
      %p155 = pneg %p103
      %p156 = pneg %p100
      %s157 = smul.u32 256, %s14
      %p158 = scmp.lt.s32.totalorder %s157, 5119
      %s159 = scalar_select %p158, %s157, 5119
      %s160 = smul.addr %s159, 8
      %s161 = scalar_lea.vmem %s3, %s160
      %s162 = smul.u32 256, %s14
      %p163 = scmp.lt.s32.totalorder %s162, 5119
      %s164 = scalar_select %p163, %s162, 5119
      %s165 = smul.addr %s164, 4
      %s166 = scalar_lea.vmem %s0, %s165
      %s167 = smul.u32 256, %s14
      %s168 = smul.u32 256, %s14
      %p169 = scmp.lt.s32.totalorder %s168, 5119
      %s170 = scalar_select %p169, %s168, 5119
      %s171 = smul.addr %s170, 8
      %s172 = scalar_lea.vmem %s3, %s171
      %s173 = smul.u32 256, %s14
      %v175 = vld [vmem:[%s166] sm:$0xf]
      %v176 = vld [vmem:[%s166 + $0x4] sm:$0xf]
      %v177 = vld [vmem:[%s166 + $0x8] sm:$0xf]
      %v178 = vld [vmem:[%s166 + $0xc] sm:$0xf]
      %v179 = vld [vmem:[%s166 + $0x10] sm:$0xf]
      %v180 = vld [vmem:[%s166 + $0x14] sm:$0xf]
      %v181 = vld [vmem:[%s166 + $0x18] sm:$0xf]
      %v182 = vld [vmem:[%s166 + $0x1c] sm:$0xf]
      %v183 = vld [vmem:[%s166 + $0x20] sm:$0xf]
      %v184 = vld [vmem:[%s166 + $0x24] sm:$0xf]
      %v185 = vld [vmem:[%s166 + $0x28] sm:$0xf]
      %v186 = vld [vmem:[%s166 + $0x2c] sm:$0xf]
      %v187 = vld [vmem:[%s166 + $0x30] sm:$0xf]
      %v188 = vld [vmem:[%s166 + $0x34] sm:$0xf]
      %v189 = vld [vmem:[%s166 + $0x38] sm:$0xf]
      %v190 = vld [vmem:[%s166 + $0x3c] sm:$0xf]
      %v191 = vld [vmem:[%s166 + $0x40] sm:$0xf]
      %v192 = vld [vmem:[%s166 + $0x44] sm:$0xf]
      %v193 = vld [vmem:[%s166 + $0x48] sm:$0xf]
      %v194 = vld [vmem:[%s166 + $0x4c] sm:$0xf]
      %v195 = vld [vmem:[%s166 + $0x50] sm:$0xf]
      %v196 = vld [vmem:[%s166 + $0x54] sm:$0xf]
      %v197 = vld [vmem:[%s166 + $0x58] sm:$0xf]
      %v198 = vld [vmem:[%s166 + $0x5c] sm:$0xf]
      %v199 = vld [vmem:[%s166 + $0x60] sm:$0xf]
      %v200 = vld [vmem:[%s166 + $0x64] sm:$0xf]
      %v201 = vld [vmem:[%s166 + $0x68] sm:$0xf]
      %v202 = vld [vmem:[%s166 + $0x6c] sm:$0xf]
      %v203 = vld [vmem:[%s166 + $0x70] sm:$0xf]
      %v204 = vld [vmem:[%s166 + $0x74] sm:$0xf]
      %v205 = vld [vmem:[%s166 + $0x78] sm:$0xf]
      %v206 = vld [vmem:[%s166 + $0x7c] sm:$0xf]
      %v207 = vld [vmem:[%s166 + $0x80] sm:$0xf]
      %v208 = vld [vmem:[%s166 + $0x84] sm:$0xf]
      %v209 = vld [vmem:[%s166 + $0x88] sm:$0xf]
      %v210 = vld [vmem:[%s166 + $0x8c] sm:$0xf]
      %v211 = vld [vmem:[%s166 + $0x90] sm:$0xf]
      %v212 = vld [vmem:[%s166 + $0x94] sm:$0xf]
      %v213 = vld [vmem:[%s166 + $0x98] sm:$0xf]
      %v214 = vld [vmem:[%s166 + $0x9c] sm:$0xf]
      %v215 = vld [vmem:[%s166 + $0xa0] sm:$0xf]
      %v216 = vld [vmem:[%s166 + $0xa4] sm:$0xf]
      %v217 = vld [vmem:[%s166 + $0xa8] sm:$0xf]
      %v218 = vld [vmem:[%s166 + $0xac] sm:$0xf]
      %v219 = vld [vmem:[%s166 + $0xb0] sm:$0xf]
      %v220 = vld [vmem:[%s166 + $0xb4] sm:$0xf]
      %v221 = vld [vmem:[%s166 + $0xb8] sm:$0xf]
      %v222 = vld [vmem:[%s166 + $0xbc] sm:$0xf]
      %v223 = vld [vmem:[%s166 + $0xc0] sm:$0xf]
      %v224 = vld [vmem:[%s166 + $0xc4] sm:$0xf]
      %v225 = vld [vmem:[%s166 + $0xc8] sm:$0xf]
      %v226 = vld [vmem:[%s166 + $0xcc] sm:$0xf]
      %v227 = vld [vmem:[%s166 + $0xd0] sm:$0xf]
      %v228 = vld [vmem:[%s166 + $0xd4] sm:$0xf]
      %v229 = vld [vmem:[%s166 + $0xd8] sm:$0xf]
      %v230 = vld [vmem:[%s166 + $0xdc] sm:$0xf]
      %v231 = vld [vmem:[%s166 + $0xe0] sm:$0xf]
      %v232 = vld [vmem:[%s166 + $0xe4] sm:$0xf]
      %v233 = vld [vmem:[%s166 + $0xe8] sm:$0xf]
      %v234 = vld [vmem:[%s166 + $0xec] sm:$0xf]
      %v235 = vld [vmem:[%s166 + $0xf0] sm:$0xf]
      %v236 = vld [vmem:[%s166 + $0xf4] sm:$0xf]
      %v237 = vld [vmem:[%s166 + $0xf8] sm:$0xf]
      %v238 = vld [vmem:[%s166 + $0xfc] sm:$0xf]
      %v239 = vld [vmem:[%s166 + $0x100] sm:$0xf]
      %v240 = vld [vmem:[%s166 + $0x104] sm:$0xf]
      %v241 = vld [vmem:[%s166 + $0x108] sm:$0xf]
      %v242 = vld [vmem:[%s166 + $0x10c] sm:$0xf]
      %v243 = vld [vmem:[%s166 + $0x110] sm:$0xf]
      %v244 = vld [vmem:[%s166 + $0x114] sm:$0xf]
      %v245 = vld [vmem:[%s166 + $0x118] sm:$0xf]
      %v246 = vld [vmem:[%s166 + $0x11c] sm:$0xf]
      %v247 = vld [vmem:[%s166 + $0x120] sm:$0xf]
      %v248 = vld [vmem:[%s166 + $0x124] sm:$0xf]
      %v249 = vld [vmem:[%s166 + $0x128] sm:$0xf]
      %v250 = vld [vmem:[%s166 + $0x12c] sm:$0xf]
      %v251 = vld [vmem:[%s166 + $0x130] sm:$0xf]
      %v252 = vld [vmem:[%s166 + $0x134] sm:$0xf]
      %v253 = vld [vmem:[%s166 + $0x138] sm:$0xf]
      %v254 = vld [vmem:[%s166 + $0x13c] sm:$0xf]
      %v255 = vld [vmem:[%s166 + $0x140] sm:$0xf]
      %v256 = vld [vmem:[%s166 + $0x144] sm:$0xf]
      %v257 = vld [vmem:[%s166 + $0x148] sm:$0xf]
      %v258 = vld [vmem:[%s166 + $0x14c] sm:$0xf]
      %v259 = vld [vmem:[%s166 + $0x150] sm:$0xf]
      %v260 = vld [vmem:[%s166 + $0x154] sm:$0xf]
      %v261 = vld [vmem:[%s166 + $0x158] sm:$0xf]
      %v262 = vld [vmem:[%s166 + $0x15c] sm:$0xf]
      %v263 = vld [vmem:[%s166 + $0x160] sm:$0xf]
      %v264 = vld [vmem:[%s166 + $0x164] sm:$0xf]
      %v265 = vld [vmem:[%s166 + $0x168] sm:$0xf]
      %v266 = vld [vmem:[%s166 + $0x16c] sm:$0xf]
      %v267 = vld [vmem:[%s166 + $0x170] sm:$0xf]
      %v268 = vld [vmem:[%s166 + $0x174] sm:$0xf]
      %v269 = vld [vmem:[%s166 + $0x178] sm:$0xf]
      %v270 = vld [vmem:[%s166 + $0x17c] sm:$0xf]
      %v271 = vld [vmem:[%s166 + $0x180] sm:$0xf]
      %v272 = vld [vmem:[%s166 + $0x184] sm:$0xf]
      %v273 = vld [vmem:[%s166 + $0x188] sm:$0xf]
      %v274 = vld [vmem:[%s166 + $0x18c] sm:$0xf]
      %v275 = vld [vmem:[%s166 + $0x190] sm:$0xf]
      %v276 = vld [vmem:[%s166 + $0x194] sm:$0xf]
      %v277 = vld [vmem:[%s166 + $0x198] sm:$0xf]
      %v278 = vld [vmem:[%s166 + $0x19c] sm:$0xf]
      %v279 = vld [vmem:[%s166 + $0x1a0] sm:$0xf]
      %v280 = vld [vmem:[%s166 + $0x1a4] sm:$0xf]
      %v281 = vld [vmem:[%s166 + $0x1a8] sm:$0xf]
      %v282 = vld [vmem:[%s166 + $0x1ac] sm:$0xf]
      %v283 = vld [vmem:[%s166 + $0x1b0] sm:$0xf]
      %v284 = vld [vmem:[%s166 + $0x1b4] sm:$0xf]
      %v285 = vld [vmem:[%s166 + $0x1b8] sm:$0xf]
      %v286 = vld [vmem:[%s166 + $0x1bc] sm:$0xf]
      %v287 = vld [vmem:[%s166 + $0x1c0] sm:$0xf]
      %v288 = vld [vmem:[%s166 + $0x1c4] sm:$0xf]
      %v289 = vld [vmem:[%s166 + $0x1c8] sm:$0xf]
      %v290 = vld [vmem:[%s166 + $0x1cc] sm:$0xf]
      %v291 = vld [vmem:[%s166 + $0x1d0] sm:$0xf]
      %v292 = vld [vmem:[%s166 + $0x1d4] sm:$0xf]
      %v293 = vld [vmem:[%s166 + $0x1d8] sm:$0xf]
      %v294 = vld [vmem:[%s166 + $0x1dc] sm:$0xf]
      %v295 = vld [vmem:[%s166 + $0x1e0] sm:$0xf]
      %v296 = vld [vmem:[%s166 + $0x1e4] sm:$0xf]
      %v297 = vld [vmem:[%s166 + $0x1e8] sm:$0xf]
      %v298 = vld [vmem:[%s166 + $0x1ec] sm:$0xf]
      %v299 = vld [vmem:[%s166 + $0x1f0] sm:$0xf]
      %v300 = vld [vmem:[%s166 + $0x1f4] sm:$0xf]
      %v301 = vld [vmem:[%s166 + $0x1f8] sm:$0xf]
      %v302 = vld [vmem:[%s166 + $0x1fc] sm:$0xf]
      %v303 = vld [vmem:[%s166 + $0x200] sm:$0xf]
      %v304 = vld [vmem:[%s166 + $0x204] sm:$0xf]
      %v305 = vld [vmem:[%s166 + $0x208] sm:$0xf]
      %v306 = vld [vmem:[%s166 + $0x20c] sm:$0xf]
      %v307 = vld [vmem:[%s166 + $0x210] sm:$0xf]
      %v308 = vld [vmem:[%s166 + $0x214] sm:$0xf]
      %v309 = vld [vmem:[%s166 + $0x218] sm:$0xf]
      %v310 = vld [vmem:[%s166 + $0x21c] sm:$0xf]
      %v311 = vld [vmem:[%s166 + $0x220] sm:$0xf]
      %v312 = vld [vmem:[%s166 + $0x224] sm:$0xf]
      %v313 = vld [vmem:[%s166 + $0x228] sm:$0xf]
      %v314 = vld [vmem:[%s166 + $0x22c] sm:$0xf]
      %v315 = vld [vmem:[%s166 + $0x230] sm:$0xf]
      %v316 = vld [vmem:[%s166 + $0x234] sm:$0xf]
      %v317 = vld [vmem:[%s166 + $0x238] sm:$0xf]
      %v318 = vld [vmem:[%s166 + $0x23c] sm:$0xf]
      %v319 = vld [vmem:[%s166 + $0x240] sm:$0xf]
      %v320 = vld [vmem:[%s166 + $0x244] sm:$0xf]
      %v321 = vld [vmem:[%s166 + $0x248] sm:$0xf]
      %v322 = vld [vmem:[%s166 + $0x24c] sm:$0xf]
      %v323 = vld [vmem:[%s166 + $0x250] sm:$0xf]
      %v324 = vld [vmem:[%s166 + $0x254] sm:$0xf]
      %v325 = vld [vmem:[%s166 + $0x258] sm:$0xf]
      %v326 = vld [vmem:[%s166 + $0x25c] sm:$0xf]
      %v327 = vld [vmem:[%s166 + $0x260] sm:$0xf]
      %v328 = vld [vmem:[%s166 + $0x264] sm:$0xf]
      %v329 = vld [vmem:[%s166 + $0x268] sm:$0xf]
      %v330 = vld [vmem:[%s166 + $0x26c] sm:$0xf]
      %v331 = vld [vmem:[%s166 + $0x270] sm:$0xf]
      %v332 = vld [vmem:[%s166 + $0x274] sm:$0xf]
      %v333 = vld [vmem:[%s166 + $0x278] sm:$0xf]
      %v334 = vld [vmem:[%s166 + $0x27c] sm:$0xf]
      %v335 = vld [vmem:[%s166 + $0x280] sm:$0xf]
      %v336 = vld [vmem:[%s166 + $0x284] sm:$0xf]
      %v337 = vld [vmem:[%s166 + $0x288] sm:$0xf]
      %v338 = vld [vmem:[%s166 + $0x28c] sm:$0xf]
      %v339 = vld [vmem:[%s166 + $0x290] sm:$0xf]
      %v340 = vld [vmem:[%s166 + $0x294] sm:$0xf]
      %v341 = vld [vmem:[%s166 + $0x298] sm:$0xf]
      %v342 = vld [vmem:[%s166 + $0x29c] sm:$0xf]
      %v343 = vld [vmem:[%s166 + $0x2a0] sm:$0xf]
      %v344 = vld [vmem:[%s166 + $0x2a4] sm:$0xf]
      %v345 = vld [vmem:[%s166 + $0x2a8] sm:$0xf]
      %v346 = vld [vmem:[%s166 + $0x2ac] sm:$0xf]
      %v347 = vld [vmem:[%s166 + $0x2b0] sm:$0xf]
      %v348 = vld [vmem:[%s166 + $0x2b4] sm:$0xf]
      %v349 = vld [vmem:[%s166 + $0x2b8] sm:$0xf]
      %v350 = vld [vmem:[%s166 + $0x2bc] sm:$0xf]
      %v351 = vld [vmem:[%s166 + $0x2c0] sm:$0xf]
      %v352 = vld [vmem:[%s166 + $0x2c4] sm:$0xf]
      %v353 = vld [vmem:[%s166 + $0x2c8] sm:$0xf]
      %v354 = vld [vmem:[%s166 + $0x2cc] sm:$0xf]
      %v355 = vld [vmem:[%s166 + $0x2d0] sm:$0xf]
      %v356 = vld [vmem:[%s166 + $0x2d4] sm:$0xf]
      %v357 = vld [vmem:[%s166 + $0x2d8] sm:$0xf]
      %v358 = vld [vmem:[%s166 + $0x2dc] sm:$0xf]
      %v359 = vld [vmem:[%s166 + $0x2e0] sm:$0xf]
      %v360 = vld [vmem:[%s166 + $0x2e4] sm:$0xf]
      %v361 = vld [vmem:[%s166 + $0x2e8] sm:$0xf]
      %v362 = vld [vmem:[%s166 + $0x2ec] sm:$0xf]
      %v363 = vld [vmem:[%s166 + $0x2f0] sm:$0xf]
      %v364 = vld [vmem:[%s166 + $0x2f4] sm:$0xf]
      %v365 = vld [vmem:[%s166 + $0x2f8] sm:$0xf]
      %v366 = vld [vmem:[%s166 + $0x2fc] sm:$0xf]
      %v367 = vld [vmem:[%s166 + $0x300] sm:$0xf]
      %v368 = vld [vmem:[%s166 + $0x304] sm:$0xf]
      %v369 = vld [vmem:[%s166 + $0x308] sm:$0xf]
      %v370 = vld [vmem:[%s166 + $0x30c] sm:$0xf]
      %v371 = vld [vmem:[%s166 + $0x310] sm:$0xf]
      %v372 = vld [vmem:[%s166 + $0x314] sm:$0xf]
      %v373 = vld [vmem:[%s166 + $0x318] sm:$0xf]
      %v374 = vld [vmem:[%s166 + $0x31c] sm:$0xf]
      %v375 = vld [vmem:[%s166 + $0x320] sm:$0xf]
      %v376 = vld [vmem:[%s166 + $0x324] sm:$0xf]
      %v377 = vld [vmem:[%s166 + $0x328] sm:$0xf]
      %v378 = vld [vmem:[%s166 + $0x32c] sm:$0xf]
      %v379 = vld [vmem:[%s166 + $0x330] sm:$0xf]
      %v380 = vld [vmem:[%s166 + $0x334] sm:$0xf]
      %v381 = vld [vmem:[%s166 + $0x338] sm:$0xf]
      %v382 = vld [vmem:[%s166 + $0x33c] sm:$0xf]
      %v383 = vld [vmem:[%s166 + $0x340] sm:$0xf]
      %v384 = vld [vmem:[%s166 + $0x344] sm:$0xf]
      %v385 = vld [vmem:[%s166 + $0x348] sm:$0xf]
      %v386 = vld [vmem:[%s166 + $0x34c] sm:$0xf]
      %v387 = vld [vmem:[%s166 + $0x350] sm:$0xf]
      %v388 = vld [vmem:[%s166 + $0x354] sm:$0xf]
      %v389 = vld [vmem:[%s166 + $0x358] sm:$0xf]
      %v390 = vld [vmem:[%s166 + $0x35c] sm:$0xf]
      %v391 = vld [vmem:[%s166 + $0x360] sm:$0xf]
      %v392 = vld [vmem:[%s166 + $0x364] sm:$0xf]
      %v393 = vld [vmem:[%s166 + $0x368] sm:$0xf]
      %v394 = vld [vmem:[%s166 + $0x36c] sm:$0xf]
      %v395 = vld [vmem:[%s166 + $0x370] sm:$0xf]
      %v396 = vld [vmem:[%s166 + $0x374] sm:$0xf]
      %v397 = vld [vmem:[%s166 + $0x378] sm:$0xf]
      %v398 = vld [vmem:[%s166 + $0x37c] sm:$0xf]
      %v399 = vld [vmem:[%s166 + $0x380] sm:$0xf]
      %v400 = vld [vmem:[%s166 + $0x384] sm:$0xf]
      %v401 = vld [vmem:[%s166 + $0x388] sm:$0xf]
      %v402 = vld [vmem:[%s166 + $0x38c] sm:$0xf]
      %v403 = vld [vmem:[%s166 + $0x390] sm:$0xf]
      %v404 = vld [vmem:[%s166 + $0x394] sm:$0xf]
      %v405 = vld [vmem:[%s166 + $0x398] sm:$0xf]
      %v406 = vld [vmem:[%s166 + $0x39c] sm:$0xf]
      %v407 = vld [vmem:[%s166 + $0x3a0] sm:$0xf]
      %v408 = vld [vmem:[%s166 + $0x3a4] sm:$0xf]
      %v409 = vld [vmem:[%s166 + $0x3a8] sm:$0xf]
      %v410 = vld [vmem:[%s166 + $0x3ac] sm:$0xf]
      %v411 = vld [vmem:[%s166 + $0x3b0] sm:$0xf]
      %v412 = vld [vmem:[%s166 + $0x3b4] sm:$0xf]
      %v413 = vld [vmem:[%s166 + $0x3b8] sm:$0xf]
      %v414 = vld [vmem:[%s166 + $0x3bc] sm:$0xf]
      %v415 = vld [vmem:[%s166 + $0x3c0] sm:$0xf]
      %v416 = vld [vmem:[%s166 + $0x3c4] sm:$0xf]
      %v417 = vld [vmem:[%s166 + $0x3c8] sm:$0xf]
      %v418 = vld [vmem:[%s166 + $0x3cc] sm:$0xf]
      %v419 = vld [vmem:[%s166 + $0x3d0] sm:$0xf]
      %v420 = vld [vmem:[%s166 + $0x3d4] sm:$0xf]
      %v421 = vld [vmem:[%s166 + $0x3d8] sm:$0xf]
      %v422 = vld [vmem:[%s166 + $0x3dc] sm:$0xf]
      %v423 = vld [vmem:[%s166 + $0x3e0] sm:$0xf]
      %v424 = vld [vmem:[%s166 + $0x3e4] sm:$0xf]
      %v425 = vld [vmem:[%s166 + $0x3e8] sm:$0xf]
      %v426 = vld [vmem:[%s166 + $0x3ec] sm:$0xf]
      %v427 = vld [vmem:[%s166 + $0x3f0] sm:$0xf]
      %v428 = vld [vmem:[%s166 + $0x3f4] sm:$0xf]
      %v429 = vld [vmem:[%s166 + $0x3f8] sm:$0xf]
      %v430 = vld [vmem:[%s166 + $0x3fc] sm:$0xf]
      %v431 = vld [vmem:[%s1] sm:$0xf]
      %v432 = vld [vmem:[%s1 + $0x4] sm:$0xf]
      %v433 = vld [vmem:[%s1 + $0x8] sm:$0xf]
      %v434 = vld [vmem:[%s1 + $0xc] sm:$0xf]
      %v435 = vld [vmem:[%s1 + $0x10] sm:$0xf]
      %v436 = vld [vmem:[%s1 + $0x14] sm:$0xf]
      %v437 = vld [vmem:[%s1 + $0x18] sm:$0xf]
      %v438 = vld [vmem:[%s1 + $0x1c] sm:$0xf]
      %v439 = vld [vmem:[%s1 + $0x20] sm:$0xf]
      %v440 = vld [vmem:[%s1 + $0x24] sm:$0xf]
      %v441 = vld [vmem:[%s2] sm:$0x1]
      %v443 = vlaneseq
      %v444 = vshrl.u32 %v443, 7
      %v445 = vsub.s32 0, %v444
      %v446 = vrot.slane %v441, %v445
      %v704 = vunpack.c.l.b16 %v175
      %v705 = vunpack.c.l.b16 %v176
      %v706 = vunpack.c.l.b16 %v177
      %v707 = vunpack.c.l.b16 %v178
      %v708 = vunpack.c.l.b16 %v179
      %v709 = vunpack.c.l.b16 %v180
      %v710 = vunpack.c.l.b16 %v181
      %v711 = vunpack.c.l.b16 %v182
      %v712 = vunpack.c.l.b16 %v183
      %v713 = vunpack.c.l.b16 %v184
      %v714 = vunpack.c.l.b16 %v185
      %v715 = vunpack.c.l.b16 %v186
      %v716 = vunpack.c.l.b16 %v187
      %v717 = vunpack.c.l.b16 %v188
      %v718 = vunpack.c.l.b16 %v189
      %v719 = vunpack.c.l.b16 %v190
      %v720 = vunpack.c.l.b16 %v191
      %v721 = vunpack.c.l.b16 %v192
      %v722 = vunpack.c.l.b16 %v193
      %v723 = vunpack.c.l.b16 %v194
      %v724 = vunpack.c.l.b16 %v195
      %v725 = vunpack.c.l.b16 %v196
      %v726 = vunpack.c.l.b16 %v197
      %v727 = vunpack.c.l.b16 %v198
      %v728 = vunpack.c.l.b16 %v199
      %v729 = vunpack.c.l.b16 %v200
      %v730 = vunpack.c.l.b16 %v201
      %v731 = vunpack.c.l.b16 %v202
      %v732 = vunpack.c.l.b16 %v203
      %v733 = vunpack.c.l.b16 %v204
      %v734 = vunpack.c.l.b16 %v205
      %v735 = vunpack.c.l.b16 %v206
      %v736 = vunpack.c.l.b16 %v207
      %v737 = vunpack.c.l.b16 %v208
      %v738 = vunpack.c.l.b16 %v209
      %v739 = vunpack.c.l.b16 %v210
      %v740 = vunpack.c.l.b16 %v211
      %v741 = vunpack.c.l.b16 %v212
      %v742 = vunpack.c.l.b16 %v213
      %v743 = vunpack.c.l.b16 %v214
      %v744 = vunpack.c.l.b16 %v215
      %v745 = vunpack.c.l.b16 %v216
      %v746 = vunpack.c.l.b16 %v217
      %v747 = vunpack.c.l.b16 %v218
      %v748 = vunpack.c.l.b16 %v219
      %v749 = vunpack.c.l.b16 %v220
      %v750 = vunpack.c.l.b16 %v221
      %v751 = vunpack.c.l.b16 %v222
      %v752 = vunpack.c.l.b16 %v223
      %v753 = vunpack.c.l.b16 %v224
      %v754 = vunpack.c.l.b16 %v225
      %v755 = vunpack.c.l.b16 %v226
      %v756 = vunpack.c.l.b16 %v227
      %v757 = vunpack.c.l.b16 %v228
      %v758 = vunpack.c.l.b16 %v229
      %v759 = vunpack.c.l.b16 %v230
      %v760 = vunpack.c.l.b16 %v231
      %v761 = vunpack.c.l.b16 %v232
      %v762 = vunpack.c.l.b16 %v233
      %v763 = vunpack.c.l.b16 %v234
      %v764 = vunpack.c.l.b16 %v235
      %v765 = vunpack.c.l.b16 %v236
      %v766 = vunpack.c.l.b16 %v237
      %v767 = vunpack.c.l.b16 %v238
      %v768 = vunpack.c.l.b16 %v239
      %v769 = vunpack.c.l.b16 %v240
      %v770 = vunpack.c.l.b16 %v241
      %v771 = vunpack.c.l.b16 %v242
      %v772 = vunpack.c.l.b16 %v243
      %v773 = vunpack.c.l.b16 %v244
      %v774 = vunpack.c.l.b16 %v245
      %v775 = vunpack.c.l.b16 %v246
      %v776 = vunpack.c.l.b16 %v247
      %v777 = vunpack.c.l.b16 %v248
      %v778 = vunpack.c.l.b16 %v249
      %v779 = vunpack.c.l.b16 %v250
      %v780 = vunpack.c.l.b16 %v251
      %v781 = vunpack.c.l.b16 %v252
      %v782 = vunpack.c.l.b16 %v253
      %v783 = vunpack.c.l.b16 %v254
      %v784 = vunpack.c.l.b16 %v255
      %v785 = vunpack.c.l.b16 %v256
      %v786 = vunpack.c.l.b16 %v257
      %v787 = vunpack.c.l.b16 %v258
      %v788 = vunpack.c.l.b16 %v259
      %v789 = vunpack.c.l.b16 %v260
      %v790 = vunpack.c.l.b16 %v261
      %v791 = vunpack.c.l.b16 %v262
      %v792 = vunpack.c.l.b16 %v263
      %v793 = vunpack.c.l.b16 %v264
      %v794 = vunpack.c.l.b16 %v265
      %v795 = vunpack.c.l.b16 %v266
      %v796 = vunpack.c.l.b16 %v267
      %v797 = vunpack.c.l.b16 %v268
      %v798 = vunpack.c.l.b16 %v269
      %v799 = vunpack.c.l.b16 %v270
      %v800 = vunpack.c.l.b16 %v271
      %v801 = vunpack.c.l.b16 %v272
      %v802 = vunpack.c.l.b16 %v273
      %v803 = vunpack.c.l.b16 %v274
      %v804 = vunpack.c.l.b16 %v275
      %v805 = vunpack.c.l.b16 %v276
      %v806 = vunpack.c.l.b16 %v277
      %v807 = vunpack.c.l.b16 %v278
      %v808 = vunpack.c.l.b16 %v279
      %v809 = vunpack.c.l.b16 %v280
      %v810 = vunpack.c.l.b16 %v281
      %v811 = vunpack.c.l.b16 %v282
      %v812 = vunpack.c.l.b16 %v283
      %v813 = vunpack.c.l.b16 %v284
      %v814 = vunpack.c.l.b16 %v285
      %v815 = vunpack.c.l.b16 %v286
      %v816 = vunpack.c.l.b16 %v287
      %v817 = vunpack.c.l.b16 %v288
      %v818 = vunpack.c.l.b16 %v289
      %v819 = vunpack.c.l.b16 %v290
      %v820 = vunpack.c.l.b16 %v291
      %v821 = vunpack.c.l.b16 %v292
      %v822 = vunpack.c.l.b16 %v293
      %v823 = vunpack.c.l.b16 %v294
      %v824 = vunpack.c.l.b16 %v295
      %v825 = vunpack.c.l.b16 %v296
      %v826 = vunpack.c.l.b16 %v297
      %v827 = vunpack.c.l.b16 %v298
      %v828 = vunpack.c.l.b16 %v299
      %v829 = vunpack.c.l.b16 %v300
      %v830 = vunpack.c.l.b16 %v301
      %v831 = vunpack.c.l.b16 %v302
      %v832 = vunpack.c.l.b16 %v303
      %v833 = vunpack.c.l.b16 %v304
      %v834 = vunpack.c.l.b16 %v305
      %v835 = vunpack.c.l.b16 %v306
      %v836 = vunpack.c.l.b16 %v307
      %v837 = vunpack.c.l.b16 %v308
      %v838 = vunpack.c.l.b16 %v309
      %v839 = vunpack.c.l.b16 %v310
      %v840 = vunpack.c.l.b16 %v311
      %v841 = vunpack.c.l.b16 %v312
      %v842 = vunpack.c.l.b16 %v313
      %v843 = vunpack.c.l.b16 %v314
      %v844 = vunpack.c.l.b16 %v315
      %v845 = vunpack.c.l.b16 %v316
      %v846 = vunpack.c.l.b16 %v317
      %v847 = vunpack.c.l.b16 %v318
      %v848 = vunpack.c.l.b16 %v319
      %v849 = vunpack.c.l.b16 %v320
      %v850 = vunpack.c.l.b16 %v321
      %v851 = vunpack.c.l.b16 %v322
      %v852 = vunpack.c.l.b16 %v323
      %v853 = vunpack.c.l.b16 %v324
      %v854 = vunpack.c.l.b16 %v325
      %v855 = vunpack.c.l.b16 %v326
      %v856 = vunpack.c.l.b16 %v327
      %v857 = vunpack.c.l.b16 %v328
      %v858 = vunpack.c.l.b16 %v329
      %v859 = vunpack.c.l.b16 %v330
      %v860 = vunpack.c.l.b16 %v331
      %v861 = vunpack.c.l.b16 %v332
      %v862 = vunpack.c.l.b16 %v333
      %v863 = vunpack.c.l.b16 %v334
      %v864 = vunpack.c.l.b16 %v335
      %v865 = vunpack.c.l.b16 %v336
      %v866 = vunpack.c.l.b16 %v337
      %v867 = vunpack.c.l.b16 %v338
      %v868 = vunpack.c.l.b16 %v339
      %v869 = vunpack.c.l.b16 %v340
      %v870 = vunpack.c.l.b16 %v341
      %v871 = vunpack.c.l.b16 %v342
      %v872 = vunpack.c.l.b16 %v343
      %v873 = vunpack.c.l.b16 %v344
      %v874 = vunpack.c.l.b16 %v345
      %v875 = vunpack.c.l.b16 %v346
      %v876 = vunpack.c.l.b16 %v347
      %v877 = vunpack.c.l.b16 %v348
      %v878 = vunpack.c.l.b16 %v349
      %v879 = vunpack.c.l.b16 %v350
      %v880 = vunpack.c.l.b16 %v351
      %v881 = vunpack.c.l.b16 %v352
      %v882 = vunpack.c.l.b16 %v353
      %v883 = vunpack.c.l.b16 %v354
      %v884 = vunpack.c.l.b16 %v355
      %v885 = vunpack.c.l.b16 %v356
      %v886 = vunpack.c.l.b16 %v357
      %v887 = vunpack.c.l.b16 %v358
      %v888 = vunpack.c.l.b16 %v359
      %v889 = vunpack.c.l.b16 %v360
      %v890 = vunpack.c.l.b16 %v361
      %v891 = vunpack.c.l.b16 %v362
      %v892 = vunpack.c.l.b16 %v363
      %v893 = vunpack.c.l.b16 %v364
      %v894 = vunpack.c.l.b16 %v365
      %v895 = vunpack.c.l.b16 %v366
      %v896 = vunpack.c.l.b16 %v367
      %v897 = vunpack.c.l.b16 %v368
      %v898 = vunpack.c.l.b16 %v369
      %v899 = vunpack.c.l.b16 %v370
      %v900 = vunpack.c.l.b16 %v371
      %v901 = vunpack.c.l.b16 %v372
      %v902 = vunpack.c.l.b16 %v373
      %v903 = vunpack.c.l.b16 %v374
      %v904 = vunpack.c.l.b16 %v375
      %v905 = vunpack.c.l.b16 %v376
      %v906 = vunpack.c.l.b16 %v377
      %v907 = vunpack.c.l.b16 %v378
      %v908 = vunpack.c.l.b16 %v379
      %v909 = vunpack.c.l.b16 %v380
      %v910 = vunpack.c.l.b16 %v381
      %v911 = vunpack.c.l.b16 %v382
      %v912 = vunpack.c.l.b16 %v383
      %v913 = vunpack.c.l.b16 %v384
      %v914 = vunpack.c.l.b16 %v385
      %v915 = vunpack.c.l.b16 %v386
      %v916 = vunpack.c.l.b16 %v387
      %v917 = vunpack.c.l.b16 %v388
      %v918 = vunpack.c.l.b16 %v389
      %v919 = vunpack.c.l.b16 %v390
      %v920 = vunpack.c.l.b16 %v391
      %v921 = vunpack.c.l.b16 %v392
      %v922 = vunpack.c.l.b16 %v393
      %v923 = vunpack.c.l.b16 %v394
      %v924 = vunpack.c.l.b16 %v395
      %v925 = vunpack.c.l.b16 %v396
      %v926 = vunpack.c.l.b16 %v397
      %v927 = vunpack.c.l.b16 %v398
      %v928 = vunpack.c.l.b16 %v399
      %v929 = vunpack.c.l.b16 %v400
      %v930 = vunpack.c.l.b16 %v401
      %v931 = vunpack.c.l.b16 %v402
      %v932 = vunpack.c.l.b16 %v403
      %v933 = vunpack.c.l.b16 %v404
      %v934 = vunpack.c.l.b16 %v405
      %v935 = vunpack.c.l.b16 %v406
      %v936 = vunpack.c.l.b16 %v407
      %v937 = vunpack.c.l.b16 %v408
      %v938 = vunpack.c.l.b16 %v409
      %v939 = vunpack.c.l.b16 %v410
      %v940 = vunpack.c.l.b16 %v411
      %v941 = vunpack.c.l.b16 %v412
      %v942 = vunpack.c.l.b16 %v413
      %v943 = vunpack.c.l.b16 %v414
      %v944 = vunpack.c.l.b16 %v415
      %v945 = vunpack.c.l.b16 %v416
      %v946 = vunpack.c.l.b16 %v417
      %v947 = vunpack.c.l.b16 %v418
      %v948 = vunpack.c.l.b16 %v419
      %v949 = vunpack.c.l.b16 %v420
      %v950 = vunpack.c.l.b16 %v421
      %v951 = vunpack.c.l.b16 %v422
      %v952 = vunpack.c.l.b16 %v423
      %v953 = vunpack.c.l.b16 %v424
      %v954 = vunpack.c.l.b16 %v425
      %v955 = vunpack.c.l.b16 %v426
      %v956 = vunpack.c.l.b16 %v427
      %v957 = vunpack.c.l.b16 %v428
      %v958 = vunpack.c.l.b16 %v429
      %v959 = vunpack.c.l.b16 %v430
      %v960 = vpack.c.b16 %v705, %v704
      %v961 = vpack.c.b16 %v707, %v706
      %v962 = vpack.c.b16 %v709, %v708
      %v963 = vpack.c.b16 %v711, %v710
      %v964 = vpack.c.b16 %v713, %v712
      %v965 = vpack.c.b16 %v715, %v714
      %v966 = vpack.c.b16 %v717, %v716
      %v967 = vpack.c.b16 %v719, %v718
      %v968 = vpack.c.b16 %v721, %v720
      %v969 = vpack.c.b16 %v723, %v722
      %v970 = vpack.c.b16 %v725, %v724
      %v971 = vpack.c.b16 %v727, %v726
      %v972 = vpack.c.b16 %v729, %v728
      %v973 = vpack.c.b16 %v731, %v730
      %v974 = vpack.c.b16 %v733, %v732
      %v975 = vpack.c.b16 %v735, %v734
      %v976 = vpack.c.b16 %v737, %v736
      %v977 = vpack.c.b16 %v739, %v738
      %v978 = vpack.c.b16 %v741, %v740
      %v979 = vpack.c.b16 %v743, %v742
      %v980 = vpack.c.b16 %v745, %v744
      %v981 = vpack.c.b16 %v747, %v746
      %v982 = vpack.c.b16 %v749, %v748
      %v983 = vpack.c.b16 %v751, %v750
      %v984 = vpack.c.b16 %v753, %v752
      %v985 = vpack.c.b16 %v755, %v754
      %v986 = vpack.c.b16 %v757, %v756
      %v987 = vpack.c.b16 %v759, %v758
      %v988 = vpack.c.b16 %v761, %v760
      %v989 = vpack.c.b16 %v763, %v762
      %v990 = vpack.c.b16 %v765, %v764
      %v991 = vpack.c.b16 %v767, %v766
      %v992 = vpack.c.b16 %v769, %v768
      %v993 = vpack.c.b16 %v771, %v770
      %v994 = vpack.c.b16 %v773, %v772
      %v995 = vpack.c.b16 %v775, %v774
      %v996 = vpack.c.b16 %v777, %v776
      %v997 = vpack.c.b16 %v779, %v778
      %v998 = vpack.c.b16 %v781, %v780
      %v999 = vpack.c.b16 %v783, %v782
      %v1000 = vpack.c.b16 %v785, %v784
      %v1001 = vpack.c.b16 %v787, %v786
      %v1002 = vpack.c.b16 %v789, %v788
      %v1003 = vpack.c.b16 %v791, %v790
      %v1004 = vpack.c.b16 %v793, %v792
      %v1005 = vpack.c.b16 %v795, %v794
      %v1006 = vpack.c.b16 %v797, %v796
      %v1007 = vpack.c.b16 %v799, %v798
      %v1008 = vpack.c.b16 %v801, %v800
      %v1009 = vpack.c.b16 %v803, %v802
      %v1010 = vpack.c.b16 %v805, %v804
      %v1011 = vpack.c.b16 %v807, %v806
      %v1012 = vpack.c.b16 %v809, %v808
      %v1013 = vpack.c.b16 %v811, %v810
      %v1014 = vpack.c.b16 %v813, %v812
      %v1015 = vpack.c.b16 %v815, %v814
      %v1016 = vpack.c.b16 %v817, %v816
      %v1017 = vpack.c.b16 %v819, %v818
      %v1018 = vpack.c.b16 %v821, %v820
      %v1019 = vpack.c.b16 %v823, %v822
      %v1020 = vpack.c.b16 %v825, %v824
      %v1021 = vpack.c.b16 %v827, %v826
      %v1022 = vpack.c.b16 %v829, %v828
      %v1023 = vpack.c.b16 %v831, %v830
      %v1024 = vpack.c.b16 %v833, %v832
      %v1025 = vpack.c.b16 %v835, %v834
      %v1026 = vpack.c.b16 %v837, %v836
      %v1027 = vpack.c.b16 %v839, %v838
      %v1028 = vpack.c.b16 %v841, %v840
      %v1029 = vpack.c.b16 %v843, %v842
      %v1030 = vpack.c.b16 %v845, %v844
      %v1031 = vpack.c.b16 %v847, %v846
      %v1032 = vpack.c.b16 %v849, %v848
      %v1033 = vpack.c.b16 %v851, %v850
      %v1034 = vpack.c.b16 %v853, %v852
      %v1035 = vpack.c.b16 %v855, %v854
      %v1036 = vpack.c.b16 %v857, %v856
      %v1037 = vpack.c.b16 %v859, %v858
      %v1038 = vpack.c.b16 %v861, %v860
      %v1039 = vpack.c.b16 %v863, %v862
      %v1040 = vpack.c.b16 %v865, %v864
      %v1041 = vpack.c.b16 %v867, %v866
      %v1042 = vpack.c.b16 %v869, %v868
      %v1043 = vpack.c.b16 %v871, %v870
      %v1044 = vpack.c.b16 %v873, %v872
      %v1045 = vpack.c.b16 %v875, %v874
      %v1046 = vpack.c.b16 %v877, %v876
      %v1047 = vpack.c.b16 %v879, %v878
      %v1048 = vpack.c.b16 %v881, %v880
      %v1049 = vpack.c.b16 %v883, %v882
      %v1050 = vpack.c.b16 %v885, %v884
      %v1051 = vpack.c.b16 %v887, %v886
      %v1052 = vpack.c.b16 %v889, %v888
      %v1053 = vpack.c.b16 %v891, %v890
      %v1054 = vpack.c.b16 %v893, %v892
      %v1055 = vpack.c.b16 %v895, %v894
      %v1056 = vpack.c.b16 %v897, %v896
      %v1057 = vpack.c.b16 %v899, %v898
      %v1058 = vpack.c.b16 %v901, %v900
      %v1059 = vpack.c.b16 %v903, %v902
      %v1060 = vpack.c.b16 %v905, %v904
      %v1061 = vpack.c.b16 %v907, %v906
      %v1062 = vpack.c.b16 %v909, %v908
      %v1063 = vpack.c.b16 %v911, %v910
      %v1064 = vpack.c.b16 %v913, %v912
      %v1065 = vpack.c.b16 %v915, %v914
      %v1066 = vpack.c.b16 %v917, %v916
      %v1067 = vpack.c.b16 %v919, %v918
      %v1068 = vpack.c.b16 %v921, %v920
      %v1069 = vpack.c.b16 %v923, %v922
      %v1070 = vpack.c.b16 %v925, %v924
      %v1071 = vpack.c.b16 %v927, %v926
      %v1072 = vpack.c.b16 %v929, %v928
      %v1073 = vpack.c.b16 %v931, %v930
      %v1074 = vpack.c.b16 %v933, %v932
      %v1075 = vpack.c.b16 %v935, %v934
      %v1076 = vpack.c.b16 %v937, %v936
      %v1077 = vpack.c.b16 %v939, %v938
      %v1078 = vpack.c.b16 %v941, %v940
      %v1079 = vpack.c.b16 %v943, %v942
      %v1080 = vpack.c.b16 %v945, %v944
      %v1081 = vpack.c.b16 %v947, %v946
      %v1082 = vpack.c.b16 %v949, %v948
      %v1083 = vpack.c.b16 %v951, %v950
      %v1084 = vpack.c.b16 %v953, %v952
      %v1085 = vpack.c.b16 %v955, %v954
      %v1086 = vpack.c.b16 %v957, %v956
      %v1087 = vpack.c.b16 %v959, %v958
      %v1098 = vunpack.c.l.b16 %v431
      %v1099 = vunpack.c.l.b16 %v432
      %v1100 = vunpack.c.l.b16 %v433
      %v1101 = vunpack.c.l.b16 %v434
      %v1102 = vunpack.c.l.b16 %v435
      %v1103 = vunpack.c.l.b16 %v436
      %v1104 = vunpack.c.l.b16 %v437
      %v1105 = vunpack.c.l.b16 %v438
      %v1106 = vunpack.c.l.b16 %v439
      %v1107 = vunpack.c.l.b16 %v440
      %v1108 = vpack.c.b16 %v1099, %v1098
      %v1109 = vpack.c.b16 %v1101, %v1100
      %v1110 = vpack.c.b16 %v1103, %v1102
      %v1111 = vpack.c.b16 %v1105, %v1104
      %v1112 = vpack.c.b16 %v1107, %v1106
      %vm1118 = vcmask 654336
      %v1120 = vsel %vm1118, %v960, 0
      %v1123 = vsel %vm1118, %v961, 0
      %v1126 = vsel %vm1118, %v962, 0
      %v1129 = vsel %vm1118, %v963, 0
      %v1132 = vsel %vm1118, %v964, 0
      %v1135 = vsel %vm1118, %v965, 0
      %v1138 = vsel %vm1118, %v966, 0
      %v1141 = vsel %vm1118, %v967, 0
      %v1144 = vsel %vm1118, %v968, 0
      %v1147 = vsel %vm1118, %v969, 0
      %v1150 = vsel %vm1118, %v970, 0
      %v1153 = vsel %vm1118, %v971, 0
      %v1156 = vsel %vm1118, %v972, 0
      %v1159 = vsel %vm1118, %v973, 0
      %v1162 = vsel %vm1118, %v974, 0
      %v1165 = vsel %vm1118, %v975, 0
      %v1168 = vsel %vm1118, %v976, 0
      %v1171 = vsel %vm1118, %v977, 0
      %v1174 = vsel %vm1118, %v978, 0
      %v1177 = vsel %vm1118, %v979, 0
      %v1180 = vsel %vm1118, %v980, 0
      %v1183 = vsel %vm1118, %v981, 0
      %v1186 = vsel %vm1118, %v982, 0
      %v1189 = vsel %vm1118, %v983, 0
      %v1192 = vsel %vm1118, %v984, 0
      %v1195 = vsel %vm1118, %v985, 0
      %v1198 = vsel %vm1118, %v986, 0
      %v1201 = vsel %vm1118, %v987, 0
      %v1204 = vsel %vm1118, %v988, 0
      %v1207 = vsel %vm1118, %v989, 0
      %v1210 = vsel %vm1118, %v990, 0
      %v1213 = vsel %vm1118, %v991, 0
      %v1216 = vsel %vm1118, %v992, 0
      %v1219 = vsel %vm1118, %v993, 0
      %v1222 = vsel %vm1118, %v994, 0
      %v1225 = vsel %vm1118, %v995, 0
      %v1228 = vsel %vm1118, %v996, 0
      %v1231 = vsel %vm1118, %v997, 0
      %v1234 = vsel %vm1118, %v998, 0
      %v1237 = vsel %vm1118, %v999, 0
      %v1240 = vsel %vm1118, %v1000, 0
      %v1243 = vsel %vm1118, %v1001, 0
      %v1246 = vsel %vm1118, %v1002, 0
      %v1249 = vsel %vm1118, %v1003, 0
      %v1252 = vsel %vm1118, %v1004, 0
      %v1255 = vsel %vm1118, %v1005, 0
      %v1258 = vsel %vm1118, %v1006, 0
      %v1261 = vsel %vm1118, %v1007, 0
      %v1264 = vsel %vm1118, %v1008, 0
      %v1267 = vsel %vm1118, %v1009, 0
      %v1270 = vsel %vm1118, %v1010, 0
      %v1273 = vsel %vm1118, %v1011, 0
      %v1276 = vsel %vm1118, %v1012, 0
      %v1279 = vsel %vm1118, %v1013, 0
      %v1282 = vsel %vm1118, %v1014, 0
      %v1285 = vsel %vm1118, %v1015, 0
      %v1288 = vsel %vm1118, %v1016, 0
      %v1291 = vsel %vm1118, %v1017, 0
      %v1294 = vsel %vm1118, %v1018, 0
      %v1297 = vsel %vm1118, %v1019, 0
      %v1300 = vsel %vm1118, %v1020, 0
      %v1303 = vsel %vm1118, %v1021, 0
      %v1306 = vsel %vm1118, %v1022, 0
      %v1309 = vsel %vm1118, %v1023, 0
      %v1312 = vsel %vm1118, %v1024, 0
      %v1315 = vsel %vm1118, %v1025, 0
      %v1318 = vsel %vm1118, %v1026, 0
      %v1321 = vsel %vm1118, %v1027, 0
      %v1324 = vsel %vm1118, %v1028, 0
      %v1327 = vsel %vm1118, %v1029, 0
      %v1330 = vsel %vm1118, %v1030, 0
      %v1333 = vsel %vm1118, %v1031, 0
      %v1336 = vsel %vm1118, %v1032, 0
      %v1339 = vsel %vm1118, %v1033, 0
      %v1342 = vsel %vm1118, %v1034, 0
      %v1345 = vsel %vm1118, %v1035, 0
      %v1348 = vsel %vm1118, %v1036, 0
      %v1351 = vsel %vm1118, %v1037, 0
      %v1354 = vsel %vm1118, %v1038, 0
      %v1357 = vsel %vm1118, %v1039, 0
      %v1360 = vsel %vm1118, %v1040, 0
      %v1363 = vsel %vm1118, %v1041, 0
      %v1366 = vsel %vm1118, %v1042, 0
      %v1369 = vsel %vm1118, %v1043, 0
      %v1372 = vsel %vm1118, %v1044, 0
      %v1375 = vsel %vm1118, %v1045, 0
      %v1378 = vsel %vm1118, %v1046, 0
      %v1381 = vsel %vm1118, %v1047, 0
      %v1384 = vsel %vm1118, %v1048, 0
      %v1387 = vsel %vm1118, %v1049, 0
      %v1390 = vsel %vm1118, %v1050, 0
      %v1393 = vsel %vm1118, %v1051, 0
      %v1396 = vsel %vm1118, %v1052, 0
      %v1399 = vsel %vm1118, %v1053, 0
      %v1402 = vsel %vm1118, %v1054, 0
      %v1405 = vsel %vm1118, %v1055, 0
      %v1408 = vsel %vm1118, %v1056, 0
      %v1411 = vsel %vm1118, %v1057, 0
      %v1414 = vsel %vm1118, %v1058, 0
      %v1417 = vsel %vm1118, %v1059, 0
      %v1420 = vsel %vm1118, %v1060, 0
      %v1423 = vsel %vm1118, %v1061, 0
      %v1426 = vsel %vm1118, %v1062, 0
      %v1429 = vsel %vm1118, %v1063, 0
      %v1432 = vsel %vm1118, %v1064, 0
      %v1435 = vsel %vm1118, %v1065, 0
      %v1438 = vsel %vm1118, %v1066, 0
      %v1441 = vsel %vm1118, %v1067, 0
      %v1444 = vsel %vm1118, %v1068, 0
      %v1447 = vsel %vm1118, %v1069, 0
      %v1450 = vsel %vm1118, %v1070, 0
      %v1453 = vsel %vm1118, %v1071, 0
      %v1456 = vsel %vm1118, %v1072, 0
      %v1459 = vsel %vm1118, %v1073, 0
      %v1462 = vsel %vm1118, %v1074, 0
      %v1465 = vsel %vm1118, %v1075, 0
      %v1468 = vsel %vm1118, %v1076, 0
      %v1471 = vsel %vm1118, %v1077, 0
      %v1474 = vsel %vm1118, %v1078, 0
      %v1477 = vsel %vm1118, %v1079, 0
      %v1480 = vsel %vm1118, %v1080, 0
      %v1483 = vsel %vm1118, %v1081, 0
      %v1486 = vsel %vm1118, %v1082, 0
      %v1489 = vsel %vm1118, %v1083, 0
      %v1492 = vsel %vm1118, %v1084, 0
      %v1495 = vsel %vm1118, %v1085, 0
      %v1498 = vsel %vm1118, %v1086, 0
      %v1501 = vsel %vm1118, %v1087, 0
      %1503 = vmatprep.subr.bf16.mxu0 0
      %1504 = vmatpush1.bf16.msra.mxu0 %v1108
      %1505 = vmatprep.subr.bf16.mxu0 0
      %1506 = vmatpush1.bf16.msra.mxu0 %v1109
      %1507 = vmatprep.subr.bf16.mxu0 0
      %1508 = vmatpush1.bf16.msra.mxu0 %v1110
      %1509 = vmatprep.subr.bf16.mxu0 0
      %1510 = vmatpush1.bf16.msra.mxu0 %v1111
      %1511 = vmatprep.subr.bf16.mxu0 0
      %1512 = vmatpush1.bf16.msra.mxu0 %v1112
      %1513 = vmatprep.subr.bf16.mxu0 0
      %1514 = vmatpush1.bf16.msra.mxu0 0
      %1515 = vmatprep.subr.bf16.mxu0 0
      %1516 = vmatpush1.bf16.msra.mxu0 0
      %1517 = vmatprep.subr.bf16.mxu0 0
      %1518 = vmatpush1.bf16.msra.mxu0 0
      %1519 = vmatprep.subr.bf16.mxu0 0
      %1520 = vmatpush1.bf16.msra.mxu0 0
      %1521 = vmatprep.subr.bf16.mxu0 0
      %1522 = vmatpush1.bf16.msra.mxu0 0
      %1523 = vmatprep.subr.bf16.mxu0 0
      %1524 = vmatpush1.bf16.msra.mxu0 0
      %1525 = vmatprep.subr.bf16.mxu0 0
      %1526 = vmatpush1.bf16.msra.mxu0 0
      %1527 = vmatprep.subr.bf16.mxu0 0
      %1528 = vmatpush1.bf16.msra.mxu0 0
      %1529 = vmatprep.subr.bf16.mxu0 0
      %1530 = vmatpush1.bf16.msra.mxu0 0
      %1531 = vmatprep.subr.bf16.mxu0 0
      %1532 = vmatpush1.bf16.msra.mxu0 0
      %1533 = vmatprep.subr.bf16.mxu0 0
      %1534 = vmatpush1.bf16.msra.mxu0 0
      %1535 = vmatprep.mubr.bf16.mxu0 0
      %1536 = vmatmul.mubr.bf16.gmra.mrb[0].mxu0 %v1120
      %v1537 = vpop.f32.mrb[0].mxu0
      %v1538 = vadd.f32 %v446, %v1537
      %v1539 = vpop.f32.mrb[0].mxu0
      %v1540 = vpop.f32.mrb[0].mxu0
      %v1541 = vadd.f32 %v446, %v1540
      %v1542 = vpop.f32.mrb[0].mxu0
      %1543 = vmatprep.mubr.bf16.mxu0 0
      %1544 = vmatmul.mubr.bf16.gmra.mrb[0].mxu0 %v1123
      %v1545 = vpop.f32.mrb[0].mxu0
      %v1546 = vadd.f32 %v446, %v1545
      %v1547 = vpop.f32.mrb[0].mxu0
      %v1548 = vpop.f32.mrb[0].mxu0
      %v1549 = vadd.f32 %v446, %v1548
      %v1550 = vpop.f32.mrb[0].mxu0
      %1551 = vmatprep.mubr.bf16.mxu0 0
      %1552 = vmatmul.mubr.bf16.gmra.mrb[0].mxu0 %v1126
      %v1553 = vpop.f32.mrb[0].mxu0
      %v1554 = vadd.f32 %v446, %v1553
      %v1555 = vpop.f32.mrb[0].mxu0
      %v1556 = vpop.f32.mrb[0].mxu0
      %v1557 = vadd.f32 %v446, %v1556
      %v1558 = vpop.f32.mrb[0].mxu0
      %1559 = vmatprep.mubr.bf16.mxu0 0
      %1560 = vmatmul.mubr.bf16.gmra.mrb[0].mxu0 %v1129
      %v1561 = vpop.f32.mrb[0].mxu0
      %v1562 = vadd.f32 %v446, %v1561
      %v1563 = vpop.f32.mrb[0].mxu0
      %v1564 = vpop.f32.mrb[0].mxu0
      %v1565 = vadd.f32 %v446, %v1564
      %v1566 = vpop.f32.mrb[0].mxu0
      %1567 = vmatprep.mubr.bf16.mxu0 0
      %1568 = vmatmul.mubr.bf16.gmra.mrb[0].mxu0 %v1132
      %v1569 = vpop.f32.mrb[0].mxu0
      %v1570 = vadd.f32 %v446, %v1569
      %v1571 = vpop.f32.mrb[0].mxu0
      %v1572 = vpop.f32.mrb[0].mxu0
      %v1573 = vadd.f32 %v446, %v1572
      %v1574 = vpop.f32.mrb[0].mxu0
      %1575 = vmatprep.mubr.bf16.mxu0 0
      %1576 = vmatmul.mubr.bf16.gmra.mrb[0].mxu0 %v1135
      %v1577 = vpop.f32.mrb[0].mxu0
      %v1578 = vadd.f32 %v446, %v1577
      %v1579 = vpop.f32.mrb[0].mxu0
      %v1580 = vpop.f32.mrb[0].mxu0
      %v1581 = vadd.f32 %v446, %v1580
      %v1582 = vpop.f32.mrb[0].mxu0
      %1583 = vmatprep.mubr.bf16.mxu0 0
      %1584 = vmatmul.mubr.bf16.gmra.mrb[0].mxu0 %v1138
      %v1585 = vpop.f32.mrb[0].mxu0
      %v1586 = vadd.f32 %v446, %v1585
      %v1587 = vpop.f32.mrb[0].mxu0
      %v1588 = vpop.f32.mrb[0].mxu0
      %v1589 = vadd.f32 %v446, %v1588
      %v1590 = vpop.f32.mrb[0].mxu0
      %1591 = vmatprep.mubr.bf16.mxu0 0
      %1592 = vmatmul.mubr.bf16.gmra.mrb[0].mxu0 %v1141
      %v1593 = vpop.f32.mrb[0].mxu0
      %v1594 = vadd.f32 %v446, %v1593
      %v1595 = vpop.f32.mrb[0].mxu0
      %v1596 = vpop.f32.mrb[0].mxu0
      %v1597 = vadd.f32 %v446, %v1596
      %v1598 = vpop.f32.mrb[0].mxu0
      %1599 = vmatprep.mubr.bf16.mxu0 0
      %1600 = vmatmul.mubr.bf16.gmra.mrb[0].mxu0 %v1144
      %v1601 = vpop.f32.mrb[0].mxu0
      %v1602 = vadd.f32 %v446, %v1601
      %v1603 = vpop.f32.mrb[0].mxu0
      %v1604 = vpop.f32.mrb[0].mxu0
      %v1605 = vadd.f32 %v446, %v1604
      %v1606 = vpop.f32.mrb[0].mxu0
      %1607 = vmatprep.mubr.bf16.mxu0 0
      %1608 = vmatmul.mubr.bf16.gmra.mrb[0].mxu0 %v1147
      %v1609 = vpop.f32.mrb[0].mxu0
      %v1610 = vadd.f32 %v446, %v1609
      %v1611 = vpop.f32.mrb[0].mxu0
      %v1612 = vpop.f32.mrb[0].mxu0
      %v1613 = vadd.f32 %v446, %v1612
      %v1614 = vpop.f32.mrb[0].mxu0
      %1615 = vmatprep.mubr.bf16.mxu0 0
      %1616 = vmatmul.mubr.bf16.gmra.mrb[0].mxu0 %v1150
      %v1617 = vpop.f32.mrb[0].mxu0
      %v1618 = vadd.f32 %v446, %v1617
      %v1619 = vpop.f32.mrb[0].mxu0
      %v1620 = vpop.f32.mrb[0].mxu0
      %v1621 = vadd.f32 %v446, %v1620
      %v1622 = vpop.f32.mrb[0].mxu0
      %1623 = vmatprep.mubr.bf16.mxu0 0
      %1624 = vmatmul.mubr.bf16.gmra.mrb[0].mxu0 %v1153
      %v1625 = vpop.f32.mrb[0].mxu0
      %v1626 = vadd.f32 %v446, %v1625
      %v1627 = vpop.f32.mrb[0].mxu0
      %v1628 = vpop.f32.mrb[0].mxu0
      %v1629 = vadd.f32 %v446, %v1628
      %v1630 = vpop.f32.mrb[0].mxu0
      %1631 = vmatprep.mubr.bf16.mxu0 0
      %1632 = vmatmul.mubr.bf16.gmra.mrb[0].mxu0 %v1156
      %v1633 = vpop.f32.mrb[0].mxu0
      %v1634 = vadd.f32 %v446, %v1633
      %v1635 = vpop.f32.mrb[0].mxu0
      %v1636 = vpop.f32.mrb[0].mxu0
      %v1637 = vadd.f32 %v446, %v1636
      %v1638 = vpop.f32.mrb[0].mxu0
      %1639 = vmatprep.mubr.bf16.mxu0 0
      %1640 = vmatmul.mubr.bf16.gmra.mrb[0].mxu0 %v1159
      %v1641 = vpop.f32.mrb[0].mxu0
      %v1642 = vadd.f32 %v446, %v1641
      %v1643 = vpop.f32.mrb[0].mxu0
      %v1644 = vpop.f32.mrb[0].mxu0
      %v1645 = vadd.f32 %v446, %v1644
      %v1646 = vpop.f32.mrb[0].mxu0
      %1647 = vmatprep.mubr.bf16.mxu0 0
      %1648 = vmatmul.mubr.bf16.gmra.mrb[0].mxu0 %v1162
      %v1649 = vpop.f32.mrb[0].mxu0
      %v1650 = vadd.f32 %v446, %v1649
      %v1651 = vpop.f32.mrb[0].mxu0
      %v1652 = vpop.f32.mrb[0].mxu0
      %v1653 = vadd.f32 %v446, %v1652
      %v1654 = vpop.f32.mrb[0].mxu0
      %1655 = vmatprep.mubr.bf16.mxu0 0
      %1656 = vmatmul.mubr.bf16.gmra.mrb[0].mxu0 %v1165
      %v1657 = vpop.f32.mrb[0].mxu0
      %v1658 = vadd.f32 %v446, %v1657
      %v1659 = vpop.f32.mrb[0].mxu0
      %v1660 = vpop.f32.mrb[0].mxu0
      %v1661 = vadd.f32 %v446, %v1660
      %v1662 = vpop.f32.mrb[0].mxu0
      %1663 = vmatprep.mubr.bf16.mxu0 0
      %1664 = vmatmul.mubr.bf16.gmra.mrb[0].mxu0 %v1168
      %v1665 = vpop.f32.mrb[0].mxu0
      %v1666 = vadd.f32 %v446, %v1665
      %v1667 = vpop.f32.mrb[0].mxu0
      %v1668 = vpop.f32.mrb[0].mxu0
      %v1669 = vadd.f32 %v446, %v1668
      %v1670 = vpop.f32.mrb[0].mxu0
      %1671 = vmatprep.mubr.bf16.mxu0 0
      %1672 = vmatmul.mubr.bf16.gmra.mrb[0].mxu0 %v1171
      %v1673 = vpop.f32.mrb[0].mxu0
      %v1674 = vadd.f32 %v446, %v1673
      %v1675 = vpop.f32.mrb[0].mxu0
      %v1676 = vpop.f32.mrb[0].mxu0
      %v1677 = vadd.f32 %v446, %v1676
      %v1678 = vpop.f32.mrb[0].mxu0
      %1679 = vmatprep.mubr.bf16.mxu0 0
      %1680 = vmatmul.mubr.bf16.gmra.mrb[0].mxu0 %v1174
      %v1681 = vpop.f32.mrb[0].mxu0
      %v1682 = vadd.f32 %v446, %v1681
      %v1683 = vpop.f32.mrb[0].mxu0
      %v1684 = vpop.f32.mrb[0].mxu0
      %v1685 = vadd.f32 %v446, %v1684
      %v1686 = vpop.f32.mrb[0].mxu0
      %1687 = vmatprep.mubr.bf16.mxu0 0
      %1688 = vmatmul.mubr.bf16.gmra.mrb[0].mxu0 %v1177
      %v1689 = vpop.f32.mrb[0].mxu0
      %v1690 = vadd.f32 %v446, %v1689
      %v1691 = vpop.f32.mrb[0].mxu0
      %v1692 = vpop.f32.mrb[0].mxu0
      %v1693 = vadd.f32 %v446, %v1692
      %v1694 = vpop.f32.mrb[0].mxu0
      %1695 = vmatprep.mubr.bf16.mxu0 0
      %1696 = vmatmul.mubr.bf16.gmra.mrb[0].mxu0 %v1180
      %v1697 = vpop.f32.mrb[0].mxu0
      %v1698 = vadd.f32 %v446, %v1697
      %v1699 = vpop.f32.mrb[0].mxu0
      %v1700 = vpop.f32.mrb[0].mxu0
      %v1701 = vadd.f32 %v446, %v1700
      %v1702 = vpop.f32.mrb[0].mxu0
      %1703 = vmatprep.mubr.bf16.mxu0 0
      %1704 = vmatmul.mubr.bf16.gmra.mrb[0].mxu0 %v1183
      %v1705 = vpop.f32.mrb[0].mxu0
      %v1706 = vadd.f32 %v446, %v1705
      %v1707 = vpop.f32.mrb[0].mxu0
      %v1708 = vpop.f32.mrb[0].mxu0
      %v1709 = vadd.f32 %v446, %v1708
      %v1710 = vpop.f32.mrb[0].mxu0
      %1711 = vmatprep.mubr.bf16.mxu0 0
      %1712 = vmatmul.mubr.bf16.gmra.mrb[0].mxu0 %v1186
      %v1713 = vpop.f32.mrb[0].mxu0
      %v1714 = vadd.f32 %v446, %v1713
      %v1715 = vpop.f32.mrb[0].mxu0
      %v1716 = vpop.f32.mrb[0].mxu0
      %v1717 = vadd.f32 %v446, %v1716
      %v1718 = vpop.f32.mrb[0].mxu0
      %1719 = vmatprep.mubr.bf16.mxu0 0
      %1720 = vmatmul.mubr.bf16.gmra.mrb[0].mxu0 %v1189
      %v1721 = vpop.f32.mrb[0].mxu0
      %v1722 = vadd.f32 %v446, %v1721
      %v1723 = vpop.f32.mrb[0].mxu0
      %v1724 = vpop.f32.mrb[0].mxu0
      %v1725 = vadd.f32 %v446, %v1724
      %v1726 = vpop.f32.mrb[0].mxu0
      %1727 = vmatprep.mubr.bf16.mxu0 0
      %1728 = vmatmul.mubr.bf16.gmra.mrb[0].mxu0 %v1192
      %v1729 = vpop.f32.mrb[0].mxu0
      %v1730 = vadd.f32 %v446, %v1729
      %v1731 = vpop.f32.mrb[0].mxu0
      %v1732 = vpop.f32.mrb[0].mxu0
      %v1733 = vadd.f32 %v446, %v1732
      %v1734 = vpop.f32.mrb[0].mxu0
      %1735 = vmatprep.mubr.bf16.mxu0 0
      %1736 = vmatmul.mubr.bf16.gmra.mrb[0].mxu0 %v1195
      %v1737 = vpop.f32.mrb[0].mxu0
      %v1738 = vadd.f32 %v446, %v1737
      %v1739 = vpop.f32.mrb[0].mxu0
      %v1740 = vpop.f32.mrb[0].mxu0
      %v1741 = vadd.f32 %v446, %v1740
      %v1742 = vpop.f32.mrb[0].mxu0
      %1743 = vmatprep.mubr.bf16.mxu0 0
      %1744 = vmatmul.mubr.bf16.gmra.mrb[0].mxu0 %v1198
      %v1745 = vpop.f32.mrb[0].mxu0
      %v1746 = vadd.f32 %v446, %v1745
      %v1747 = vpop.f32.mrb[0].mxu0
      %v1748 = vpop.f32.mrb[0].mxu0
      %v1749 = vadd.f32 %v446, %v1748
      %v1750 = vpop.f32.mrb[0].mxu0
      %1751 = vmatprep.mubr.bf16.mxu0 0
      %1752 = vmatmul.mubr.bf16.gmra.mrb[0].mxu0 %v1201
      %v1753 = vpop.f32.mrb[0].mxu0
      %v1754 = vadd.f32 %v446, %v1753
      %v1755 = vpop.f32.mrb[0].mxu0
      %v1756 = vpop.f32.mrb[0].mxu0
      %v1757 = vadd.f32 %v446, %v1756
      %v1758 = vpop.f32.mrb[0].mxu0
      %1759 = vmatprep.mubr.bf16.mxu0 0
      %1760 = vmatmul.mubr.bf16.gmra.mrb[0].mxu0 %v1204
      %v1761 = vpop.f32.mrb[0].mxu0
      %v1762 = vadd.f32 %v446, %v1761
      %v1763 = vpop.f32.mrb[0].mxu0
      %v1764 = vpop.f32.mrb[0].mxu0
      %v1765 = vadd.f32 %v446, %v1764
      %v1766 = vpop.f32.mrb[0].mxu0
      %1767 = vmatprep.mubr.bf16.mxu0 0
      %1768 = vmatmul.mubr.bf16.gmra.mrb[0].mxu0 %v1207
      %v1769 = vpop.f32.mrb[0].mxu0
      %v1770 = vadd.f32 %v446, %v1769
      %v1771 = vpop.f32.mrb[0].mxu0
      %v1772 = vpop.f32.mrb[0].mxu0
      %v1773 = vadd.f32 %v446, %v1772
      %v1774 = vpop.f32.mrb[0].mxu0
      %1775 = vmatprep.mubr.bf16.mxu0 0
      %1776 = vmatmul.mubr.bf16.gmra.mrb[0].mxu0 %v1210
      %v1777 = vpop.f32.mrb[0].mxu0
      %v1778 = vadd.f32 %v446, %v1777
      %v1779 = vpop.f32.mrb[0].mxu0
      %v1780 = vpop.f32.mrb[0].mxu0
      %v1781 = vadd.f32 %v446, %v1780
      %v1782 = vpop.f32.mrb[0].mxu0
      %1783 = vmatprep.mubr.bf16.mxu0 0
      %1784 = vmatmul.mubr.bf16.gmra.mrb[0].mxu0 %v1213
      %v1785 = vpop.f32.mrb[0].mxu0
      %v1786 = vadd.f32 %v446, %v1785
      %v1787 = vpop.f32.mrb[0].mxu0
      %v1788 = vpop.f32.mrb[0].mxu0
      %v1789 = vadd.f32 %v446, %v1788
      %v1790 = vpop.f32.mrb[0].mxu0
      %1791 = vmatprep.mubr.bf16.mxu0 0
      %1792 = vmatmul.mubr.bf16.gmra.mrb[0].mxu0 %v1216
      %v1793 = vpop.f32.mrb[0].mxu0
      %v1794 = vadd.f32 %v446, %v1793
      %v1795 = vpop.f32.mrb[0].mxu0
      %v1796 = vpop.f32.mrb[0].mxu0
      %v1797 = vadd.f32 %v446, %v1796
      %v1798 = vpop.f32.mrb[0].mxu0
      %1799 = vmatprep.mubr.bf16.mxu0 0
      %1800 = vmatmul.mubr.bf16.gmra.mrb[0].mxu0 %v1219
      %v1801 = vpop.f32.mrb[0].mxu0
      %v1802 = vadd.f32 %v446, %v1801
      %v1803 = vpop.f32.mrb[0].mxu0
      %v1804 = vpop.f32.mrb[0].mxu0
      %v1805 = vadd.f32 %v446, %v1804
      %v1806 = vpop.f32.mrb[0].mxu0
      %1807 = vmatprep.mubr.bf16.mxu0 0
      %1808 = vmatmul.mubr.bf16.gmra.mrb[0].mxu0 %v1222
      %v1809 = vpop.f32.mrb[0].mxu0
      %v1810 = vadd.f32 %v446, %v1809
      %v1811 = vpop.f32.mrb[0].mxu0
      %v1812 = vpop.f32.mrb[0].mxu0
      %v1813 = vadd.f32 %v446, %v1812
      %v1814 = vpop.f32.mrb[0].mxu0
      %1815 = vmatprep.mubr.bf16.mxu0 0
      %1816 = vmatmul.mubr.bf16.gmra.mrb[0].mxu0 %v1225
      %v1817 = vpop.f32.mrb[0].mxu0
      %v1818 = vadd.f32 %v446, %v1817
      %v1819 = vpop.f32.mrb[0].mxu0
      %v1820 = vpop.f32.mrb[0].mxu0
      %v1821 = vadd.f32 %v446, %v1820
      %v1822 = vpop.f32.mrb[0].mxu0
      %1823 = vmatprep.mubr.bf16.mxu0 0
      %1824 = vmatmul.mubr.bf16.gmra.mrb[0].mxu0 %v1228
      %v1825 = vpop.f32.mrb[0].mxu0
      %v1826 = vadd.f32 %v446, %v1825
      %v1827 = vpop.f32.mrb[0].mxu0
      %v1828 = vpop.f32.mrb[0].mxu0
      %v1829 = vadd.f32 %v446, %v1828
      %v1830 = vpop.f32.mrb[0].mxu0
      %1831 = vmatprep.mubr.bf16.mxu0 0
      %1832 = vmatmul.mubr.bf16.gmra.mrb[0].mxu0 %v1231
      %v1833 = vpop.f32.mrb[0].mxu0
      %v1834 = vadd.f32 %v446, %v1833
      %v1835 = vpop.f32.mrb[0].mxu0
      %v1836 = vpop.f32.mrb[0].mxu0
      %v1837 = vadd.f32 %v446, %v1836
      %v1838 = vpop.f32.mrb[0].mxu0
      %1839 = vmatprep.mubr.bf16.mxu0 0
      %1840 = vmatmul.mubr.bf16.gmra.mrb[0].mxu0 %v1234
      %v1841 = vpop.f32.mrb[0].mxu0
      %v1842 = vadd.f32 %v446, %v1841
      %v1843 = vpop.f32.mrb[0].mxu0
      %v1844 = vpop.f32.mrb[0].mxu0
      %v1845 = vadd.f32 %v446, %v1844
      %v1846 = vpop.f32.mrb[0].mxu0
      %1847 = vmatprep.mubr.bf16.mxu0 0
      %1848 = vmatmul.mubr.bf16.gmra.mrb[0].mxu0 %v1237
      %v1849 = vpop.f32.mrb[0].mxu0
      %v1850 = vadd.f32 %v446, %v1849
      %v1851 = vpop.f32.mrb[0].mxu0
      %v1852 = vpop.f32.mrb[0].mxu0
      %v1853 = vadd.f32 %v446, %v1852
      %v1854 = vpop.f32.mrb[0].mxu0
      %1855 = vmatprep.mubr.bf16.mxu0 0
      %1856 = vmatmul.mubr.bf16.gmra.mrb[0].mxu0 %v1240
      %v1857 = vpop.f32.mrb[0].mxu0
      %v1858 = vadd.f32 %v446, %v1857
      %v1859 = vpop.f32.mrb[0].mxu0
      %v1860 = vpop.f32.mrb[0].mxu0
      %v1861 = vadd.f32 %v446, %v1860
      %v1862 = vpop.f32.mrb[0].mxu0
      %1863 = vmatprep.mubr.bf16.mxu0 0
      %1864 = vmatmul.mubr.bf16.gmra.mrb[0].mxu0 %v1243
      %v1865 = vpop.f32.mrb[0].mxu0
      %v1866 = vadd.f32 %v446, %v1865
      %v1867 = vpop.f32.mrb[0].mxu0
      %v1868 = vpop.f32.mrb[0].mxu0
      %v1869 = vadd.f32 %v446, %v1868
      %v1870 = vpop.f32.mrb[0].mxu0
      %1871 = vmatprep.mubr.bf16.mxu0 0
      %1872 = vmatmul.mubr.bf16.gmra.mrb[0].mxu0 %v1246
      %v1873 = vpop.f32.mrb[0].mxu0
      %v1874 = vadd.f32 %v446, %v1873
      %v1875 = vpop.f32.mrb[0].mxu0
      %v1876 = vpop.f32.mrb[0].mxu0
      %v1877 = vadd.f32 %v446, %v1876
      %v1878 = vpop.f32.mrb[0].mxu0
      %1879 = vmatprep.mubr.bf16.mxu0 0
      %1880 = vmatmul.mubr.bf16.gmra.mrb[0].mxu0 %v1249
      %v1881 = vpop.f32.mrb[0].mxu0
      %v1882 = vadd.f32 %v446, %v1881
      %v1883 = vpop.f32.mrb[0].mxu0
      %v1884 = vpop.f32.mrb[0].mxu0
      %v1885 = vadd.f32 %v446, %v1884
      %v1886 = vpop.f32.mrb[0].mxu0
      %1887 = vmatprep.mubr.bf16.mxu0 0
      %1888 = vmatmul.mubr.bf16.gmra.mrb[0].mxu0 %v1252
      %v1889 = vpop.f32.mrb[0].mxu0
      %v1890 = vadd.f32 %v446, %v1889
      %v1891 = vpop.f32.mrb[0].mxu0
      %v1892 = vpop.f32.mrb[0].mxu0
      %v1893 = vadd.f32 %v446, %v1892
      %v1894 = vpop.f32.mrb[0].mxu0
      %1895 = vmatprep.mubr.bf16.mxu0 0
      %1896 = vmatmul.mubr.bf16.gmra.mrb[0].mxu0 %v1255
      %v1897 = vpop.f32.mrb[0].mxu0
      %v1898 = vadd.f32 %v446, %v1897
      %v1899 = vpop.f32.mrb[0].mxu0
      %v1900 = vpop.f32.mrb[0].mxu0
      %v1901 = vadd.f32 %v446, %v1900
      %v1902 = vpop.f32.mrb[0].mxu0
      %1903 = vmatprep.mubr.bf16.mxu0 0
      %1904 = vmatmul.mubr.bf16.gmra.mrb[0].mxu0 %v1258
      %v1905 = vpop.f32.mrb[0].mxu0
      %v1906 = vadd.f32 %v446, %v1905
      %v1907 = vpop.f32.mrb[0].mxu0
      %v1908 = vpop.f32.mrb[0].mxu0
      %v1909 = vadd.f32 %v446, %v1908
      %v1910 = vpop.f32.mrb[0].mxu0
      %1911 = vmatprep.mubr.bf16.mxu0 0
      %1912 = vmatmul.mubr.bf16.gmra.mrb[0].mxu0 %v1261
      %v1913 = vpop.f32.mrb[0].mxu0
      %v1914 = vadd.f32 %v446, %v1913
      %v1915 = vpop.f32.mrb[0].mxu0
      %v1916 = vpop.f32.mrb[0].mxu0
      %v1917 = vadd.f32 %v446, %v1916
      %v1918 = vpop.f32.mrb[0].mxu0
      %1919 = vmatprep.mubr.bf16.mxu0 0
      %1920 = vmatmul.mubr.bf16.gmra.mrb[0].mxu0 %v1264
      %v1921 = vpop.f32.mrb[0].mxu0
      %v1922 = vadd.f32 %v446, %v1921
      %v1923 = vpop.f32.mrb[0].mxu0
      %v1924 = vpop.f32.mrb[0].mxu0
      %v1925 = vadd.f32 %v446, %v1924
      %v1926 = vpop.f32.mrb[0].mxu0
      %1927 = vmatprep.mubr.bf16.mxu0 0
      %1928 = vmatmul.mubr.bf16.gmra.mrb[0].mxu0 %v1267
      %v1929 = vpop.f32.mrb[0].mxu0
      %v1930 = vadd.f32 %v446, %v1929
      %v1931 = vpop.f32.mrb[0].mxu0
      %v1932 = vpop.f32.mrb[0].mxu0
      %v1933 = vadd.f32 %v446, %v1932
      %v1934 = vpop.f32.mrb[0].mxu0
      %1935 = vmatprep.mubr.bf16.mxu0 0
      %1936 = vmatmul.mubr.bf16.gmra.mrb[0].mxu0 %v1270
      %v1937 = vpop.f32.mrb[0].mxu0
      %v1938 = vadd.f32 %v446, %v1937
      %v1939 = vpop.f32.mrb[0].mxu0
      %v1940 = vpop.f32.mrb[0].mxu0
      %v1941 = vadd.f32 %v446, %v1940
      %v1942 = vpop.f32.mrb[0].mxu0
      %1943 = vmatprep.mubr.bf16.mxu0 0
      %1944 = vmatmul.mubr.bf16.gmra.mrb[0].mxu0 %v1273
      %v1945 = vpop.f32.mrb[0].mxu0
      %v1946 = vadd.f32 %v446, %v1945
      %v1947 = vpop.f32.mrb[0].mxu0
      %v1948 = vpop.f32.mrb[0].mxu0
      %v1949 = vadd.f32 %v446, %v1948
      %v1950 = vpop.f32.mrb[0].mxu0
      %1951 = vmatprep.mubr.bf16.mxu0 0
      %1952 = vmatmul.mubr.bf16.gmra.mrb[0].mxu0 %v1276
      %v1953 = vpop.f32.mrb[0].mxu0
      %v1954 = vadd.f32 %v446, %v1953
      %v1955 = vpop.f32.mrb[0].mxu0
      %v1956 = vpop.f32.mrb[0].mxu0
      %v1957 = vadd.f32 %v446, %v1956
      %v1958 = vpop.f32.mrb[0].mxu0
      %1959 = vmatprep.mubr.bf16.mxu0 0
      %1960 = vmatmul.mubr.bf16.gmra.mrb[0].mxu0 %v1279
      %v1961 = vpop.f32.mrb[0].mxu0
      %v1962 = vadd.f32 %v446, %v1961
      %v1963 = vpop.f32.mrb[0].mxu0
      %v1964 = vpop.f32.mrb[0].mxu0
      %v1965 = vadd.f32 %v446, %v1964
      %v1966 = vpop.f32.mrb[0].mxu0
      %1967 = vmatprep.mubr.bf16.mxu0 0
      %1968 = vmatmul.mubr.bf16.gmra.mrb[0].mxu0 %v1282
      %v1969 = vpop.f32.mrb[0].mxu0
      %v1970 = vadd.f32 %v446, %v1969
      %v1971 = vpop.f32.mrb[0].mxu0
      %v1972 = vpop.f32.mrb[0].mxu0
      %v1973 = vadd.f32 %v446, %v1972
      %v1974 = vpop.f32.mrb[0].mxu0
      %1975 = vmatprep.mubr.bf16.mxu0 0
      %1976 = vmatmul.mubr.bf16.gmra.mrb[0].mxu0 %v1285
      %v1977 = vpop.f32.mrb[0].mxu0
      %v1978 = vadd.f32 %v446, %v1977
      %v1979 = vpop.f32.mrb[0].mxu0
      %v1980 = vpop.f32.mrb[0].mxu0
      %v1981 = vadd.f32 %v446, %v1980
      %v1982 = vpop.f32.mrb[0].mxu0
      %1983 = vmatprep.mubr.bf16.mxu0 0
      %1984 = vmatmul.mubr.bf16.gmra.mrb[0].mxu0 %v1288
      %v1985 = vpop.f32.mrb[0].mxu0
      %v1986 = vadd.f32 %v446, %v1985
      %v1987 = vpop.f32.mrb[0].mxu0
      %v1988 = vpop.f32.mrb[0].mxu0
      %v1989 = vadd.f32 %v446, %v1988
      %v1990 = vpop.f32.mrb[0].mxu0
      %1991 = vmatprep.mubr.bf16.mxu0 0
      %1992 = vmatmul.mubr.bf16.gmra.mrb[0].mxu0 %v1291
      %v1993 = vpop.f32.mrb[0].mxu0
      %v1994 = vadd.f32 %v446, %v1993
      %v1995 = vpop.f32.mrb[0].mxu0
      %v1996 = vpop.f32.mrb[0].mxu0
      %v1997 = vadd.f32 %v446, %v1996
      %v1998 = vpop.f32.mrb[0].mxu0
      %1999 = vmatprep.mubr.bf16.mxu0 0
      %2000 = vmatmul.mubr.bf16.gmra.mrb[0].mxu0 %v1294
      %v2001 = vpop.f32.mrb[0].mxu0
      %v2002 = vadd.f32 %v446, %v2001
      %v2003 = vpop.f32.mrb[0].mxu0
      %v2004 = vpop.f32.mrb[0].mxu0
      %v2005 = vadd.f32 %v446, %v2004
      %v2006 = vpop.f32.mrb[0].mxu0
      %2007 = vmatprep.mubr.bf16.mxu0 0
      %2008 = vmatmul.mubr.bf16.gmra.mrb[0].mxu0 %v1297
      %v2009 = vpop.f32.mrb[0].mxu0
      %v2010 = vadd.f32 %v446, %v2009
      %v2011 = vpop.f32.mrb[0].mxu0
      %v2012 = vpop.f32.mrb[0].mxu0
      %v2013 = vadd.f32 %v446, %v2012
      %v2014 = vpop.f32.mrb[0].mxu0
      %2015 = vmatprep.mubr.bf16.mxu0 0
      %2016 = vmatmul.mubr.bf16.gmra.mrb[0].mxu0 %v1300
      %v2017 = vpop.f32.mrb[0].mxu0
      %v2018 = vadd.f32 %v446, %v2017
      %v2019 = vpop.f32.mrb[0].mxu0
      %v2020 = vpop.f32.mrb[0].mxu0
      %v2021 = vadd.f32 %v446, %v2020
      %v2022 = vpop.f32.mrb[0].mxu0
      %2023 = vmatprep.mubr.bf16.mxu0 0
      %2024 = vmatmul.mubr.bf16.gmra.mrb[0].mxu0 %v1303
      %v2025 = vpop.f32.mrb[0].mxu0
      %v2026 = vadd.f32 %v446, %v2025
      %v2027 = vpop.f32.mrb[0].mxu0
      %v2028 = vpop.f32.mrb[0].mxu0
      %v2029 = vadd.f32 %v446, %v2028
      %v2030 = vpop.f32.mrb[0].mxu0
      %2031 = vmatprep.mubr.bf16.mxu0 0
      %2032 = vmatmul.mubr.bf16.gmra.mrb[0].mxu0 %v1306
      %v2033 = vpop.f32.mrb[0].mxu0
      %v2034 = vadd.f32 %v446, %v2033
      %v2035 = vpop.f32.mrb[0].mxu0
      %v2036 = vpop.f32.mrb[0].mxu0
      %v2037 = vadd.f32 %v446, %v2036
      %v2038 = vpop.f32.mrb[0].mxu0
      %2039 = vmatprep.mubr.bf16.mxu0 0
      %2040 = vmatmul.mubr.bf16.gmra.mrb[0].mxu0 %v1309
      %v2041 = vpop.f32.mrb[0].mxu0
      %v2042 = vadd.f32 %v446, %v2041
      %v2043 = vpop.f32.mrb[0].mxu0
      %v2044 = vpop.f32.mrb[0].mxu0
      %v2045 = vadd.f32 %v446, %v2044
      %v2046 = vpop.f32.mrb[0].mxu0
      %2047 = vmatprep.mubr.bf16.mxu0 0
      %2048 = vmatmul.mubr.bf16.gmra.mrb[0].mxu0 %v1312
      %v2049 = vpop.f32.mrb[0].mxu0
      %v2050 = vadd.f32 %v446, %v2049
      %v2051 = vpop.f32.mrb[0].mxu0
      %v2052 = vpop.f32.mrb[0].mxu0
      %v2053 = vadd.f32 %v446, %v2052
      %v2054 = vpop.f32.mrb[0].mxu0
      %2055 = vmatprep.mubr.bf16.mxu0 0
      %2056 = vmatmul.mubr.bf16.gmra.mrb[0].mxu0 %v1315
      %v2057 = vpop.f32.mrb[0].mxu0
      %v2058 = vadd.f32 %v446, %v2057
      %v2059 = vpop.f32.mrb[0].mxu0
      %v2060 = vpop.f32.mrb[0].mxu0
      %v2061 = vadd.f32 %v446, %v2060
      %v2062 = vpop.f32.mrb[0].mxu0
      %2063 = vmatprep.mubr.bf16.mxu0 0
      %2064 = vmatmul.mubr.bf16.gmra.mrb[0].mxu0 %v1318
      %v2065 = vpop.f32.mrb[0].mxu0
      %v2066 = vadd.f32 %v446, %v2065
      %v2067 = vpop.f32.mrb[0].mxu0
      %v2068 = vpop.f32.mrb[0].mxu0
      %v2069 = vadd.f32 %v446, %v2068
      %v2070 = vpop.f32.mrb[0].mxu0
      %2071 = vmatprep.mubr.bf16.mxu0 0
      %2072 = vmatmul.mubr.bf16.gmra.mrb[0].mxu0 %v1321
      %v2073 = vpop.f32.mrb[0].mxu0
      %v2074 = vadd.f32 %v446, %v2073
      %v2075 = vpop.f32.mrb[0].mxu0
      %v2076 = vpop.f32.mrb[0].mxu0
      %v2077 = vadd.f32 %v446, %v2076
      %v2078 = vpop.f32.mrb[0].mxu0
      %2079 = vmatprep.mubr.bf16.mxu0 0
      %2080 = vmatmul.mubr.bf16.gmra.mrb[0].mxu0 %v1324
      %v2081 = vpop.f32.mrb[0].mxu0
      %v2082 = vadd.f32 %v446, %v2081
      %v2083 = vpop.f32.mrb[0].mxu0
      %v2084 = vpop.f32.mrb[0].mxu0
      %v2085 = vadd.f32 %v446, %v2084
      %v2086 = vpop.f32.mrb[0].mxu0
      %2087 = vmatprep.mubr.bf16.mxu0 0
      %2088 = vmatmul.mubr.bf16.gmra.mrb[0].mxu0 %v1327
      %v2089 = vpop.f32.mrb[0].mxu0
      %v2090 = vadd.f32 %v446, %v2089
      %v2091 = vpop.f32.mrb[0].mxu0
      %v2092 = vpop.f32.mrb[0].mxu0
      %v2093 = vadd.f32 %v446, %v2092
      %v2094 = vpop.f32.mrb[0].mxu0
      %2095 = vmatprep.mubr.bf16.mxu0 0
      %2096 = vmatmul.mubr.bf16.gmra.mrb[0].mxu0 %v1330
      %v2097 = vpop.f32.mrb[0].mxu0
      %v2098 = vadd.f32 %v446, %v2097
      %v2099 = vpop.f32.mrb[0].mxu0
      %v2100 = vpop.f32.mrb[0].mxu0
      %v2101 = vadd.f32 %v446, %v2100
      %v2102 = vpop.f32.mrb[0].mxu0
      %2103 = vmatprep.mubr.bf16.mxu0 0
      %2104 = vmatmul.mubr.bf16.gmra.mrb[0].mxu0 %v1333
      %v2105 = vpop.f32.mrb[0].mxu0
      %v2106 = vadd.f32 %v446, %v2105
      %v2107 = vpop.f32.mrb[0].mxu0
      %v2108 = vpop.f32.mrb[0].mxu0
      %v2109 = vadd.f32 %v446, %v2108
      %v2110 = vpop.f32.mrb[0].mxu0
      %2111 = vmatprep.mubr.bf16.mxu0 0
      %2112 = vmatmul.mubr.bf16.gmra.mrb[0].mxu0 %v1336
      %v2113 = vpop.f32.mrb[0].mxu0
      %v2114 = vadd.f32 %v446, %v2113
      %v2115 = vpop.f32.mrb[0].mxu0
      %v2116 = vpop.f32.mrb[0].mxu0
      %v2117 = vadd.f32 %v446, %v2116
      %v2118 = vpop.f32.mrb[0].mxu0
      %2119 = vmatprep.mubr.bf16.mxu0 0
      %2120 = vmatmul.mubr.bf16.gmra.mrb[0].mxu0 %v1339
      %v2121 = vpop.f32.mrb[0].mxu0
      %v2122 = vadd.f32 %v446, %v2121
      %v2123 = vpop.f32.mrb[0].mxu0
      %v2124 = vpop.f32.mrb[0].mxu0
      %v2125 = vadd.f32 %v446, %v2124
      %v2126 = vpop.f32.mrb[0].mxu0
      %2127 = vmatprep.mubr.bf16.mxu0 0
      %2128 = vmatmul.mubr.bf16.gmra.mrb[0].mxu0 %v1342
      %v2129 = vpop.f32.mrb[0].mxu0
      %v2130 = vadd.f32 %v446, %v2129
      %v2131 = vpop.f32.mrb[0].mxu0
      %v2132 = vpop.f32.mrb[0].mxu0
      %v2133 = vadd.f32 %v446, %v2132
      %v2134 = vpop.f32.mrb[0].mxu0
      %2135 = vmatprep.mubr.bf16.mxu0 0
      %2136 = vmatmul.mubr.bf16.gmra.mrb[0].mxu0 %v1345
      %v2137 = vpop.f32.mrb[0].mxu0
      %v2138 = vadd.f32 %v446, %v2137
      %v2139 = vpop.f32.mrb[0].mxu0
      %v2140 = vpop.f32.mrb[0].mxu0
      %v2141 = vadd.f32 %v446, %v2140
      %v2142 = vpop.f32.mrb[0].mxu0
      %2143 = vmatprep.mubr.bf16.mxu0 0
      %2144 = vmatmul.mubr.bf16.gmra.mrb[0].mxu0 %v1348
      %v2145 = vpop.f32.mrb[0].mxu0
      %v2146 = vadd.f32 %v446, %v2145
      %v2147 = vpop.f32.mrb[0].mxu0
      %v2148 = vpop.f32.mrb[0].mxu0
      %v2149 = vadd.f32 %v446, %v2148
      %v2150 = vpop.f32.mrb[0].mxu0
      %2151 = vmatprep.mubr.bf16.mxu0 0
      %2152 = vmatmul.mubr.bf16.gmra.mrb[0].mxu0 %v1351
      %v2153 = vpop.f32.mrb[0].mxu0
      %v2154 = vadd.f32 %v446, %v2153
      %v2155 = vpop.f32.mrb[0].mxu0
      %v2156 = vpop.f32.mrb[0].mxu0
      %v2157 = vadd.f32 %v446, %v2156
      %v2158 = vpop.f32.mrb[0].mxu0
      %2159 = vmatprep.mubr.bf16.mxu0 0
      %2160 = vmatmul.mubr.bf16.gmra.mrb[0].mxu0 %v1354
      %v2161 = vpop.f32.mrb[0].mxu0
      %v2162 = vadd.f32 %v446, %v2161
      %v2163 = vpop.f32.mrb[0].mxu0
      %v2164 = vpop.f32.mrb[0].mxu0
      %v2165 = vadd.f32 %v446, %v2164
      %v2166 = vpop.f32.mrb[0].mxu0
      %2167 = vmatprep.mubr.bf16.mxu0 0
      %2168 = vmatmul.mubr.bf16.gmra.mrb[0].mxu0 %v1357
      %v2169 = vpop.f32.mrb[0].mxu0
      %v2170 = vadd.f32 %v446, %v2169
      %v2171 = vpop.f32.mrb[0].mxu0
      %v2172 = vpop.f32.mrb[0].mxu0
      %v2173 = vadd.f32 %v446, %v2172
      %v2174 = vpop.f32.mrb[0].mxu0
      %2175 = vmatprep.mubr.bf16.mxu0 0
      %2176 = vmatmul.mubr.bf16.gmra.mrb[0].mxu0 %v1360
      %v2177 = vpop.f32.mrb[0].mxu0
      %v2178 = vadd.f32 %v446, %v2177
      %v2179 = vpop.f32.mrb[0].mxu0
      %v2180 = vpop.f32.mrb[0].mxu0
      %v2181 = vadd.f32 %v446, %v2180
      %v2182 = vpop.f32.mrb[0].mxu0
      %2183 = vmatprep.mubr.bf16.mxu0 0
      %2184 = vmatmul.mubr.bf16.gmra.mrb[0].mxu0 %v1363
      %v2185 = vpop.f32.mrb[0].mxu0
      %v2186 = vadd.f32 %v446, %v2185
      %v2187 = vpop.f32.mrb[0].mxu0
      %v2188 = vpop.f32.mrb[0].mxu0
      %v2189 = vadd.f32 %v446, %v2188
      %v2190 = vpop.f32.mrb[0].mxu0
      %2191 = vmatprep.mubr.bf16.mxu0 0
      %2192 = vmatmul.mubr.bf16.gmra.mrb[0].mxu0 %v1366
      %v2193 = vpop.f32.mrb[0].mxu0
      %v2194 = vadd.f32 %v446, %v2193
      %v2195 = vpop.f32.mrb[0].mxu0
      %v2196 = vpop.f32.mrb[0].mxu0
      %v2197 = vadd.f32 %v446, %v2196
      %v2198 = vpop.f32.mrb[0].mxu0
      %2199 = vmatprep.mubr.bf16.mxu0 0
      %2200 = vmatmul.mubr.bf16.gmra.mrb[0].mxu0 %v1369
      %v2201 = vpop.f32.mrb[0].mxu0
      %v2202 = vadd.f32 %v446, %v2201
      %v2203 = vpop.f32.mrb[0].mxu0
      %v2204 = vpop.f32.mrb[0].mxu0
      %v2205 = vadd.f32 %v446, %v2204
      %v2206 = vpop.f32.mrb[0].mxu0
      %2207 = vmatprep.mubr.bf16.mxu0 0
      %2208 = vmatmul.mubr.bf16.gmra.mrb[0].mxu0 %v1372
      %v2209 = vpop.f32.mrb[0].mxu0
      %v2210 = vadd.f32 %v446, %v2209
      %v2211 = vpop.f32.mrb[0].mxu0
      %v2212 = vpop.f32.mrb[0].mxu0
      %v2213 = vadd.f32 %v446, %v2212
      %v2214 = vpop.f32.mrb[0].mxu0
      %2215 = vmatprep.mubr.bf16.mxu0 0
      %2216 = vmatmul.mubr.bf16.gmra.mrb[0].mxu0 %v1375
      %v2217 = vpop.f32.mrb[0].mxu0
      %v2218 = vadd.f32 %v446, %v2217
      %v2219 = vpop.f32.mrb[0].mxu0
      %v2220 = vpop.f32.mrb[0].mxu0
      %v2221 = vadd.f32 %v446, %v2220
      %v2222 = vpop.f32.mrb[0].mxu0
      %2223 = vmatprep.mubr.bf16.mxu0 0
      %2224 = vmatmul.mubr.bf16.gmra.mrb[0].mxu0 %v1378
      %v2225 = vpop.f32.mrb[0].mxu0
      %v2226 = vadd.f32 %v446, %v2225
      %v2227 = vpop.f32.mrb[0].mxu0
      %v2228 = vpop.f32.mrb[0].mxu0
      %v2229 = vadd.f32 %v446, %v2228
      %v2230 = vpop.f32.mrb[0].mxu0
      %2231 = vmatprep.mubr.bf16.mxu0 0
      %2232 = vmatmul.mubr.bf16.gmra.mrb[0].mxu0 %v1381
      %v2233 = vpop.f32.mrb[0].mxu0
      %v2234 = vadd.f32 %v446, %v2233
      %v2235 = vpop.f32.mrb[0].mxu0
      %v2236 = vpop.f32.mrb[0].mxu0
      %v2237 = vadd.f32 %v446, %v2236
      %v2238 = vpop.f32.mrb[0].mxu0
      %2239 = vmatprep.mubr.bf16.mxu0 0
      %2240 = vmatmul.mubr.bf16.gmra.mrb[0].mxu0 %v1384
      %v2241 = vpop.f32.mrb[0].mxu0
      %v2242 = vadd.f32 %v446, %v2241
      %v2243 = vpop.f32.mrb[0].mxu0
      %v2244 = vpop.f32.mrb[0].mxu0
      %v2245 = vadd.f32 %v446, %v2244
      %v2246 = vpop.f32.mrb[0].mxu0
      %2247 = vmatprep.mubr.bf16.mxu0 0
      %2248 = vmatmul.mubr.bf16.gmra.mrb[0].mxu0 %v1387
      %v2249 = vpop.f32.mrb[0].mxu0
      %v2250 = vadd.f32 %v446, %v2249
      %v2251 = vpop.f32.mrb[0].mxu0
      %v2252 = vpop.f32.mrb[0].mxu0
      %v2253 = vadd.f32 %v446, %v2252
      %v2254 = vpop.f32.mrb[0].mxu0
      %2255 = vmatprep.mubr.bf16.mxu0 0
      %2256 = vmatmul.mubr.bf16.gmra.mrb[0].mxu0 %v1390
      %v2257 = vpop.f32.mrb[0].mxu0
      %v2258 = vadd.f32 %v446, %v2257
      %v2259 = vpop.f32.mrb[0].mxu0
      %v2260 = vpop.f32.mrb[0].mxu0
      %v2261 = vadd.f32 %v446, %v2260
      %v2262 = vpop.f32.mrb[0].mxu0
      %2263 = vmatprep.mubr.bf16.mxu0 0
      %2264 = vmatmul.mubr.bf16.gmra.mrb[0].mxu0 %v1393
      %v2265 = vpop.f32.mrb[0].mxu0
      %v2266 = vadd.f32 %v446, %v2265
      %v2267 = vpop.f32.mrb[0].mxu0
      %v2268 = vpop.f32.mrb[0].mxu0
      %v2269 = vadd.f32 %v446, %v2268
      %v2270 = vpop.f32.mrb[0].mxu0
      %2271 = vmatprep.mubr.bf16.mxu0 0
      %2272 = vmatmul.mubr.bf16.gmra.mrb[0].mxu0 %v1396
      %v2273 = vpop.f32.mrb[0].mxu0
      %v2274 = vadd.f32 %v446, %v2273
      %v2275 = vpop.f32.mrb[0].mxu0
      %v2276 = vpop.f32.mrb[0].mxu0
      %v2277 = vadd.f32 %v446, %v2276
      %v2278 = vpop.f32.mrb[0].mxu0
      %2279 = vmatprep.mubr.bf16.mxu0 0
      %2280 = vmatmul.mubr.bf16.gmra.mrb[0].mxu0 %v1399
      %v2281 = vpop.f32.mrb[0].mxu0
      %v2282 = vadd.f32 %v446, %v2281
      %v2283 = vpop.f32.mrb[0].mxu0
      %v2284 = vpop.f32.mrb[0].mxu0
      %v2285 = vadd.f32 %v446, %v2284
      %v2286 = vpop.f32.mrb[0].mxu0
      %2287 = vmatprep.mubr.bf16.mxu0 0
      %2288 = vmatmul.mubr.bf16.gmra.mrb[0].mxu0 %v1402
      %v2289 = vpop.f32.mrb[0].mxu0
      %v2290 = vadd.f32 %v446, %v2289
      %v2291 = vpop.f32.mrb[0].mxu0
      %v2292 = vpop.f32.mrb[0].mxu0
      %v2293 = vadd.f32 %v446, %v2292
      %v2294 = vpop.f32.mrb[0].mxu0
      %2295 = vmatprep.mubr.bf16.mxu0 0
      %2296 = vmatmul.mubr.bf16.gmra.mrb[0].mxu0 %v1405
      %v2297 = vpop.f32.mrb[0].mxu0
      %v2298 = vadd.f32 %v446, %v2297
      %v2299 = vpop.f32.mrb[0].mxu0
      %v2300 = vpop.f32.mrb[0].mxu0
      %v2301 = vadd.f32 %v446, %v2300
      %v2302 = vpop.f32.mrb[0].mxu0
      %2303 = vmatprep.mubr.bf16.mxu0 0
      %2304 = vmatmul.mubr.bf16.gmra.mrb[0].mxu0 %v1408
      %v2305 = vpop.f32.mrb[0].mxu0
      %v2306 = vadd.f32 %v446, %v2305
      %v2307 = vpop.f32.mrb[0].mxu0
      %v2308 = vpop.f32.mrb[0].mxu0
      %v2309 = vadd.f32 %v446, %v2308
      %v2310 = vpop.f32.mrb[0].mxu0
      %2311 = vmatprep.mubr.bf16.mxu0 0
      %2312 = vmatmul.mubr.bf16.gmra.mrb[0].mxu0 %v1411
      %v2313 = vpop.f32.mrb[0].mxu0
      %v2314 = vadd.f32 %v446, %v2313
      %v2315 = vpop.f32.mrb[0].mxu0
      %v2316 = vpop.f32.mrb[0].mxu0
      %v2317 = vadd.f32 %v446, %v2316
      %v2318 = vpop.f32.mrb[0].mxu0
      %2319 = vmatprep.mubr.bf16.mxu0 0
      %2320 = vmatmul.mubr.bf16.gmra.mrb[0].mxu0 %v1414
      %v2321 = vpop.f32.mrb[0].mxu0
      %v2322 = vadd.f32 %v446, %v2321
      %v2323 = vpop.f32.mrb[0].mxu0
      %v2324 = vpop.f32.mrb[0].mxu0
      %v2325 = vadd.f32 %v446, %v2324
      %v2326 = vpop.f32.mrb[0].mxu0
      %2327 = vmatprep.mubr.bf16.mxu0 0
      %2328 = vmatmul.mubr.bf16.gmra.mrb[0].mxu0 %v1417
      %v2329 = vpop.f32.mrb[0].mxu0
      %v2330 = vadd.f32 %v446, %v2329
      %v2331 = vpop.f32.mrb[0].mxu0
      %v2332 = vpop.f32.mrb[0].mxu0
      %v2333 = vadd.f32 %v446, %v2332
      %v2334 = vpop.f32.mrb[0].mxu0
      %2335 = vmatprep.mubr.bf16.mxu0 0
      %2336 = vmatmul.mubr.bf16.gmra.mrb[0].mxu0 %v1420
      %v2337 = vpop.f32.mrb[0].mxu0
      %v2338 = vadd.f32 %v446, %v2337
      %v2339 = vpop.f32.mrb[0].mxu0
      %v2340 = vpop.f32.mrb[0].mxu0
      %v2341 = vadd.f32 %v446, %v2340
      %v2342 = vpop.f32.mrb[0].mxu0
      %2343 = vmatprep.mubr.bf16.mxu0 0
      %2344 = vmatmul.mubr.bf16.gmra.mrb[0].mxu0 %v1423
      %v2345 = vpop.f32.mrb[0].mxu0
      %v2346 = vadd.f32 %v446, %v2345
      %v2347 = vpop.f32.mrb[0].mxu0
      %v2348 = vpop.f32.mrb[0].mxu0
      %v2349 = vadd.f32 %v446, %v2348
      %v2350 = vpop.f32.mrb[0].mxu0
      %2351 = vmatprep.mubr.bf16.mxu0 0
      %2352 = vmatmul.mubr.bf16.gmra.mrb[0].mxu0 %v1426
      %v2353 = vpop.f32.mrb[0].mxu0
      %v2354 = vadd.f32 %v446, %v2353
      %v2355 = vpop.f32.mrb[0].mxu0
      %v2356 = vpop.f32.mrb[0].mxu0
      %v2357 = vadd.f32 %v446, %v2356
      %v2358 = vpop.f32.mrb[0].mxu0
      %2359 = vmatprep.mubr.bf16.mxu0 0
      %2360 = vmatmul.mubr.bf16.gmra.mrb[0].mxu0 %v1429
      %v2361 = vpop.f32.mrb[0].mxu0
      %v2362 = vadd.f32 %v446, %v2361
      %v2363 = vpop.f32.mrb[0].mxu0
      %v2364 = vpop.f32.mrb[0].mxu0
      %v2365 = vadd.f32 %v446, %v2364
      %v2366 = vpop.f32.mrb[0].mxu0
      %2367 = vmatprep.mubr.bf16.mxu0 0
      %2368 = vmatmul.mubr.bf16.gmra.mrb[0].mxu0 %v1432
      %v2369 = vpop.f32.mrb[0].mxu0
      %v2370 = vadd.f32 %v446, %v2369
      %v2371 = vpop.f32.mrb[0].mxu0
      %v2372 = vpop.f32.mrb[0].mxu0
      %v2373 = vadd.f32 %v446, %v2372
      %v2374 = vpop.f32.mrb[0].mxu0
      %2375 = vmatprep.mubr.bf16.mxu0 0
      %2376 = vmatmul.mubr.bf16.gmra.mrb[0].mxu0 %v1435
      %v2377 = vpop.f32.mrb[0].mxu0
      %v2378 = vadd.f32 %v446, %v2377
      %v2379 = vpop.f32.mrb[0].mxu0
      %v2380 = vpop.f32.mrb[0].mxu0
      %v2381 = vadd.f32 %v446, %v2380
      %v2382 = vpop.f32.mrb[0].mxu0
      %2383 = vmatprep.mubr.bf16.mxu0 0
      %2384 = vmatmul.mubr.bf16.gmra.mrb[0].mxu0 %v1438
      %v2385 = vpop.f32.mrb[0].mxu0
      %v2386 = vadd.f32 %v446, %v2385
      %v2387 = vpop.f32.mrb[0].mxu0
      %v2388 = vpop.f32.mrb[0].mxu0
      %v2389 = vadd.f32 %v446, %v2388
      %v2390 = vpop.f32.mrb[0].mxu0
      %2391 = vmatprep.mubr.bf16.mxu0 0
      %2392 = vmatmul.mubr.bf16.gmra.mrb[0].mxu0 %v1441
      %v2393 = vpop.f32.mrb[0].mxu0
      %v2394 = vadd.f32 %v446, %v2393
      %v2395 = vpop.f32.mrb[0].mxu0
      %v2396 = vpop.f32.mrb[0].mxu0
      %v2397 = vadd.f32 %v446, %v2396
      %v2398 = vpop.f32.mrb[0].mxu0
      %2399 = vmatprep.mubr.bf16.mxu0 0
      %2400 = vmatmul.mubr.bf16.gmra.mrb[0].mxu0 %v1444
      %v2401 = vpop.f32.mrb[0].mxu0
      %v2402 = vadd.f32 %v446, %v2401
      %v2403 = vpop.f32.mrb[0].mxu0
      %v2404 = vpop.f32.mrb[0].mxu0
      %v2405 = vadd.f32 %v446, %v2404
      %v2406 = vpop.f32.mrb[0].mxu0
      %2407 = vmatprep.mubr.bf16.mxu0 0
      %2408 = vmatmul.mubr.bf16.gmra.mrb[0].mxu0 %v1447
      %v2409 = vpop.f32.mrb[0].mxu0
      %v2410 = vadd.f32 %v446, %v2409
      %v2411 = vpop.f32.mrb[0].mxu0
      %v2412 = vpop.f32.mrb[0].mxu0
      %v2413 = vadd.f32 %v446, %v2412
      %v2414 = vpop.f32.mrb[0].mxu0
      %2415 = vmatprep.mubr.bf16.mxu0 0
      %2416 = vmatmul.mubr.bf16.gmra.mrb[0].mxu0 %v1450
      %v2417 = vpop.f32.mrb[0].mxu0
      %v2418 = vadd.f32 %v446, %v2417
      %v2419 = vpop.f32.mrb[0].mxu0
      %v2420 = vpop.f32.mrb[0].mxu0
      %v2421 = vadd.f32 %v446, %v2420
      %v2422 = vpop.f32.mrb[0].mxu0
      %2423 = vmatprep.mubr.bf16.mxu0 0
      %2424 = vmatmul.mubr.bf16.gmra.mrb[0].mxu0 %v1453
      %v2425 = vpop.f32.mrb[0].mxu0
      %v2426 = vadd.f32 %v446, %v2425
      %v2427 = vpop.f32.mrb[0].mxu0
      %v2428 = vpop.f32.mrb[0].mxu0
      %v2429 = vadd.f32 %v446, %v2428
      %v2430 = vpop.f32.mrb[0].mxu0
      %2431 = vmatprep.mubr.bf16.mxu0 0
      %2432 = vmatmul.mubr.bf16.gmra.mrb[0].mxu0 %v1456
      %v2433 = vpop.f32.mrb[0].mxu0
      %v2434 = vadd.f32 %v446, %v2433
      %v2435 = vpop.f32.mrb[0].mxu0
      %v2436 = vpop.f32.mrb[0].mxu0
      %v2437 = vadd.f32 %v446, %v2436
      %v2438 = vpop.f32.mrb[0].mxu0
      %2439 = vmatprep.mubr.bf16.mxu0 0
      %2440 = vmatmul.mubr.bf16.gmra.mrb[0].mxu0 %v1459
      %v2441 = vpop.f32.mrb[0].mxu0
      %v2442 = vadd.f32 %v446, %v2441
      %v2443 = vpop.f32.mrb[0].mxu0
      %v2444 = vpop.f32.mrb[0].mxu0
      %v2445 = vadd.f32 %v446, %v2444
      %v2446 = vpop.f32.mrb[0].mxu0
      %2447 = vmatprep.mubr.bf16.mxu0 0
      %2448 = vmatmul.mubr.bf16.gmra.mrb[0].mxu0 %v1462
      %v2449 = vpop.f32.mrb[0].mxu0
      %v2450 = vadd.f32 %v446, %v2449
      %v2451 = vpop.f32.mrb[0].mxu0
      %v2452 = vpop.f32.mrb[0].mxu0
      %v2453 = vadd.f32 %v446, %v2452
      %v2454 = vpop.f32.mrb[0].mxu0
      %2455 = vmatprep.mubr.bf16.mxu0 0
      %2456 = vmatmul.mubr.bf16.gmra.mrb[0].mxu0 %v1465
      %v2457 = vpop.f32.mrb[0].mxu0
      %v2458 = vadd.f32 %v446, %v2457
      %v2459 = vpop.f32.mrb[0].mxu0
      %v2460 = vpop.f32.mrb[0].mxu0
      %v2461 = vadd.f32 %v446, %v2460
      %v2462 = vpop.f32.mrb[0].mxu0
      %2463 = vmatprep.mubr.bf16.mxu0 0
      %2464 = vmatmul.mubr.bf16.gmra.mrb[0].mxu0 %v1468
      %v2465 = vpop.f32.mrb[0].mxu0
      %v2466 = vadd.f32 %v446, %v2465
      %v2467 = vpop.f32.mrb[0].mxu0
      %v2468 = vpop.f32.mrb[0].mxu0
      %v2469 = vadd.f32 %v446, %v2468
      %v2470 = vpop.f32.mrb[0].mxu0
      %2471 = vmatprep.mubr.bf16.mxu0 0
      %2472 = vmatmul.mubr.bf16.gmra.mrb[0].mxu0 %v1471
      %v2473 = vpop.f32.mrb[0].mxu0
      %v2474 = vadd.f32 %v446, %v2473
      %v2475 = vpop.f32.mrb[0].mxu0
      %v2476 = vpop.f32.mrb[0].mxu0
      %v2477 = vadd.f32 %v446, %v2476
      %v2478 = vpop.f32.mrb[0].mxu0
      %2479 = vmatprep.mubr.bf16.mxu0 0
      %2480 = vmatmul.mubr.bf16.gmra.mrb[0].mxu0 %v1474
      %v2481 = vpop.f32.mrb[0].mxu0
      %v2482 = vadd.f32 %v446, %v2481
      %v2483 = vpop.f32.mrb[0].mxu0
      %v2484 = vpop.f32.mrb[0].mxu0
      %v2485 = vadd.f32 %v446, %v2484
      %v2486 = vpop.f32.mrb[0].mxu0
      %2487 = vmatprep.mubr.bf16.mxu0 0
      %2488 = vmatmul.mubr.bf16.gmra.mrb[0].mxu0 %v1477
      %v2489 = vpop.f32.mrb[0].mxu0
      %v2490 = vadd.f32 %v446, %v2489
      %v2491 = vpop.f32.mrb[0].mxu0
      %v2492 = vpop.f32.mrb[0].mxu0
      %v2493 = vadd.f32 %v446, %v2492
      %v2494 = vpop.f32.mrb[0].mxu0
      %2495 = vmatprep.mubr.bf16.mxu0 0
      %2496 = vmatmul.mubr.bf16.gmra.mrb[0].mxu0 %v1480
      %v2497 = vpop.f32.mrb[0].mxu0
      %v2498 = vadd.f32 %v446, %v2497
      %v2499 = vpop.f32.mrb[0].mxu0
      %v2500 = vpop.f32.mrb[0].mxu0
      %v2501 = vadd.f32 %v446, %v2500
      %v2502 = vpop.f32.mrb[0].mxu0
      %2503 = vmatprep.mubr.bf16.mxu0 0
      %2504 = vmatmul.mubr.bf16.gmra.mrb[0].mxu0 %v1483
      %v2505 = vpop.f32.mrb[0].mxu0
      %v2506 = vadd.f32 %v446, %v2505
      %v2507 = vpop.f32.mrb[0].mxu0
      %v2508 = vpop.f32.mrb[0].mxu0
      %v2509 = vadd.f32 %v446, %v2508
      %v2510 = vpop.f32.mrb[0].mxu0
      %2511 = vmatprep.mubr.bf16.mxu0 0
      %2512 = vmatmul.mubr.bf16.gmra.mrb[0].mxu0 %v1486
      %v2513 = vpop.f32.mrb[0].mxu0
      %v2514 = vadd.f32 %v446, %v2513
      %v2515 = vpop.f32.mrb[0].mxu0
      %v2516 = vpop.f32.mrb[0].mxu0
      %v2517 = vadd.f32 %v446, %v2516
      %v2518 = vpop.f32.mrb[0].mxu0
      %2519 = vmatprep.mubr.bf16.mxu0 0
      %2520 = vmatmul.mubr.bf16.gmra.mrb[0].mxu0 %v1489
      %v2521 = vpop.f32.mrb[0].mxu0
      %v2522 = vadd.f32 %v446, %v2521
      %v2523 = vpop.f32.mrb[0].mxu0
      %v2524 = vpop.f32.mrb[0].mxu0
      %v2525 = vadd.f32 %v446, %v2524
      %v2526 = vpop.f32.mrb[0].mxu0
      %2527 = vmatprep.mubr.bf16.mxu0 0
      %2528 = vmatmul.mubr.bf16.gmra.mrb[0].mxu0 %v1492
      %v2529 = vpop.f32.mrb[0].mxu0
      %v2530 = vadd.f32 %v446, %v2529
      %v2531 = vpop.f32.mrb[0].mxu0
      %v2532 = vpop.f32.mrb[0].mxu0
      %v2533 = vadd.f32 %v446, %v2532
      %v2534 = vpop.f32.mrb[0].mxu0
      %2535 = vmatprep.mubr.bf16.mxu0 0
      %2536 = vmatmul.mubr.bf16.gmra.mrb[0].mxu0 %v1495
      %v2537 = vpop.f32.mrb[0].mxu0
      %v2538 = vadd.f32 %v446, %v2537
      %v2539 = vpop.f32.mrb[0].mxu0
      %v2540 = vpop.f32.mrb[0].mxu0
      %v2541 = vadd.f32 %v446, %v2540
      %v2542 = vpop.f32.mrb[0].mxu0
      %2543 = vmatprep.mubr.bf16.mxu0 0
      %2544 = vmatmul.mubr.bf16.gmra.mrb[0].mxu0 %v1498
      %v2545 = vpop.f32.mrb[0].mxu0
      %v2546 = vadd.f32 %v446, %v2545
      %v2547 = vpop.f32.mrb[0].mxu0
      %v2548 = vpop.f32.mrb[0].mxu0
      %v2549 = vadd.f32 %v446, %v2548
      %v2550 = vpop.f32.mrb[0].mxu0
      %2551 = vmatprep.mubr.bf16.mxu0 0
      %2552 = vmatmul.mubr.bf16.gmra.mrb[0].mxu0 %v1501
      %v2553 = vpop.f32.mrb[0].mxu0
      %v2554 = vadd.f32 %v446, %v2553
      %v2555 = vpop.f32.mrb[0].mxu0
      %v2556 = vpop.f32.mrb[0].mxu0
      %v2557 = vadd.f32 %v446, %v2556
      %v2558 = vpop.f32.mrb[0].mxu0
      %2559 = vdwg.mxu0
      %2560 = vst.msk [vmem:[%s172] sm:$0xff] %vm1118, %v1538
      %2561 = vst.msk [vmem:[%s172 + $0x8] sm:$0xff] %vm1118, %v1541
      %2562 = vst.msk [vmem:[%s172 + $0x10] sm:$0xff] %vm1118, %v1546
      %2563 = vst.msk [vmem:[%s172 + $0x18] sm:$0xff] %vm1118, %v1549
      %2564 = vst.msk [vmem:[%s172 + $0x20] sm:$0xff] %vm1118, %v1554
      %2565 = vst.msk [vmem:[%s172 + $0x28] sm:$0xff] %vm1118, %v1557
      %2566 = vst.msk [vmem:[%s172 + $0x30] sm:$0xff] %vm1118, %v1562
      %2567 = vst.msk [vmem:[%s172 + $0x38] sm:$0xff] %vm1118, %v1565
      %2568 = vst.msk [vmem:[%s172 + $0x40] sm:$0xff] %vm1118, %v1570
      %2569 = vst.msk [vmem:[%s172 + $0x48] sm:$0xff] %vm1118, %v1573
      %2570 = vst.msk [vmem:[%s172 + $0x50] sm:$0xff] %vm1118, %v1578
      %2571 = vst.msk [vmem:[%s172 + $0x58] sm:$0xff] %vm1118, %v1581
      %2572 = vst.msk [vmem:[%s172 + $0x60] sm:$0xff] %vm1118, %v1586
      %2573 = vst.msk [vmem:[%s172 + $0x68] sm:$0xff] %vm1118, %v1589
      %2574 = vst.msk [vmem:[%s172 + $0x70] sm:$0xff] %vm1118, %v1594
      %2575 = vst.msk [vmem:[%s172 + $0x78] sm:$0xff] %vm1118, %v1597
      %2576 = vst.msk [vmem:[%s172 + $0x80] sm:$0xff] %vm1118, %v1602
      %2577 = vst.msk [vmem:[%s172 + $0x88] sm:$0xff] %vm1118, %v1605
      %2578 = vst.msk [vmem:[%s172 + $0x90] sm:$0xff] %vm1118, %v1610
      %2579 = vst.msk [vmem:[%s172 + $0x98] sm:$0xff] %vm1118, %v1613
      %2580 = vst.msk [vmem:[%s172 + $0xa0] sm:$0xff] %vm1118, %v1618
      %2581 = vst.msk [vmem:[%s172 + $0xa8] sm:$0xff] %vm1118, %v1621
      %2582 = vst.msk [vmem:[%s172 + $0xb0] sm:$0xff] %vm1118, %v1626
      %2583 = vst.msk [vmem:[%s172 + $0xb8] sm:$0xff] %vm1118, %v1629
      %2584 = vst.msk [vmem:[%s172 + $0xc0] sm:$0xff] %vm1118, %v1634
      %2585 = vst.msk [vmem:[%s172 + $0xc8] sm:$0xff] %vm1118, %v1637
      %2586 = vst.msk [vmem:[%s172 + $0xd0] sm:$0xff] %vm1118, %v1642
      %2587 = vst.msk [vmem:[%s172 + $0xd8] sm:$0xff] %vm1118, %v1645
      %2588 = vst.msk [vmem:[%s172 + $0xe0] sm:$0xff] %vm1118, %v1650
      %2589 = vst.msk [vmem:[%s172 + $0xe8] sm:$0xff] %vm1118, %v1653
      %2590 = vst.msk [vmem:[%s172 + $0xf0] sm:$0xff] %vm1118, %v1658
      %2591 = vst.msk [vmem:[%s172 + $0xf8] sm:$0xff] %vm1118, %v1661
      %2592 = vst.msk [vmem:[%s172 + $0x100] sm:$0xff] %vm1118, %v1666
      %2593 = vst.msk [vmem:[%s172 + $0x108] sm:$0xff] %vm1118, %v1669
      %2594 = vst.msk [vmem:[%s172 + $0x110] sm:$0xff] %vm1118, %v1674
      %2595 = vst.msk [vmem:[%s172 + $0x118] sm:$0xff] %vm1118, %v1677
      %2596 = vst.msk [vmem:[%s172 + $0x120] sm:$0xff] %vm1118, %v1682
      %2597 = vst.msk [vmem:[%s172 + $0x128] sm:$0xff] %vm1118, %v1685
      %2598 = vst.msk [vmem:[%s172 + $0x130] sm:$0xff] %vm1118, %v1690
      %2599 = vst.msk [vmem:[%s172 + $0x138] sm:$0xff] %vm1118, %v1693
      %2600 = vst.msk [vmem:[%s172 + $0x140] sm:$0xff] %vm1118, %v1698
      %2601 = vst.msk [vmem:[%s172 + $0x148] sm:$0xff] %vm1118, %v1701
      %2602 = vst.msk [vmem:[%s172 + $0x150] sm:$0xff] %vm1118, %v1706
      %2603 = vst.msk [vmem:[%s172 + $0x158] sm:$0xff] %vm1118, %v1709
      %2604 = vst.msk [vmem:[%s172 + $0x160] sm:$0xff] %vm1118, %v1714
      %2605 = vst.msk [vmem:[%s172 + $0x168] sm:$0xff] %vm1118, %v1717
      %2606 = vst.msk [vmem:[%s172 + $0x170] sm:$0xff] %vm1118, %v1722
      %2607 = vst.msk [vmem:[%s172 + $0x178] sm:$0xff] %vm1118, %v1725
      %2608 = vst.msk [vmem:[%s172 + $0x180] sm:$0xff] %vm1118, %v1730
      %2609 = vst.msk [vmem:[%s172 + $0x188] sm:$0xff] %vm1118, %v1733
      %2610 = vst.msk [vmem:[%s172 + $0x190] sm:$0xff] %vm1118, %v1738
      %2611 = vst.msk [vmem:[%s172 + $0x198] sm:$0xff] %vm1118, %v1741
      %2612 = vst.msk [vmem:[%s172 + $0x1a0] sm:$0xff] %vm1118, %v1746
      %2613 = vst.msk [vmem:[%s172 + $0x1a8] sm:$0xff] %vm1118, %v1749
      %2614 = vst.msk [vmem:[%s172 + $0x1b0] sm:$0xff] %vm1118, %v1754
      %2615 = vst.msk [vmem:[%s172 + $0x1b8] sm:$0xff] %vm1118, %v1757
      %2616 = vst.msk [vmem:[%s172 + $0x1c0] sm:$0xff] %vm1118, %v1762
      %2617 = vst.msk [vmem:[%s172 + $0x1c8] sm:$0xff] %vm1118, %v1765
      %2618 = vst.msk [vmem:[%s172 + $0x1d0] sm:$0xff] %vm1118, %v1770
      %2619 = vst.msk [vmem:[%s172 + $0x1d8] sm:$0xff] %vm1118, %v1773
      %2620 = vst.msk [vmem:[%s172 + $0x1e0] sm:$0xff] %vm1118, %v1778
      %2621 = vst.msk [vmem:[%s172 + $0x1e8] sm:$0xff] %vm1118, %v1781
      %2622 = vst.msk [vmem:[%s172 + $0x1f0] sm:$0xff] %vm1118, %v1786
      %2623 = vst.msk [vmem:[%s172 + $0x1f8] sm:$0xff] %vm1118, %v1789
      %2624 = vst.msk [vmem:[%s172 + $0x200] sm:$0xff] %vm1118, %v1794
      %2625 = vst.msk [vmem:[%s172 + $0x208] sm:$0xff] %vm1118, %v1797
      %2626 = vst.msk [vmem:[%s172 + $0x210] sm:$0xff] %vm1118, %v1802
      %2627 = vst.msk [vmem:[%s172 + $0x218] sm:$0xff] %vm1118, %v1805
      %2628 = vst.msk [vmem:[%s172 + $0x220] sm:$0xff] %vm1118, %v1810
      %2629 = vst.msk [vmem:[%s172 + $0x228] sm:$0xff] %vm1118, %v1813
      %2630 = vst.msk [vmem:[%s172 + $0x230] sm:$0xff] %vm1118, %v1818
      %2631 = vst.msk [vmem:[%s172 + $0x238] sm:$0xff] %vm1118, %v1821
      %2632 = vst.msk [vmem:[%s172 + $0x240] sm:$0xff] %vm1118, %v1826
      %2633 = vst.msk [vmem:[%s172 + $0x248] sm:$0xff] %vm1118, %v1829
      %2634 = vst.msk [vmem:[%s172 + $0x250] sm:$0xff] %vm1118, %v1834
      %2635 = vst.msk [vmem:[%s172 + $0x258] sm:$0xff] %vm1118, %v1837
      %2636 = vst.msk [vmem:[%s172 + $0x260] sm:$0xff] %vm1118, %v1842
      %2637 = vst.msk [vmem:[%s172 + $0x268] sm:$0xff] %vm1118, %v1845
      %2638 = vst.msk [vmem:[%s172 + $0x270] sm:$0xff] %vm1118, %v1850
      %2639 = vst.msk [vmem:[%s172 + $0x278] sm:$0xff] %vm1118, %v1853
      %2640 = vst.msk [vmem:[%s172 + $0x280] sm:$0xff] %vm1118, %v1858
      %2641 = vst.msk [vmem:[%s172 + $0x288] sm:$0xff] %vm1118, %v1861
      %2642 = vst.msk [vmem:[%s172 + $0x290] sm:$0xff] %vm1118, %v1866
      %2643 = vst.msk [vmem:[%s172 + $0x298] sm:$0xff] %vm1118, %v1869
      %2644 = vst.msk [vmem:[%s172 + $0x2a0] sm:$0xff] %vm1118, %v1874
      %2645 = vst.msk [vmem:[%s172 + $0x2a8] sm:$0xff] %vm1118, %v1877
      %2646 = vst.msk [vmem:[%s172 + $0x2b0] sm:$0xff] %vm1118, %v1882
      %2647 = vst.msk [vmem:[%s172 + $0x2b8] sm:$0xff] %vm1118, %v1885
      %2648 = vst.msk [vmem:[%s172 + $0x2c0] sm:$0xff] %vm1118, %v1890
      %2649 = vst.msk [vmem:[%s172 + $0x2c8] sm:$0xff] %vm1118, %v1893
      %2650 = vst.msk [vmem:[%s172 + $0x2d0] sm:$0xff] %vm1118, %v1898
      %2651 = vst.msk [vmem:[%s172 + $0x2d8] sm:$0xff] %vm1118, %v1901
      %2652 = vst.msk [vmem:[%s172 + $0x2e0] sm:$0xff] %vm1118, %v1906
      %2653 = vst.msk [vmem:[%s172 + $0x2e8] sm:$0xff] %vm1118, %v1909
      %2654 = vst.msk [vmem:[%s172 + $0x2f0] sm:$0xff] %vm1118, %v1914
      %2655 = vst.msk [vmem:[%s172 + $0x2f8] sm:$0xff] %vm1118, %v1917
      %2656 = vst.msk [vmem:[%s172 + $0x300] sm:$0xff] %vm1118, %v1922
      %2657 = vst.msk [vmem:[%s172 + $0x308] sm:$0xff] %vm1118, %v1925
      %2658 = vst.msk [vmem:[%s172 + $0x310] sm:$0xff] %vm1118, %v1930
      %2659 = vst.msk [vmem:[%s172 + $0x318] sm:$0xff] %vm1118, %v1933
      %2660 = vst.msk [vmem:[%s172 + $0x320] sm:$0xff] %vm1118, %v1938
      %2661 = vst.msk [vmem:[%s172 + $0x328] sm:$0xff] %vm1118, %v1941
      %2662 = vst.msk [vmem:[%s172 + $0x330] sm:$0xff] %vm1118, %v1946
      %2663 = vst.msk [vmem:[%s172 + $0x338] sm:$0xff] %vm1118, %v1949
      %2664 = vst.msk [vmem:[%s172 + $0x340] sm:$0xff] %vm1118, %v1954
      %2665 = vst.msk [vmem:[%s172 + $0x348] sm:$0xff] %vm1118, %v1957
      %2666 = vst.msk [vmem:[%s172 + $0x350] sm:$0xff] %vm1118, %v1962
      %2667 = vst.msk [vmem:[%s172 + $0x358] sm:$0xff] %vm1118, %v1965
      %2668 = vst.msk [vmem:[%s172 + $0x360] sm:$0xff] %vm1118, %v1970
      %2669 = vst.msk [vmem:[%s172 + $0x368] sm:$0xff] %vm1118, %v1973
      %2670 = vst.msk [vmem:[%s172 + $0x370] sm:$0xff] %vm1118, %v1978
      %2671 = vst.msk [vmem:[%s172 + $0x378] sm:$0xff] %vm1118, %v1981
      %2672 = vst.msk [vmem:[%s172 + $0x380] sm:$0xff] %vm1118, %v1986
      %2673 = vst.msk [vmem:[%s172 + $0x388] sm:$0xff] %vm1118, %v1989
      %2674 = vst.msk [vmem:[%s172 + $0x390] sm:$0xff] %vm1118, %v1994
      %2675 = vst.msk [vmem:[%s172 + $0x398] sm:$0xff] %vm1118, %v1997
      %2676 = vst.msk [vmem:[%s172 + $0x3a0] sm:$0xff] %vm1118, %v2002
      %2677 = vst.msk [vmem:[%s172 + $0x3a8] sm:$0xff] %vm1118, %v2005
      %2678 = vst.msk [vmem:[%s172 + $0x3b0] sm:$0xff] %vm1118, %v2010
      %2679 = vst.msk [vmem:[%s172 + $0x3b8] sm:$0xff] %vm1118, %v2013
      %2680 = vst.msk [vmem:[%s172 + $0x3c0] sm:$0xff] %vm1118, %v2018
      %2681 = vst.msk [vmem:[%s172 + $0x3c8] sm:$0xff] %vm1118, %v2021
      %2682 = vst.msk [vmem:[%s172 + $0x3d0] sm:$0xff] %vm1118, %v2026
      %2683 = vst.msk [vmem:[%s172 + $0x3d8] sm:$0xff] %vm1118, %v2029
      %2684 = vst.msk [vmem:[%s172 + $0x3e0] sm:$0xff] %vm1118, %v2034
      %2685 = vst.msk [vmem:[%s172 + $0x3e8] sm:$0xff] %vm1118, %v2037
      %2686 = vst.msk [vmem:[%s172 + $0x3f0] sm:$0xff] %vm1118, %v2042
      %2687 = vst.msk [vmem:[%s172 + $0x3f8] sm:$0xff] %vm1118, %v2045
      %2688 = vst.msk [vmem:[%s172 + $0x400] sm:$0xff] %vm1118, %v2050
      %2689 = vst.msk [vmem:[%s172 + $0x408] sm:$0xff] %vm1118, %v2053
      %2690 = vst.msk [vmem:[%s172 + $0x410] sm:$0xff] %vm1118, %v2058
      %2691 = vst.msk [vmem:[%s172 + $0x418] sm:$0xff] %vm1118, %v2061
      %2692 = vst.msk [vmem:[%s172 + $0x420] sm:$0xff] %vm1118, %v2066
      %2693 = vst.msk [vmem:[%s172 + $0x428] sm:$0xff] %vm1118, %v2069
      %2694 = vst.msk [vmem:[%s172 + $0x430] sm:$0xff] %vm1118, %v2074
      %2695 = vst.msk [vmem:[%s172 + $0x438] sm:$0xff] %vm1118, %v2077
      %2696 = vst.msk [vmem:[%s172 + $0x440] sm:$0xff] %vm1118, %v2082
      %2697 = vst.msk [vmem:[%s172 + $0x448] sm:$0xff] %vm1118, %v2085
      %2698 = vst.msk [vmem:[%s172 + $0x450] sm:$0xff] %vm1118, %v2090
      %2699 = vst.msk [vmem:[%s172 + $0x458] sm:$0xff] %vm1118, %v2093
      %2700 = vst.msk [vmem:[%s172 + $0x460] sm:$0xff] %vm1118, %v2098
      %2701 = vst.msk [vmem:[%s172 + $0x468] sm:$0xff] %vm1118, %v2101
      %2702 = vst.msk [vmem:[%s172 + $0x470] sm:$0xff] %vm1118, %v2106
      %2703 = vst.msk [vmem:[%s172 + $0x478] sm:$0xff] %vm1118, %v2109
      %2704 = vst.msk [vmem:[%s172 + $0x480] sm:$0xff] %vm1118, %v2114
      %2705 = vst.msk [vmem:[%s172 + $0x488] sm:$0xff] %vm1118, %v2117
      %2706 = vst.msk [vmem:[%s172 + $0x490] sm:$0xff] %vm1118, %v2122
      %2707 = vst.msk [vmem:[%s172 + $0x498] sm:$0xff] %vm1118, %v2125
      %2708 = vst.msk [vmem:[%s172 + $0x4a0] sm:$0xff] %vm1118, %v2130
      %2709 = vst.msk [vmem:[%s172 + $0x4a8] sm:$0xff] %vm1118, %v2133
      %2710 = vst.msk [vmem:[%s172 + $0x4b0] sm:$0xff] %vm1118, %v2138
      %2711 = vst.msk [vmem:[%s172 + $0x4b8] sm:$0xff] %vm1118, %v2141
      %2712 = vst.msk [vmem:[%s172 + $0x4c0] sm:$0xff] %vm1118, %v2146
      %2713 = vst.msk [vmem:[%s172 + $0x4c8] sm:$0xff] %vm1118, %v2149
      %2714 = vst.msk [vmem:[%s172 + $0x4d0] sm:$0xff] %vm1118, %v2154
      %2715 = vst.msk [vmem:[%s172 + $0x4d8] sm:$0xff] %vm1118, %v2157
      %2716 = vst.msk [vmem:[%s172 + $0x4e0] sm:$0xff] %vm1118, %v2162
      %2717 = vst.msk [vmem:[%s172 + $0x4e8] sm:$0xff] %vm1118, %v2165
      %2718 = vst.msk [vmem:[%s172 + $0x4f0] sm:$0xff] %vm1118, %v2170
      %2719 = vst.msk [vmem:[%s172 + $0x4f8] sm:$0xff] %vm1118, %v2173
      %2720 = vst.msk [vmem:[%s172 + $0x500] sm:$0xff] %vm1118, %v2178
      %2721 = vst.msk [vmem:[%s172 + $0x508] sm:$0xff] %vm1118, %v2181
      %2722 = vst.msk [vmem:[%s172 + $0x510] sm:$0xff] %vm1118, %v2186
      %2723 = vst.msk [vmem:[%s172 + $0x518] sm:$0xff] %vm1118, %v2189
      %2724 = vst.msk [vmem:[%s172 + $0x520] sm:$0xff] %vm1118, %v2194
      %2725 = vst.msk [vmem:[%s172 + $0x528] sm:$0xff] %vm1118, %v2197
      %2726 = vst.msk [vmem:[%s172 + $0x530] sm:$0xff] %vm1118, %v2202
      %2727 = vst.msk [vmem:[%s172 + $0x538] sm:$0xff] %vm1118, %v2205
      %2728 = vst.msk [vmem:[%s172 + $0x540] sm:$0xff] %vm1118, %v2210
      %2729 = vst.msk [vmem:[%s172 + $0x548] sm:$0xff] %vm1118, %v2213
      %2730 = vst.msk [vmem:[%s172 + $0x550] sm:$0xff] %vm1118, %v2218
      %2731 = vst.msk [vmem:[%s172 + $0x558] sm:$0xff] %vm1118, %v2221
      %2732 = vst.msk [vmem:[%s172 + $0x560] sm:$0xff] %vm1118, %v2226
      %2733 = vst.msk [vmem:[%s172 + $0x568] sm:$0xff] %vm1118, %v2229
      %2734 = vst.msk [vmem:[%s172 + $0x570] sm:$0xff] %vm1118, %v2234
      %2735 = vst.msk [vmem:[%s172 + $0x578] sm:$0xff] %vm1118, %v2237
      %2736 = vst.msk [vmem:[%s172 + $0x580] sm:$0xff] %vm1118, %v2242
      %2737 = vst.msk [vmem:[%s172 + $0x588] sm:$0xff] %vm1118, %v2245
      %2738 = vst.msk [vmem:[%s172 + $0x590] sm:$0xff] %vm1118, %v2250
      %2739 = vst.msk [vmem:[%s172 + $0x598] sm:$0xff] %vm1118, %v2253
      %2740 = vst.msk [vmem:[%s172 + $0x5a0] sm:$0xff] %vm1118, %v2258
      %2741 = vst.msk [vmem:[%s172 + $0x5a8] sm:$0xff] %vm1118, %v2261
      %2742 = vst.msk [vmem:[%s172 + $0x5b0] sm:$0xff] %vm1118, %v2266
      %2743 = vst.msk [vmem:[%s172 + $0x5b8] sm:$0xff] %vm1118, %v2269
      %2744 = vst.msk [vmem:[%s172 + $0x5c0] sm:$0xff] %vm1118, %v2274
      %2745 = vst.msk [vmem:[%s172 + $0x5c8] sm:$0xff] %vm1118, %v2277
      %2746 = vst.msk [vmem:[%s172 + $0x5d0] sm:$0xff] %vm1118, %v2282
      %2747 = vst.msk [vmem:[%s172 + $0x5d8] sm:$0xff] %vm1118, %v2285
      %2748 = vst.msk [vmem:[%s172 + $0x5e0] sm:$0xff] %vm1118, %v2290
      %2749 = vst.msk [vmem:[%s172 + $0x5e8] sm:$0xff] %vm1118, %v2293
      %2750 = vst.msk [vmem:[%s172 + $0x5f0] sm:$0xff] %vm1118, %v2298
      %2751 = vst.msk [vmem:[%s172 + $0x5f8] sm:$0xff] %vm1118, %v2301
      %2752 = vst.msk [vmem:[%s172 + $0x600] sm:$0xff] %vm1118, %v2306
      %2753 = vst.msk [vmem:[%s172 + $0x608] sm:$0xff] %vm1118, %v2309
      %2754 = vst.msk [vmem:[%s172 + $0x610] sm:$0xff] %vm1118, %v2314
      %2755 = vst.msk [vmem:[%s172 + $0x618] sm:$0xff] %vm1118, %v2317
      %2756 = vst.msk [vmem:[%s172 + $0x620] sm:$0xff] %vm1118, %v2322
      %2757 = vst.msk [vmem:[%s172 + $0x628] sm:$0xff] %vm1118, %v2325
      %2758 = vst.msk [vmem:[%s172 + $0x630] sm:$0xff] %vm1118, %v2330
      %2759 = vst.msk [vmem:[%s172 + $0x638] sm:$0xff] %vm1118, %v2333
      %2760 = vst.msk [vmem:[%s172 + $0x640] sm:$0xff] %vm1118, %v2338
      %2761 = vst.msk [vmem:[%s172 + $0x648] sm:$0xff] %vm1118, %v2341
      %2762 = vst.msk [vmem:[%s172 + $0x650] sm:$0xff] %vm1118, %v2346
      %2763 = vst.msk [vmem:[%s172 + $0x658] sm:$0xff] %vm1118, %v2349
      %2764 = vst.msk [vmem:[%s172 + $0x660] sm:$0xff] %vm1118, %v2354
      %2765 = vst.msk [vmem:[%s172 + $0x668] sm:$0xff] %vm1118, %v2357
      %2766 = vst.msk [vmem:[%s172 + $0x670] sm:$0xff] %vm1118, %v2362
      %2767 = vst.msk [vmem:[%s172 + $0x678] sm:$0xff] %vm1118, %v2365
      %2768 = vst.msk [vmem:[%s172 + $0x680] sm:$0xff] %vm1118, %v2370
      %2769 = vst.msk [vmem:[%s172 + $0x688] sm:$0xff] %vm1118, %v2373
      %2770 = vst.msk [vmem:[%s172 + $0x690] sm:$0xff] %vm1118, %v2378
      %2771 = vst.msk [vmem:[%s172 + $0x698] sm:$0xff] %vm1118, %v2381
      %2772 = vst.msk [vmem:[%s172 + $0x6a0] sm:$0xff] %vm1118, %v2386
      %2773 = vst.msk [vmem:[%s172 + $0x6a8] sm:$0xff] %vm1118, %v2389
      %2774 = vst.msk [vmem:[%s172 + $0x6b0] sm:$0xff] %vm1118, %v2394
      %2775 = vst.msk [vmem:[%s172 + $0x6b8] sm:$0xff] %vm1118, %v2397
      %2776 = vst.msk [vmem:[%s172 + $0x6c0] sm:$0xff] %vm1118, %v2402
      %2777 = vst.msk [vmem:[%s172 + $0x6c8] sm:$0xff] %vm1118, %v2405
      %2778 = vst.msk [vmem:[%s172 + $0x6d0] sm:$0xff] %vm1118, %v2410
      %2779 = vst.msk [vmem:[%s172 + $0x6d8] sm:$0xff] %vm1118, %v2413
      %2780 = vst.msk [vmem:[%s172 + $0x6e0] sm:$0xff] %vm1118, %v2418
      %2781 = vst.msk [vmem:[%s172 + $0x6e8] sm:$0xff] %vm1118, %v2421
      %2782 = vst.msk [vmem:[%s172 + $0x6f0] sm:$0xff] %vm1118, %v2426
      %2783 = vst.msk [vmem:[%s172 + $0x6f8] sm:$0xff] %vm1118, %v2429
      %2784 = vst.msk [vmem:[%s172 + $0x700] sm:$0xff] %vm1118, %v2434
      %2785 = vst.msk [vmem:[%s172 + $0x708] sm:$0xff] %vm1118, %v2437
      %2786 = vst.msk [vmem:[%s172 + $0x710] sm:$0xff] %vm1118, %v2442
      %2787 = vst.msk [vmem:[%s172 + $0x718] sm:$0xff] %vm1118, %v2445
      %2788 = vst.msk [vmem:[%s172 + $0x720] sm:$0xff] %vm1118, %v2450
      %2789 = vst.msk [vmem:[%s172 + $0x728] sm:$0xff] %vm1118, %v2453
      %2790 = vst.msk [vmem:[%s172 + $0x730] sm:$0xff] %vm1118, %v2458
      %2791 = vst.msk [vmem:[%s172 + $0x738] sm:$0xff] %vm1118, %v2461
      %2792 = vst.msk [vmem:[%s172 + $0x740] sm:$0xff] %vm1118, %v2466
      %2793 = vst.msk [vmem:[%s172 + $0x748] sm:$0xff] %vm1118, %v2469
      %2794 = vst.msk [vmem:[%s172 + $0x750] sm:$0xff] %vm1118, %v2474
      %2795 = vst.msk [vmem:[%s172 + $0x758] sm:$0xff] %vm1118, %v2477
      %2796 = vst.msk [vmem:[%s172 + $0x760] sm:$0xff] %vm1118, %v2482
      %2797 = vst.msk [vmem:[%s172 + $0x768] sm:$0xff] %vm1118, %v2485
      %2798 = vst.msk [vmem:[%s172 + $0x770] sm:$0xff] %vm1118, %v2490
      %2799 = vst.msk [vmem:[%s172 + $0x778] sm:$0xff] %vm1118, %v2493
      %2800 = vst.msk [vmem:[%s172 + $0x780] sm:$0xff] %vm1118, %v2498
      %2801 = vst.msk [vmem:[%s172 + $0x788] sm:$0xff] %vm1118, %v2501
      %2802 = vst.msk [vmem:[%s172 + $0x790] sm:$0xff] %vm1118, %v2506
      %2803 = vst.msk [vmem:[%s172 + $0x798] sm:$0xff] %vm1118, %v2509
      %2804 = vst.msk [vmem:[%s172 + $0x7a0] sm:$0xff] %vm1118, %v2514
      %2805 = vst.msk [vmem:[%s172 + $0x7a8] sm:$0xff] %vm1118, %v2517
      %2806 = vst.msk [vmem:[%s172 + $0x7b0] sm:$0xff] %vm1118, %v2522
      %2807 = vst.msk [vmem:[%s172 + $0x7b8] sm:$0xff] %vm1118, %v2525
      %2808 = vst.msk [vmem:[%s172 + $0x7c0] sm:$0xff] %vm1118, %v2530
      %2809 = vst.msk [vmem:[%s172 + $0x7c8] sm:$0xff] %vm1118, %v2533
      %2810 = vst.msk [vmem:[%s172 + $0x7d0] sm:$0xff] %vm1118, %v2538
      %2811 = vst.msk [vmem:[%s172 + $0x7d8] sm:$0xff] %vm1118, %v2541
      %2812 = vst.msk [vmem:[%s172 + $0x7e0] sm:$0xff] %vm1118, %v2546
      %2813 = vst.msk [vmem:[%s172 + $0x7e8] sm:$0xff] %vm1118, %v2549
      %2814 = vst.msk [vmem:[%s172 + $0x7f0] sm:$0xff] %vm1118, %v2554
      %2815 = vst.msk [vmem:[%s172 + $0x7f8] sm:$0xff] %vm1118, %v2557
      %s2816 = smul.u32 256, %s14
      %p2817 = scmp.lt.s32.totalorder %s2816, 5119
      %s2818 = scalar_select %p2817, %s2816, 5119
      %s2819 = smul.addr %s2818, 8
      %s2820 = scalar_lea.vmem %s3, %s2819
      // Predicated region
      $region33: #{very_small_decoder_forward.8} parent=31 // pred_check
        %p2821 = pneg %p100
      $region34: #{very_small_decoder_forward.8} parent=31 // pred_check_branch
        %2823 = sbr.rel (%p2821) target = $region36
      $region35: #{very_small_decoder_forward.8} parent=31 // pred_region
        %s2824 = smul.u32 256, %s14
      $region36: #{very_small_decoder_forward.8} parent=31 // pred_fallthru
        _
    $region32: #{very_small_decoder_forward.8} parent=5 // pred_fallthru
      _
    %p2825 = scmp.le.s32.totalorder 2, %s9
    // Predicated region
    $region37: #{very_small_decoder_forward.8} parent=5 // pred_check
      %p2826 = pneg %p2825
    $region38: #{very_small_decoder_forward.8} parent=5 // pred_check_branch
      %2828 = sbr.rel (%p2826) target = $region40
    $region39: #{very_small_decoder_forward.8} parent=5 // pred_region
      %s2829 = ssub.s32 %s9, 2
      // Predicated region
      $region41: #{very_small_decoder_forward.8} parent=39 // pred_check
        %p2830 = pneg %p106
      $region42: #{very_small_decoder_forward.8} parent=39 // pred_check_branch
        %2832 = sbr.rel (%p2830) target = $region44
      $region43: #{very_small_decoder_forward.8} parent=39 // pred_region
        %s2833 = smul.u32 256, %s15
        %p2834 = scmp.lt.s32.totalorder %s2833, 5119
        %s2835 = scalar_select %p2834, %s2833, 5119
        %s2836 = smul.addr %s2835, 8
        %s2837 = scalar_lea.vmem %s3, %s2836
      $region44: #{very_small_decoder_forward.8} parent=39 // pred_fallthru
        _
    $region40: #{very_small_decoder_forward.8} parent=5 // pred_fallthru
      _
  $region6: #{very_small_decoder_forward.8} parent=0 // loop_footer
    %s13 = sadd.s32 1, %s9
  $region7: #{very_small_decoder_forward.8} parent=0 // loop_footer_branch
    %8 = sbr.rel target = $region3
  $region8: #{very_small_decoder_forward.8} parent=0 // loop_exit
    _

// kernel: very_small_decoder_forward.9
$region0: #{very_small_decoder_forward.9}
  #allocation0 [shape = 'u32[]', space=smem, size = 0x4, offset = 0x4, fixed_abs, tag = 'smem constant byte address 0x4 - core index']
  #allocation1 [shape = 'u32[144,128]{1,0:T(1,128)}', space=vmem, size = 0x12000, scoped, tag = 'internal scratch']
  %s0 = inlined_call_operand.vmem [shape: bf16[40960,96], index: 0, kind: input, shape index: {}]
  %s1 = inlined_call_operand.vmem [shape: bf16[96,8], index: 1, kind: input, shape index: {}]
  %s2 = inlined_call_operand.vmem [shape: f32[1,8], index: 2, kind: input, shape index: {}]
  %s3 = inlined_call_operand.vmem [shape: f32[40960,8], index: 3, kind: output, shape index: {}]
  %s4 = sld [smem:[#allocation0]]
  $region45: #{very_small_decoder_forward.9} parent=0
    _
  %s6 = ssub.s32 1, %s4
  %s7 = scalar_select 0, %s6, %s4
  loop: start=0, step=1, limit=22
  $region2: #{very_small_decoder_forward.9} parent=0 // loop_pre_header
    _
  $region3: #{very_small_decoder_forward.9} parent=0 // loop_header
    %s9 = sphi 0, %s13
    %p10 = scmp.ge.s32.totalorder %s9, 22
    %s19 = sphi 0, %s21
    %s22 = sphi 0, %s19
    %s23 = sphi 0, %s22
    %s39 = sphi 0, %s23
    %s43 = sphi 0, %s43
    %s45 = sphi 0, %s43
    %s46 = sphi 0, %s45
    %s60 = sphi 0, %s46
    %s64 = sphi 0, %s64
    %s66 = sphi 0, %s64
    %s67 = sphi 0, %s66
    %s81 = sphi 0, %s67
    %s87 = sphi 0, %s89
    %s90 = sphi 0, %s87
    %s91 = sphi 0, %s90
    %s107 = sphi 0, %s91
  $region4: #{very_small_decoder_forward.9} parent=0 // loop_header_branch
    %12 = sbr.rel (%p10) target = $region8
  $region5: #{very_small_decoder_forward.9} parent=0 // loop_body
    %s14 = ssub.s32 %s9, 1
    %s15 = ssub.s32 %s9, 2
    %s16 = sadd.s32 %s9, 1
    %s17 = ssub.s32 %s9, %s16
    %p18 = scmp.eq.s32.totalorder %s17, 0
    %s20 = sadd.s32 %s19, 1
    %s21 = scalar_select %p18, %s19, %s20
    %p24 = pneg %p18
    %p25 = scmp.eq.s32.totalorder %s9, 19
    %p26 = por %p24, %p25
    %p27 = scmp.ne.s32.totalorder %s19, %s22
    %p28 = scmp.eq.s32.totalorder %s9, 0
    %p29 = por %p27, %p28
    %p30 = scmp.ne.s32.totalorder %s19, %s22
    %p31 = scmp.eq.s32.totalorder %s14, 19
    %p32 = por %p30, %p31
    %p33 = scmp.ne.s32.totalorder %s22, %s23
    %p34 = scmp.eq.s32.totalorder %s14, 0
    %p35 = por %p33, %p34
    %p36 = scmp.ne.s32.totalorder %s22, %s23
    %p37 = scmp.eq.s32.totalorder %s15, 19
    %p38 = por %p36, %p37
    %p40 = scmp.ne.s32.totalorder %s23, %s39
    %p41 = scmp.eq.s32.totalorder %s15, 0
    %p42 = por %p40, %p41
    %s44 = sadd.s32 %s43, 1
    %p47 = scmp.eq.s32.totalorder %s9, 19
    %p48 = scmp.ne.s32.totalorder %s43, %s45
    %p49 = scmp.eq.s32.totalorder %s9, 0
    %p50 = por %p48, %p49
    %p51 = scmp.ne.s32.totalorder %s43, %s45
    %p52 = scmp.eq.s32.totalorder %s14, 19
    %p53 = por %p51, %p52
    %p54 = scmp.ne.s32.totalorder %s45, %s46
    %p55 = scmp.eq.s32.totalorder %s14, 0
    %p56 = por %p54, %p55
    %p57 = scmp.ne.s32.totalorder %s45, %s46
    %p58 = scmp.eq.s32.totalorder %s15, 19
    %p59 = por %p57, %p58
    %p61 = scmp.ne.s32.totalorder %s46, %s60
    %p62 = scmp.eq.s32.totalorder %s15, 0
    %p63 = por %p61, %p62
    %s65 = sadd.s32 %s64, 1
    %p68 = scmp.eq.s32.totalorder %s9, 19
    %p69 = scmp.ne.s32.totalorder %s64, %s66
    %p70 = scmp.eq.s32.totalorder %s9, 0
    %p71 = por %p69, %p70
    %p72 = scmp.ne.s32.totalorder %s64, %s66
    %p73 = scmp.eq.s32.totalorder %s14, 19
    %p74 = por %p72, %p73
    %p75 = scmp.ne.s32.totalorder %s66, %s67
    %p76 = scmp.eq.s32.totalorder %s14, 0
    %p77 = por %p75, %p76
    %p78 = scmp.ne.s32.totalorder %s66, %s67
    %p79 = scmp.eq.s32.totalorder %s15, 19
    %p80 = por %p78, %p79
    %p82 = scmp.ne.s32.totalorder %s67, %s81
    %p83 = scmp.eq.s32.totalorder %s15, 0
    %p84 = por %p82, %p83
    %s85 = ssub.s32 %s9, %s16
    %p86 = scmp.eq.s32.totalorder %s85, 0
    %s88 = sadd.s32 %s87, 1
    %s89 = scalar_select %p86, %s87, %s88
    %p92 = pneg %p86
    %p93 = scmp.eq.s32.totalorder %s9, 19
    %p94 = por %p92, %p93
    %p95 = scmp.ne.s32.totalorder %s87, %s90
    %p96 = scmp.eq.s32.totalorder %s9, 0
    %p97 = por %p95, %p96
    %p98 = scmp.ne.s32.totalorder %s87, %s90
    %p99 = scmp.eq.s32.totalorder %s14, 19
    %p100 = por %p98, %p99
    %p101 = scmp.ne.s32.totalorder %s90, %s91
    %p102 = scmp.eq.s32.totalorder %s14, 0
    %p103 = por %p101, %p102
    %p104 = scmp.ne.s32.totalorder %s90, %s91
    %p105 = scmp.eq.s32.totalorder %s15, 19
    %p106 = por %p104, %p105
    %p108 = scmp.ne.s32.totalorder %s91, %s107
    %p109 = scmp.eq.s32.totalorder %s15, 0
    %p110 = por %p108, %p109
    %p111 = scmp.le.s32.totalorder 1, %s9
    %p112 = scmp.lt.s32.totalorder %s9, 21
    %p113 = pnand %p111, %p112
    %p114 = pneg %p113
    // Predicated region
    $region9: #{very_small_decoder_forward.9} parent=5 // pred_check
      _
    $region10: #{very_small_decoder_forward.9} parent=5 // pred_check_branch
      %116 = sbr.rel (%p113) target = $region12
    $region11: #{very_small_decoder_forward.9} parent=5 // pred_region
      %s117 = ssub.s32 %s9, 1
      // Predicated region
      $region13: #{very_small_decoder_forward.9} parent=11 // pred_check
        %p118 = pneg %p56
      $region14: #{very_small_decoder_forward.9} parent=11 // pred_check_branch
        %120 = sbr.rel (%p118) target = $region16
      $region15: #{very_small_decoder_forward.9} parent=11 // pred_region
        _
      $region16: #{very_small_decoder_forward.9} parent=11 // pred_fallthru
        _
      // Predicated region
      $region17: #{very_small_decoder_forward.9} parent=11 // pred_check
        %p121 = pneg %p77
      $region18: #{very_small_decoder_forward.9} parent=11 // pred_check_branch
        %123 = sbr.rel (%p121) target = $region20
      $region19: #{very_small_decoder_forward.9} parent=11 // pred_region
        _
      $region20: #{very_small_decoder_forward.9} parent=11 // pred_fallthru
        _
    $region12: #{very_small_decoder_forward.9} parent=5 // pred_fallthru
      _
    %p124 = scmp.lt.s32.totalorder %s9, 20
    // Predicated region
    $region21: #{very_small_decoder_forward.9} parent=5 // pred_check
      %p125 = pneg %p124
    $region22: #{very_small_decoder_forward.9} parent=5 // pred_check_branch
      %127 = sbr.rel (%p125) target = $region24
    $region23: #{very_small_decoder_forward.9} parent=5 // pred_region
      // Predicated region
      $region25: #{very_small_decoder_forward.9} parent=23 // pred_check
        %p128 = pneg %p29
      $region26: #{very_small_decoder_forward.9} parent=23 // pred_check_branch
        %130 = sbr.rel (%p128) target = $region28
      $region27: #{very_small_decoder_forward.9} parent=23 // pred_region
        %s131 = smul.u32 256, %s9
        %p132 = scmp.lt.s32.totalorder %s131, 5119
        %s133 = scalar_select %p132, %s131, 5119
        %s134 = smul.addr %s133, 4
        %s135 = scalar_lea.vmem %s0, %s134
        %s136 = smul.u32 256, %s9
      $region28: #{very_small_decoder_forward.9} parent=23 // pred_fallthru
        _
    $region24: #{very_small_decoder_forward.9} parent=5 // pred_fallthru
      _
    %p137 = scmp.le.s32.totalorder 1, %s9
    %p138 = scmp.lt.s32.totalorder %s9, 21
    %p139 = pnand %p137, %p138
    %p140 = pneg %p139
    // Predicated region
    $region29: #{very_small_decoder_forward.9} parent=5 // pred_check
      _
    $region30: #{very_small_decoder_forward.9} parent=5 // pred_check_branch
      %142 = sbr.rel (%p139) target = $region32
    $region31: #{very_small_decoder_forward.9} parent=5 // pred_region
      %s143 = ssub.s32 %s9, 1
      %s144 = smul.u32 256, %s14
      %p145 = scmp.lt.s32.totalorder %s144, 5119
      %s146 = scalar_select %p145, %s144, 5119
      %s147 = smul.addr %s146, 4
      %s148 = scalar_lea.vmem %s0, %s147
      %p149 = pneg %p35
      %p150 = pneg %p32
      %p151 = pneg %p56
      %p152 = pneg %p53
      %p153 = pneg %p77
      %p154 = pneg %p74
      %p155 = pneg %p103
      %p156 = pneg %p100
      %s157 = smul.u32 256, %s14
      %p158 = scmp.lt.s32.totalorder %s157, 5119
      %s159 = scalar_select %p158, %s157, 5119
      %s160 = smul.addr %s159, 8
      %s161 = scalar_lea.vmem %s3, %s160
      %s162 = smul.u32 256, %s14
      %p163 = scmp.lt.s32.totalorder %s162, 5119
      %s164 = scalar_select %p163, %s162, 5119
      %s165 = smul.addr %s164, 4
      %s166 = scalar_lea.vmem %s0, %s165
      %s167 = smul.u32 256, %s14
      %s168 = smul.u32 256, %s14
      %p169 = scmp.lt.s32.totalorder %s168, 5119
      %s170 = scalar_select %p169, %s168, 5119
      %s171 = smul.addr %s170, 8
      %s172 = scalar_lea.vmem %s3, %s171
      %s173 = smul.u32 256, %s14
      %v175 = vld [vmem:[%s166] sm:$0xf]
      %v176 = vld [vmem:[%s166 + $0x4] sm:$0xf]
      %v177 = vld [vmem:[%s166 + $0x8] sm:$0xf]
      %v178 = vld [vmem:[%s166 + $0xc] sm:$0xf]
      %v179 = vld [vmem:[%s166 + $0x10] sm:$0xf]
      %v180 = vld [vmem:[%s166 + $0x14] sm:$0xf]
      %v181 = vld [vmem:[%s166 + $0x18] sm:$0xf]
      %v182 = vld [vmem:[%s166 + $0x1c] sm:$0xf]
      %v183 = vld [vmem:[%s166 + $0x20] sm:$0xf]
      %v184 = vld [vmem:[%s166 + $0x24] sm:$0xf]
      %v185 = vld [vmem:[%s166 + $0x28] sm:$0xf]
      %v186 = vld [vmem:[%s166 + $0x2c] sm:$0xf]
      %v187 = vld [vmem:[%s166 + $0x30] sm:$0xf]
      %v188 = vld [vmem:[%s166 + $0x34] sm:$0xf]
      %v189 = vld [vmem:[%s166 + $0x38] sm:$0xf]
      %v190 = vld [vmem:[%s166 + $0x3c] sm:$0xf]
      %v191 = vld [vmem:[%s166 + $0x40] sm:$0xf]
      %v192 = vld [vmem:[%s166 + $0x44] sm:$0xf]
      %v193 = vld [vmem:[%s166 + $0x48] sm:$0xf]
      %v194 = vld [vmem:[%s166 + $0x4c] sm:$0xf]
      %v195 = vld [vmem:[%s166 + $0x50] sm:$0xf]
      %v196 = vld [vmem:[%s166 + $0x54] sm:$0xf]
      %v197 = vld [vmem:[%s166 + $0x58] sm:$0xf]
      %v198 = vld [vmem:[%s166 + $0x5c] sm:$0xf]
      %v199 = vld [vmem:[%s166 + $0x60] sm:$0xf]
      %v200 = vld [vmem:[%s166 + $0x64] sm:$0xf]
      %v201 = vld [vmem:[%s166 + $0x68] sm:$0xf]
      %v202 = vld [vmem:[%s166 + $0x6c] sm:$0xf]
      %v203 = vld [vmem:[%s166 + $0x70] sm:$0xf]
      %v204 = vld [vmem:[%s166 + $0x74] sm:$0xf]
      %v205 = vld [vmem:[%s166 + $0x78] sm:$0xf]
      %v206 = vld [vmem:[%s166 + $0x7c] sm:$0xf]
      %v207 = vld [vmem:[%s166 + $0x80] sm:$0xf]
      %v208 = vld [vmem:[%s166 + $0x84] sm:$0xf]
      %v209 = vld [vmem:[%s166 + $0x88] sm:$0xf]
      %v210 = vld [vmem:[%s166 + $0x8c] sm:$0xf]
      %v211 = vld [vmem:[%s166 + $0x90] sm:$0xf]
      %v212 = vld [vmem:[%s166 + $0x94] sm:$0xf]
      %v213 = vld [vmem:[%s166 + $0x98] sm:$0xf]
      %v214 = vld [vmem:[%s166 + $0x9c] sm:$0xf]
      %v215 = vld [vmem:[%s166 + $0xa0] sm:$0xf]
      %v216 = vld [vmem:[%s166 + $0xa4] sm:$0xf]
      %v217 = vld [vmem:[%s166 + $0xa8] sm:$0xf]
      %v218 = vld [vmem:[%s166 + $0xac] sm:$0xf]
      %v219 = vld [vmem:[%s166 + $0xb0] sm:$0xf]
      %v220 = vld [vmem:[%s166 + $0xb4] sm:$0xf]
      %v221 = vld [vmem:[%s166 + $0xb8] sm:$0xf]
      %v222 = vld [vmem:[%s166 + $0xbc] sm:$0xf]
      %v223 = vld [vmem:[%s166 + $0xc0] sm:$0xf]
      %v224 = vld [vmem:[%s166 + $0xc4] sm:$0xf]
      %v225 = vld [vmem:[%s166 + $0xc8] sm:$0xf]
      %v226 = vld [vmem:[%s166 + $0xcc] sm:$0xf]
      %v227 = vld [vmem:[%s166 + $0xd0] sm:$0xf]
      %v228 = vld [vmem:[%s166 + $0xd4] sm:$0xf]
      %v229 = vld [vmem:[%s166 + $0xd8] sm:$0xf]
      %v230 = vld [vmem:[%s166 + $0xdc] sm:$0xf]
      %v231 = vld [vmem:[%s166 + $0xe0] sm:$0xf]
      %v232 = vld [vmem:[%s166 + $0xe4] sm:$0xf]
      %v233 = vld [vmem:[%s166 + $0xe8] sm:$0xf]
      %v234 = vld [vmem:[%s166 + $0xec] sm:$0xf]
      %v235 = vld [vmem:[%s166 + $0xf0] sm:$0xf]
      %v236 = vld [vmem:[%s166 + $0xf4] sm:$0xf]
      %v237 = vld [vmem:[%s166 + $0xf8] sm:$0xf]
      %v238 = vld [vmem:[%s166 + $0xfc] sm:$0xf]
      %v239 = vld [vmem:[%s166 + $0x100] sm:$0xf]
      %v240 = vld [vmem:[%s166 + $0x104] sm:$0xf]
      %v241 = vld [vmem:[%s166 + $0x108] sm:$0xf]
      %v242 = vld [vmem:[%s166 + $0x10c] sm:$0xf]
      %v243 = vld [vmem:[%s166 + $0x110] sm:$0xf]
      %v244 = vld [vmem:[%s166 + $0x114] sm:$0xf]
      %v245 = vld [vmem:[%s166 + $0x118] sm:$0xf]
      %v246 = vld [vmem:[%s166 + $0x11c] sm:$0xf]
      %v247 = vld [vmem:[%s166 + $0x120] sm:$0xf]
      %v248 = vld [vmem:[%s166 + $0x124] sm:$0xf]
      %v249 = vld [vmem:[%s166 + $0x128] sm:$0xf]
      %v250 = vld [vmem:[%s166 + $0x12c] sm:$0xf]
      %v251 = vld [vmem:[%s166 + $0x130] sm:$0xf]
      %v252 = vld [vmem:[%s166 + $0x134] sm:$0xf]
      %v253 = vld [vmem:[%s166 + $0x138] sm:$0xf]
      %v254 = vld [vmem:[%s166 + $0x13c] sm:$0xf]
      %v255 = vld [vmem:[%s166 + $0x140] sm:$0xf]
      %v256 = vld [vmem:[%s166 + $0x144] sm:$0xf]
      %v257 = vld [vmem:[%s166 + $0x148] sm:$0xf]
      %v258 = vld [vmem:[%s166 + $0x14c] sm:$0xf]
      %v259 = vld [vmem:[%s166 + $0x150] sm:$0xf]
      %v260 = vld [vmem:[%s166 + $0x154] sm:$0xf]
      %v261 = vld [vmem:[%s166 + $0x158] sm:$0xf]
      %v262 = vld [vmem:[%s166 + $0x15c] sm:$0xf]
      %v263 = vld [vmem:[%s166 + $0x160] sm:$0xf]
      %v264 = vld [vmem:[%s166 + $0x164] sm:$0xf]
      %v265 = vld [vmem:[%s166 + $0x168] sm:$0xf]
      %v266 = vld [vmem:[%s166 + $0x16c] sm:$0xf]
      %v267 = vld [vmem:[%s166 + $0x170] sm:$0xf]
      %v268 = vld [vmem:[%s166 + $0x174] sm:$0xf]
      %v269 = vld [vmem:[%s166 + $0x178] sm:$0xf]
      %v270 = vld [vmem:[%s166 + $0x17c] sm:$0xf]
      %v271 = vld [vmem:[%s166 + $0x180] sm:$0xf]
      %v272 = vld [vmem:[%s166 + $0x184] sm:$0xf]
      %v273 = vld [vmem:[%s166 + $0x188] sm:$0xf]
      %v274 = vld [vmem:[%s166 + $0x18c] sm:$0xf]
      %v275 = vld [vmem:[%s166 + $0x190] sm:$0xf]
      %v276 = vld [vmem:[%s166 + $0x194] sm:$0xf]
      %v277 = vld [vmem:[%s166 + $0x198] sm:$0xf]
      %v278 = vld [vmem:[%s166 + $0x19c] sm:$0xf]
      %v279 = vld [vmem:[%s166 + $0x1a0] sm:$0xf]
      %v280 = vld [vmem:[%s166 + $0x1a4] sm:$0xf]
      %v281 = vld [vmem:[%s166 + $0x1a8] sm:$0xf]
      %v282 = vld [vmem:[%s166 + $0x1ac] sm:$0xf]
      %v283 = vld [vmem:[%s166 + $0x1b0] sm:$0xf]
      %v284 = vld [vmem:[%s166 + $0x1b4] sm:$0xf]
      %v285 = vld [vmem:[%s166 + $0x1b8] sm:$0xf]
      %v286 = vld [vmem:[%s166 + $0x1bc] sm:$0xf]
      %v287 = vld [vmem:[%s166 + $0x1c0] sm:$0xf]
      %v288 = vld [vmem:[%s166 + $0x1c4] sm:$0xf]
      %v289 = vld [vmem:[%s166 + $0x1c8] sm:$0xf]
      %v290 = vld [vmem:[%s166 + $0x1cc] sm:$0xf]
      %v291 = vld [vmem:[%s166 + $0x1d0] sm:$0xf]
      %v292 = vld [vmem:[%s166 + $0x1d4] sm:$0xf]
      %v293 = vld [vmem:[%s166 + $0x1d8] sm:$0xf]
      %v294 = vld [vmem:[%s166 + $0x1dc] sm:$0xf]
      %v295 = vld [vmem:[%s166 + $0x1e0] sm:$0xf]
      %v296 = vld [vmem:[%s166 + $0x1e4] sm:$0xf]
      %v297 = vld [vmem:[%s166 + $0x1e8] sm:$0xf]
      %v298 = vld [vmem:[%s166 + $0x1ec] sm:$0xf]
      %v299 = vld [vmem:[%s166 + $0x1f0] sm:$0xf]
      %v300 = vld [vmem:[%s166 + $0x1f4] sm:$0xf]
      %v301 = vld [vmem:[%s166 + $0x1f8] sm:$0xf]
      %v302 = vld [vmem:[%s166 + $0x1fc] sm:$0xf]
      %v303 = vld [vmem:[%s166 + $0x200] sm:$0xf]
      %v304 = vld [vmem:[%s166 + $0x204] sm:$0xf]
      %v305 = vld [vmem:[%s166 + $0x208] sm:$0xf]
      %v306 = vld [vmem:[%s166 + $0x20c] sm:$0xf]
      %v307 = vld [vmem:[%s166 + $0x210] sm:$0xf]
      %v308 = vld [vmem:[%s166 + $0x214] sm:$0xf]
      %v309 = vld [vmem:[%s166 + $0x218] sm:$0xf]
      %v310 = vld [vmem:[%s166 + $0x21c] sm:$0xf]
      %v311 = vld [vmem:[%s166 + $0x220] sm:$0xf]
      %v312 = vld [vmem:[%s166 + $0x224] sm:$0xf]
      %v313 = vld [vmem:[%s166 + $0x228] sm:$0xf]
      %v314 = vld [vmem:[%s166 + $0x22c] sm:$0xf]
      %v315 = vld [vmem:[%s166 + $0x230] sm:$0xf]
      %v316 = vld [vmem:[%s166 + $0x234] sm:$0xf]
      %v317 = vld [vmem:[%s166 + $0x238] sm:$0xf]
      %v318 = vld [vmem:[%s166 + $0x23c] sm:$0xf]
      %v319 = vld [vmem:[%s166 + $0x240] sm:$0xf]
      %v320 = vld [vmem:[%s166 + $0x244] sm:$0xf]
      %v321 = vld [vmem:[%s166 + $0x248] sm:$0xf]
      %v322 = vld [vmem:[%s166 + $0x24c] sm:$0xf]
      %v323 = vld [vmem:[%s166 + $0x250] sm:$0xf]
      %v324 = vld [vmem:[%s166 + $0x254] sm:$0xf]
      %v325 = vld [vmem:[%s166 + $0x258] sm:$0xf]
      %v326 = vld [vmem:[%s166 + $0x25c] sm:$0xf]
      %v327 = vld [vmem:[%s166 + $0x260] sm:$0xf]
      %v328 = vld [vmem:[%s166 + $0x264] sm:$0xf]
      %v329 = vld [vmem:[%s166 + $0x268] sm:$0xf]
      %v330 = vld [vmem:[%s166 + $0x26c] sm:$0xf]
      %v331 = vld [vmem:[%s166 + $0x270] sm:$0xf]
      %v332 = vld [vmem:[%s166 + $0x274] sm:$0xf]
      %v333 = vld [vmem:[%s166 + $0x278] sm:$0xf]
      %v334 = vld [vmem:[%s166 + $0x27c] sm:$0xf]
      %v335 = vld [vmem:[%s166 + $0x280] sm:$0xf]
      %v336 = vld [vmem:[%s166 + $0x284] sm:$0xf]
      %v337 = vld [vmem:[%s166 + $0x288] sm:$0xf]
      %v338 = vld [vmem:[%s166 + $0x28c] sm:$0xf]
      %v339 = vld [vmem:[%s166 + $0x290] sm:$0xf]
      %v340 = vld [vmem:[%s166 + $0x294] sm:$0xf]
      %v341 = vld [vmem:[%s166 + $0x298] sm:$0xf]
      %v342 = vld [vmem:[%s166 + $0x29c] sm:$0xf]
      %v343 = vld [vmem:[%s166 + $0x2a0] sm:$0xf]
      %v344 = vld [vmem:[%s166 + $0x2a4] sm:$0xf]
      %v345 = vld [vmem:[%s166 + $0x2a8] sm:$0xf]
      %v346 = vld [vmem:[%s166 + $0x2ac] sm:$0xf]
      %v347 = vld [vmem:[%s166 + $0x2b0] sm:$0xf]
      %v348 = vld [vmem:[%s166 + $0x2b4] sm:$0xf]
      %v349 = vld [vmem:[%s166 + $0x2b8] sm:$0xf]
      %v350 = vld [vmem:[%s166 + $0x2bc] sm:$0xf]
      %v351 = vld [vmem:[%s166 + $0x2c0] sm:$0xf]
      %v352 = vld [vmem:[%s166 + $0x2c4] sm:$0xf]
      %v353 = vld [vmem:[%s166 + $0x2c8] sm:$0xf]
      %v354 = vld [vmem:[%s166 + $0x2cc] sm:$0xf]
      %v355 = vld [vmem:[%s166 + $0x2d0] sm:$0xf]
      %v356 = vld [vmem:[%s166 + $0x2d4] sm:$0xf]
      %v357 = vld [vmem:[%s166 + $0x2d8] sm:$0xf]
      %v358 = vld [vmem:[%s166 + $0x2dc] sm:$0xf]
      %v359 = vld [vmem:[%s166 + $0x2e0] sm:$0xf]
      %v360 = vld [vmem:[%s166 + $0x2e4] sm:$0xf]
      %v361 = vld [vmem:[%s166 + $0x2e8] sm:$0xf]
      %v362 = vld [vmem:[%s166 + $0x2ec] sm:$0xf]
      %v363 = vld [vmem:[%s166 + $0x2f0] sm:$0xf]
      %v364 = vld [vmem:[%s166 + $0x2f4] sm:$0xf]
      %v365 = vld [vmem:[%s166 + $0x2f8] sm:$0xf]
      %v366 = vld [vmem:[%s166 + $0x2fc] sm:$0xf]
      %v367 = vld [vmem:[%s166 + $0x300] sm:$0xf]
      %v368 = vld [vmem:[%s166 + $0x304] sm:$0xf]
      %v369 = vld [vmem:[%s166 + $0x308] sm:$0xf]
      %v370 = vld [vmem:[%s166 + $0x30c] sm:$0xf]
      %v371 = vld [vmem:[%s166 + $0x310] sm:$0xf]
      %v372 = vld [vmem:[%s166 + $0x314] sm:$0xf]
      %v373 = vld [vmem:[%s166 + $0x318] sm:$0xf]
      %v374 = vld [vmem:[%s166 + $0x31c] sm:$0xf]
      %v375 = vld [vmem:[%s166 + $0x320] sm:$0xf]
      %v376 = vld [vmem:[%s166 + $0x324] sm:$0xf]
      %v377 = vld [vmem:[%s166 + $0x328] sm:$0xf]
      %v378 = vld [vmem:[%s166 + $0x32c] sm:$0xf]
      %v379 = vld [vmem:[%s166 + $0x330] sm:$0xf]
      %v380 = vld [vmem:[%s166 + $0x334] sm:$0xf]
      %v381 = vld [vmem:[%s166 + $0x338] sm:$0xf]
      %v382 = vld [vmem:[%s166 + $0x33c] sm:$0xf]
      %v383 = vld [vmem:[%s166 + $0x340] sm:$0xf]
      %v384 = vld [vmem:[%s166 + $0x344] sm:$0xf]
      %v385 = vld [vmem:[%s166 + $0x348] sm:$0xf]
      %v386 = vld [vmem:[%s166 + $0x34c] sm:$0xf]
      %v387 = vld [vmem:[%s166 + $0x350] sm:$0xf]
      %v388 = vld [vmem:[%s166 + $0x354] sm:$0xf]
      %v389 = vld [vmem:[%s166 + $0x358] sm:$0xf]
      %v390 = vld [vmem:[%s166 + $0x35c] sm:$0xf]
      %v391 = vld [vmem:[%s166 + $0x360] sm:$0xf]
      %v392 = vld [vmem:[%s166 + $0x364] sm:$0xf]
      %v393 = vld [vmem:[%s166 + $0x368] sm:$0xf]
      %v394 = vld [vmem:[%s166 + $0x36c] sm:$0xf]
      %v395 = vld [vmem:[%s166 + $0x370] sm:$0xf]
      %v396 = vld [vmem:[%s166 + $0x374] sm:$0xf]
      %v397 = vld [vmem:[%s166 + $0x378] sm:$0xf]
      %v398 = vld [vmem:[%s166 + $0x37c] sm:$0xf]
      %v399 = vld [vmem:[%s166 + $0x380] sm:$0xf]
      %v400 = vld [vmem:[%s166 + $0x384] sm:$0xf]
      %v401 = vld [vmem:[%s166 + $0x388] sm:$0xf]
      %v402 = vld [vmem:[%s166 + $0x38c] sm:$0xf]
      %v403 = vld [vmem:[%s166 + $0x390] sm:$0xf]
      %v404 = vld [vmem:[%s166 + $0x394] sm:$0xf]
      %v405 = vld [vmem:[%s166 + $0x398] sm:$0xf]
      %v406 = vld [vmem:[%s166 + $0x39c] sm:$0xf]
      %v407 = vld [vmem:[%s166 + $0x3a0] sm:$0xf]
      %v408 = vld [vmem:[%s166 + $0x3a4] sm:$0xf]
      %v409 = vld [vmem:[%s166 + $0x3a8] sm:$0xf]
      %v410 = vld [vmem:[%s166 + $0x3ac] sm:$0xf]
      %v411 = vld [vmem:[%s166 + $0x3b0] sm:$0xf]
      %v412 = vld [vmem:[%s166 + $0x3b4] sm:$0xf]
      %v413 = vld [vmem:[%s166 + $0x3b8] sm:$0xf]
      %v414 = vld [vmem:[%s166 + $0x3bc] sm:$0xf]
      %v415 = vld [vmem:[%s166 + $0x3c0] sm:$0xf]
      %v416 = vld [vmem:[%s166 + $0x3c4] sm:$0xf]
      %v417 = vld [vmem:[%s166 + $0x3c8] sm:$0xf]
      %v418 = vld [vmem:[%s166 + $0x3cc] sm:$0xf]
      %v419 = vld [vmem:[%s166 + $0x3d0] sm:$0xf]
      %v420 = vld [vmem:[%s166 + $0x3d4] sm:$0xf]
      %v421 = vld [vmem:[%s166 + $0x3d8] sm:$0xf]
      %v422 = vld [vmem:[%s166 + $0x3dc] sm:$0xf]
      %v423 = vld [vmem:[%s166 + $0x3e0] sm:$0xf]
      %v424 = vld [vmem:[%s166 + $0x3e4] sm:$0xf]
      %v425 = vld [vmem:[%s166 + $0x3e8] sm:$0xf]
      %v426 = vld [vmem:[%s166 + $0x3ec] sm:$0xf]
      %v427 = vld [vmem:[%s166 + $0x3f0] sm:$0xf]
      %v428 = vld [vmem:[%s166 + $0x3f4] sm:$0xf]
      %v429 = vld [vmem:[%s166 + $0x3f8] sm:$0xf]
      %v430 = vld [vmem:[%s166 + $0x3fc] sm:$0xf]
      %v431 = vld [vmem:[%s1] sm:$0xf]
      %v432 = vld [vmem:[%s1 + $0x4] sm:$0xf]
      %v433 = vld [vmem:[%s1 + $0x8] sm:$0xf]
      %v434 = vld [vmem:[%s1 + $0xc] sm:$0xf]
      %v435 = vld [vmem:[%s1 + $0x10] sm:$0xf]
      %v436 = vld [vmem:[%s1 + $0x14] sm:$0xf]
      %v437 = vld [vmem:[%s1 + $0x18] sm:$0xf]
      %v438 = vld [vmem:[%s1 + $0x1c] sm:$0xf]
      %v439 = vld [vmem:[%s1 + $0x20] sm:$0xf]
      %v440 = vld [vmem:[%s1 + $0x24] sm:$0xf]
      %v441 = vld [vmem:[%s1 + $0x28] sm:$0xf]
      %v442 = vld [vmem:[%s1 + $0x2c] sm:$0xf]
      %v443 = vld [vmem:[%s2] sm:$0x1]
      %v445 = vlaneseq
      %v446 = vshrl.u32 %v445, 7
      %v447 = vsub.s32 0, %v446
      %v448 = vrot.slane %v443, %v447
      %v706 = vunpack.c.l.b16 %v175
      %v707 = vunpack.c.l.b16 %v176
      %v708 = vunpack.c.l.b16 %v177
      %v709 = vunpack.c.l.b16 %v178
      %v710 = vunpack.c.l.b16 %v179
      %v711 = vunpack.c.l.b16 %v180
      %v712 = vunpack.c.l.b16 %v181
      %v713 = vunpack.c.l.b16 %v182
      %v714 = vunpack.c.l.b16 %v183
      %v715 = vunpack.c.l.b16 %v184
      %v716 = vunpack.c.l.b16 %v185
      %v717 = vunpack.c.l.b16 %v186
      %v718 = vunpack.c.l.b16 %v187
      %v719 = vunpack.c.l.b16 %v188
      %v720 = vunpack.c.l.b16 %v189
      %v721 = vunpack.c.l.b16 %v190
      %v722 = vunpack.c.l.b16 %v191
      %v723 = vunpack.c.l.b16 %v192
      %v724 = vunpack.c.l.b16 %v193
      %v725 = vunpack.c.l.b16 %v194
      %v726 = vunpack.c.l.b16 %v195
      %v727 = vunpack.c.l.b16 %v196
      %v728 = vunpack.c.l.b16 %v197
      %v729 = vunpack.c.l.b16 %v198
      %v730 = vunpack.c.l.b16 %v199
      %v731 = vunpack.c.l.b16 %v200
      %v732 = vunpack.c.l.b16 %v201
      %v733 = vunpack.c.l.b16 %v202
      %v734 = vunpack.c.l.b16 %v203
      %v735 = vunpack.c.l.b16 %v204
      %v736 = vunpack.c.l.b16 %v205
      %v737 = vunpack.c.l.b16 %v206
      %v738 = vunpack.c.l.b16 %v207
      %v739 = vunpack.c.l.b16 %v208
      %v740 = vunpack.c.l.b16 %v209
      %v741 = vunpack.c.l.b16 %v210
      %v742 = vunpack.c.l.b16 %v211
      %v743 = vunpack.c.l.b16 %v212
      %v744 = vunpack.c.l.b16 %v213
      %v745 = vunpack.c.l.b16 %v214
      %v746 = vunpack.c.l.b16 %v215
      %v747 = vunpack.c.l.b16 %v216
      %v748 = vunpack.c.l.b16 %v217
      %v749 = vunpack.c.l.b16 %v218
      %v750 = vunpack.c.l.b16 %v219
      %v751 = vunpack.c.l.b16 %v220
      %v752 = vunpack.c.l.b16 %v221
      %v753 = vunpack.c.l.b16 %v222
      %v754 = vunpack.c.l.b16 %v223
      %v755 = vunpack.c.l.b16 %v224
      %v756 = vunpack.c.l.b16 %v225
      %v757 = vunpack.c.l.b16 %v226
      %v758 = vunpack.c.l.b16 %v227
      %v759 = vunpack.c.l.b16 %v228
      %v760 = vunpack.c.l.b16 %v229
      %v761 = vunpack.c.l.b16 %v230
      %v762 = vunpack.c.l.b16 %v231
      %v763 = vunpack.c.l.b16 %v232
      %v764 = vunpack.c.l.b16 %v233
      %v765 = vunpack.c.l.b16 %v234
      %v766 = vunpack.c.l.b16 %v235
      %v767 = vunpack.c.l.b16 %v236
      %v768 = vunpack.c.l.b16 %v237
      %v769 = vunpack.c.l.b16 %v238
      %v770 = vunpack.c.l.b16 %v239
      %v771 = vunpack.c.l.b16 %v240
      %v772 = vunpack.c.l.b16 %v241
      %v773 = vunpack.c.l.b16 %v242
      %v774 = vunpack.c.l.b16 %v243
      %v775 = vunpack.c.l.b16 %v244
      %v776 = vunpack.c.l.b16 %v245
      %v777 = vunpack.c.l.b16 %v246
      %v778 = vunpack.c.l.b16 %v247
      %v779 = vunpack.c.l.b16 %v248
      %v780 = vunpack.c.l.b16 %v249
      %v781 = vunpack.c.l.b16 %v250
      %v782 = vunpack.c.l.b16 %v251
      %v783 = vunpack.c.l.b16 %v252
      %v784 = vunpack.c.l.b16 %v253
      %v785 = vunpack.c.l.b16 %v254
      %v786 = vunpack.c.l.b16 %v255
      %v787 = vunpack.c.l.b16 %v256
      %v788 = vunpack.c.l.b16 %v257
      %v789 = vunpack.c.l.b16 %v258
      %v790 = vunpack.c.l.b16 %v259
      %v791 = vunpack.c.l.b16 %v260
      %v792 = vunpack.c.l.b16 %v261
      %v793 = vunpack.c.l.b16 %v262
      %v794 = vunpack.c.l.b16 %v263
      %v795 = vunpack.c.l.b16 %v264
      %v796 = vunpack.c.l.b16 %v265
      %v797 = vunpack.c.l.b16 %v266
      %v798 = vunpack.c.l.b16 %v267
      %v799 = vunpack.c.l.b16 %v268
      %v800 = vunpack.c.l.b16 %v269
      %v801 = vunpack.c.l.b16 %v270
      %v802 = vunpack.c.l.b16 %v271
      %v803 = vunpack.c.l.b16 %v272
      %v804 = vunpack.c.l.b16 %v273
      %v805 = vunpack.c.l.b16 %v274
      %v806 = vunpack.c.l.b16 %v275
      %v807 = vunpack.c.l.b16 %v276
      %v808 = vunpack.c.l.b16 %v277
      %v809 = vunpack.c.l.b16 %v278
      %v810 = vunpack.c.l.b16 %v279
      %v811 = vunpack.c.l.b16 %v280
      %v812 = vunpack.c.l.b16 %v281
      %v813 = vunpack.c.l.b16 %v282
      %v814 = vunpack.c.l.b16 %v283
      %v815 = vunpack.c.l.b16 %v284
      %v816 = vunpack.c.l.b16 %v285
      %v817 = vunpack.c.l.b16 %v286
      %v818 = vunpack.c.l.b16 %v287
      %v819 = vunpack.c.l.b16 %v288
      %v820 = vunpack.c.l.b16 %v289
      %v821 = vunpack.c.l.b16 %v290
      %v822 = vunpack.c.l.b16 %v291
      %v823 = vunpack.c.l.b16 %v292
      %v824 = vunpack.c.l.b16 %v293
      %v825 = vunpack.c.l.b16 %v294
      %v826 = vunpack.c.l.b16 %v295
      %v827 = vunpack.c.l.b16 %v296
      %v828 = vunpack.c.l.b16 %v297
      %v829 = vunpack.c.l.b16 %v298
      %v830 = vunpack.c.l.b16 %v299
      %v831 = vunpack.c.l.b16 %v300
      %v832 = vunpack.c.l.b16 %v301
      %v833 = vunpack.c.l.b16 %v302
      %v834 = vunpack.c.l.b16 %v303
      %v835 = vunpack.c.l.b16 %v304
      %v836 = vunpack.c.l.b16 %v305
      %v837 = vunpack.c.l.b16 %v306
      %v838 = vunpack.c.l.b16 %v307
      %v839 = vunpack.c.l.b16 %v308
      %v840 = vunpack.c.l.b16 %v309
      %v841 = vunpack.c.l.b16 %v310
      %v842 = vunpack.c.l.b16 %v311
      %v843 = vunpack.c.l.b16 %v312
      %v844 = vunpack.c.l.b16 %v313
      %v845 = vunpack.c.l.b16 %v314
      %v846 = vunpack.c.l.b16 %v315
      %v847 = vunpack.c.l.b16 %v316
      %v848 = vunpack.c.l.b16 %v317
      %v849 = vunpack.c.l.b16 %v318
      %v850 = vunpack.c.l.b16 %v319
      %v851 = vunpack.c.l.b16 %v320
      %v852 = vunpack.c.l.b16 %v321
      %v853 = vunpack.c.l.b16 %v322
      %v854 = vunpack.c.l.b16 %v323
      %v855 = vunpack.c.l.b16 %v324
      %v856 = vunpack.c.l.b16 %v325
      %v857 = vunpack.c.l.b16 %v326
      %v858 = vunpack.c.l.b16 %v327
      %v859 = vunpack.c.l.b16 %v328
      %v860 = vunpack.c.l.b16 %v329
      %v861 = vunpack.c.l.b16 %v330
      %v862 = vunpack.c.l.b16 %v331
      %v863 = vunpack.c.l.b16 %v332
      %v864 = vunpack.c.l.b16 %v333
      %v865 = vunpack.c.l.b16 %v334
      %v866 = vunpack.c.l.b16 %v335
      %v867 = vunpack.c.l.b16 %v336
      %v868 = vunpack.c.l.b16 %v337
      %v869 = vunpack.c.l.b16 %v338
      %v870 = vunpack.c.l.b16 %v339
      %v871 = vunpack.c.l.b16 %v340
      %v872 = vunpack.c.l.b16 %v341
      %v873 = vunpack.c.l.b16 %v342
      %v874 = vunpack.c.l.b16 %v343
      %v875 = vunpack.c.l.b16 %v344
      %v876 = vunpack.c.l.b16 %v345
      %v877 = vunpack.c.l.b16 %v346
      %v878 = vunpack.c.l.b16 %v347
      %v879 = vunpack.c.l.b16 %v348
      %v880 = vunpack.c.l.b16 %v349
      %v881 = vunpack.c.l.b16 %v350
      %v882 = vunpack.c.l.b16 %v351
      %v883 = vunpack.c.l.b16 %v352
      %v884 = vunpack.c.l.b16 %v353
      %v885 = vunpack.c.l.b16 %v354
      %v886 = vunpack.c.l.b16 %v355
      %v887 = vunpack.c.l.b16 %v356
      %v888 = vunpack.c.l.b16 %v357
      %v889 = vunpack.c.l.b16 %v358
      %v890 = vunpack.c.l.b16 %v359
      %v891 = vunpack.c.l.b16 %v360
      %v892 = vunpack.c.l.b16 %v361
      %v893 = vunpack.c.l.b16 %v362
      %v894 = vunpack.c.l.b16 %v363
      %v895 = vunpack.c.l.b16 %v364
      %v896 = vunpack.c.l.b16 %v365
      %v897 = vunpack.c.l.b16 %v366
      %v898 = vunpack.c.l.b16 %v367
      %v899 = vunpack.c.l.b16 %v368
      %v900 = vunpack.c.l.b16 %v369
      %v901 = vunpack.c.l.b16 %v370
      %v902 = vunpack.c.l.b16 %v371
      %v903 = vunpack.c.l.b16 %v372
      %v904 = vunpack.c.l.b16 %v373
      %v905 = vunpack.c.l.b16 %v374
      %v906 = vunpack.c.l.b16 %v375
      %v907 = vunpack.c.l.b16 %v376
      %v908 = vunpack.c.l.b16 %v377
      %v909 = vunpack.c.l.b16 %v378
      %v910 = vunpack.c.l.b16 %v379
      %v911 = vunpack.c.l.b16 %v380
      %v912 = vunpack.c.l.b16 %v381
      %v913 = vunpack.c.l.b16 %v382
      %v914 = vunpack.c.l.b16 %v383
      %v915 = vunpack.c.l.b16 %v384
      %v916 = vunpack.c.l.b16 %v385
      %v917 = vunpack.c.l.b16 %v386
      %v918 = vunpack.c.l.b16 %v387
      %v919 = vunpack.c.l.b16 %v388
      %v920 = vunpack.c.l.b16 %v389
      %v921 = vunpack.c.l.b16 %v390
      %v922 = vunpack.c.l.b16 %v391
      %v923 = vunpack.c.l.b16 %v392
      %v924 = vunpack.c.l.b16 %v393
      %v925 = vunpack.c.l.b16 %v394
      %v926 = vunpack.c.l.b16 %v395
      %v927 = vunpack.c.l.b16 %v396
      %v928 = vunpack.c.l.b16 %v397
      %v929 = vunpack.c.l.b16 %v398
      %v930 = vunpack.c.l.b16 %v399
      %v931 = vunpack.c.l.b16 %v400
      %v932 = vunpack.c.l.b16 %v401
      %v933 = vunpack.c.l.b16 %v402
      %v934 = vunpack.c.l.b16 %v403
      %v935 = vunpack.c.l.b16 %v404
      %v936 = vunpack.c.l.b16 %v405
      %v937 = vunpack.c.l.b16 %v406
      %v938 = vunpack.c.l.b16 %v407
      %v939 = vunpack.c.l.b16 %v408
      %v940 = vunpack.c.l.b16 %v409
      %v941 = vunpack.c.l.b16 %v410
      %v942 = vunpack.c.l.b16 %v411
      %v943 = vunpack.c.l.b16 %v412
      %v944 = vunpack.c.l.b16 %v413
      %v945 = vunpack.c.l.b16 %v414
      %v946 = vunpack.c.l.b16 %v415
      %v947 = vunpack.c.l.b16 %v416
      %v948 = vunpack.c.l.b16 %v417
      %v949 = vunpack.c.l.b16 %v418
      %v950 = vunpack.c.l.b16 %v419
      %v951 = vunpack.c.l.b16 %v420
      %v952 = vunpack.c.l.b16 %v421
      %v953 = vunpack.c.l.b16 %v422
      %v954 = vunpack.c.l.b16 %v423
      %v955 = vunpack.c.l.b16 %v424
      %v956 = vunpack.c.l.b16 %v425
      %v957 = vunpack.c.l.b16 %v426
      %v958 = vunpack.c.l.b16 %v427
      %v959 = vunpack.c.l.b16 %v428
      %v960 = vunpack.c.l.b16 %v429
      %v961 = vunpack.c.l.b16 %v430
      %v962 = vpack.c.b16 %v707, %v706
      %v963 = vpack.c.b16 %v709, %v708
      %v964 = vpack.c.b16 %v711, %v710
      %v965 = vpack.c.b16 %v713, %v712
      %v966 = vpack.c.b16 %v715, %v714
      %v967 = vpack.c.b16 %v717, %v716
      %v968 = vpack.c.b16 %v719, %v718
      %v969 = vpack.c.b16 %v721, %v720
      %v970 = vpack.c.b16 %v723, %v722
      %v971 = vpack.c.b16 %v725, %v724
      %v972 = vpack.c.b16 %v727, %v726
      %v973 = vpack.c.b16 %v729, %v728
      %v974 = vpack.c.b16 %v731, %v730
      %v975 = vpack.c.b16 %v733, %v732
      %v976 = vpack.c.b16 %v735, %v734
      %v977 = vpack.c.b16 %v737, %v736
      %v978 = vpack.c.b16 %v739, %v738
      %v979 = vpack.c.b16 %v741, %v740
      %v980 = vpack.c.b16 %v743, %v742
      %v981 = vpack.c.b16 %v745, %v744
      %v982 = vpack.c.b16 %v747, %v746
      %v983 = vpack.c.b16 %v749, %v748
      %v984 = vpack.c.b16 %v751, %v750
      %v985 = vpack.c.b16 %v753, %v752
      %v986 = vpack.c.b16 %v755, %v754
      %v987 = vpack.c.b16 %v757, %v756
      %v988 = vpack.c.b16 %v759, %v758
      %v989 = vpack.c.b16 %v761, %v760
      %v990 = vpack.c.b16 %v763, %v762
      %v991 = vpack.c.b16 %v765, %v764
      %v992 = vpack.c.b16 %v767, %v766
      %v993 = vpack.c.b16 %v769, %v768
      %v994 = vpack.c.b16 %v771, %v770
      %v995 = vpack.c.b16 %v773, %v772
      %v996 = vpack.c.b16 %v775, %v774
      %v997 = vpack.c.b16 %v777, %v776
      %v998 = vpack.c.b16 %v779, %v778
      %v999 = vpack.c.b16 %v781, %v780
      %v1000 = vpack.c.b16 %v783, %v782
      %v1001 = vpack.c.b16 %v785, %v784
      %v1002 = vpack.c.b16 %v787, %v786
      %v1003 = vpack.c.b16 %v789, %v788
      %v1004 = vpack.c.b16 %v791, %v790
      %v1005 = vpack.c.b16 %v793, %v792
      %v1006 = vpack.c.b16 %v795, %v794
      %v1007 = vpack.c.b16 %v797, %v796
      %v1008 = vpack.c.b16 %v799, %v798
      %v1009 = vpack.c.b16 %v801, %v800
      %v1010 = vpack.c.b16 %v803, %v802
      %v1011 = vpack.c.b16 %v805, %v804
      %v1012 = vpack.c.b16 %v807, %v806
      %v1013 = vpack.c.b16 %v809, %v808
      %v1014 = vpack.c.b16 %v811, %v810
      %v1015 = vpack.c.b16 %v813, %v812
      %v1016 = vpack.c.b16 %v815, %v814
      %v1017 = vpack.c.b16 %v817, %v816
      %v1018 = vpack.c.b16 %v819, %v818
      %v1019 = vpack.c.b16 %v821, %v820
      %v1020 = vpack.c.b16 %v823, %v822
      %v1021 = vpack.c.b16 %v825, %v824
      %v1022 = vpack.c.b16 %v827, %v826
      %v1023 = vpack.c.b16 %v829, %v828
      %v1024 = vpack.c.b16 %v831, %v830
      %v1025 = vpack.c.b16 %v833, %v832
      %v1026 = vpack.c.b16 %v835, %v834
      %v1027 = vpack.c.b16 %v837, %v836
      %v1028 = vpack.c.b16 %v839, %v838
      %v1029 = vpack.c.b16 %v841, %v840
      %v1030 = vpack.c.b16 %v843, %v842
      %v1031 = vpack.c.b16 %v845, %v844
      %v1032 = vpack.c.b16 %v847, %v846
      %v1033 = vpack.c.b16 %v849, %v848
      %v1034 = vpack.c.b16 %v851, %v850
      %v1035 = vpack.c.b16 %v853, %v852
      %v1036 = vpack.c.b16 %v855, %v854
      %v1037 = vpack.c.b16 %v857, %v856
      %v1038 = vpack.c.b16 %v859, %v858
      %v1039 = vpack.c.b16 %v861, %v860
      %v1040 = vpack.c.b16 %v863, %v862
      %v1041 = vpack.c.b16 %v865, %v864
      %v1042 = vpack.c.b16 %v867, %v866
      %v1043 = vpack.c.b16 %v869, %v868
      %v1044 = vpack.c.b16 %v871, %v870
      %v1045 = vpack.c.b16 %v873, %v872
      %v1046 = vpack.c.b16 %v875, %v874
      %v1047 = vpack.c.b16 %v877, %v876
      %v1048 = vpack.c.b16 %v879, %v878
      %v1049 = vpack.c.b16 %v881, %v880
      %v1050 = vpack.c.b16 %v883, %v882
      %v1051 = vpack.c.b16 %v885, %v884
      %v1052 = vpack.c.b16 %v887, %v886
      %v1053 = vpack.c.b16 %v889, %v888
      %v1054 = vpack.c.b16 %v891, %v890
      %v1055 = vpack.c.b16 %v893, %v892
      %v1056 = vpack.c.b16 %v895, %v894
      %v1057 = vpack.c.b16 %v897, %v896
      %v1058 = vpack.c.b16 %v899, %v898
      %v1059 = vpack.c.b16 %v901, %v900
      %v1060 = vpack.c.b16 %v903, %v902
      %v1061 = vpack.c.b16 %v905, %v904
      %v1062 = vpack.c.b16 %v907, %v906
      %v1063 = vpack.c.b16 %v909, %v908
      %v1064 = vpack.c.b16 %v911, %v910
      %v1065 = vpack.c.b16 %v913, %v912
      %v1066 = vpack.c.b16 %v915, %v914
      %v1067 = vpack.c.b16 %v917, %v916
      %v1068 = vpack.c.b16 %v919, %v918
      %v1069 = vpack.c.b16 %v921, %v920
      %v1070 = vpack.c.b16 %v923, %v922
      %v1071 = vpack.c.b16 %v925, %v924
      %v1072 = vpack.c.b16 %v927, %v926
      %v1073 = vpack.c.b16 %v929, %v928
      %v1074 = vpack.c.b16 %v931, %v930
      %v1075 = vpack.c.b16 %v933, %v932
      %v1076 = vpack.c.b16 %v935, %v934
      %v1077 = vpack.c.b16 %v937, %v936
      %v1078 = vpack.c.b16 %v939, %v938
      %v1079 = vpack.c.b16 %v941, %v940
      %v1080 = vpack.c.b16 %v943, %v942
      %v1081 = vpack.c.b16 %v945, %v944
      %v1082 = vpack.c.b16 %v947, %v946
      %v1083 = vpack.c.b16 %v949, %v948
      %v1084 = vpack.c.b16 %v951, %v950
      %v1085 = vpack.c.b16 %v953, %v952
      %v1086 = vpack.c.b16 %v955, %v954
      %v1087 = vpack.c.b16 %v957, %v956
      %v1088 = vpack.c.b16 %v959, %v958
      %v1089 = vpack.c.b16 %v961, %v960
      %v1102 = vunpack.c.l.b16 %v431
      %v1103 = vunpack.c.l.b16 %v432
      %v1104 = vunpack.c.l.b16 %v433
      %v1105 = vunpack.c.l.b16 %v434
      %v1106 = vunpack.c.l.b16 %v435
      %v1107 = vunpack.c.l.b16 %v436
      %v1108 = vunpack.c.l.b16 %v437
      %v1109 = vunpack.c.l.b16 %v438
      %v1110 = vunpack.c.l.b16 %v439
      %v1111 = vunpack.c.l.b16 %v440
      %v1112 = vunpack.c.l.b16 %v441
      %v1113 = vunpack.c.l.b16 %v442
      %v1114 = vpack.c.b16 %v1103, %v1102
      %v1115 = vpack.c.b16 %v1105, %v1104
      %v1116 = vpack.c.b16 %v1107, %v1106
      %v1117 = vpack.c.b16 %v1109, %v1108
      %v1118 = vpack.c.b16 %v1111, %v1110
      %v1119 = vpack.c.b16 %v1113, %v1112
      %vm1126 = vcmask 785408
      %v1128 = vsel %vm1126, %v962, 0
      %v1131 = vsel %vm1126, %v963, 0
      %v1134 = vsel %vm1126, %v964, 0
      %v1137 = vsel %vm1126, %v965, 0
      %v1140 = vsel %vm1126, %v966, 0
      %v1143 = vsel %vm1126, %v967, 0
      %v1146 = vsel %vm1126, %v968, 0
      %v1149 = vsel %vm1126, %v969, 0
      %v1152 = vsel %vm1126, %v970, 0
      %v1155 = vsel %vm1126, %v971, 0
      %v1158 = vsel %vm1126, %v972, 0
      %v1161 = vsel %vm1126, %v973, 0
      %v1164 = vsel %vm1126, %v974, 0
      %v1167 = vsel %vm1126, %v975, 0
      %v1170 = vsel %vm1126, %v976, 0
      %v1173 = vsel %vm1126, %v977, 0
      %v1176 = vsel %vm1126, %v978, 0
      %v1179 = vsel %vm1126, %v979, 0
      %v1182 = vsel %vm1126, %v980, 0
      %v1185 = vsel %vm1126, %v981, 0
      %v1188 = vsel %vm1126, %v982, 0
      %v1191 = vsel %vm1126, %v983, 0
      %v1194 = vsel %vm1126, %v984, 0
      %v1197 = vsel %vm1126, %v985, 0
      %v1200 = vsel %vm1126, %v986, 0
      %v1203 = vsel %vm1126, %v987, 0
      %v1206 = vsel %vm1126, %v988, 0
      %v1209 = vsel %vm1126, %v989, 0
      %v1212 = vsel %vm1126, %v990, 0
      %v1215 = vsel %vm1126, %v991, 0
      %v1218 = vsel %vm1126, %v992, 0
      %v1221 = vsel %vm1126, %v993, 0
      %v1224 = vsel %vm1126, %v994, 0
      %v1227 = vsel %vm1126, %v995, 0
      %v1230 = vsel %vm1126, %v996, 0
      %v1233 = vsel %vm1126, %v997, 0
      %v1236 = vsel %vm1126, %v998, 0
      %v1239 = vsel %vm1126, %v999, 0
      %v1242 = vsel %vm1126, %v1000, 0
      %v1245 = vsel %vm1126, %v1001, 0
      %v1248 = vsel %vm1126, %v1002, 0
      %v1251 = vsel %vm1126, %v1003, 0
      %v1254 = vsel %vm1126, %v1004, 0
      %v1257 = vsel %vm1126, %v1005, 0
      %v1260 = vsel %vm1126, %v1006, 0
      %v1263 = vsel %vm1126, %v1007, 0
      %v1266 = vsel %vm1126, %v1008, 0
      %v1269 = vsel %vm1126, %v1009, 0
      %v1272 = vsel %vm1126, %v1010, 0
      %v1275 = vsel %vm1126, %v1011, 0
      %v1278 = vsel %vm1126, %v1012, 0
      %v1281 = vsel %vm1126, %v1013, 0
      %v1284 = vsel %vm1126, %v1014, 0
      %v1287 = vsel %vm1126, %v1015, 0
      %v1290 = vsel %vm1126, %v1016, 0
      %v1293 = vsel %vm1126, %v1017, 0
      %v1296 = vsel %vm1126, %v1018, 0
      %v1299 = vsel %vm1126, %v1019, 0
      %v1302 = vsel %vm1126, %v1020, 0
      %v1305 = vsel %vm1126, %v1021, 0
      %v1308 = vsel %vm1126, %v1022, 0
      %v1311 = vsel %vm1126, %v1023, 0
      %v1314 = vsel %vm1126, %v1024, 0
      %v1317 = vsel %vm1126, %v1025, 0
      %v1320 = vsel %vm1126, %v1026, 0
      %v1323 = vsel %vm1126, %v1027, 0
      %v1326 = vsel %vm1126, %v1028, 0
      %v1329 = vsel %vm1126, %v1029, 0
      %v1332 = vsel %vm1126, %v1030, 0
      %v1335 = vsel %vm1126, %v1031, 0
      %v1338 = vsel %vm1126, %v1032, 0
      %v1341 = vsel %vm1126, %v1033, 0
      %v1344 = vsel %vm1126, %v1034, 0
      %v1347 = vsel %vm1126, %v1035, 0
      %v1350 = vsel %vm1126, %v1036, 0
      %v1353 = vsel %vm1126, %v1037, 0
      %v1356 = vsel %vm1126, %v1038, 0
      %v1359 = vsel %vm1126, %v1039, 0
      %v1362 = vsel %vm1126, %v1040, 0
      %v1365 = vsel %vm1126, %v1041, 0
      %v1368 = vsel %vm1126, %v1042, 0
      %v1371 = vsel %vm1126, %v1043, 0
      %v1374 = vsel %vm1126, %v1044, 0
      %v1377 = vsel %vm1126, %v1045, 0
      %v1380 = vsel %vm1126, %v1046, 0
      %v1383 = vsel %vm1126, %v1047, 0
      %v1386 = vsel %vm1126, %v1048, 0
      %v1389 = vsel %vm1126, %v1049, 0
      %v1392 = vsel %vm1126, %v1050, 0
      %v1395 = vsel %vm1126, %v1051, 0
      %v1398 = vsel %vm1126, %v1052, 0
      %v1401 = vsel %vm1126, %v1053, 0
      %v1404 = vsel %vm1126, %v1054, 0
      %v1407 = vsel %vm1126, %v1055, 0
      %v1410 = vsel %vm1126, %v1056, 0
      %v1413 = vsel %vm1126, %v1057, 0
      %v1416 = vsel %vm1126, %v1058, 0
      %v1419 = vsel %vm1126, %v1059, 0
      %v1422 = vsel %vm1126, %v1060, 0
      %v1425 = vsel %vm1126, %v1061, 0
      %v1428 = vsel %vm1126, %v1062, 0
      %v1431 = vsel %vm1126, %v1063, 0
      %v1434 = vsel %vm1126, %v1064, 0
      %v1437 = vsel %vm1126, %v1065, 0
      %v1440 = vsel %vm1126, %v1066, 0
      %v1443 = vsel %vm1126, %v1067, 0
      %v1446 = vsel %vm1126, %v1068, 0
      %v1449 = vsel %vm1126, %v1069, 0
      %v1452 = vsel %vm1126, %v1070, 0
      %v1455 = vsel %vm1126, %v1071, 0
      %v1458 = vsel %vm1126, %v1072, 0
      %v1461 = vsel %vm1126, %v1073, 0
      %v1464 = vsel %vm1126, %v1074, 0
      %v1467 = vsel %vm1126, %v1075, 0
      %v1470 = vsel %vm1126, %v1076, 0
      %v1473 = vsel %vm1126, %v1077, 0
      %v1476 = vsel %vm1126, %v1078, 0
      %v1479 = vsel %vm1126, %v1079, 0
      %v1482 = vsel %vm1126, %v1080, 0
      %v1485 = vsel %vm1126, %v1081, 0
      %v1488 = vsel %vm1126, %v1082, 0
      %v1491 = vsel %vm1126, %v1083, 0
      %v1494 = vsel %vm1126, %v1084, 0
      %v1497 = vsel %vm1126, %v1085, 0
      %v1500 = vsel %vm1126, %v1086, 0
      %v1503 = vsel %vm1126, %v1087, 0
      %v1506 = vsel %vm1126, %v1088, 0
      %v1509 = vsel %vm1126, %v1089, 0
      %1511 = vmatprep.subr.bf16.mxu0 0
      %1512 = vmatpush1.bf16.msra.mxu0 %v1114
      %1513 = vmatprep.subr.bf16.mxu0 0
      %1514 = vmatpush1.bf16.msra.mxu0 %v1115
      %1515 = vmatprep.subr.bf16.mxu0 0
      %1516 = vmatpush1.bf16.msra.mxu0 %v1116
      %1517 = vmatprep.subr.bf16.mxu0 0
      %1518 = vmatpush1.bf16.msra.mxu0 %v1117
      %1519 = vmatprep.subr.bf16.mxu0 0
      %1520 = vmatpush1.bf16.msra.mxu0 %v1118
      %1521 = vmatprep.subr.bf16.mxu0 0
      %1522 = vmatpush1.bf16.msra.mxu0 %v1119
      %1523 = vmatprep.subr.bf16.mxu0 0
      %1524 = vmatpush1.bf16.msra.mxu0 0
      %1525 = vmatprep.subr.bf16.mxu0 0
      %1526 = vmatpush1.bf16.msra.mxu0 0
      %1527 = vmatprep.subr.bf16.mxu0 0
      %1528 = vmatpush1.bf16.msra.mxu0 0
      %1529 = vmatprep.subr.bf16.mxu0 0
      %1530 = vmatpush1.bf16.msra.mxu0 0
      %1531 = vmatprep.subr.bf16.mxu0 0
      %1532 = vmatpush1.bf16.msra.mxu0 0
      %1533 = vmatprep.subr.bf16.mxu0 0
      %1534 = vmatpush1.bf16.msra.mxu0 0
      %1535 = vmatprep.subr.bf16.mxu0 0
      %1536 = vmatpush1.bf16.msra.mxu0 0
      %1537 = vmatprep.subr.bf16.mxu0 0
      %1538 = vmatpush1.bf16.msra.mxu0 0
      %1539 = vmatprep.subr.bf16.mxu0 0
      %1540 = vmatpush1.bf16.msra.mxu0 0
      %1541 = vmatprep.subr.bf16.mxu0 0
      %1542 = vmatpush1.bf16.msra.mxu0 0
      %1543 = vmatprep.mubr.bf16.mxu0 0
      %1544 = vmatmul.mubr.bf16.gmra.mrb[0].mxu0 %v1128
      %v1545 = vpop.f32.mrb[0].mxu0
      %v1546 = vadd.f32 %v448, %v1545
      %v1547 = vpop.f32.mrb[0].mxu0
      %v1548 = vpop.f32.mrb[0].mxu0
      %v1549 = vadd.f32 %v448, %v1548
      %v1550 = vpop.f32.mrb[0].mxu0
      %1551 = vmatprep.mubr.bf16.mxu0 0
      %1552 = vmatmul.mubr.bf16.gmra.mrb[0].mxu0 %v1131
      %v1553 = vpop.f32.mrb[0].mxu0
      %v1554 = vadd.f32 %v448, %v1553
      %v1555 = vpop.f32.mrb[0].mxu0
      %v1556 = vpop.f32.mrb[0].mxu0
      %v1557 = vadd.f32 %v448, %v1556
      %v1558 = vpop.f32.mrb[0].mxu0
      %1559 = vmatprep.mubr.bf16.mxu0 0
      %1560 = vmatmul.mubr.bf16.gmra.mrb[0].mxu0 %v1134
      %v1561 = vpop.f32.mrb[0].mxu0
      %v1562 = vadd.f32 %v448, %v1561
      %v1563 = vpop.f32.mrb[0].mxu0
      %v1564 = vpop.f32.mrb[0].mxu0
      %v1565 = vadd.f32 %v448, %v1564
      %v1566 = vpop.f32.mrb[0].mxu0
      %1567 = vmatprep.mubr.bf16.mxu0 0
      %1568 = vmatmul.mubr.bf16.gmra.mrb[0].mxu0 %v1137
      %v1569 = vpop.f32.mrb[0].mxu0
      %v1570 = vadd.f32 %v448, %v1569
      %v1571 = vpop.f32.mrb[0].mxu0
      %v1572 = vpop.f32.mrb[0].mxu0
      %v1573 = vadd.f32 %v448, %v1572
      %v1574 = vpop.f32.mrb[0].mxu0
      %1575 = vmatprep.mubr.bf16.mxu0 0
      %1576 = vmatmul.mubr.bf16.gmra.mrb[0].mxu0 %v1140
      %v1577 = vpop.f32.mrb[0].mxu0
      %v1578 = vadd.f32 %v448, %v1577
      %v1579 = vpop.f32.mrb[0].mxu0
      %v1580 = vpop.f32.mrb[0].mxu0
      %v1581 = vadd.f32 %v448, %v1580
      %v1582 = vpop.f32.mrb[0].mxu0
      %1583 = vmatprep.mubr.bf16.mxu0 0
      %1584 = vmatmul.mubr.bf16.gmra.mrb[0].mxu0 %v1143
      %v1585 = vpop.f32.mrb[0].mxu0
      %v1586 = vadd.f32 %v448, %v1585
      %v1587 = vpop.f32.mrb[0].mxu0
      %v1588 = vpop.f32.mrb[0].mxu0
      %v1589 = vadd.f32 %v448, %v1588
      %v1590 = vpop.f32.mrb[0].mxu0
      %1591 = vmatprep.mubr.bf16.mxu0 0
      %1592 = vmatmul.mubr.bf16.gmra.mrb[0].mxu0 %v1146
      %v1593 = vpop.f32.mrb[0].mxu0
      %v1594 = vadd.f32 %v448, %v1593
      %v1595 = vpop.f32.mrb[0].mxu0
      %v1596 = vpop.f32.mrb[0].mxu0
      %v1597 = vadd.f32 %v448, %v1596
      %v1598 = vpop.f32.mrb[0].mxu0
      %1599 = vmatprep.mubr.bf16.mxu0 0
      %1600 = vmatmul.mubr.bf16.gmra.mrb[0].mxu0 %v1149
      %v1601 = vpop.f32.mrb[0].mxu0
      %v1602 = vadd.f32 %v448, %v1601
      %v1603 = vpop.f32.mrb[0].mxu0
      %v1604 = vpop.f32.mrb[0].mxu0
      %v1605 = vadd.f32 %v448, %v1604
      %v1606 = vpop.f32.mrb[0].mxu0
      %1607 = vmatprep.mubr.bf16.mxu0 0
      %1608 = vmatmul.mubr.bf16.gmra.mrb[0].mxu0 %v1152
      %v1609 = vpop.f32.mrb[0].mxu0
      %v1610 = vadd.f32 %v448, %v1609
      %v1611 = vpop.f32.mrb[0].mxu0
      %v1612 = vpop.f32.mrb[0].mxu0
      %v1613 = vadd.f32 %v448, %v1612
      %v1614 = vpop.f32.mrb[0].mxu0
      %1615 = vmatprep.mubr.bf16.mxu0 0
      %1616 = vmatmul.mubr.bf16.gmra.mrb[0].mxu0 %v1155
      %v1617 = vpop.f32.mrb[0].mxu0
      %v1618 = vadd.f32 %v448, %v1617
      %v1619 = vpop.f32.mrb[0].mxu0
      %v1620 = vpop.f32.mrb[0].mxu0
      %v1621 = vadd.f32 %v448, %v1620
      %v1622 = vpop.f32.mrb[0].mxu0
      %1623 = vmatprep.mubr.bf16.mxu0 0
      %1624 = vmatmul.mubr.bf16.gmra.mrb[0].mxu0 %v1158
      %v1625 = vpop.f32.mrb[0].mxu0
      %v1626 = vadd.f32 %v448, %v1625
      %v1627 = vpop.f32.mrb[0].mxu0
      %v1628 = vpop.f32.mrb[0].mxu0
      %v1629 = vadd.f32 %v448, %v1628
      %v1630 = vpop.f32.mrb[0].mxu0
      %1631 = vmatprep.mubr.bf16.mxu0 0
      %1632 = vmatmul.mubr.bf16.gmra.mrb[0].mxu0 %v1161
      %v1633 = vpop.f32.mrb[0].mxu0
      %v1634 = vadd.f32 %v448, %v1633
      %v1635 = vpop.f32.mrb[0].mxu0
      %v1636 = vpop.f32.mrb[0].mxu0
      %v1637 = vadd.f32 %v448, %v1636
      %v1638 = vpop.f32.mrb[0].mxu0
      %1639 = vmatprep.mubr.bf16.mxu0 0
      %1640 = vmatmul.mubr.bf16.gmra.mrb[0].mxu0 %v1164
      %v1641 = vpop.f32.mrb[0].mxu0
      %v1642 = vadd.f32 %v448, %v1641
      %v1643 = vpop.f32.mrb[0].mxu0
      %v1644 = vpop.f32.mrb[0].mxu0
      %v1645 = vadd.f32 %v448, %v1644
      %v1646 = vpop.f32.mrb[0].mxu0
      %1647 = vmatprep.mubr.bf16.mxu0 0
      %1648 = vmatmul.mubr.bf16.gmra.mrb[0].mxu0 %v1167
      %v1649 = vpop.f32.mrb[0].mxu0
      %v1650 = vadd.f32 %v448, %v1649
      %v1651 = vpop.f32.mrb[0].mxu0
      %v1652 = vpop.f32.mrb[0].mxu0
      %v1653 = vadd.f32 %v448, %v1652
      %v1654 = vpop.f32.mrb[0].mxu0
      %1655 = vmatprep.mubr.bf16.mxu0 0
      %1656 = vmatmul.mubr.bf16.gmra.mrb[0].mxu0 %v1170
      %v1657 = vpop.f32.mrb[0].mxu0
      %v1658 = vadd.f32 %v448, %v1657
      %v1659 = vpop.f32.mrb[0].mxu0
      %v1660 = vpop.f32.mrb[0].mxu0
      %v1661 = vadd.f32 %v448, %v1660
      %v1662 = vpop.f32.mrb[0].mxu0
      %1663 = vmatprep.mubr.bf16.mxu0 0
      %1664 = vmatmul.mubr.bf16.gmra.mrb[0].mxu0 %v1173
      %v1665 = vpop.f32.mrb[0].mxu0
      %v1666 = vadd.f32 %v448, %v1665
      %v1667 = vpop.f32.mrb[0].mxu0
      %v1668 = vpop.f32.mrb[0].mxu0
      %v1669 = vadd.f32 %v448, %v1668
      %v1670 = vpop.f32.mrb[0].mxu0
      %1671 = vmatprep.mubr.bf16.mxu0 0
      %1672 = vmatmul.mubr.bf16.gmra.mrb[0].mxu0 %v1176
      %v1673 = vpop.f32.mrb[0].mxu0
      %v1674 = vadd.f32 %v448, %v1673
      %v1675 = vpop.f32.mrb[0].mxu0
      %v1676 = vpop.f32.mrb[0].mxu0
      %v1677 = vadd.f32 %v448, %v1676
      %v1678 = vpop.f32.mrb[0].mxu0
      %1679 = vmatprep.mubr.bf16.mxu0 0
      %1680 = vmatmul.mubr.bf16.gmra.mrb[0].mxu0 %v1179
      %v1681 = vpop.f32.mrb[0].mxu0
      %v1682 = vadd.f32 %v448, %v1681
      %v1683 = vpop.f32.mrb[0].mxu0
      %v1684 = vpop.f32.mrb[0].mxu0
      %v1685 = vadd.f32 %v448, %v1684
      %v1686 = vpop.f32.mrb[0].mxu0
      %1687 = vmatprep.mubr.bf16.mxu0 0
      %1688 = vmatmul.mubr.bf16.gmra.mrb[0].mxu0 %v1182
      %v1689 = vpop.f32.mrb[0].mxu0
      %v1690 = vadd.f32 %v448, %v1689
      %v1691 = vpop.f32.mrb[0].mxu0
      %v1692 = vpop.f32.mrb[0].mxu0
      %v1693 = vadd.f32 %v448, %v1692
      %v1694 = vpop.f32.mrb[0].mxu0
      %1695 = vmatprep.mubr.bf16.mxu0 0
      %1696 = vmatmul.mubr.bf16.gmra.mrb[0].mxu0 %v1185
      %v1697 = vpop.f32.mrb[0].mxu0
      %v1698 = vadd.f32 %v448, %v1697
      %v1699 = vpop.f32.mrb[0].mxu0
      %v1700 = vpop.f32.mrb[0].mxu0
      %v1701 = vadd.f32 %v448, %v1700
      %v1702 = vpop.f32.mrb[0].mxu0
      %1703 = vmatprep.mubr.bf16.mxu0 0
      %1704 = vmatmul.mubr.bf16.gmra.mrb[0].mxu0 %v1188
      %v1705 = vpop.f32.mrb[0].mxu0
      %v1706 = vadd.f32 %v448, %v1705
      %v1707 = vpop.f32.mrb[0].mxu0
      %v1708 = vpop.f32.mrb[0].mxu0
      %v1709 = vadd.f32 %v448, %v1708
      %v1710 = vpop.f32.mrb[0].mxu0
      %1711 = vmatprep.mubr.bf16.mxu0 0
      %1712 = vmatmul.mubr.bf16.gmra.mrb[0].mxu0 %v1191
      %v1713 = vpop.f32.mrb[0].mxu0
      %v1714 = vadd.f32 %v448, %v1713
      %v1715 = vpop.f32.mrb[0].mxu0
      %v1716 = vpop.f32.mrb[0].mxu0
      %v1717 = vadd.f32 %v448, %v1716
      %v1718 = vpop.f32.mrb[0].mxu0
      %1719 = vmatprep.mubr.bf16.mxu0 0
      %1720 = vmatmul.mubr.bf16.gmra.mrb[0].mxu0 %v1194
      %v1721 = vpop.f32.mrb[0].mxu0
      %v1722 = vadd.f32 %v448, %v1721
      %v1723 = vpop.f32.mrb[0].mxu0
      %v1724 = vpop.f32.mrb[0].mxu0
      %v1725 = vadd.f32 %v448, %v1724
      %v1726 = vpop.f32.mrb[0].mxu0
      %1727 = vmatprep.mubr.bf16.mxu0 0
      %1728 = vmatmul.mubr.bf16.gmra.mrb[0].mxu0 %v1197
      %v1729 = vpop.f32.mrb[0].mxu0
      %v1730 = vadd.f32 %v448, %v1729
      %v1731 = vpop.f32.mrb[0].mxu0
      %v1732 = vpop.f32.mrb[0].mxu0
      %v1733 = vadd.f32 %v448, %v1732
      %v1734 = vpop.f32.mrb[0].mxu0
      %1735 = vmatprep.mubr.bf16.mxu0 0
      %1736 = vmatmul.mubr.bf16.gmra.mrb[0].mxu0 %v1200
      %v1737 = vpop.f32.mrb[0].mxu0
      %v1738 = vadd.f32 %v448, %v1737
      %v1739 = vpop.f32.mrb[0].mxu0
      %v1740 = vpop.f32.mrb[0].mxu0
      %v1741 = vadd.f32 %v448, %v1740
      %v1742 = vpop.f32.mrb[0].mxu0
      %1743 = vmatprep.mubr.bf16.mxu0 0
      %1744 = vmatmul.mubr.bf16.gmra.mrb[0].mxu0 %v1203
      %v1745 = vpop.f32.mrb[0].mxu0
      %v1746 = vadd.f32 %v448, %v1745
      %v1747 = vpop.f32.mrb[0].mxu0
      %v1748 = vpop.f32.mrb[0].mxu0
      %v1749 = vadd.f32 %v448, %v1748
      %v1750 = vpop.f32.mrb[0].mxu0
      %1751 = vmatprep.mubr.bf16.mxu0 0
      %1752 = vmatmul.mubr.bf16.gmra.mrb[0].mxu0 %v1206
      %v1753 = vpop.f32.mrb[0].mxu0
      %v1754 = vadd.f32 %v448, %v1753
      %v1755 = vpop.f32.mrb[0].mxu0
      %v1756 = vpop.f32.mrb[0].mxu0
      %v1757 = vadd.f32 %v448, %v1756
      %v1758 = vpop.f32.mrb[0].mxu0
      %1759 = vmatprep.mubr.bf16.mxu0 0
      %1760 = vmatmul.mubr.bf16.gmra.mrb[0].mxu0 %v1209
      %v1761 = vpop.f32.mrb[0].mxu0
      %v1762 = vadd.f32 %v448, %v1761
      %v1763 = vpop.f32.mrb[0].mxu0
      %v1764 = vpop.f32.mrb[0].mxu0
      %v1765 = vadd.f32 %v448, %v1764
      %v1766 = vpop.f32.mrb[0].mxu0
      %1767 = vmatprep.mubr.bf16.mxu0 0
      %1768 = vmatmul.mubr.bf16.gmra.mrb[0].mxu0 %v1212
      %v1769 = vpop.f32.mrb[0].mxu0
      %v1770 = vadd.f32 %v448, %v1769
      %v1771 = vpop.f32.mrb[0].mxu0
      %v1772 = vpop.f32.mrb[0].mxu0
      %v1773 = vadd.f32 %v448, %v1772
      %v1774 = vpop.f32.mrb[0].mxu0
      %1775 = vmatprep.mubr.bf16.mxu0 0
      %1776 = vmatmul.mubr.bf16.gmra.mrb[0].mxu0 %v1215
      %v1777 = vpop.f32.mrb[0].mxu0
      %v1778 = vadd.f32 %v448, %v1777
      %v1779 = vpop.f32.mrb[0].mxu0
      %v1780 = vpop.f32.mrb[0].mxu0
      %v1781 = vadd.f32 %v448, %v1780
      %v1782 = vpop.f32.mrb[0].mxu0
      %1783 = vmatprep.mubr.bf16.mxu0 0
      %1784 = vmatmul.mubr.bf16.gmra.mrb[0].mxu0 %v1218
      %v1785 = vpop.f32.mrb[0].mxu0
      %v1786 = vadd.f32 %v448, %v1785
      %v1787 = vpop.f32.mrb[0].mxu0
      %v1788 = vpop.f32.mrb[0].mxu0
      %v1789 = vadd.f32 %v448, %v1788
      %v1790 = vpop.f32.mrb[0].mxu0
      %1791 = vmatprep.mubr.bf16.mxu0 0
      %1792 = vmatmul.mubr.bf16.gmra.mrb[0].mxu0 %v1221
      %v1793 = vpop.f32.mrb[0].mxu0
      %v1794 = vadd.f32 %v448, %v1793
      %v1795 = vpop.f32.mrb[0].mxu0
      %v1796 = vpop.f32.mrb[0].mxu0
      %v1797 = vadd.f32 %v448, %v1796
      %v1798 = vpop.f32.mrb[0].mxu0
      %1799 = vmatprep.mubr.bf16.mxu0 0
      %1800 = vmatmul.mubr.bf16.gmra.mrb[0].mxu0 %v1224
      %v1801 = vpop.f32.mrb[0].mxu0
      %v1802 = vadd.f32 %v448, %v1801
      %v1803 = vpop.f32.mrb[0].mxu0
      %v1804 = vpop.f32.mrb[0].mxu0
      %v1805 = vadd.f32 %v448, %v1804
      %v1806 = vpop.f32.mrb[0].mxu0
      %1807 = vmatprep.mubr.bf16.mxu0 0
      %1808 = vmatmul.mubr.bf16.gmra.mrb[0].mxu0 %v1227
      %v1809 = vpop.f32.mrb[0].mxu0
      %v1810 = vadd.f32 %v448, %v1809
      %v1811 = vpop.f32.mrb[0].mxu0
      %v1812 = vpop.f32.mrb[0].mxu0
      %v1813 = vadd.f32 %v448, %v1812
      %v1814 = vpop.f32.mrb[0].mxu0
      %1815 = vmatprep.mubr.bf16.mxu0 0
      %1816 = vmatmul.mubr.bf16.gmra.mrb[0].mxu0 %v1230
      %v1817 = vpop.f32.mrb[0].mxu0
      %v1818 = vadd.f32 %v448, %v1817
      %v1819 = vpop.f32.mrb[0].mxu0
      %v1820 = vpop.f32.mrb[0].mxu0
      %v1821 = vadd.f32 %v448, %v1820
      %v1822 = vpop.f32.mrb[0].mxu0
      %1823 = vmatprep.mubr.bf16.mxu0 0
      %1824 = vmatmul.mubr.bf16.gmra.mrb[0].mxu0 %v1233
      %v1825 = vpop.f32.mrb[0].mxu0
      %v1826 = vadd.f32 %v448, %v1825
      %v1827 = vpop.f32.mrb[0].mxu0
      %v1828 = vpop.f32.mrb[0].mxu0
      %v1829 = vadd.f32 %v448, %v1828
      %v1830 = vpop.f32.mrb[0].mxu0
      %1831 = vmatprep.mubr.bf16.mxu0 0
      %1832 = vmatmul.mubr.bf16.gmra.mrb[0].mxu0 %v1236
      %v1833 = vpop.f32.mrb[0].mxu0
      %v1834 = vadd.f32 %v448, %v1833
      %v1835 = vpop.f32.mrb[0].mxu0
      %v1836 = vpop.f32.mrb[0].mxu0
      %v1837 = vadd.f32 %v448, %v1836
      %v1838 = vpop.f32.mrb[0].mxu0
      %1839 = vmatprep.mubr.bf16.mxu0 0
      %1840 = vmatmul.mubr.bf16.gmra.mrb[0].mxu0 %v1239
      %v1841 = vpop.f32.mrb[0].mxu0
      %v1842 = vadd.f32 %v448, %v1841
      %v1843 = vpop.f32.mrb[0].mxu0
      %v1844 = vpop.f32.mrb[0].mxu0
      %v1845 = vadd.f32 %v448, %v1844
      %v1846 = vpop.f32.mrb[0].mxu0
      %1847 = vmatprep.mubr.bf16.mxu0 0
      %1848 = vmatmul.mubr.bf16.gmra.mrb[0].mxu0 %v1242
      %v1849 = vpop.f32.mrb[0].mxu0
      %v1850 = vadd.f32 %v448, %v1849
      %v1851 = vpop.f32.mrb[0].mxu0
      %v1852 = vpop.f32.mrb[0].mxu0
      %v1853 = vadd.f32 %v448, %v1852
      %v1854 = vpop.f32.mrb[0].mxu0
      %1855 = vmatprep.mubr.bf16.mxu0 0
      %1856 = vmatmul.mubr.bf16.gmra.mrb[0].mxu0 %v1245
      %v1857 = vpop.f32.mrb[0].mxu0
      %v1858 = vadd.f32 %v448, %v1857
      %v1859 = vpop.f32.mrb[0].mxu0
      %v1860 = vpop.f32.mrb[0].mxu0
      %v1861 = vadd.f32 %v448, %v1860
      %v1862 = vpop.f32.mrb[0].mxu0
      %1863 = vmatprep.mubr.bf16.mxu0 0
      %1864 = vmatmul.mubr.bf16.gmra.mrb[0].mxu0 %v1248
      %v1865 = vpop.f32.mrb[0].mxu0
      %v1866 = vadd.f32 %v448, %v1865
      %v1867 = vpop.f32.mrb[0].mxu0
      %v1868 = vpop.f32.mrb[0].mxu0
      %v1869 = vadd.f32 %v448, %v1868
      %v1870 = vpop.f32.mrb[0].mxu0
      %1871 = vmatprep.mubr.bf16.mxu0 0
      %1872 = vmatmul.mubr.bf16.gmra.mrb[0].mxu0 %v1251
      %v1873 = vpop.f32.mrb[0].mxu0
      %v1874 = vadd.f32 %v448, %v1873
      %v1875 = vpop.f32.mrb[0].mxu0
      %v1876 = vpop.f32.mrb[0].mxu0
      %v1877 = vadd.f32 %v448, %v1876
      %v1878 = vpop.f32.mrb[0].mxu0
      %1879 = vmatprep.mubr.bf16.mxu0 0
      %1880 = vmatmul.mubr.bf16.gmra.mrb[0].mxu0 %v1254
      %v1881 = vpop.f32.mrb[0].mxu0
      %v1882 = vadd.f32 %v448, %v1881
      %v1883 = vpop.f32.mrb[0].mxu0
      %v1884 = vpop.f32.mrb[0].mxu0
      %v1885 = vadd.f32 %v448, %v1884
      %v1886 = vpop.f32.mrb[0].mxu0
      %1887 = vmatprep.mubr.bf16.mxu0 0
      %1888 = vmatmul.mubr.bf16.gmra.mrb[0].mxu0 %v1257
      %v1889 = vpop.f32.mrb[0].mxu0
      %v1890 = vadd.f32 %v448, %v1889
      %v1891 = vpop.f32.mrb[0].mxu0
      %v1892 = vpop.f32.mrb[0].mxu0
      %v1893 = vadd.f32 %v448, %v1892
      %v1894 = vpop.f32.mrb[0].mxu0
      %1895 = vmatprep.mubr.bf16.mxu0 0
      %1896 = vmatmul.mubr.bf16.gmra.mrb[0].mxu0 %v1260
      %v1897 = vpop.f32.mrb[0].mxu0
      %v1898 = vadd.f32 %v448, %v1897
      %v1899 = vpop.f32.mrb[0].mxu0
      %v1900 = vpop.f32.mrb[0].mxu0
      %v1901 = vadd.f32 %v448, %v1900
      %v1902 = vpop.f32.mrb[0].mxu0
      %1903 = vmatprep.mubr.bf16.mxu0 0
      %1904 = vmatmul.mubr.bf16.gmra.mrb[0].mxu0 %v1263
      %v1905 = vpop.f32.mrb[0].mxu0
      %v1906 = vadd.f32 %v448, %v1905
      %v1907 = vpop.f32.mrb[0].mxu0
      %v1908 = vpop.f32.mrb[0].mxu0
      %v1909 = vadd.f32 %v448, %v1908
      %v1910 = vpop.f32.mrb[0].mxu0
      %1911 = vmatprep.mubr.bf16.mxu0 0
      %1912 = vmatmul.mubr.bf16.gmra.mrb[0].mxu0 %v1266
      %v1913 = vpop.f32.mrb[0].mxu0
      %v1914 = vadd.f32 %v448, %v1913
      %v1915 = vpop.f32.mrb[0].mxu0
      %v1916 = vpop.f32.mrb[0].mxu0
      %v1917 = vadd.f32 %v448, %v1916
      %v1918 = vpop.f32.mrb[0].mxu0
      %1919 = vmatprep.mubr.bf16.mxu0 0
      %1920 = vmatmul.mubr.bf16.gmra.mrb[0].mxu0 %v1269
      %v1921 = vpop.f32.mrb[0].mxu0
      %v1922 = vadd.f32 %v448, %v1921
      %v1923 = vpop.f32.mrb[0].mxu0
      %v1924 = vpop.f32.mrb[0].mxu0
      %v1925 = vadd.f32 %v448, %v1924
      %v1926 = vpop.f32.mrb[0].mxu0
      %1927 = vmatprep.mubr.bf16.mxu0 0
      %1928 = vmatmul.mubr.bf16.gmra.mrb[0].mxu0 %v1272
      %v1929 = vpop.f32.mrb[0].mxu0
      %v1930 = vadd.f32 %v448, %v1929
      %v1931 = vpop.f32.mrb[0].mxu0
      %v1932 = vpop.f32.mrb[0].mxu0
      %v1933 = vadd.f32 %v448, %v1932
      %v1934 = vpop.f32.mrb[0].mxu0
      %1935 = vmatprep.mubr.bf16.mxu0 0
      %1936 = vmatmul.mubr.bf16.gmra.mrb[0].mxu0 %v1275
      %v1937 = vpop.f32.mrb[0].mxu0
      %v1938 = vadd.f32 %v448, %v1937
      %v1939 = vpop.f32.mrb[0].mxu0
      %v1940 = vpop.f32.mrb[0].mxu0
      %v1941 = vadd.f32 %v448, %v1940
      %v1942 = vpop.f32.mrb[0].mxu0
      %1943 = vmatprep.mubr.bf16.mxu0 0
      %1944 = vmatmul.mubr.bf16.gmra.mrb[0].mxu0 %v1278
      %v1945 = vpop.f32.mrb[0].mxu0
      %v1946 = vadd.f32 %v448, %v1945
      %v1947 = vpop.f32.mrb[0].mxu0
      %v1948 = vpop.f32.mrb[0].mxu0
      %v1949 = vadd.f32 %v448, %v1948
      %v1950 = vpop.f32.mrb[0].mxu0
      %1951 = vmatprep.mubr.bf16.mxu0 0
      %1952 = vmatmul.mubr.bf16.gmra.mrb[0].mxu0 %v1281
      %v1953 = vpop.f32.mrb[0].mxu0
      %v1954 = vadd.f32 %v448, %v1953
      %v1955 = vpop.f32.mrb[0].mxu0
      %v1956 = vpop.f32.mrb[0].mxu0
      %v1957 = vadd.f32 %v448, %v1956
      %v1958 = vpop.f32.mrb[0].mxu0
      %1959 = vmatprep.mubr.bf16.mxu0 0
      %1960 = vmatmul.mubr.bf16.gmra.mrb[0].mxu0 %v1284
      %v1961 = vpop.f32.mrb[0].mxu0
      %v1962 = vadd.f32 %v448, %v1961
      %v1963 = vpop.f32.mrb[0].mxu0
      %v1964 = vpop.f32.mrb[0].mxu0
      %v1965 = vadd.f32 %v448, %v1964
      %v1966 = vpop.f32.mrb[0].mxu0
      %1967 = vmatprep.mubr.bf16.mxu0 0
      %1968 = vmatmul.mubr.bf16.gmra.mrb[0].mxu0 %v1287
      %v1969 = vpop.f32.mrb[0].mxu0
      %v1970 = vadd.f32 %v448, %v1969
      %v1971 = vpop.f32.mrb[0].mxu0
      %v1972 = vpop.f32.mrb[0].mxu0
      %v1973 = vadd.f32 %v448, %v1972
      %v1974 = vpop.f32.mrb[0].mxu0
      %1975 = vmatprep.mubr.bf16.mxu0 0
      %1976 = vmatmul.mubr.bf16.gmra.mrb[0].mxu0 %v1290
      %v1977 = vpop.f32.mrb[0].mxu0
      %v1978 = vadd.f32 %v448, %v1977
      %v1979 = vpop.f32.mrb[0].mxu0
      %v1980 = vpop.f32.mrb[0].mxu0
      %v1981 = vadd.f32 %v448, %v1980
      %v1982 = vpop.f32.mrb[0].mxu0
      %1983 = vmatprep.mubr.bf16.mxu0 0
      %1984 = vmatmul.mubr.bf16.gmra.mrb[0].mxu0 %v1293
      %v1985 = vpop.f32.mrb[0].mxu0
      %v1986 = vadd.f32 %v448, %v1985
      %v1987 = vpop.f32.mrb[0].mxu0
      %v1988 = vpop.f32.mrb[0].mxu0
      %v1989 = vadd.f32 %v448, %v1988
      %v1990 = vpop.f32.mrb[0].mxu0
      %1991 = vmatprep.mubr.bf16.mxu0 0
      %1992 = vmatmul.mubr.bf16.gmra.mrb[0].mxu0 %v1296
      %v1993 = vpop.f32.mrb[0].mxu0
      %v1994 = vadd.f32 %v448, %v1993
      %v1995 = vpop.f32.mrb[0].mxu0
      %v1996 = vpop.f32.mrb[0].mxu0
      %v1997 = vadd.f32 %v448, %v1996
      %v1998 = vpop.f32.mrb[0].mxu0
      %1999 = vmatprep.mubr.bf16.mxu0 0
      %2000 = vmatmul.mubr.bf16.gmra.mrb[0].mxu0 %v1299
      %v2001 = vpop.f32.mrb[0].mxu0
      %v2002 = vadd.f32 %v448, %v2001
      %v2003 = vpop.f32.mrb[0].mxu0
      %v2004 = vpop.f32.mrb[0].mxu0
      %v2005 = vadd.f32 %v448, %v2004
      %v2006 = vpop.f32.mrb[0].mxu0
      %2007 = vmatprep.mubr.bf16.mxu0 0
      %2008 = vmatmul.mubr.bf16.gmra.mrb[0].mxu0 %v1302
      %v2009 = vpop.f32.mrb[0].mxu0
      %v2010 = vadd.f32 %v448, %v2009
      %v2011 = vpop.f32.mrb[0].mxu0
      %v2012 = vpop.f32.mrb[0].mxu0
      %v2013 = vadd.f32 %v448, %v2012
      %v2014 = vpop.f32.mrb[0].mxu0
      %2015 = vmatprep.mubr.bf16.mxu0 0
      %2016 = vmatmul.mubr.bf16.gmra.mrb[0].mxu0 %v1305
      %v2017 = vpop.f32.mrb[0].mxu0
      %v2018 = vadd.f32 %v448, %v2017
      %v2019 = vpop.f32.mrb[0].mxu0
      %v2020 = vpop.f32.mrb[0].mxu0
      %v2021 = vadd.f32 %v448, %v2020
      %v2022 = vpop.f32.mrb[0].mxu0
      %2023 = vmatprep.mubr.bf16.mxu0 0
      %2024 = vmatmul.mubr.bf16.gmra.mrb[0].mxu0 %v1308
      %v2025 = vpop.f32.mrb[0].mxu0
      %v2026 = vadd.f32 %v448, %v2025
      %v2027 = vpop.f32.mrb[0].mxu0
      %v2028 = vpop.f32.mrb[0].mxu0
      %v2029 = vadd.f32 %v448, %v2028
      %v2030 = vpop.f32.mrb[0].mxu0
      %2031 = vmatprep.mubr.bf16.mxu0 0
      %2032 = vmatmul.mubr.bf16.gmra.mrb[0].mxu0 %v1311
      %v2033 = vpop.f32.mrb[0].mxu0
      %v2034 = vadd.f32 %v448, %v2033
      %v2035 = vpop.f32.mrb[0].mxu0
      %v2036 = vpop.f32.mrb[0].mxu0
      %v2037 = vadd.f32 %v448, %v2036
      %v2038 = vpop.f32.mrb[0].mxu0
      %2039 = vmatprep.mubr.bf16.mxu0 0
      %2040 = vmatmul.mubr.bf16.gmra.mrb[0].mxu0 %v1314
      %v2041 = vpop.f32.mrb[0].mxu0
      %v2042 = vadd.f32 %v448, %v2041
      %v2043 = vpop.f32.mrb[0].mxu0
      %v2044 = vpop.f32.mrb[0].mxu0
      %v2045 = vadd.f32 %v448, %v2044
      %v2046 = vpop.f32.mrb[0].mxu0
      %2047 = vmatprep.mubr.bf16.mxu0 0
      %2048 = vmatmul.mubr.bf16.gmra.mrb[0].mxu0 %v1317
      %v2049 = vpop.f32.mrb[0].mxu0
      %v2050 = vadd.f32 %v448, %v2049
      %v2051 = vpop.f32.mrb[0].mxu0
      %v2052 = vpop.f32.mrb[0].mxu0
      %v2053 = vadd.f32 %v448, %v2052
      %v2054 = vpop.f32.mrb[0].mxu0
      %2055 = vmatprep.mubr.bf16.mxu0 0
      %2056 = vmatmul.mubr.bf16.gmra.mrb[0].mxu0 %v1320
      %v2057 = vpop.f32.mrb[0].mxu0
      %v2058 = vadd.f32 %v448, %v2057
      %v2059 = vpop.f32.mrb[0].mxu0
      %v2060 = vpop.f32.mrb[0].mxu0
      %v2061 = vadd.f32 %v448, %v2060
      %v2062 = vpop.f32.mrb[0].mxu0
      %2063 = vmatprep.mubr.bf16.mxu0 0
      %2064 = vmatmul.mubr.bf16.gmra.mrb[0].mxu0 %v1323
      %v2065 = vpop.f32.mrb[0].mxu0
      %v2066 = vadd.f32 %v448, %v2065
      %v2067 = vpop.f32.mrb[0].mxu0
      %v2068 = vpop.f32.mrb[0].mxu0
      %v2069 = vadd.f32 %v448, %v2068
      %v2070 = vpop.f32.mrb[0].mxu0
      %2071 = vmatprep.mubr.bf16.mxu0 0
      %2072 = vmatmul.mubr.bf16.gmra.mrb[0].mxu0 %v1326
      %v2073 = vpop.f32.mrb[0].mxu0
      %v2074 = vadd.f32 %v448, %v2073
      %v2075 = vpop.f32.mrb[0].mxu0
      %v2076 = vpop.f32.mrb[0].mxu0
      %v2077 = vadd.f32 %v448, %v2076
      %v2078 = vpop.f32.mrb[0].mxu0
      %2079 = vmatprep.mubr.bf16.mxu0 0
      %2080 = vmatmul.mubr.bf16.gmra.mrb[0].mxu0 %v1329
      %v2081 = vpop.f32.mrb[0].mxu0
      %v2082 = vadd.f32 %v448, %v2081
      %v2083 = vpop.f32.mrb[0].mxu0
      %v2084 = vpop.f32.mrb[0].mxu0
      %v2085 = vadd.f32 %v448, %v2084
      %v2086 = vpop.f32.mrb[0].mxu0
      %2087 = vmatprep.mubr.bf16.mxu0 0
      %2088 = vmatmul.mubr.bf16.gmra.mrb[0].mxu0 %v1332
      %v2089 = vpop.f32.mrb[0].mxu0
      %v2090 = vadd.f32 %v448, %v2089
      %v2091 = vpop.f32.mrb[0].mxu0
      %v2092 = vpop.f32.mrb[0].mxu0
      %v2093 = vadd.f32 %v448, %v2092
      %v2094 = vpop.f32.mrb[0].mxu0
      %2095 = vmatprep.mubr.bf16.mxu0 0
      %2096 = vmatmul.mubr.bf16.gmra.mrb[0].mxu0 %v1335
      %v2097 = vpop.f32.mrb[0].mxu0
      %v2098 = vadd.f32 %v448, %v2097
      %v2099 = vpop.f32.mrb[0].mxu0
      %v2100 = vpop.f32.mrb[0].mxu0
      %v2101 = vadd.f32 %v448, %v2100
      %v2102 = vpop.f32.mrb[0].mxu0
      %2103 = vmatprep.mubr.bf16.mxu0 0
      %2104 = vmatmul.mubr.bf16.gmra.mrb[0].mxu0 %v1338
      %v2105 = vpop.f32.mrb[0].mxu0
      %v2106 = vadd.f32 %v448, %v2105
      %v2107 = vpop.f32.mrb[0].mxu0
      %v2108 = vpop.f32.mrb[0].mxu0
      %v2109 = vadd.f32 %v448, %v2108
      %v2110 = vpop.f32.mrb[0].mxu0
      %2111 = vmatprep.mubr.bf16.mxu0 0
      %2112 = vmatmul.mubr.bf16.gmra.mrb[0].mxu0 %v1341
      %v2113 = vpop.f32.mrb[0].mxu0
      %v2114 = vadd.f32 %v448, %v2113
      %v2115 = vpop.f32.mrb[0].mxu0
      %v2116 = vpop.f32.mrb[0].mxu0
      %v2117 = vadd.f32 %v448, %v2116
      %v2118 = vpop.f32.mrb[0].mxu0
      %2119 = vmatprep.mubr.bf16.mxu0 0
      %2120 = vmatmul.mubr.bf16.gmra.mrb[0].mxu0 %v1344
      %v2121 = vpop.f32.mrb[0].mxu0
      %v2122 = vadd.f32 %v448, %v2121
      %v2123 = vpop.f32.mrb[0].mxu0
      %v2124 = vpop.f32.mrb[0].mxu0
      %v2125 = vadd.f32 %v448, %v2124
      %v2126 = vpop.f32.mrb[0].mxu0
      %2127 = vmatprep.mubr.bf16.mxu0 0
      %2128 = vmatmul.mubr.bf16.gmra.mrb[0].mxu0 %v1347
      %v2129 = vpop.f32.mrb[0].mxu0
      %v2130 = vadd.f32 %v448, %v2129
      %v2131 = vpop.f32.mrb[0].mxu0
      %v2132 = vpop.f32.mrb[0].mxu0
      %v2133 = vadd.f32 %v448, %v2132
      %v2134 = vpop.f32.mrb[0].mxu0
      %2135 = vmatprep.mubr.bf16.mxu0 0
      %2136 = vmatmul.mubr.bf16.gmra.mrb[0].mxu0 %v1350
      %v2137 = vpop.f32.mrb[0].mxu0
      %v2138 = vadd.f32 %v448, %v2137
      %v2139 = vpop.f32.mrb[0].mxu0
      %v2140 = vpop.f32.mrb[0].mxu0
      %v2141 = vadd.f32 %v448, %v2140
      %v2142 = vpop.f32.mrb[0].mxu0
      %2143 = vmatprep.mubr.bf16.mxu0 0
      %2144 = vmatmul.mubr.bf16.gmra.mrb[0].mxu0 %v1353
      %v2145 = vpop.f32.mrb[0].mxu0
      %v2146 = vadd.f32 %v448, %v2145
      %v2147 = vpop.f32.mrb[0].mxu0
      %v2148 = vpop.f32.mrb[0].mxu0
      %v2149 = vadd.f32 %v448, %v2148
      %v2150 = vpop.f32.mrb[0].mxu0
      %2151 = vmatprep.mubr.bf16.mxu0 0
      %2152 = vmatmul.mubr.bf16.gmra.mrb[0].mxu0 %v1356
      %v2153 = vpop.f32.mrb[0].mxu0
      %v2154 = vadd.f32 %v448, %v2153
      %v2155 = vpop.f32.mrb[0].mxu0
      %v2156 = vpop.f32.mrb[0].mxu0
      %v2157 = vadd.f32 %v448, %v2156
      %v2158 = vpop.f32.mrb[0].mxu0
      %2159 = vmatprep.mubr.bf16.mxu0 0
      %2160 = vmatmul.mubr.bf16.gmra.mrb[0].mxu0 %v1359
      %v2161 = vpop.f32.mrb[0].mxu0
      %v2162 = vadd.f32 %v448, %v2161
      %v2163 = vpop.f32.mrb[0].mxu0
      %v2164 = vpop.f32.mrb[0].mxu0
      %v2165 = vadd.f32 %v448, %v2164
      %v2166 = vpop.f32.mrb[0].mxu0
      %2167 = vmatprep.mubr.bf16.mxu0 0
      %2168 = vmatmul.mubr.bf16.gmra.mrb[0].mxu0 %v1362
      %v2169 = vpop.f32.mrb[0].mxu0
      %v2170 = vadd.f32 %v448, %v2169
      %v2171 = vpop.f32.mrb[0].mxu0
      %v2172 = vpop.f32.mrb[0].mxu0
      %v2173 = vadd.f32 %v448, %v2172
      %v2174 = vpop.f32.mrb[0].mxu0
      %2175 = vmatprep.mubr.bf16.mxu0 0
      %2176 = vmatmul.mubr.bf16.gmra.mrb[0].mxu0 %v1365
      %v2177 = vpop.f32.mrb[0].mxu0
      %v2178 = vadd.f32 %v448, %v2177
      %v2179 = vpop.f32.mrb[0].mxu0
      %v2180 = vpop.f32.mrb[0].mxu0
      %v2181 = vadd.f32 %v448, %v2180
      %v2182 = vpop.f32.mrb[0].mxu0
      %2183 = vmatprep.mubr.bf16.mxu0 0
      %2184 = vmatmul.mubr.bf16.gmra.mrb[0].mxu0 %v1368
      %v2185 = vpop.f32.mrb[0].mxu0
      %v2186 = vadd.f32 %v448, %v2185
      %v2187 = vpop.f32.mrb[0].mxu0
      %v2188 = vpop.f32.mrb[0].mxu0
      %v2189 = vadd.f32 %v448, %v2188
      %v2190 = vpop.f32.mrb[0].mxu0
      %2191 = vmatprep.mubr.bf16.mxu0 0
      %2192 = vmatmul.mubr.bf16.gmra.mrb[0].mxu0 %v1371
      %v2193 = vpop.f32.mrb[0].mxu0
      %v2194 = vadd.f32 %v448, %v2193
      %v2195 = vpop.f32.mrb[0].mxu0
      %v2196 = vpop.f32.mrb[0].mxu0
      %v2197 = vadd.f32 %v448, %v2196
      %v2198 = vpop.f32.mrb[0].mxu0
      %2199 = vmatprep.mubr.bf16.mxu0 0
      %2200 = vmatmul.mubr.bf16.gmra.mrb[0].mxu0 %v1374
      %v2201 = vpop.f32.mrb[0].mxu0
      %v2202 = vadd.f32 %v448, %v2201
      %v2203 = vpop.f32.mrb[0].mxu0
      %v2204 = vpop.f32.mrb[0].mxu0
      %v2205 = vadd.f32 %v448, %v2204
      %v2206 = vpop.f32.mrb[0].mxu0
      %2207 = vmatprep.mubr.bf16.mxu0 0
      %2208 = vmatmul.mubr.bf16.gmra.mrb[0].mxu0 %v1377
      %v2209 = vpop.f32.mrb[0].mxu0
      %v2210 = vadd.f32 %v448, %v2209
      %v2211 = vpop.f32.mrb[0].mxu0
      %v2212 = vpop.f32.mrb[0].mxu0
      %v2213 = vadd.f32 %v448, %v2212
      %v2214 = vpop.f32.mrb[0].mxu0
      %2215 = vmatprep.mubr.bf16.mxu0 0
      %2216 = vmatmul.mubr.bf16.gmra.mrb[0].mxu0 %v1380
      %v2217 = vpop.f32.mrb[0].mxu0
      %v2218 = vadd.f32 %v448, %v2217
      %v2219 = vpop.f32.mrb[0].mxu0
      %v2220 = vpop.f32.mrb[0].mxu0
      %v2221 = vadd.f32 %v448, %v2220
      %v2222 = vpop.f32.mrb[0].mxu0
      %2223 = vmatprep.mubr.bf16.mxu0 0
      %2224 = vmatmul.mubr.bf16.gmra.mrb[0].mxu0 %v1383
      %v2225 = vpop.f32.mrb[0].mxu0
      %v2226 = vadd.f32 %v448, %v2225
      %v2227 = vpop.f32.mrb[0].mxu0
      %v2228 = vpop.f32.mrb[0].mxu0
      %v2229 = vadd.f32 %v448, %v2228
      %v2230 = vpop.f32.mrb[0].mxu0
      %2231 = vmatprep.mubr.bf16.mxu0 0
      %2232 = vmatmul.mubr.bf16.gmra.mrb[0].mxu0 %v1386
      %v2233 = vpop.f32.mrb[0].mxu0
      %v2234 = vadd.f32 %v448, %v2233
      %v2235 = vpop.f32.mrb[0].mxu0
      %v2236 = vpop.f32.mrb[0].mxu0
      %v2237 = vadd.f32 %v448, %v2236
      %v2238 = vpop.f32.mrb[0].mxu0
      %2239 = vmatprep.mubr.bf16.mxu0 0
      %2240 = vmatmul.mubr.bf16.gmra.mrb[0].mxu0 %v1389
      %v2241 = vpop.f32.mrb[0].mxu0
      %v2242 = vadd.f32 %v448, %v2241
      %v2243 = vpop.f32.mrb[0].mxu0
      %v2244 = vpop.f32.mrb[0].mxu0
      %v2245 = vadd.f32 %v448, %v2244
      %v2246 = vpop.f32.mrb[0].mxu0
      %2247 = vmatprep.mubr.bf16.mxu0 0
      %2248 = vmatmul.mubr.bf16.gmra.mrb[0].mxu0 %v1392
      %v2249 = vpop.f32.mrb[0].mxu0
      %v2250 = vadd.f32 %v448, %v2249
      %v2251 = vpop.f32.mrb[0].mxu0
      %v2252 = vpop.f32.mrb[0].mxu0
      %v2253 = vadd.f32 %v448, %v2252
      %v2254 = vpop.f32.mrb[0].mxu0
      %2255 = vmatprep.mubr.bf16.mxu0 0
      %2256 = vmatmul.mubr.bf16.gmra.mrb[0].mxu0 %v1395
      %v2257 = vpop.f32.mrb[0].mxu0
      %v2258 = vadd.f32 %v448, %v2257
      %v2259 = vpop.f32.mrb[0].mxu0
      %v2260 = vpop.f32.mrb[0].mxu0
      %v2261 = vadd.f32 %v448, %v2260
      %v2262 = vpop.f32.mrb[0].mxu0
      %2263 = vmatprep.mubr.bf16.mxu0 0
      %2264 = vmatmul.mubr.bf16.gmra.mrb[0].mxu0 %v1398
      %v2265 = vpop.f32.mrb[0].mxu0
      %v2266 = vadd.f32 %v448, %v2265
      %v2267 = vpop.f32.mrb[0].mxu0
      %v2268 = vpop.f32.mrb[0].mxu0
      %v2269 = vadd.f32 %v448, %v2268
      %v2270 = vpop.f32.mrb[0].mxu0
      %2271 = vmatprep.mubr.bf16.mxu0 0
      %2272 = vmatmul.mubr.bf16.gmra.mrb[0].mxu0 %v1401
      %v2273 = vpop.f32.mrb[0].mxu0
      %v2274 = vadd.f32 %v448, %v2273
      %v2275 = vpop.f32.mrb[0].mxu0
      %v2276 = vpop.f32.mrb[0].mxu0
      %v2277 = vadd.f32 %v448, %v2276
      %v2278 = vpop.f32.mrb[0].mxu0
      %2279 = vmatprep.mubr.bf16.mxu0 0
      %2280 = vmatmul.mubr.bf16.gmra.mrb[0].mxu0 %v1404
      %v2281 = vpop.f32.mrb[0].mxu0
      %v2282 = vadd.f32 %v448, %v2281
      %v2283 = vpop.f32.mrb[0].mxu0
      %v2284 = vpop.f32.mrb[0].mxu0
      %v2285 = vadd.f32 %v448, %v2284
      %v2286 = vpop.f32.mrb[0].mxu0
      %2287 = vmatprep.mubr.bf16.mxu0 0
      %2288 = vmatmul.mubr.bf16.gmra.mrb[0].mxu0 %v1407
      %v2289 = vpop.f32.mrb[0].mxu0
      %v2290 = vadd.f32 %v448, %v2289
      %v2291 = vpop.f32.mrb[0].mxu0
      %v2292 = vpop.f32.mrb[0].mxu0
      %v2293 = vadd.f32 %v448, %v2292
      %v2294 = vpop.f32.mrb[0].mxu0
      %2295 = vmatprep.mubr.bf16.mxu0 0
      %2296 = vmatmul.mubr.bf16.gmra.mrb[0].mxu0 %v1410
      %v2297 = vpop.f32.mrb[0].mxu0
      %v2298 = vadd.f32 %v448, %v2297
      %v2299 = vpop.f32.mrb[0].mxu0
      %v2300 = vpop.f32.mrb[0].mxu0
      %v2301 = vadd.f32 %v448, %v2300
      %v2302 = vpop.f32.mrb[0].mxu0
      %2303 = vmatprep.mubr.bf16.mxu0 0
      %2304 = vmatmul.mubr.bf16.gmra.mrb[0].mxu0 %v1413
      %v2305 = vpop.f32.mrb[0].mxu0
      %v2306 = vadd.f32 %v448, %v2305
      %v2307 = vpop.f32.mrb[0].mxu0
      %v2308 = vpop.f32.mrb[0].mxu0
      %v2309 = vadd.f32 %v448, %v2308
      %v2310 = vpop.f32.mrb[0].mxu0
      %2311 = vmatprep.mubr.bf16.mxu0 0
      %2312 = vmatmul.mubr.bf16.gmra.mrb[0].mxu0 %v1416
      %v2313 = vpop.f32.mrb[0].mxu0
      %v2314 = vadd.f32 %v448, %v2313
      %v2315 = vpop.f32.mrb[0].mxu0
      %v2316 = vpop.f32.mrb[0].mxu0
      %v2317 = vadd.f32 %v448, %v2316
      %v2318 = vpop.f32.mrb[0].mxu0
      %2319 = vmatprep.mubr.bf16.mxu0 0
      %2320 = vmatmul.mubr.bf16.gmra.mrb[0].mxu0 %v1419
      %v2321 = vpop.f32.mrb[0].mxu0
      %v2322 = vadd.f32 %v448, %v2321
      %v2323 = vpop.f32.mrb[0].mxu0
      %v2324 = vpop.f32.mrb[0].mxu0
      %v2325 = vadd.f32 %v448, %v2324
      %v2326 = vpop.f32.mrb[0].mxu0
      %2327 = vmatprep.mubr.bf16.mxu0 0
      %2328 = vmatmul.mubr.bf16.gmra.mrb[0].mxu0 %v1422
      %v2329 = vpop.f32.mrb[0].mxu0
      %v2330 = vadd.f32 %v448, %v2329
      %v2331 = vpop.f32.mrb[0].mxu0
      %v2332 = vpop.f32.mrb[0].mxu0
      %v2333 = vadd.f32 %v448, %v2332
      %v2334 = vpop.f32.mrb[0].mxu0
      %2335 = vmatprep.mubr.bf16.mxu0 0
      %2336 = vmatmul.mubr.bf16.gmra.mrb[0].mxu0 %v1425
      %v2337 = vpop.f32.mrb[0].mxu0
      %v2338 = vadd.f32 %v448, %v2337
      %v2339 = vpop.f32.mrb[0].mxu0
      %v2340 = vpop.f32.mrb[0].mxu0
      %v2341 = vadd.f32 %v448, %v2340
      %v2342 = vpop.f32.mrb[0].mxu0
      %2343 = vmatprep.mubr.bf16.mxu0 0
      %2344 = vmatmul.mubr.bf16.gmra.mrb[0].mxu0 %v1428
      %v2345 = vpop.f32.mrb[0].mxu0
      %v2346 = vadd.f32 %v448, %v2345
      %v2347 = vpop.f32.mrb[0].mxu0
      %v2348 = vpop.f32.mrb[0].mxu0
      %v2349 = vadd.f32 %v448, %v2348
      %v2350 = vpop.f32.mrb[0].mxu0
      %2351 = vmatprep.mubr.bf16.mxu0 0
      %2352 = vmatmul.mubr.bf16.gmra.mrb[0].mxu0 %v1431
      %v2353 = vpop.f32.mrb[0].mxu0
      %v2354 = vadd.f32 %v448, %v2353
      %v2355 = vpop.f32.mrb[0].mxu0
      %v2356 = vpop.f32.mrb[0].mxu0
      %v2357 = vadd.f32 %v448, %v2356
      %v2358 = vpop.f32.mrb[0].mxu0
      %2359 = vmatprep.mubr.bf16.mxu0 0
      %2360 = vmatmul.mubr.bf16.gmra.mrb[0].mxu0 %v1434
      %v2361 = vpop.f32.mrb[0].mxu0
      %v2362 = vadd.f32 %v448, %v2361
      %v2363 = vpop.f32.mrb[0].mxu0
      %v2364 = vpop.f32.mrb[0].mxu0
      %v2365 = vadd.f32 %v448, %v2364
      %v2366 = vpop.f32.mrb[0].mxu0
      %2367 = vmatprep.mubr.bf16.mxu0 0
      %2368 = vmatmul.mubr.bf16.gmra.mrb[0].mxu0 %v1437
      %v2369 = vpop.f32.mrb[0].mxu0
      %v2370 = vadd.f32 %v448, %v2369
      %v2371 = vpop.f32.mrb[0].mxu0
      %v2372 = vpop.f32.mrb[0].mxu0
      %v2373 = vadd.f32 %v448, %v2372
      %v2374 = vpop.f32.mrb[0].mxu0
      %2375 = vmatprep.mubr.bf16.mxu0 0
      %2376 = vmatmul.mubr.bf16.gmra.mrb[0].mxu0 %v1440
      %v2377 = vpop.f32.mrb[0].mxu0
      %v2378 = vadd.f32 %v448, %v2377
      %v2379 = vpop.f32.mrb[0].mxu0
      %v2380 = vpop.f32.mrb[0].mxu0
      %v2381 = vadd.f32 %v448, %v2380
      %v2382 = vpop.f32.mrb[0].mxu0
      %2383 = vmatprep.mubr.bf16.mxu0 0
      %2384 = vmatmul.mubr.bf16.gmra.mrb[0].mxu0 %v1443
      %v2385 = vpop.f32.mrb[0].mxu0
      %v2386 = vadd.f32 %v448, %v2385
      %v2387 = vpop.f32.mrb[0].mxu0
      %v2388 = vpop.f32.mrb[0].mxu0
      %v2389 = vadd.f32 %v448, %v2388
      %v2390 = vpop.f32.mrb[0].mxu0
      %2391 = vmatprep.mubr.bf16.mxu0 0
      %2392 = vmatmul.mubr.bf16.gmra.mrb[0].mxu0 %v1446
      %v2393 = vpop.f32.mrb[0].mxu0
      %v2394 = vadd.f32 %v448, %v2393
      %v2395 = vpop.f32.mrb[0].mxu0
      %v2396 = vpop.f32.mrb[0].mxu0
      %v2397 = vadd.f32 %v448, %v2396
      %v2398 = vpop.f32.mrb[0].mxu0
      %2399 = vmatprep.mubr.bf16.mxu0 0
      %2400 = vmatmul.mubr.bf16.gmra.mrb[0].mxu0 %v1449
      %v2401 = vpop.f32.mrb[0].mxu0
      %v2402 = vadd.f32 %v448, %v2401
      %v2403 = vpop.f32.mrb[0].mxu0
      %v2404 = vpop.f32.mrb[0].mxu0
      %v2405 = vadd.f32 %v448, %v2404
      %v2406 = vpop.f32.mrb[0].mxu0
      %2407 = vmatprep.mubr.bf16.mxu0 0
      %2408 = vmatmul.mubr.bf16.gmra.mrb[0].mxu0 %v1452
      %v2409 = vpop.f32.mrb[0].mxu0
      %v2410 = vadd.f32 %v448, %v2409
      %v2411 = vpop.f32.mrb[0].mxu0
      %v2412 = vpop.f32.mrb[0].mxu0
      %v2413 = vadd.f32 %v448, %v2412
      %v2414 = vpop.f32.mrb[0].mxu0
      %2415 = vmatprep.mubr.bf16.mxu0 0
      %2416 = vmatmul.mubr.bf16.gmra.mrb[0].mxu0 %v1455
      %v2417 = vpop.f32.mrb[0].mxu0
      %v2418 = vadd.f32 %v448, %v2417
      %v2419 = vpop.f32.mrb[0].mxu0
      %v2420 = vpop.f32.mrb[0].mxu0
      %v2421 = vadd.f32 %v448, %v2420
      %v2422 = vpop.f32.mrb[0].mxu0
      %2423 = vmatprep.mubr.bf16.mxu0 0
      %2424 = vmatmul.mubr.bf16.gmra.mrb[0].mxu0 %v1458
      %v2425 = vpop.f32.mrb[0].mxu0
      %v2426 = vadd.f32 %v448, %v2425
      %v2427 = vpop.f32.mrb[0].mxu0
      %v2428 = vpop.f32.mrb[0].mxu0
      %v2429 = vadd.f32 %v448, %v2428
      %v2430 = vpop.f32.mrb[0].mxu0
      %2431 = vmatprep.mubr.bf16.mxu0 0
      %2432 = vmatmul.mubr.bf16.gmra.mrb[0].mxu0 %v1461
      %v2433 = vpop.f32.mrb[0].mxu0
      %v2434 = vadd.f32 %v448, %v2433
      %v2435 = vpop.f32.mrb[0].mxu0
      %v2436 = vpop.f32.mrb[0].mxu0
      %v2437 = vadd.f32 %v448, %v2436
      %v2438 = vpop.f32.mrb[0].mxu0
      %2439 = vmatprep.mubr.bf16.mxu0 0
      %2440 = vmatmul.mubr.bf16.gmra.mrb[0].mxu0 %v1464
      %v2441 = vpop.f32.mrb[0].mxu0
      %v2442 = vadd.f32 %v448, %v2441
      %v2443 = vpop.f32.mrb[0].mxu0
      %v2444 = vpop.f32.mrb[0].mxu0
      %v2445 = vadd.f32 %v448, %v2444
      %v2446 = vpop.f32.mrb[0].mxu0
      %2447 = vmatprep.mubr.bf16.mxu0 0
      %2448 = vmatmul.mubr.bf16.gmra.mrb[0].mxu0 %v1467
      %v2449 = vpop.f32.mrb[0].mxu0
      %v2450 = vadd.f32 %v448, %v2449
      %v2451 = vpop.f32.mrb[0].mxu0
      %v2452 = vpop.f32.mrb[0].mxu0
      %v2453 = vadd.f32 %v448, %v2452
      %v2454 = vpop.f32.mrb[0].mxu0
      %2455 = vmatprep.mubr.bf16.mxu0 0
      %2456 = vmatmul.mubr.bf16.gmra.mrb[0].mxu0 %v1470
      %v2457 = vpop.f32.mrb[0].mxu0
      %v2458 = vadd.f32 %v448, %v2457
      %v2459 = vpop.f32.mrb[0].mxu0
      %v2460 = vpop.f32.mrb[0].mxu0
      %v2461 = vadd.f32 %v448, %v2460
      %v2462 = vpop.f32.mrb[0].mxu0
      %2463 = vmatprep.mubr.bf16.mxu0 0
      %2464 = vmatmul.mubr.bf16.gmra.mrb[0].mxu0 %v1473
      %v2465 = vpop.f32.mrb[0].mxu0
      %v2466 = vadd.f32 %v448, %v2465
      %v2467 = vpop.f32.mrb[0].mxu0
      %v2468 = vpop.f32.mrb[0].mxu0
      %v2469 = vadd.f32 %v448, %v2468
      %v2470 = vpop.f32.mrb[0].mxu0
      %2471 = vmatprep.mubr.bf16.mxu0 0
      %2472 = vmatmul.mubr.bf16.gmra.mrb[0].mxu0 %v1476
      %v2473 = vpop.f32.mrb[0].mxu0
      %v2474 = vadd.f32 %v448, %v2473
      %v2475 = vpop.f32.mrb[0].mxu0
      %v2476 = vpop.f32.mrb[0].mxu0
      %v2477 = vadd.f32 %v448, %v2476
      %v2478 = vpop.f32.mrb[0].mxu0
      %2479 = vmatprep.mubr.bf16.mxu0 0
      %2480 = vmatmul.mubr.bf16.gmra.mrb[0].mxu0 %v1479
      %v2481 = vpop.f32.mrb[0].mxu0
      %v2482 = vadd.f32 %v448, %v2481
      %v2483 = vpop.f32.mrb[0].mxu0
      %v2484 = vpop.f32.mrb[0].mxu0
      %v2485 = vadd.f32 %v448, %v2484
      %v2486 = vpop.f32.mrb[0].mxu0
      %2487 = vmatprep.mubr.bf16.mxu0 0
      %2488 = vmatmul.mubr.bf16.gmra.mrb[0].mxu0 %v1482
      %v2489 = vpop.f32.mrb[0].mxu0
      %v2490 = vadd.f32 %v448, %v2489
      %v2491 = vpop.f32.mrb[0].mxu0
      %v2492 = vpop.f32.mrb[0].mxu0
      %v2493 = vadd.f32 %v448, %v2492
      %v2494 = vpop.f32.mrb[0].mxu0
      %2495 = vmatprep.mubr.bf16.mxu0 0
      %2496 = vmatmul.mubr.bf16.gmra.mrb[0].mxu0 %v1485
      %v2497 = vpop.f32.mrb[0].mxu0
      %v2498 = vadd.f32 %v448, %v2497
      %v2499 = vpop.f32.mrb[0].mxu0
      %v2500 = vpop.f32.mrb[0].mxu0
      %v2501 = vadd.f32 %v448, %v2500
      %v2502 = vpop.f32.mrb[0].mxu0
      %2503 = vmatprep.mubr.bf16.mxu0 0
      %2504 = vmatmul.mubr.bf16.gmra.mrb[0].mxu0 %v1488
      %v2505 = vpop.f32.mrb[0].mxu0
      %v2506 = vadd.f32 %v448, %v2505
      %v2507 = vpop.f32.mrb[0].mxu0
      %v2508 = vpop.f32.mrb[0].mxu0
      %v2509 = vadd.f32 %v448, %v2508
      %v2510 = vpop.f32.mrb[0].mxu0
      %2511 = vmatprep.mubr.bf16.mxu0 0
      %2512 = vmatmul.mubr.bf16.gmra.mrb[0].mxu0 %v1491
      %v2513 = vpop.f32.mrb[0].mxu0
      %v2514 = vadd.f32 %v448, %v2513
      %v2515 = vpop.f32.mrb[0].mxu0
      %v2516 = vpop.f32.mrb[0].mxu0
      %v2517 = vadd.f32 %v448, %v2516
      %v2518 = vpop.f32.mrb[0].mxu0
      %2519 = vmatprep.mubr.bf16.mxu0 0
      %2520 = vmatmul.mubr.bf16.gmra.mrb[0].mxu0 %v1494
      %v2521 = vpop.f32.mrb[0].mxu0
      %v2522 = vadd.f32 %v448, %v2521
      %v2523 = vpop.f32.mrb[0].mxu0
      %v2524 = vpop.f32.mrb[0].mxu0
      %v2525 = vadd.f32 %v448, %v2524
      %v2526 = vpop.f32.mrb[0].mxu0
      %2527 = vmatprep.mubr.bf16.mxu0 0
      %2528 = vmatmul.mubr.bf16.gmra.mrb[0].mxu0 %v1497
      %v2529 = vpop.f32.mrb[0].mxu0
      %v2530 = vadd.f32 %v448, %v2529
      %v2531 = vpop.f32.mrb[0].mxu0
      %v2532 = vpop.f32.mrb[0].mxu0
      %v2533 = vadd.f32 %v448, %v2532
      %v2534 = vpop.f32.mrb[0].mxu0
      %2535 = vmatprep.mubr.bf16.mxu0 0
      %2536 = vmatmul.mubr.bf16.gmra.mrb[0].mxu0 %v1500
      %v2537 = vpop.f32.mrb[0].mxu0
      %v2538 = vadd.f32 %v448, %v2537
      %v2539 = vpop.f32.mrb[0].mxu0
      %v2540 = vpop.f32.mrb[0].mxu0
      %v2541 = vadd.f32 %v448, %v2540
      %v2542 = vpop.f32.mrb[0].mxu0
      %2543 = vmatprep.mubr.bf16.mxu0 0
      %2544 = vmatmul.mubr.bf16.gmra.mrb[0].mxu0 %v1503
      %v2545 = vpop.f32.mrb[0].mxu0
      %v2546 = vadd.f32 %v448, %v2545
      %v2547 = vpop.f32.mrb[0].mxu0
      %v2548 = vpop.f32.mrb[0].mxu0
      %v2549 = vadd.f32 %v448, %v2548
      %v2550 = vpop.f32.mrb[0].mxu0
      %2551 = vmatprep.mubr.bf16.mxu0 0
      %2552 = vmatmul.mubr.bf16.gmra.mrb[0].mxu0 %v1506
      %v2553 = vpop.f32.mrb[0].mxu0
      %v2554 = vadd.f32 %v448, %v2553
      %v2555 = vpop.f32.mrb[0].mxu0
      %v2556 = vpop.f32.mrb[0].mxu0
      %v2557 = vadd.f32 %v448, %v2556
      %v2558 = vpop.f32.mrb[0].mxu0
      %2559 = vmatprep.mubr.bf16.mxu0 0
      %2560 = vmatmul.mubr.bf16.gmra.mrb[0].mxu0 %v1509
      %v2561 = vpop.f32.mrb[0].mxu0
      %v2562 = vadd.f32 %v448, %v2561
      %v2563 = vpop.f32.mrb[0].mxu0
      %v2564 = vpop.f32.mrb[0].mxu0
      %v2565 = vadd.f32 %v448, %v2564
      %v2566 = vpop.f32.mrb[0].mxu0
      %2567 = vdwg.mxu0
      %vm2568 = vcmask 64512
      %2569 = vst.msk [vmem:[%s172] sm:$0xff] %vm2568, %v1546
      %2570 = vst.msk [vmem:[%s172 + $0x8] sm:$0xff] %vm2568, %v1549
      %2571 = vst.msk [vmem:[%s172 + $0x10] sm:$0xff] %vm2568, %v1554
      %2572 = vst.msk [vmem:[%s172 + $0x18] sm:$0xff] %vm2568, %v1557
      %2573 = vst.msk [vmem:[%s172 + $0x20] sm:$0xff] %vm2568, %v1562
      %2574 = vst.msk [vmem:[%s172 + $0x28] sm:$0xff] %vm2568, %v1565
      %2575 = vst.msk [vmem:[%s172 + $0x30] sm:$0xff] %vm2568, %v1570
      %2576 = vst.msk [vmem:[%s172 + $0x38] sm:$0xff] %vm2568, %v1573
      %2577 = vst.msk [vmem:[%s172 + $0x40] sm:$0xff] %vm2568, %v1578
      %2578 = vst.msk [vmem:[%s172 + $0x48] sm:$0xff] %vm2568, %v1581
      %2579 = vst.msk [vmem:[%s172 + $0x50] sm:$0xff] %vm2568, %v1586
      %2580 = vst.msk [vmem:[%s172 + $0x58] sm:$0xff] %vm2568, %v1589
      %2581 = vst.msk [vmem:[%s172 + $0x60] sm:$0xff] %vm2568, %v1594
      %2582 = vst.msk [vmem:[%s172 + $0x68] sm:$0xff] %vm2568, %v1597
      %2583 = vst.msk [vmem:[%s172 + $0x70] sm:$0xff] %vm2568, %v1602
      %2584 = vst.msk [vmem:[%s172 + $0x78] sm:$0xff] %vm2568, %v1605
      %2585 = vst.msk [vmem:[%s172 + $0x80] sm:$0xff] %vm2568, %v1610
      %2586 = vst.msk [vmem:[%s172 + $0x88] sm:$0xff] %vm2568, %v1613
      %2587 = vst.msk [vmem:[%s172 + $0x90] sm:$0xff] %vm2568, %v1618
      %2588 = vst.msk [vmem:[%s172 + $0x98] sm:$0xff] %vm2568, %v1621
      %2589 = vst.msk [vmem:[%s172 + $0xa0] sm:$0xff] %vm2568, %v1626
      %2590 = vst.msk [vmem:[%s172 + $0xa8] sm:$0xff] %vm2568, %v1629
      %2591 = vst.msk [vmem:[%s172 + $0xb0] sm:$0xff] %vm2568, %v1634
      %2592 = vst.msk [vmem:[%s172 + $0xb8] sm:$0xff] %vm2568, %v1637
      %2593 = vst.msk [vmem:[%s172 + $0xc0] sm:$0xff] %vm2568, %v1642
      %2594 = vst.msk [vmem:[%s172 + $0xc8] sm:$0xff] %vm2568, %v1645
      %2595 = vst.msk [vmem:[%s172 + $0xd0] sm:$0xff] %vm2568, %v1650
      %2596 = vst.msk [vmem:[%s172 + $0xd8] sm:$0xff] %vm2568, %v1653
      %2597 = vst.msk [vmem:[%s172 + $0xe0] sm:$0xff] %vm2568, %v1658
      %2598 = vst.msk [vmem:[%s172 + $0xe8] sm:$0xff] %vm2568, %v1661
      %2599 = vst.msk [vmem:[%s172 + $0xf0] sm:$0xff] %vm2568, %v1666
      %2600 = vst.msk [vmem:[%s172 + $0xf8] sm:$0xff] %vm2568, %v1669
      %2601 = vst.msk [vmem:[%s172 + $0x100] sm:$0xff] %vm2568, %v1674
      %2602 = vst.msk [vmem:[%s172 + $0x108] sm:$0xff] %vm2568, %v1677
      %2603 = vst.msk [vmem:[%s172 + $0x110] sm:$0xff] %vm2568, %v1682
      %2604 = vst.msk [vmem:[%s172 + $0x118] sm:$0xff] %vm2568, %v1685
      %2605 = vst.msk [vmem:[%s172 + $0x120] sm:$0xff] %vm2568, %v1690
      %2606 = vst.msk [vmem:[%s172 + $0x128] sm:$0xff] %vm2568, %v1693
      %2607 = vst.msk [vmem:[%s172 + $0x130] sm:$0xff] %vm2568, %v1698
      %2608 = vst.msk [vmem:[%s172 + $0x138] sm:$0xff] %vm2568, %v1701
      %2609 = vst.msk [vmem:[%s172 + $0x140] sm:$0xff] %vm2568, %v1706
      %2610 = vst.msk [vmem:[%s172 + $0x148] sm:$0xff] %vm2568, %v1709
      %2611 = vst.msk [vmem:[%s172 + $0x150] sm:$0xff] %vm2568, %v1714
      %2612 = vst.msk [vmem:[%s172 + $0x158] sm:$0xff] %vm2568, %v1717
      %2613 = vst.msk [vmem:[%s172 + $0x160] sm:$0xff] %vm2568, %v1722
      %2614 = vst.msk [vmem:[%s172 + $0x168] sm:$0xff] %vm2568, %v1725
      %2615 = vst.msk [vmem:[%s172 + $0x170] sm:$0xff] %vm2568, %v1730
      %2616 = vst.msk [vmem:[%s172 + $0x178] sm:$0xff] %vm2568, %v1733
      %2617 = vst.msk [vmem:[%s172 + $0x180] sm:$0xff] %vm2568, %v1738
      %2618 = vst.msk [vmem:[%s172 + $0x188] sm:$0xff] %vm2568, %v1741
      %2619 = vst.msk [vmem:[%s172 + $0x190] sm:$0xff] %vm2568, %v1746
      %2620 = vst.msk [vmem:[%s172 + $0x198] sm:$0xff] %vm2568, %v1749
      %2621 = vst.msk [vmem:[%s172 + $0x1a0] sm:$0xff] %vm2568, %v1754
      %2622 = vst.msk [vmem:[%s172 + $0x1a8] sm:$0xff] %vm2568, %v1757
      %2623 = vst.msk [vmem:[%s172 + $0x1b0] sm:$0xff] %vm2568, %v1762
      %2624 = vst.msk [vmem:[%s172 + $0x1b8] sm:$0xff] %vm2568, %v1765
      %2625 = vst.msk [vmem:[%s172 + $0x1c0] sm:$0xff] %vm2568, %v1770
      %2626 = vst.msk [vmem:[%s172 + $0x1c8] sm:$0xff] %vm2568, %v1773
      %2627 = vst.msk [vmem:[%s172 + $0x1d0] sm:$0xff] %vm2568, %v1778
      %2628 = vst.msk [vmem:[%s172 + $0x1d8] sm:$0xff] %vm2568, %v1781
      %2629 = vst.msk [vmem:[%s172 + $0x1e0] sm:$0xff] %vm2568, %v1786
      %2630 = vst.msk [vmem:[%s172 + $0x1e8] sm:$0xff] %vm2568, %v1789
      %2631 = vst.msk [vmem:[%s172 + $0x1f0] sm:$0xff] %vm2568, %v1794
      %2632 = vst.msk [vmem:[%s172 + $0x1f8] sm:$0xff] %vm2568, %v1797
      %2633 = vst.msk [vmem:[%s172 + $0x200] sm:$0xff] %vm2568, %v1802
      %2634 = vst.msk [vmem:[%s172 + $0x208] sm:$0xff] %vm2568, %v1805
      %2635 = vst.msk [vmem:[%s172 + $0x210] sm:$0xff] %vm2568, %v1810
      %2636 = vst.msk [vmem:[%s172 + $0x218] sm:$0xff] %vm2568, %v1813
      %2637 = vst.msk [vmem:[%s172 + $0x220] sm:$0xff] %vm2568, %v1818
      %2638 = vst.msk [vmem:[%s172 + $0x228] sm:$0xff] %vm2568, %v1821
      %2639 = vst.msk [vmem:[%s172 + $0x230] sm:$0xff] %vm2568, %v1826
      %2640 = vst.msk [vmem:[%s172 + $0x238] sm:$0xff] %vm2568, %v1829
      %2641 = vst.msk [vmem:[%s172 + $0x240] sm:$0xff] %vm2568, %v1834
      %2642 = vst.msk [vmem:[%s172 + $0x248] sm:$0xff] %vm2568, %v1837
      %2643 = vst.msk [vmem:[%s172 + $0x250] sm:$0xff] %vm2568, %v1842
      %2644 = vst.msk [vmem:[%s172 + $0x258] sm:$0xff] %vm2568, %v1845
      %2645 = vst.msk [vmem:[%s172 + $0x260] sm:$0xff] %vm2568, %v1850
      %2646 = vst.msk [vmem:[%s172 + $0x268] sm:$0xff] %vm2568, %v1853
      %2647 = vst.msk [vmem:[%s172 + $0x270] sm:$0xff] %vm2568, %v1858
      %2648 = vst.msk [vmem:[%s172 + $0x278] sm:$0xff] %vm2568, %v1861
      %2649 = vst.msk [vmem:[%s172 + $0x280] sm:$0xff] %vm2568, %v1866
      %2650 = vst.msk [vmem:[%s172 + $0x288] sm:$0xff] %vm2568, %v1869
      %2651 = vst.msk [vmem:[%s172 + $0x290] sm:$0xff] %vm2568, %v1874
      %2652 = vst.msk [vmem:[%s172 + $0x298] sm:$0xff] %vm2568, %v1877
      %2653 = vst.msk [vmem:[%s172 + $0x2a0] sm:$0xff] %vm2568, %v1882
      %2654 = vst.msk [vmem:[%s172 + $0x2a8] sm:$0xff] %vm2568, %v1885
      %2655 = vst.msk [vmem:[%s172 + $0x2b0] sm:$0xff] %vm2568, %v1890
      %2656 = vst.msk [vmem:[%s172 + $0x2b8] sm:$0xff] %vm2568, %v1893
      %2657 = vst.msk [vmem:[%s172 + $0x2c0] sm:$0xff] %vm2568, %v1898
      %2658 = vst.msk [vmem:[%s172 + $0x2c8] sm:$0xff] %vm2568, %v1901
      %2659 = vst.msk [vmem:[%s172 + $0x2d0] sm:$0xff] %vm2568, %v1906
      %2660 = vst.msk [vmem:[%s172 + $0x2d8] sm:$0xff] %vm2568, %v1909
      %2661 = vst.msk [vmem:[%s172 + $0x2e0] sm:$0xff] %vm2568, %v1914
      %2662 = vst.msk [vmem:[%s172 + $0x2e8] sm:$0xff] %vm2568, %v1917
      %2663 = vst.msk [vmem:[%s172 + $0x2f0] sm:$0xff] %vm2568, %v1922
      %2664 = vst.msk [vmem:[%s172 + $0x2f8] sm:$0xff] %vm2568, %v1925
      %2665 = vst.msk [vmem:[%s172 + $0x300] sm:$0xff] %vm2568, %v1930
      %2666 = vst.msk [vmem:[%s172 + $0x308] sm:$0xff] %vm2568, %v1933
      %2667 = vst.msk [vmem:[%s172 + $0x310] sm:$0xff] %vm2568, %v1938
      %2668 = vst.msk [vmem:[%s172 + $0x318] sm:$0xff] %vm2568, %v1941
      %2669 = vst.msk [vmem:[%s172 + $0x320] sm:$0xff] %vm2568, %v1946
      %2670 = vst.msk [vmem:[%s172 + $0x328] sm:$0xff] %vm2568, %v1949
      %2671 = vst.msk [vmem:[%s172 + $0x330] sm:$0xff] %vm2568, %v1954
      %2672 = vst.msk [vmem:[%s172 + $0x338] sm:$0xff] %vm2568, %v1957
      %2673 = vst.msk [vmem:[%s172 + $0x340] sm:$0xff] %vm2568, %v1962
      %2674 = vst.msk [vmem:[%s172 + $0x348] sm:$0xff] %vm2568, %v1965
      %2675 = vst.msk [vmem:[%s172 + $0x350] sm:$0xff] %vm2568, %v1970
      %2676 = vst.msk [vmem:[%s172 + $0x358] sm:$0xff] %vm2568, %v1973
      %2677 = vst.msk [vmem:[%s172 + $0x360] sm:$0xff] %vm2568, %v1978
      %2678 = vst.msk [vmem:[%s172 + $0x368] sm:$0xff] %vm2568, %v1981
      %2679 = vst.msk [vmem:[%s172 + $0x370] sm:$0xff] %vm2568, %v1986
      %2680 = vst.msk [vmem:[%s172 + $0x378] sm:$0xff] %vm2568, %v1989
      %2681 = vst.msk [vmem:[%s172 + $0x380] sm:$0xff] %vm2568, %v1994
      %2682 = vst.msk [vmem:[%s172 + $0x388] sm:$0xff] %vm2568, %v1997
      %2683 = vst.msk [vmem:[%s172 + $0x390] sm:$0xff] %vm2568, %v2002
      %2684 = vst.msk [vmem:[%s172 + $0x398] sm:$0xff] %vm2568, %v2005
      %2685 = vst.msk [vmem:[%s172 + $0x3a0] sm:$0xff] %vm2568, %v2010
      %2686 = vst.msk [vmem:[%s172 + $0x3a8] sm:$0xff] %vm2568, %v2013
      %2687 = vst.msk [vmem:[%s172 + $0x3b0] sm:$0xff] %vm2568, %v2018
      %2688 = vst.msk [vmem:[%s172 + $0x3b8] sm:$0xff] %vm2568, %v2021
      %2689 = vst.msk [vmem:[%s172 + $0x3c0] sm:$0xff] %vm2568, %v2026
      %2690 = vst.msk [vmem:[%s172 + $0x3c8] sm:$0xff] %vm2568, %v2029
      %2691 = vst.msk [vmem:[%s172 + $0x3d0] sm:$0xff] %vm2568, %v2034
      %2692 = vst.msk [vmem:[%s172 + $0x3d8] sm:$0xff] %vm2568, %v2037
      %2693 = vst.msk [vmem:[%s172 + $0x3e0] sm:$0xff] %vm2568, %v2042
      %2694 = vst.msk [vmem:[%s172 + $0x3e8] sm:$0xff] %vm2568, %v2045
      %2695 = vst.msk [vmem:[%s172 + $0x3f0] sm:$0xff] %vm2568, %v2050
      %2696 = vst.msk [vmem:[%s172 + $0x3f8] sm:$0xff] %vm2568, %v2053
      %2697 = vst.msk [vmem:[%s172 + $0x400] sm:$0xff] %vm2568, %v2058
      %2698 = vst.msk [vmem:[%s172 + $0x408] sm:$0xff] %vm2568, %v2061
      %2699 = vst.msk [vmem:[%s172 + $0x410] sm:$0xff] %vm2568, %v2066
      %2700 = vst.msk [vmem:[%s172 + $0x418] sm:$0xff] %vm2568, %v2069
      %2701 = vst.msk [vmem:[%s172 + $0x420] sm:$0xff] %vm2568, %v2074
      %2702 = vst.msk [vmem:[%s172 + $0x428] sm:$0xff] %vm2568, %v2077
      %2703 = vst.msk [vmem:[%s172 + $0x430] sm:$0xff] %vm2568, %v2082
      %2704 = vst.msk [vmem:[%s172 + $0x438] sm:$0xff] %vm2568, %v2085
      %2705 = vst.msk [vmem:[%s172 + $0x440] sm:$0xff] %vm2568, %v2090
      %2706 = vst.msk [vmem:[%s172 + $0x448] sm:$0xff] %vm2568, %v2093
      %2707 = vst.msk [vmem:[%s172 + $0x450] sm:$0xff] %vm2568, %v2098
      %2708 = vst.msk [vmem:[%s172 + $0x458] sm:$0xff] %vm2568, %v2101
      %2709 = vst.msk [vmem:[%s172 + $0x460] sm:$0xff] %vm2568, %v2106
      %2710 = vst.msk [vmem:[%s172 + $0x468] sm:$0xff] %vm2568, %v2109
      %2711 = vst.msk [vmem:[%s172 + $0x470] sm:$0xff] %vm2568, %v2114
      %2712 = vst.msk [vmem:[%s172 + $0x478] sm:$0xff] %vm2568, %v2117
      %2713 = vst.msk [vmem:[%s172 + $0x480] sm:$0xff] %vm2568, %v2122
      %2714 = vst.msk [vmem:[%s172 + $0x488] sm:$0xff] %vm2568, %v2125
      %2715 = vst.msk [vmem:[%s172 + $0x490] sm:$0xff] %vm2568, %v2130
      %2716 = vst.msk [vmem:[%s172 + $0x498] sm:$0xff] %vm2568, %v2133
      %2717 = vst.msk [vmem:[%s172 + $0x4a0] sm:$0xff] %vm2568, %v2138
      %2718 = vst.msk [vmem:[%s172 + $0x4a8] sm:$0xff] %vm2568, %v2141
      %2719 = vst.msk [vmem:[%s172 + $0x4b0] sm:$0xff] %vm2568, %v2146
      %2720 = vst.msk [vmem:[%s172 + $0x4b8] sm:$0xff] %vm2568, %v2149
      %2721 = vst.msk [vmem:[%s172 + $0x4c0] sm:$0xff] %vm2568, %v2154
      %2722 = vst.msk [vmem:[%s172 + $0x4c8] sm:$0xff] %vm2568, %v2157
      %2723 = vst.msk [vmem:[%s172 + $0x4d0] sm:$0xff] %vm2568, %v2162
      %2724 = vst.msk [vmem:[%s172 + $0x4d8] sm:$0xff] %vm2568, %v2165
      %2725 = vst.msk [vmem:[%s172 + $0x4e0] sm:$0xff] %vm2568, %v2170
      %2726 = vst.msk [vmem:[%s172 + $0x4e8] sm:$0xff] %vm2568, %v2173
      %2727 = vst.msk [vmem:[%s172 + $0x4f0] sm:$0xff] %vm2568, %v2178
      %2728 = vst.msk [vmem:[%s172 + $0x4f8] sm:$0xff] %vm2568, %v2181
      %2729 = vst.msk [vmem:[%s172 + $0x500] sm:$0xff] %vm2568, %v2186
      %2730 = vst.msk [vmem:[%s172 + $0x508] sm:$0xff] %vm2568, %v2189
      %2731 = vst.msk [vmem:[%s172 + $0x510] sm:$0xff] %vm2568, %v2194
      %2732 = vst.msk [vmem:[%s172 + $0x518] sm:$0xff] %vm2568, %v2197
      %2733 = vst.msk [vmem:[%s172 + $0x520] sm:$0xff] %vm2568, %v2202
      %2734 = vst.msk [vmem:[%s172 + $0x528] sm:$0xff] %vm2568, %v2205
      %2735 = vst.msk [vmem:[%s172 + $0x530] sm:$0xff] %vm2568, %v2210
      %2736 = vst.msk [vmem:[%s172 + $0x538] sm:$0xff] %vm2568, %v2213
      %2737 = vst.msk [vmem:[%s172 + $0x540] sm:$0xff] %vm2568, %v2218
      %2738 = vst.msk [vmem:[%s172 + $0x548] sm:$0xff] %vm2568, %v2221
      %2739 = vst.msk [vmem:[%s172 + $0x550] sm:$0xff] %vm2568, %v2226
      %2740 = vst.msk [vmem:[%s172 + $0x558] sm:$0xff] %vm2568, %v2229
      %2741 = vst.msk [vmem:[%s172 + $0x560] sm:$0xff] %vm2568, %v2234
      %2742 = vst.msk [vmem:[%s172 + $0x568] sm:$0xff] %vm2568, %v2237
      %2743 = vst.msk [vmem:[%s172 + $0x570] sm:$0xff] %vm2568, %v2242
      %2744 = vst.msk [vmem:[%s172 + $0x578] sm:$0xff] %vm2568, %v2245
      %2745 = vst.msk [vmem:[%s172 + $0x580] sm:$0xff] %vm2568, %v2250
      %2746 = vst.msk [vmem:[%s172 + $0x588] sm:$0xff] %vm2568, %v2253
      %2747 = vst.msk [vmem:[%s172 + $0x590] sm:$0xff] %vm2568, %v2258
      %2748 = vst.msk [vmem:[%s172 + $0x598] sm:$0xff] %vm2568, %v2261
      %2749 = vst.msk [vmem:[%s172 + $0x5a0] sm:$0xff] %vm2568, %v2266
      %2750 = vst.msk [vmem:[%s172 + $0x5a8] sm:$0xff] %vm2568, %v2269
      %2751 = vst.msk [vmem:[%s172 + $0x5b0] sm:$0xff] %vm2568, %v2274
      %2752 = vst.msk [vmem:[%s172 + $0x5b8] sm:$0xff] %vm2568, %v2277
      %2753 = vst.msk [vmem:[%s172 + $0x5c0] sm:$0xff] %vm2568, %v2282
      %2754 = vst.msk [vmem:[%s172 + $0x5c8] sm:$0xff] %vm2568, %v2285
      %2755 = vst.msk [vmem:[%s172 + $0x5d0] sm:$0xff] %vm2568, %v2290
      %2756 = vst.msk [vmem:[%s172 + $0x5d8] sm:$0xff] %vm2568, %v2293
      %2757 = vst.msk [vmem:[%s172 + $0x5e0] sm:$0xff] %vm2568, %v2298
      %2758 = vst.msk [vmem:[%s172 + $0x5e8] sm:$0xff] %vm2568, %v2301
      %2759 = vst.msk [vmem:[%s172 + $0x5f0] sm:$0xff] %vm2568, %v2306
      %2760 = vst.msk [vmem:[%s172 + $0x5f8] sm:$0xff] %vm2568, %v2309
      %2761 = vst.msk [vmem:[%s172 + $0x600] sm:$0xff] %vm2568, %v2314
      %2762 = vst.msk [vmem:[%s172 + $0x608] sm:$0xff] %vm2568, %v2317
      %2763 = vst.msk [vmem:[%s172 + $0x610] sm:$0xff] %vm2568, %v2322
      %2764 = vst.msk [vmem:[%s172 + $0x618] sm:$0xff] %vm2568, %v2325
      %2765 = vst.msk [vmem:[%s172 + $0x620] sm:$0xff] %vm2568, %v2330
      %2766 = vst.msk [vmem:[%s172 + $0x628] sm:$0xff] %vm2568, %v2333
      %2767 = vst.msk [vmem:[%s172 + $0x630] sm:$0xff] %vm2568, %v2338
      %2768 = vst.msk [vmem:[%s172 + $0x638] sm:$0xff] %vm2568, %v2341
      %2769 = vst.msk [vmem:[%s172 + $0x640] sm:$0xff] %vm2568, %v2346
      %2770 = vst.msk [vmem:[%s172 + $0x648] sm:$0xff] %vm2568, %v2349
      %2771 = vst.msk [vmem:[%s172 + $0x650] sm:$0xff] %vm2568, %v2354
      %2772 = vst.msk [vmem:[%s172 + $0x658] sm:$0xff] %vm2568, %v2357
      %2773 = vst.msk [vmem:[%s172 + $0x660] sm:$0xff] %vm2568, %v2362
      %2774 = vst.msk [vmem:[%s172 + $0x668] sm:$0xff] %vm2568, %v2365
      %2775 = vst.msk [vmem:[%s172 + $0x670] sm:$0xff] %vm2568, %v2370
      %2776 = vst.msk [vmem:[%s172 + $0x678] sm:$0xff] %vm2568, %v2373
      %2777 = vst.msk [vmem:[%s172 + $0x680] sm:$0xff] %vm2568, %v2378
      %2778 = vst.msk [vmem:[%s172 + $0x688] sm:$0xff] %vm2568, %v2381
      %2779 = vst.msk [vmem:[%s172 + $0x690] sm:$0xff] %vm2568, %v2386
      %2780 = vst.msk [vmem:[%s172 + $0x698] sm:$0xff] %vm2568, %v2389
      %2781 = vst.msk [vmem:[%s172 + $0x6a0] sm:$0xff] %vm2568, %v2394
      %2782 = vst.msk [vmem:[%s172 + $0x6a8] sm:$0xff] %vm2568, %v2397
      %2783 = vst.msk [vmem:[%s172 + $0x6b0] sm:$0xff] %vm2568, %v2402
      %2784 = vst.msk [vmem:[%s172 + $0x6b8] sm:$0xff] %vm2568, %v2405
      %2785 = vst.msk [vmem:[%s172 + $0x6c0] sm:$0xff] %vm2568, %v2410
      %2786 = vst.msk [vmem:[%s172 + $0x6c8] sm:$0xff] %vm2568, %v2413
      %2787 = vst.msk [vmem:[%s172 + $0x6d0] sm:$0xff] %vm2568, %v2418
      %2788 = vst.msk [vmem:[%s172 + $0x6d8] sm:$0xff] %vm2568, %v2421
      %2789 = vst.msk [vmem:[%s172 + $0x6e0] sm:$0xff] %vm2568, %v2426
      %2790 = vst.msk [vmem:[%s172 + $0x6e8] sm:$0xff] %vm2568, %v2429
      %2791 = vst.msk [vmem:[%s172 + $0x6f0] sm:$0xff] %vm2568, %v2434
      %2792 = vst.msk [vmem:[%s172 + $0x6f8] sm:$0xff] %vm2568, %v2437
      %2793 = vst.msk [vmem:[%s172 + $0x700] sm:$0xff] %vm2568, %v2442
      %2794 = vst.msk [vmem:[%s172 + $0x708] sm:$0xff] %vm2568, %v2445
      %2795 = vst.msk [vmem:[%s172 + $0x710] sm:$0xff] %vm2568, %v2450
      %2796 = vst.msk [vmem:[%s172 + $0x718] sm:$0xff] %vm2568, %v2453
      %2797 = vst.msk [vmem:[%s172 + $0x720] sm:$0xff] %vm2568, %v2458
      %2798 = vst.msk [vmem:[%s172 + $0x728] sm:$0xff] %vm2568, %v2461
      %2799 = vst.msk [vmem:[%s172 + $0x730] sm:$0xff] %vm2568, %v2466
      %2800 = vst.msk [vmem:[%s172 + $0x738] sm:$0xff] %vm2568, %v2469
      %2801 = vst.msk [vmem:[%s172 + $0x740] sm:$0xff] %vm2568, %v2474
      %2802 = vst.msk [vmem:[%s172 + $0x748] sm:$0xff] %vm2568, %v2477
      %2803 = vst.msk [vmem:[%s172 + $0x750] sm:$0xff] %vm2568, %v2482
      %2804 = vst.msk [vmem:[%s172 + $0x758] sm:$0xff] %vm2568, %v2485
      %2805 = vst.msk [vmem:[%s172 + $0x760] sm:$0xff] %vm2568, %v2490
      %2806 = vst.msk [vmem:[%s172 + $0x768] sm:$0xff] %vm2568, %v2493
      %2807 = vst.msk [vmem:[%s172 + $0x770] sm:$0xff] %vm2568, %v2498
      %2808 = vst.msk [vmem:[%s172 + $0x778] sm:$0xff] %vm2568, %v2501
      %2809 = vst.msk [vmem:[%s172 + $0x780] sm:$0xff] %vm2568, %v2506
      %2810 = vst.msk [vmem:[%s172 + $0x788] sm:$0xff] %vm2568, %v2509
      %2811 = vst.msk [vmem:[%s172 + $0x790] sm:$0xff] %vm2568, %v2514
      %2812 = vst.msk [vmem:[%s172 + $0x798] sm:$0xff] %vm2568, %v2517
      %2813 = vst.msk [vmem:[%s172 + $0x7a0] sm:$0xff] %vm2568, %v2522
      %2814 = vst.msk [vmem:[%s172 + $0x7a8] sm:$0xff] %vm2568, %v2525
      %2815 = vst.msk [vmem:[%s172 + $0x7b0] sm:$0xff] %vm2568, %v2530
      %2816 = vst.msk [vmem:[%s172 + $0x7b8] sm:$0xff] %vm2568, %v2533
      %2817 = vst.msk [vmem:[%s172 + $0x7c0] sm:$0xff] %vm2568, %v2538
      %2818 = vst.msk [vmem:[%s172 + $0x7c8] sm:$0xff] %vm2568, %v2541
      %2819 = vst.msk [vmem:[%s172 + $0x7d0] sm:$0xff] %vm2568, %v2546
      %2820 = vst.msk [vmem:[%s172 + $0x7d8] sm:$0xff] %vm2568, %v2549
      %2821 = vst.msk [vmem:[%s172 + $0x7e0] sm:$0xff] %vm2568, %v2554
      %2822 = vst.msk [vmem:[%s172 + $0x7e8] sm:$0xff] %vm2568, %v2557
      %2823 = vst.msk [vmem:[%s172 + $0x7f0] sm:$0xff] %vm2568, %v2562
      %2824 = vst.msk [vmem:[%s172 + $0x7f8] sm:$0xff] %vm2568, %v2565
      %s2825 = smul.u32 256, %s14
      %p2826 = scmp.lt.s32.totalorder %s2825, 5119
      %s2827 = scalar_select %p2826, %s2825, 5119
      %s2828 = smul.addr %s2827, 8
      %s2829 = scalar_lea.vmem %s3, %s2828
      // Predicated region
      $region33: #{very_small_decoder_forward.9} parent=31 // pred_check
        %p2830 = pneg %p100
      $region34: #{very_small_decoder_forward.9} parent=31 // pred_check_branch
        %2832 = sbr.rel (%p2830) target = $region36
      $region35: #{very_small_decoder_forward.9} parent=31 // pred_region
        %s2833 = smul.u32 256, %s14
      $region36: #{very_small_decoder_forward.9} parent=31 // pred_fallthru
        _
    $region32: #{very_small_decoder_forward.9} parent=5 // pred_fallthru
      _
    %p2834 = scmp.le.s32.totalorder 2, %s9
    // Predicated region
    $region37: #{very_small_decoder_forward.9} parent=5 // pred_check
      %p2835 = pneg %p2834
    $region38: #{very_small_decoder_forward.9} parent=5 // pred_check_branch
      %2837 = sbr.rel (%p2835) target = $region40
    $region39: #{very_small_decoder_forward.9} parent=5 // pred_region
      %s2838 = ssub.s32 %s9, 2
      // Predicated region
      $region41: #{very_small_decoder_forward.9} parent=39 // pred_check
        %p2839 = pneg %p106
      $region42: #{very_small_decoder_forward.9} parent=39 // pred_check_branch
        %2841 = sbr.rel (%p2839) target = $region44
      $region43: #{very_small_decoder_forward.9} parent=39 // pred_region
        %s2842 = smul.u32 256, %s15
        %p2843 = scmp.lt.s32.totalorder %s2842, 5119
        %s2844 = scalar_select %p2843, %s2842, 5119
        %s2845 = smul.addr %s2844, 8
        %s2846 = scalar_lea.vmem %s3, %s2845
      $region44: #{very_small_decoder_forward.9} parent=39 // pred_fallthru
        _
    $region40: #{very_small_decoder_forward.9} parent=5 // pred_fallthru
      _
  $region6: #{very_small_decoder_forward.9} parent=0 // loop_footer
    %s13 = sadd.s32 1, %s9
  $region7: #{very_small_decoder_forward.9} parent=0 // loop_footer_branch
    %8 = sbr.rel target = $region3
  $region8: #{very_small_decoder_forward.9} parent=0 // loop_exit
    _

</llo_original>
